<compile_context>
chip_gen: v6e
topology: v6e:2x2x1
jax: 0.10.0
libtpu: 0.0.40
codegen_flags: <defaults>
</compile_context>

<pallas_src>
import functools

import jax
import jax.numpy as jnp
from jax.experimental import pallas as pl
from jax.experimental.pallas import tpu as pltpu

_VMEM_LIMIT = 48 * 1024 * 1024  # fits v7x (64 MiB phys); plenty of headroom on v5e/v6e.


# ------------------------------ Pallas kernels -------------------------------

def _conv1_kernel(a_ref, x_ref, w1_ref, b1_ref, w2_ref, o_ref, acc_ref):
    # acc = A_hat @ X (f32).  Last-k epilogue: H1 = relu(acc @ W1 + b1); out = H1 @ W2.
    k = pl.program_id(1)

    @pl.when(k == 0)
    def _():
        acc_ref[...] = jnp.zeros_like(acc_ref)

    acc_ref[...] += jnp.dot(a_ref[...], x_ref[...],
                            preferred_element_type=jnp.float32)

    @pl.when(k == pl.num_programs(1) - 1)
    def _():
        ax = acc_ref[...].astype(w1_ref.dtype)
        h1 = jnp.dot(ax, w1_ref[...], preferred_element_type=jnp.float32)
        h1 = jnp.maximum(h1 + b1_ref[...], 0.0).astype(w2_ref.dtype)
        y2 = jnp.dot(h1, w2_ref[...], preferred_element_type=jnp.float32)
        o_ref[...] = y2.astype(o_ref.dtype)


def _conv2_kernel(a_ref, y_ref, b2_ref, w3_ref, o_ref, acc_ref):
    # acc = A_hat @ Y2.  Last-k epilogue: H2 = relu(acc + b2); out = H2 @ W3.
    k = pl.program_id(1)

    @pl.when(k == 0)
    def _():
        acc_ref[...] = jnp.zeros_like(acc_ref)

    acc_ref[...] += jnp.dot(a_ref[...], y_ref[...],
                            preferred_element_type=jnp.float32)

    @pl.when(k == pl.num_programs(1) - 1)
    def _():
        h2 = jnp.maximum(acc_ref[...] + b2_ref[...], 0.0).astype(w3_ref.dtype)
        y3 = jnp.dot(h2, w3_ref[...], preferred_element_type=jnp.float32)
        o_ref[...] = y3.astype(o_ref.dtype)


def _conv3_pool_kernel(a_ref, y_ref, b3_ref, o_ref, acc_ref, *, n_real, tm):
    # acc = A_hat @ Y3.  Last-k epilogue: H3 = relu(acc + b3), mask padded node rows,
    # write this row-tile's pooled partial sum (row 0 of an 8-sublane block).
    # No cross-row-tile state -> row axis stays "parallel" (v7x megacore).
    i = pl.program_id(0)
    k = pl.program_id(1)

    @pl.when(k == 0)
    def _():
        acc_ref[...] = jnp.zeros_like(acc_ref)

    acc_ref[...] += jnp.dot(a_ref[...], y_ref[...],
                            preferred_element_type=jnp.float32)

    @pl.when(k == pl.num_programs(1) - 1)
    def _():
        h3 = jnp.maximum(acc_ref[...] + b3_ref[...], 0.0)                # (tm, F3)
        row = i * tm + jax.lax.broadcasted_iota(jnp.int32, (tm, 1), 0)   # global row id
        h3 = jnp.where(row < n_real, h3, 0.0)                            # mask padded rows
        ps = jnp.sum(h3, axis=0, keepdims=True)                          # (1, F3)
        sub = jax.lax.broadcasted_iota(jnp.int32, (8, h3.shape[1]), 0)
        o_ref[...] = jnp.where(sub == 0, ps, 0.0)                        # partial in row 0


def _fused_small_kernel(a_ref, x_ref, w1_ref, b1_ref, w2_ref, b2_ref,
                        w3_ref, b3_ref, wl_ref, bl_ref, o_ref, *, n_real):
    # Whole 3-layer GCN + masked mean-pool + classifier; everything VMEM-resident.
    f32 = jnp.float32
    a = a_ref[...]
    ax = jnp.dot(a, x_ref[...], preferred_element_type=f32)
    h1 = jnp.maximum(jnp.dot(ax.astype(w1_ref.dtype), w1_ref[...],
                             preferred_element_type=f32) + b1_ref[...], 0.0)
    y2 = jnp.dot(h1.astype(w2_ref.dtype), w2_ref[...], preferred_element_type=f32)
    h2 = jnp.maximum(jnp.dot(a, y2.astype(a.dtype),
                             preferred_element_type=f32) + b2_ref[...], 0.0)
    y3 = jnp.dot(h2.astype(w3_ref.dtype), w3_ref[...], preferred_element_type=f32)
    h3 = jnp.maximum(jnp.dot(a, y3.astype(a.dtype),
                             preferred_element_type=f32) + b3_ref[...], 0.0)
    row = jax.lax.broadcasted_iota(jnp.int32, (h3.shape[0], 1), 0)
    h3 = jnp.where(row < n_real, h3, 0.0)                                 # mask padded rows
    pooled = jnp.sum(h3, axis=0, keepdims=True) * (1.0 / n_real)          # global_mean_pool
    # TODO(synk): F.dropout(p=0.5) is identity in eval mode (training=False).
    logits = jnp.dot(pooled, wl_ref[...], preferred_element_type=f32) + bl_ref[...]
    o_ref[...] = logits


# ------------------------------ kernel wrappers -------------------------------

def conv1_fused(a, x, w1, b1, w2, *, tm, tk, out_dtype):
    n = a.shape[0]
    f0, f1, f2 = x.shape[1], w1.shape[1], w2.shape[1]
    return pl.pallas_call(
        _conv1_kernel,
        out_shape=jax.ShapeDtypeStruct((n, f2), out_dtype),
        grid_spec=pltpu.PrefetchScalarGridSpec(
            num_scalar_prefetch=0,
            grid=(n // tm, n // tk),
            in_specs=[pl.BlockSpec((tm, tk), lambda i, k: (i, k)),
                      pl.BlockSpec((tk, f0), lambda i, k: (k, 0)),
                      pl.BlockSpec((f0, f1), lambda i, k: (0, 0)),
                      pl.BlockSpec((1, f1), lambda i, k: (0, 0)),
                      pl.BlockSpec((f1, f2), lambda i, k: (0, 0))],
            out_specs=pl.BlockSpec((tm, f2), lambda i, k: (i, 0)),
            scratch_shapes=[pltpu.VMEM((tm, f0), jnp.float32)],
        ),
        compiler_params=pltpu.CompilerParams(
            dimension_semantics=("parallel", "arbitrary"),
            vmem_limit_bytes=_VMEM_LIMIT),
    )(a, x, w1, b1, w2)


def conv2_fused(a, y2, b2, w3, *, tm, tk, out_dtype):
    n = a.shape[0]
    f2, f3 = y2.shape[1], w3.shape[1]
    return pl.pallas_call(
        _conv2_kernel,
        out_shape=jax.ShapeDtypeStruct((n, f3), out_dtype),
        grid_spec=pltpu.PrefetchScalarGridSpec(
            num_scalar_prefetch=0,
            grid=(n // tm, n // tk),
            in_specs=[pl.BlockSpec((tm, tk), lambda i, k: (i, k)),
                      pl.BlockSpec((tk, f2), lambda i, k: (k, 0)),
                      pl.BlockSpec((1, f2), lambda i, k: (0, 0)),
                      pl.BlockSpec((f2, f3), lambda i, k: (0, 0))],
            out_specs=pl.BlockSpec((tm, f3), lambda i, k: (i, 0)),
            scratch_shapes=[pltpu.VMEM((tm, f2), jnp.float32)],
        ),
        compiler_params=pltpu.CompilerParams(
            dimension_semantics=("parallel", "arbitrary"),
            vmem_limit_bytes=_VMEM_LIMIT),
    )(a, y2, b2, w3)


def conv3_pool(a, y3, b3, n_real, *, tm, tk):
    # Returns ((n//tm)*8, F3) f32; each 8-row block holds one tile's pooled sum in row 0.
    n = a.shape[0]
    f3 = y3.shape[1]
    n_tiles = n // tm
    return pl.pallas_call(
        functools.partial(_conv3_pool_kernel, n_real=int(n_real), tm=tm),
        out_shape=jax.ShapeDtypeStruct((n_tiles * 8, f3), jnp.float32),
        grid_spec=pltpu.PrefetchScalarGridSpec(
            num_scalar_prefetch=0,
            grid=(n_tiles, n // tk),
            in_specs=[pl.BlockSpec((tm, tk), lambda i, k: (i, k)),
                      pl.BlockSpec((tk, f3), lambda i, k: (k, 0)),
                      pl.BlockSpec((1, f3), lambda i, k: (0, 0))],
            out_specs=pl.BlockSpec((8, f3), lambda i, k: (i, 0)),
            scratch_shapes=[pltpu.VMEM((tm, f3), jnp.float32)],
        ),
        compiler_params=pltpu.CompilerParams(
            dimension_semantics=("parallel", "arbitrary"),
            vmem_limit_bytes=_VMEM_LIMIT),
    )(a, y3, b3)


def fused_small_forward(a, x, w1, b1, w2, b2, w3, b3, wl, bl, n_real):
    # Single pallas_call for small graphs (n_pad <= 512).
    c_pad = wl.shape[1]
    full = lambda arr: pl.BlockSpec(arr.shape, lambda i: (0, 0))
    return pl.pallas_call(
        functools.partial(_fused_small_kernel, n_real=int(n_real)),
        out_shape=jax.ShapeDtypeStruct((1, c_pad), jnp.float32),
        grid_spec=pltpu.PrefetchScalarGridSpec(
            num_scalar_prefetch=0,
            grid=(1,),
            in_specs=[full(a), full(x), full(w1), full(b1), full(w2), full(b2),
                      full(w3), full(b3), full(wl), full(bl)],
            out_specs=pl.BlockSpec((1, c_pad), lambda i: (0, 0)),
        ),
        compiler_params=pltpu.CompilerParams(
            dimension_semantics=("arbitrary",),
            vmem_limit_bytes=_VMEM_LIMIT),
    )(a, x, w1, b1, w2, b2, w3, b3, wl, bl)


# ------------------------------ JAX glue --------------------------------------

def _round_up(x, m):
    return ((x + m - 1) // m) * m


def _pick_tile(n_pad):
    # n_pad is a multiple of 256; use 512-wide agg tiles when they divide n_pad.
    return 512 if n_pad % 512 == 0 else 256


def _pad2(a, r, c):
    return jnp.pad(a, ((0, r - a.shape[0]), (0, c - a.shape[1])))


def _pad_bias(b, c):
    return jnp.pad(b, (0, c - b.shape[0])).reshape(1, -1)


def build_normalized_adjacency(edge_index, num_nodes):
    """Dense A_hat = D^-1/2 (A + I) D^-1/2 (GCNConv defaults; self-loops added where
    missing).  edge_index: (2, E), row 0 = src, row 1 = dst."""
    # TODO(synk): for realistic graph sizes, replace this dense O(N^2) A_hat with a
    # CSR/block-sparse formulation driven by scalar prefetch, and hoist its construction
    # out of the jitted forward when edge_index is static across calls.
    src, dst = edge_index[0], edge_index[1]
    a = jnp.zeros((num_nodes, num_nodes), jnp.float32).at[dst, src].add(1.0)
    diag = jnp.diagonal(a)
    a = a + jnp.diag(jnp.where(diag > 0, 0.0, 1.0))
    deg = a.sum(axis=1)
    dinv = jnp.where(deg > 0, jax.lax.rsqrt(deg), 0.0)
    return dinv[:, None] * a * dinv[None, :]


def xavier_uniform(key, fan_in, fan_out):
    limit = jnp.sqrt(6.0 / (fan_in + fan_out))
    return jax.random.uniform(key, (fan_in, fan_out), jnp.float32, -limit, limit)


def init_params(key, input_feature, num_classes):
    ks = jax.random.split(key, 4)
    dims = [(input_feature, 1000), (1000, 700), (700, 200), (200, num_classes)]
    names = ["conv1", "conv2", "conv3", "lin"]
    params = {}
    for name, k, (fi, fo) in zip(names, ks, dims):
        params[name] = {"w": xavier_uniform(k, fi, fo),
                        "b": jnp.zeros((fo,), jnp.float32)}
    return params


@jax.jit
def simple_gcn_forward(params, x, edge_index):
    """x: (N, input_feature) f32, edge_index: (2, E) int32.
    Returns (1, num_classes) f32 — batch=None => single graph (global_mean_pool)."""
    num_nodes, f_in = x.shape
    num_classes = params["lin"]["w"].shape[1]

    # Padded (lane-dense) dimensions.  N padded to 256 so agg tiles always fill the MXU.
    n_pad = _round_up(num_nodes, 256)
    f0 = _round_up(f_in, 128)
    f1, f2, f3 = 1024, 768, 256          # 1000 / 700 / 200 padded to 128 multiples
    c_pad = _round_up(num_classes, 128)

    bf16 = jnp.bfloat16
    a_hat = build_normalized_adjacency(edge_index, num_nodes)
    a_hat = _pad2(a_hat, n_pad, n_pad).astype(bf16)
    x_p = _pad2(x, n_pad, f0).astype(bf16)

    w1 = _pad2(params["conv1"]["w"], f0, f1).astype(bf16)
    b1 = _pad_bias(params["conv1"]["b"], f1)                     # f32 epilogues
    w2 = _pad2(params["conv2"]["w"], f1, f2).astype(bf16)
    b2 = _pad_bias(params["conv2"]["b"], f2)
    w3 = _pad2(params["conv3"]["w"], f2, f3).astype(bf16)
    b3 = _pad_bias(params["conv3"]["b"], f3)

    if n_pad <= 512:
        # Small graph: one fully-fused kernel (all weights + A_hat VMEM-resident).
        wl = _pad2(params["lin"]["w"], f3, c_pad)                # tiny, keep f32
        bl = _pad_bias(params["lin"]["b"], c_pad)
        logits = fused_small_forward(a_hat, x_p, w1, b1, w2, b2, w3, b3, wl, bl,
                                     num_nodes)
        return logits[:, :num_classes]

    tm = tk = _pick_tile(n_pad)
    # conv1: relu((A@X)@W1 + b1) fused with conv2's feature matmul -> Y2 = H1 @ W2.
    y2 = conv1_fused(a_hat, x_p, w1, b1, w2, tm=tm, tk=tk, out_dtype=bf16)
    # conv2: relu(A@Y2 + b2) fused with conv3's feature matmul -> Y3 = H2 @ W3.
    y3 = conv2_fused(a_hat, y2, b2, w3, tm=tm, tk=tk, out_dtype=bf16)
    # conv3: relu(A@Y3 + b3) + masked sum-pool partials (row axis "parallel" for v7x).
    partials = conv3_pool(a_hat, y3, b3, num_nodes, tm=tm, tk=tk)
    pooled = jnp.sum(partials, axis=0) * (1.0 / num_nodes)       # (f3,) f32, exact mean
    # TODO(synk): F.dropout(p=0.5) is identity in eval mode (training=False).
    f3_real = params["lin"]["w"].shape[0]
    logits = pooled[:f3_real] @ params["lin"]["w"] + params["lin"]["b"]
    return logits[None, :]


# --------------------------------- driver --------------------------------------

if __name__ == "__main__":
    key = jax.random.PRNGKey(0)
    k_param, k_x1, k_e1, k_x2, k_e2 = jax.random.split(key, 5)

    input_feature, num_classes = 16, 4
    params = init_params(k_param, input_feature, num_classes)

    # Small graph -> single fully-fused kernel path.
    n1, e1 = 32, 64
    x1 = jax.random.normal(k_x1, (n1, input_feature), jnp.float32)
    ei1 = jax.random.randint(k_e1, (2, e1), 0, n1, jnp.int32)
    out1 = simple_gcn_forward(params, x1, ei1)

    # Larger graph -> tiled 3-kernel path (exercises the general pipeline).
    n2, e2 = 600, 2400
    x2 = jax.random.normal(k_x2, (n2, input_feature), jnp.float32)
    ei2 = jax.random.randint(k_e2, (2, e2), 0, n2, jnp.int32)
    out2 = simple_gcn_forward(params, x2, ei2)

    jax.block_until_ready((out1, out2))
    assert out1.shape == (1, num_classes) and out2.shape == (1, num_classes)

    # Loose f32 reference check (MXU inputs are bf16 -> small numeric drift expected).
    def ref_forward(params, x, edge_index):
        a = build_normalized_adjacency(edge_index, x.shape[0])
        h = x
        for name in ("conv1", "conv2", "conv3"):
            h = jnp.maximum(a @ (h @ params[name]["w"]) + params[name]["b"], 0.0)
        pooled = h.mean(axis=0)
        return (pooled @ params["lin"]["w"] + params["lin"]["b"])[None, :]

    for out, xx, ee in ((out1, x1, ei1), (out2, x2, ei2)):
        ref = ref_forward(params, xx, ee)
        err = float(jnp.max(jnp.abs(out - ref)))
        scale = float(jnp.max(jnp.abs(ref)))
        assert err <= 0.05 + 0.05 * scale, (err, scale)

    print("KERNEL_OK")
</pallas_src>

<mosaic_0001>
module attributes {stable_mosaic.version = 11 : i64} {
  func.func private @main(%arg0: i32) attributes {dimension_semantics = [#tpu.dimension_semantics<core_parallel>], iteration_bounds = array<i64: 2>, tpu.core_type = #tpu.core_type<sc_scalar_subcore>, window_params = []} {
    return
  }
}

module attributes {stable_mosaic.version = 11 : i64} {
  func.func private @main(%arg0: i32) attributes {dimension_semantics = [#tpu.dimension_semantics<core_parallel>], iteration_bounds = array<i64: 2>, tpu.core_type = #tpu.core_type<sc_scalar_subcore>, window_params = []} {
    return
  }
}

module attributes {stable_mosaic.version = 11 : i64} {
  func.func @_fused_small_kernel(%arg0: i32, %arg1: memref<256x256xbf16, #tpu.memory_space<vmem>>, %arg2: memref<256x128xbf16, #tpu.memory_space<vmem>>, %arg3: memref<128x1024xbf16, #tpu.memory_space<vmem>>, %arg4: memref<1x1024xf32, #tpu.memory_space<vmem>>, %arg5: memref<1024x768xbf16, #tpu.memory_space<vmem>>, %arg6: memref<1x768xf32, #tpu.memory_space<vmem>>, %arg7: memref<768x256xbf16, #tpu.memory_space<vmem>>, %arg8: memref<1x256xf32, #tpu.memory_space<vmem>>, %arg9: memref<256x128xf32, #tpu.memory_space<vmem>>, %arg10: memref<1x128xf32, #tpu.memory_space<vmem>>, %arg11: memref<1x128xf32, #tpu.memory_space<vmem>>) attributes {dimension_semantics = [#tpu.dimension_semantics<arbitrary>], iteration_bounds = array<i64: 1>, scalar_prefetch = 0 : i64, scratch_operands = 0 : i64, tpu.core_type = #tpu.core_type<tc>, window_params = [{pipeline_mode = #tpu.pipeline_mode<synchronous>, transform_indices = @transform_0, window_bounds = array<i64: 256, 256>}, {pipeline_mode = #tpu.pipeline_mode<synchronous>, transform_indices = @transform_1, window_bounds = array<i64: 256, 128>}, {pipeline_mode = #tpu.pipeline_mode<synchronous>, transform_indices = @transform_2, window_bounds = array<i64: 128, 1024>}, {pipeline_mode = #tpu.pipeline_mode<synchronous>, transform_indices = @transform_3, window_bounds = array<i64: 1, 1024>}, {pipeline_mode = #tpu.pipeline_mode<synchronous>, transform_indices = @transform_4, window_bounds = array<i64: 1024, 768>}, {pipeline_mode = #tpu.pipeline_mode<synchronous>, transform_indices = @transform_5, window_bounds = array<i64: 1, 768>}, {pipeline_mode = #tpu.pipeline_mode<synchronous>, transform_indices = @transform_6, window_bounds = array<i64: 768, 256>}, {pipeline_mode = #tpu.pipeline_mode<synchronous>, transform_indices = @transform_7, window_bounds = array<i64: 1, 256>}, {pipeline_mode = #tpu.pipeline_mode<synchronous>, transform_indices = @transform_8, window_bounds = array<i64: 256, 128>}, {pipeline_mode = #tpu.pipeline_mode<synchronous>, transform_indices = @transform_9, window_bounds = array<i64: 1, 128>}, {pipeline_mode = #tpu.pipeline_mode<synchronous>, transform_indices = @transform_10, window_bounds = array<i64: 1, 128>}]} {
    %c0 = arith.constant 0 : index
    %c0_0 = arith.constant 0 : index
    %0 = vector.load %arg1[%c0, %c0_0] : memref<256x256xbf16, #tpu.memory_space<vmem>>, vector<256x256xbf16>
    %c0_1 = arith.constant 0 : index
    %c0_2 = arith.constant 0 : index
    %1 = vector.load %arg2[%c0_1, %c0_2] : memref<256x128xbf16, #tpu.memory_space<vmem>>, vector<256x128xbf16>
    %cst = arith.constant dense<0.000000e+00> : vector<256x128xf32>
    %2 = tpu.matmul %0, %1, %cst {dimension_numbers = #tpu.dot_dimension_numbers<[1], [0], [0], [1], [0, 0, 1, 1], [], []>} : vector<256x256xbf16>, vector<256x128xbf16>, vector<256x128xf32> -> vector<256x128xf32>
    %3 = arith.truncf %2 : vector<256x128xf32> to vector<256x128xbf16>
    %c0_3 = arith.constant 0 : index
    %c0_4 = arith.constant 0 : index
    %4 = vector.load %arg3[%c0_3, %c0_4] : memref<128x1024xbf16, #tpu.memory_space<vmem>>, vector<128x1024xbf16>
    %cst_5 = arith.constant dense<0.000000e+00> : vector<256x1024xf32>
    %5 = tpu.matmul %3, %4, %cst_5 {dimension_numbers = #tpu.dot_dimension_numbers<[1], [0], [0], [1], [0, 0, 1, 1], [], []>} : vector<256x128xbf16>, vector<128x1024xbf16>, vector<256x1024xf32> -> vector<256x1024xf32>
    %c0_6 = arith.constant 0 : index
    %c0_7 = arith.constant 0 : index
    %6 = vector.load %arg4[%c0_6, %c0_7] : memref<1x1024xf32, #tpu.memory_space<vmem>>, vector<1x1024xf32>
    %7 = vector.broadcast %6 : vector<1x1024xf32> to vector<256x1024xf32>
    %8 = arith.addf %5, %7 : vector<256x1024xf32>
    %cst_8 = arith.constant 0.000000e+00 : f32
    %9 = vector.broadcast %cst_8 : f32 to vector<256x1024xf32>
    %10 = arith.maximumf %8, %9 : vector<256x1024xf32>
    %11 = arith.truncf %10 : vector<256x1024xf32> to vector<256x1024xbf16>
    %c0_9 = arith.constant 0 : index
    %c0_10 = arith.constant 0 : index
    %12 = vector.load %arg5[%c0_9, %c0_10] : memref<1024x768xbf16, #tpu.memory_space<vmem>>, vector<1024x768xbf16>
    %cst_11 = arith.constant dense<0.000000e+00> : vector<256x768xf32>
    %13 = tpu.matmul %11, %12, %cst_11 {dimension_numbers = #tpu.dot_dimension_numbers<[1], [0], [0], [1], [0, 0, 1, 1], [], []>} : vector<256x1024xbf16>, vector<1024x768xbf16>, vector<256x768xf32> -> vector<256x768xf32>
    %14 = arith.truncf %13 : vector<256x768xf32> to vector<256x768xbf16>
    %cst_12 = arith.constant dense<0.000000e+00> : vector<256x768xf32>
    %15 = tpu.matmul %0, %14, %cst_12 {dimension_numbers = #tpu.dot_dimension_numbers<[1], [0], [0], [1], [0, 0, 1, 1], [], []>} : vector<256x256xbf16>, vector<256x768xbf16>, vector<256x768xf32> -> vector<256x768xf32>
    %c0_13 = arith.constant 0 : index
    %c0_14 = arith.constant 0 : index
    %16 = vector.load %arg6[%c0_13, %c0_14] : memref<1x768xf32, #tpu.memory_space<vmem>>, vector<1x768xf32>
    %17 = vector.broadcast %16 : vector<1x768xf32> to vector<256x768xf32>
    %18 = arith.addf %15, %17 : vector<256x768xf32>
    %cst_15 = arith.constant 0.000000e+00 : f32
    %19 = vector.broadcast %cst_15 : f32 to vector<256x768xf32>
    %20 = arith.maximumf %18, %19 : vector<256x768xf32>
    %21 = arith.truncf %20 : vector<256x768xf32> to vector<256x768xbf16>
    %c0_16 = arith.constant 0 : index
    %c0_17 = arith.constant 0 : index
    %22 = vector.load %arg7[%c0_16, %c0_17] : memref<768x256xbf16, #tpu.memory_space<vmem>>, vector<768x256xbf16>
    %cst_18 = arith.constant dense<0.000000e+00> : vector<256x256xf32>
    %23 = tpu.matmul %21, %22, %cst_18 {dimension_numbers = #tpu.dot_dimension_numbers<[1], [0], [0], [1], [0, 0, 1, 1], [], []>} : vector<256x768xbf16>, vector<768x256xbf16>, vector<256x256xf32> -> vector<256x256xf32>
    %24 = arith.truncf %23 : vector<256x256xf32> to vector<256x256xbf16>
    %cst_19 = arith.constant dense<0.000000e+00> : vector<256x256xf32>
    %25 = tpu.matmul %0, %24, %cst_19 {dimension_numbers = #tpu.dot_dimension_numbers<[1], [0], [0], [1], [0, 0, 1, 1], [], []>} : vector<256x256xbf16>, vector<256x256xbf16>, vector<256x256xf32> -> vector<256x256xf32>
    %c0_20 = arith.constant 0 : index
    %c0_21 = arith.constant 0 : index
    %26 = vector.load %arg8[%c0_20, %c0_21] : memref<1x256xf32, #tpu.memory_space<vmem>>, vector<1x256xf32>
    %27 = vector.broadcast %26 : vector<1x256xf32> to vector<256x256xf32>
    %28 = arith.addf %25, %27 : vector<256x256xf32>
    %cst_22 = arith.constant 0.000000e+00 : f32
    %29 = vector.broadcast %cst_22 : f32 to vector<256x256xf32>
    %30 = arith.maximumf %28, %29 : vector<256x256xf32>
    %31 = tpu.iota {dimensions = array<i32: 0>} : vector<256x1xi32>
    %c32_i32 = arith.constant 32 : i32
    %32 = vector.broadcast %c32_i32 : i32 to vector<256x1xi32>
    %33 = arith.cmpi slt, %31, %32 : vector<256x1xi32>
    %cst_23 = arith.constant 0.000000e+00 : f32
    %34 = vector.shape_cast %33 : vector<256x1xi1> to vector<256x1xi1>
    %35 = vector.broadcast %34 : vector<256x1xi1> to vector<256x256xi1>
    %36 = vector.broadcast %cst_23 : f32 to vector<256x256xf32>
    %37 = arith.select %35, %30, %36 : vector<256x256xi1>, vector<256x256xf32>
    %cst_24 = arith.constant dense<0.000000e+00> : vector<256xf32>
    %38 = vector.multi_reduction <add>, %37, %cst_24 [0] : vector<256x256xf32> to vector<256xf32>
    %39 = vector.shape_cast %38 : vector<256xf32> to vector<1x256xf32>
    %cst_25 = arith.constant 3.125000e-02 : f32
    %40 = vector.broadcast %cst_25 : f32 to vector<1x256xf32>
    %41 = arith.mulf %39, %40 : vector<1x256xf32>
    %c0_26 = arith.constant 0 : index
    %c0_27 = arith.constant 0 : index
    %42 = vector.load %arg9[%c0_26, %c0_27] : memref<256x128xf32, #tpu.memory_space<vmem>>, vector<256x128xf32>
    %cst_28 = arith.constant dense<0.000000e+00> : vector<1x128xf32>
    %43 = tpu.matmul %41, %42, %cst_28 {dimension_numbers = #tpu.dot_dimension_numbers<[1], [0], [0], [1], [0, 0, 1, 1], [], []>} : vector<1x256xf32>, vector<256x128xf32>, vector<1x128xf32> -> vector<1x128xf32>
    %c0_29 = arith.constant 0 : index
    %c0_30 = arith.constant 0 : index
    %44 = vector.load %arg10[%c0_29, %c0_30] : memref<1x128xf32, #tpu.memory_space<vmem>>, vector<1x128xf32>
    %45 = arith.addf %43, %44 : vector<1x128xf32>
    %c0_31 = arith.constant 0 : index
    %c0_32 = arith.constant 0 : index
    %46 = vector.load %arg11[%c0_31, %c0_32] : memref<1x128xf32, #tpu.memory_space<vmem>>, vector<1x128xf32>
    tpu.vector_store %arg11[%c0_31, %c0_32], %45 {strides = array<i32>} : memref<1x128xf32, #tpu.memory_space<vmem>>, vector<1x128xf32>,
    return
  }
  func.func @transform_0(%arg0: i32) -> (i32, i32) {
    %c0_i32 = arith.constant 0 : i32
    %c0_i32_0 = arith.constant 0 : i32
    %c0_i32_1 = arith.constant 0 : i32
    return %c0_i32, %c0_i32_0 : i32, i32
  }
  func.func @transform_1(%arg0: i32) -> (i32, i32) {
    %c0_i32 = arith.constant 0 : i32
    %c0_i32_0 = arith.constant 0 : i32
    %c0_i32_1 = arith.constant 0 : i32
    return %c0_i32, %c0_i32_0 : i32, i32
  }
  func.func @transform_2(%arg0: i32) -> (i32, i32) {
    %c0_i32 = arith.constant 0 : i32
    %c0_i32_0 = arith.constant 0 : i32
    %c0_i32_1 = arith.constant 0 : i32
    return %c0_i32, %c0_i32_0 : i32, i32
  }
  func.func @transform_3(%arg0: i32) -> (i32, i32) {
    %c0_i32 = arith.constant 0 : i32
    %c0_i32_0 = arith.constant 0 : i32
    %c0_i32_1 = arith.constant 0 : i32
    return %c0_i32, %c0_i32_0 : i32, i32
  }
  func.func @transform_4(%arg0: i32) -> (i32, i32) {
    %c0_i32 = arith.constant 0 : i32
    %c0_i32_0 = arith.constant 0 : i32
    %c0_i32_1 = arith.constant 0 : i32
    return %c0_i32, %c0_i32_0 : i32, i32
  }
  func.func @transform_5(%arg0: i32) -> (i32, i32) {
    %c0_i32 = arith.constant 0 : i32
    %c0_i32_0 = arith.constant 0 : i32
    %c0_i32_1 = arith.constant 0 : i32
    return %c0_i32, %c0_i32_0 : i32, i32
  }
  func.func @transform_6(%arg0: i32) -> (i32, i32) {
    %c0_i32 = arith.constant 0 : i32
    %c0_i32_0 = arith.constant 0 : i32
    %c0_i32_1 = arith.constant 0 : i32
    return %c0_i32, %c0_i32_0 : i32, i32
  }
  func.func @transform_7(%arg0: i32) -> (i32, i32) {
    %c0_i32 = arith.constant 0 : i32
    %c0_i32_0 = arith.constant 0 : i32
    %c0_i32_1 = arith.constant 0 : i32
    return %c0_i32, %c0_i32_0 : i32, i32
  }
  func.func @transform_8(%arg0: i32) -> (i32, i32) {
    %c0_i32 = arith.constant 0 : i32
    %c0_i32_0 = arith.constant 0 : i32
    %c0_i32_1 = arith.constant 0 : i32
    return %c0_i32, %c0_i32_0 : i32, i32
  }
  func.func @transform_9(%arg0: i32) -> (i32, i32) {
    %c0_i32 = arith.constant 0 : i32
    %c0_i32_0 = arith.constant 0 : i32
    %c0_i32_1 = arith.constant 0 : i32
    return %c0_i32, %c0_i32_0 : i32, i32
  }
  func.func @transform_10(%arg0: i32) -> (i32, i32) {
    %c0_i32 = arith.constant 0 : i32
    %c0_i32_0 = arith.constant 0 : i32
    %c0_i32_1 = arith.constant 0 : i32
    return %c0_i32, %c0_i32_0 : i32, i32
  }
}

</mosaic_0001>

<llo_original>
// kernel: simple_gcn_forward.1
$region0: #{simple_gcn_forward.1}
  #allocation0 [shape = 'u32[]', space=smem, size = 0x4, offset = 0x4, fixed_abs, tag = 'smem constant byte address 0x4 - core index']
  #allocation1 [shape = 'u32[144,128]{1,0:T(1,128)}', space=vmem, size = 0x12000, scoped, tag = 'internal scratch']
  %s0 = inlined_call_operand.vmem [shape: bf16[256,256], index: 0, kind: input, shape index: {}]
  %s1 = inlined_call_operand.vmem [shape: bf16[256,128], index: 1, kind: input, shape index: {}]
  %s2 = inlined_call_operand.vmem [shape: bf16[128,1024], index: 2, kind: input, shape index: {}]
  %s3 = inlined_call_operand.vmem [shape: f32[1,1024], index: 3, kind: input, shape index: {}]
  %s4 = inlined_call_operand.vmem [shape: bf16[1024,768], index: 4, kind: input, shape index: {}]
  %s5 = inlined_call_operand.vmem [shape: f32[1,768], index: 5, kind: input, shape index: {}]
  %s6 = inlined_call_operand.vmem [shape: bf16[768,256], index: 6, kind: input, shape index: {}]
  %s7 = inlined_call_operand.vmem [shape: f32[1,256], index: 7, kind: input, shape index: {}]
  %s8 = inlined_call_operand.vmem [shape: f32[256,128], index: 8, kind: input, shape index: {}]
  %s9 = inlined_call_operand.vmem [shape: f32[1,128], index: 9, kind: input, shape index: {}]
  %s10 = inlined_call_operand.hbm [shape: f32[1,128], index: 10, kind: output, shape index: {}]
  %s11 = sld [smem:[#allocation0]]
  $region50: #{simple_gcn_forward.1} parent=0
    _
  %s13 = ssub.s32 1, %s11
  %s14 = scalar_select 0, %s13, %s11
  $region1: #{simple_gcn_forward.1} parent=0
    #allocation2 [shape = 'u8[512]{0}', space=vmem, size = 0x400, scoped, tag = 'output window, operand 0, single buffered']
    #allocation3 [shape = 's32[1]{0}', space=sflag, size = 0x4, scoped, tag = 'scoped memory for simple_gcn_forward.1']
    %15 = vsyncpa [#allocation3], 0
    // Predicated region
    $region2: #{simple_gcn_forward.1} parent=1 // pred_check
      _
    $region3: #{simple_gcn_forward.1} parent=1 // pred_check_branch
      %17 = sbr.rel (0) target = $region5
    $region4: #{simple_gcn_forward.1} parent=1 // pred_region
      _
    $region5: #{simple_gcn_forward.1} parent=1 // pred_fallthru
      _
    // Predicated region
    $region6: #{simple_gcn_forward.1} parent=1 // pred_check
      _
    $region7: #{simple_gcn_forward.1} parent=1 // pred_check_branch
      %19 = sbr.rel (0) target = $region9
    $region8: #{simple_gcn_forward.1} parent=1 // pred_region
      _
    $region9: #{simple_gcn_forward.1} parent=1 // pred_fallthru
      _
    // Predicated region
    $region10: #{simple_gcn_forward.1} parent=1 // pred_check
      _
    $region11: #{simple_gcn_forward.1} parent=1 // pred_check_branch
      %21 = sbr.rel (0) target = $region13
    $region12: #{simple_gcn_forward.1} parent=1 // pred_region
      _
    $region13: #{simple_gcn_forward.1} parent=1 // pred_fallthru
      _
    // Predicated region
    $region14: #{simple_gcn_forward.1} parent=1 // pred_check
      _
    $region15: #{simple_gcn_forward.1} parent=1 // pred_check_branch
      %23 = sbr.rel (0) target = $region17
    $region16: #{simple_gcn_forward.1} parent=1 // pred_region
      _
    $region17: #{simple_gcn_forward.1} parent=1 // pred_fallthru
      _
    // Predicated region
    $region18: #{simple_gcn_forward.1} parent=1 // pred_check
      _
    $region19: #{simple_gcn_forward.1} parent=1 // pred_check_branch
      %25 = sbr.rel (0) target = $region21
    $region20: #{simple_gcn_forward.1} parent=1 // pred_region
      _
    $region21: #{simple_gcn_forward.1} parent=1 // pred_fallthru
      _
    // Predicated region
    $region22: #{simple_gcn_forward.1} parent=1 // pred_check
      _
    $region23: #{simple_gcn_forward.1} parent=1 // pred_check_branch
      %27 = sbr.rel (0) target = $region25
    $region24: #{simple_gcn_forward.1} parent=1 // pred_region
      _
    $region25: #{simple_gcn_forward.1} parent=1 // pred_fallthru
      _
    // Predicated region
    $region26: #{simple_gcn_forward.1} parent=1 // pred_check
      _
    $region27: #{simple_gcn_forward.1} parent=1 // pred_check_branch
      %29 = sbr.rel (0) target = $region29
    $region28: #{simple_gcn_forward.1} parent=1 // pred_region
      _
    $region29: #{simple_gcn_forward.1} parent=1 // pred_fallthru
      _
    // Predicated region
    $region30: #{simple_gcn_forward.1} parent=1 // pred_check
      _
    $region31: #{simple_gcn_forward.1} parent=1 // pred_check_branch
      %31 = sbr.rel (0) target = $region33
    $region32: #{simple_gcn_forward.1} parent=1 // pred_region
      _
    $region33: #{simple_gcn_forward.1} parent=1 // pred_fallthru
      _
    // Predicated region
    $region34: #{simple_gcn_forward.1} parent=1 // pred_check
      _
    $region35: #{simple_gcn_forward.1} parent=1 // pred_check_branch
      %33 = sbr.rel (0) target = $region37
    $region36: #{simple_gcn_forward.1} parent=1 // pred_region
      _
    $region37: #{simple_gcn_forward.1} parent=1 // pred_fallthru
      _
    // Predicated region
    $region38: #{simple_gcn_forward.1} parent=1 // pred_check
      _
    $region39: #{simple_gcn_forward.1} parent=1 // pred_check_branch
      %35 = sbr.rel (0) target = $region41
    $region40: #{simple_gcn_forward.1} parent=1 // pred_region
      _
    $region41: #{simple_gcn_forward.1} parent=1 // pred_fallthru
      _
    %v37 = vld [vmem:[%s0] sm:$0xff]
    %v38 = vld [vmem:[%s0 + $0x8] sm:$0xff]
    %v39 = vld [vmem:[%s0 + $0x10] sm:$0xff]
    %v40 = vld [vmem:[%s0 + $0x18] sm:$0xff]
    %v41 = vld [vmem:[%s0 + $0x20] sm:$0xff]
    %v42 = vld [vmem:[%s0 + $0x28] sm:$0xff]
    %v43 = vld [vmem:[%s0 + $0x30] sm:$0xff]
    %v44 = vld [vmem:[%s0 + $0x38] sm:$0xff]
    %v45 = vld [vmem:[%s0 + $0x40] sm:$0xff]
    %v46 = vld [vmem:[%s0 + $0x48] sm:$0xff]
    %v47 = vld [vmem:[%s0 + $0x50] sm:$0xff]
    %v48 = vld [vmem:[%s0 + $0x58] sm:$0xff]
    %v49 = vld [vmem:[%s0 + $0x60] sm:$0xff]
    %v50 = vld [vmem:[%s0 + $0x68] sm:$0xff]
    %v51 = vld [vmem:[%s0 + $0x70] sm:$0xff]
    %v52 = vld [vmem:[%s0 + $0x78] sm:$0xff]
    %v53 = vld [vmem:[%s0 + $0x80] sm:$0xff]
    %v54 = vld [vmem:[%s0 + $0x88] sm:$0xff]
    %v55 = vld [vmem:[%s0 + $0x90] sm:$0xff]
    %v56 = vld [vmem:[%s0 + $0x98] sm:$0xff]
    %v57 = vld [vmem:[%s0 + $0xa0] sm:$0xff]
    %v58 = vld [vmem:[%s0 + $0xa8] sm:$0xff]
    %v59 = vld [vmem:[%s0 + $0xb0] sm:$0xff]
    %v60 = vld [vmem:[%s0 + $0xb8] sm:$0xff]
    %v61 = vld [vmem:[%s0 + $0xc0] sm:$0xff]
    %v62 = vld [vmem:[%s0 + $0xc8] sm:$0xff]
    %v63 = vld [vmem:[%s0 + $0xd0] sm:$0xff]
    %v64 = vld [vmem:[%s0 + $0xd8] sm:$0xff]
    %v65 = vld [vmem:[%s0 + $0xe0] sm:$0xff]
    %v66 = vld [vmem:[%s0 + $0xe8] sm:$0xff]
    %v67 = vld [vmem:[%s0 + $0xf0] sm:$0xff]
    %v68 = vld [vmem:[%s0 + $0xf8] sm:$0xff]
    %v69 = vld [vmem:[%s1] sm:$0xf]
    %v70 = vld [vmem:[%s1 + $0x4] sm:$0xf]
    %v71 = vld [vmem:[%s1 + $0x8] sm:$0xf]
    %v72 = vld [vmem:[%s1 + $0xc] sm:$0xf]
    %v73 = vld [vmem:[%s1 + $0x10] sm:$0xf]
    %v74 = vld [vmem:[%s1 + $0x14] sm:$0xf]
    %v75 = vld [vmem:[%s1 + $0x18] sm:$0xf]
    %v76 = vld [vmem:[%s1 + $0x1c] sm:$0xf]
    %v77 = vld [vmem:[%s1 + $0x20] sm:$0xf]
    %v78 = vld [vmem:[%s1 + $0x24] sm:$0xf]
    %v79 = vld [vmem:[%s1 + $0x28] sm:$0xf]
    %v80 = vld [vmem:[%s1 + $0x2c] sm:$0xf]
    %v81 = vld [vmem:[%s1 + $0x30] sm:$0xf]
    %v82 = vld [vmem:[%s1 + $0x34] sm:$0xf]
    %v83 = vld [vmem:[%s1 + $0x38] sm:$0xf]
    %v84 = vld [vmem:[%s1 + $0x3c] sm:$0xf]
    %v85 = vld [vmem:[%s1 + $0x40] sm:$0xf]
    %v86 = vld [vmem:[%s1 + $0x44] sm:$0xf]
    %v87 = vld [vmem:[%s1 + $0x48] sm:$0xf]
    %v88 = vld [vmem:[%s1 + $0x4c] sm:$0xf]
    %v89 = vld [vmem:[%s1 + $0x50] sm:$0xf]
    %v90 = vld [vmem:[%s1 + $0x54] sm:$0xf]
    %v91 = vld [vmem:[%s1 + $0x58] sm:$0xf]
    %v92 = vld [vmem:[%s1 + $0x5c] sm:$0xf]
    %v93 = vld [vmem:[%s1 + $0x60] sm:$0xf]
    %v94 = vld [vmem:[%s1 + $0x64] sm:$0xf]
    %v95 = vld [vmem:[%s1 + $0x68] sm:$0xf]
    %v96 = vld [vmem:[%s1 + $0x6c] sm:$0xf]
    %v97 = vld [vmem:[%s1 + $0x70] sm:$0xf]
    %v98 = vld [vmem:[%s1 + $0x74] sm:$0xf]
    %v99 = vld [vmem:[%s1 + $0x78] sm:$0xf]
    %v100 = vld [vmem:[%s1 + $0x7c] sm:$0xf]
    %v133 = vunpack.c.l.b16 %v37
    %v134 = vunpack.c.h.b16 %v37
    %v135 = vunpack.c.l.b16 %v38
    %v136 = vunpack.c.h.b16 %v38
    %v137 = vunpack.c.l.b16 %v39
    %v138 = vunpack.c.h.b16 %v39
    %v139 = vunpack.c.l.b16 %v40
    %v140 = vunpack.c.h.b16 %v40
    %v141 = vunpack.c.l.b16 %v41
    %v142 = vunpack.c.h.b16 %v41
    %v143 = vunpack.c.l.b16 %v42
    %v144 = vunpack.c.h.b16 %v42
    %v145 = vunpack.c.l.b16 %v43
    %v146 = vunpack.c.h.b16 %v43
    %v147 = vunpack.c.l.b16 %v44
    %v148 = vunpack.c.h.b16 %v44
    %v149 = vunpack.c.l.b16 %v45
    %v150 = vunpack.c.h.b16 %v45
    %v151 = vunpack.c.l.b16 %v46
    %v152 = vunpack.c.h.b16 %v46
    %v153 = vunpack.c.l.b16 %v47
    %v154 = vunpack.c.h.b16 %v47
    %v155 = vunpack.c.l.b16 %v48
    %v156 = vunpack.c.h.b16 %v48
    %v157 = vunpack.c.l.b16 %v49
    %v158 = vunpack.c.h.b16 %v49
    %v159 = vunpack.c.l.b16 %v50
    %v160 = vunpack.c.h.b16 %v50
    %v161 = vunpack.c.l.b16 %v51
    %v162 = vunpack.c.h.b16 %v51
    %v163 = vunpack.c.l.b16 %v52
    %v164 = vunpack.c.h.b16 %v52
    %v165 = vunpack.c.l.b16 %v53
    %v166 = vunpack.c.h.b16 %v53
    %v167 = vunpack.c.l.b16 %v54
    %v168 = vunpack.c.h.b16 %v54
    %v169 = vunpack.c.l.b16 %v55
    %v170 = vunpack.c.h.b16 %v55
    %v171 = vunpack.c.l.b16 %v56
    %v172 = vunpack.c.h.b16 %v56
    %v173 = vunpack.c.l.b16 %v57
    %v174 = vunpack.c.h.b16 %v57
    %v175 = vunpack.c.l.b16 %v58
    %v176 = vunpack.c.h.b16 %v58
    %v177 = vunpack.c.l.b16 %v59
    %v178 = vunpack.c.h.b16 %v59
    %v179 = vunpack.c.l.b16 %v60
    %v180 = vunpack.c.h.b16 %v60
    %v181 = vunpack.c.l.b16 %v61
    %v182 = vunpack.c.h.b16 %v61
    %v183 = vunpack.c.l.b16 %v62
    %v184 = vunpack.c.h.b16 %v62
    %v185 = vunpack.c.l.b16 %v63
    %v186 = vunpack.c.h.b16 %v63
    %v187 = vunpack.c.l.b16 %v64
    %v188 = vunpack.c.h.b16 %v64
    %v189 = vunpack.c.l.b16 %v65
    %v190 = vunpack.c.h.b16 %v65
    %v191 = vunpack.c.l.b16 %v66
    %v192 = vunpack.c.h.b16 %v66
    %v193 = vunpack.c.l.b16 %v67
    %v194 = vunpack.c.h.b16 %v67
    %v195 = vunpack.c.l.b16 %v68
    %v196 = vunpack.c.h.b16 %v68
    %v197 = vpack.c.b16 %v135, %v133
    %v198 = vpack.c.b16 %v136, %v134
    %v199 = vpack.c.b16 %v139, %v137
    %v200 = vpack.c.b16 %v140, %v138
    %v201 = vpack.c.b16 %v143, %v141
    %v202 = vpack.c.b16 %v144, %v142
    %v203 = vpack.c.b16 %v147, %v145
    %v204 = vpack.c.b16 %v148, %v146
    %v205 = vpack.c.b16 %v151, %v149
    %v206 = vpack.c.b16 %v152, %v150
    %v207 = vpack.c.b16 %v155, %v153
    %v208 = vpack.c.b16 %v156, %v154
    %v209 = vpack.c.b16 %v159, %v157
    %v210 = vpack.c.b16 %v160, %v158
    %v211 = vpack.c.b16 %v163, %v161
    %v212 = vpack.c.b16 %v164, %v162
    %v213 = vpack.c.b16 %v167, %v165
    %v214 = vpack.c.b16 %v168, %v166
    %v215 = vpack.c.b16 %v171, %v169
    %v216 = vpack.c.b16 %v172, %v170
    %v217 = vpack.c.b16 %v175, %v173
    %v218 = vpack.c.b16 %v176, %v174
    %v219 = vpack.c.b16 %v179, %v177
    %v220 = vpack.c.b16 %v180, %v178
    %v221 = vpack.c.b16 %v183, %v181
    %v222 = vpack.c.b16 %v184, %v182
    %v223 = vpack.c.b16 %v187, %v185
    %v224 = vpack.c.b16 %v188, %v186
    %v225 = vpack.c.b16 %v191, %v189
    %v226 = vpack.c.b16 %v192, %v190
    %v227 = vpack.c.b16 %v195, %v193
    %v228 = vpack.c.b16 %v196, %v194
    %v293 = vunpack.c.l.b16 %v69
    %v294 = vunpack.c.l.b16 %v70
    %v295 = vunpack.c.l.b16 %v71
    %v296 = vunpack.c.l.b16 %v72
    %v297 = vunpack.c.l.b16 %v73
    %v298 = vunpack.c.l.b16 %v74
    %v299 = vunpack.c.l.b16 %v75
    %v300 = vunpack.c.l.b16 %v76
    %v301 = vunpack.c.l.b16 %v77
    %v302 = vunpack.c.l.b16 %v78
    %v303 = vunpack.c.l.b16 %v79
    %v304 = vunpack.c.l.b16 %v80
    %v305 = vunpack.c.l.b16 %v81
    %v306 = vunpack.c.l.b16 %v82
    %v307 = vunpack.c.l.b16 %v83
    %v308 = vunpack.c.l.b16 %v84
    %v309 = vunpack.c.l.b16 %v85
    %v310 = vunpack.c.l.b16 %v86
    %v311 = vunpack.c.l.b16 %v87
    %v312 = vunpack.c.l.b16 %v88
    %v313 = vunpack.c.l.b16 %v89
    %v314 = vunpack.c.l.b16 %v90
    %v315 = vunpack.c.l.b16 %v91
    %v316 = vunpack.c.l.b16 %v92
    %v317 = vunpack.c.l.b16 %v93
    %v318 = vunpack.c.l.b16 %v94
    %v319 = vunpack.c.l.b16 %v95
    %v320 = vunpack.c.l.b16 %v96
    %v321 = vunpack.c.l.b16 %v97
    %v322 = vunpack.c.l.b16 %v98
    %v323 = vunpack.c.l.b16 %v99
    %v324 = vunpack.c.l.b16 %v100
    %v325 = vpack.c.b16 %v294, %v293
    %v326 = vpack.c.b16 %v296, %v295
    %v327 = vpack.c.b16 %v298, %v297
    %v328 = vpack.c.b16 %v300, %v299
    %v329 = vpack.c.b16 %v302, %v301
    %v330 = vpack.c.b16 %v304, %v303
    %v331 = vpack.c.b16 %v306, %v305
    %v332 = vpack.c.b16 %v308, %v307
    %v333 = vpack.c.b16 %v310, %v309
    %v334 = vpack.c.b16 %v312, %v311
    %v335 = vpack.c.b16 %v314, %v313
    %v336 = vpack.c.b16 %v316, %v315
    %v337 = vpack.c.b16 %v318, %v317
    %v338 = vpack.c.b16 %v320, %v319
    %v339 = vpack.c.b16 %v322, %v321
    %v340 = vpack.c.b16 %v324, %v323
    %357 = vmatprep.subr.bf16.mxu0 0
    %358 = vmatpush1.bf16.msra.mxu0 %v332
    %359 = vmatprep.subr.bf16.mxu0 0
    %360 = vmatpush1.bf16.msra.mxu0 %v331
    %361 = vmatprep.subr.bf16.mxu0 0
    %362 = vmatpush1.bf16.msra.mxu0 %v330
    %363 = vmatprep.subr.bf16.mxu0 0
    %364 = vmatpush1.bf16.msra.mxu0 %v329
    %365 = vmatprep.subr.bf16.mxu0 0
    %366 = vmatpush1.bf16.msra.mxu0 %v328
    %367 = vmatprep.subr.bf16.mxu0 0
    %368 = vmatpush1.bf16.msra.mxu0 %v327
    %369 = vmatprep.subr.bf16.mxu0 0
    %370 = vmatpush1.bf16.msra.mxu0 %v326
    %371 = vmatprep.subr.bf16.mxu0 0
    %372 = vmatpush1.bf16.msra.mxu0 %v325
    %373 = vmatprep.subr.bf16.mxu0 0
    %374 = vmatpush2.bf16.msra.mxu0 %v340
    %375 = vmatprep.subr.bf16.mxu0 0
    %376 = vmatpush2.bf16.msra.mxu0 %v339
    %377 = vmatprep.subr.bf16.mxu0 0
    %378 = vmatpush2.bf16.msra.mxu0 %v338
    %379 = vmatprep.subr.bf16.mxu0 0
    %380 = vmatpush2.bf16.msra.mxu0 %v337
    %381 = vmatprep.subr.bf16.mxu0 0
    %382 = vmatpush2.bf16.msra.mxu0 %v336
    %383 = vmatprep.subr.bf16.mxu0 0
    %384 = vmatpush2.bf16.msra.mxu0 %v335
    %385 = vmatprep.subr.bf16.mxu0 0
    %386 = vmatpush2.bf16.msra.mxu0 %v334
    %387 = vmatprep.subr.bf16.mxu0 0
    %388 = vmatpush2.bf16.msra.mxu0 %v333
    %389 = vmatprep.mubr.bf16.mxu0 %v198
    %390 = vmatmul.mubr.bf16.gmra.mxu0 %v197
    %v391 = vpop.f32.mrf.mxu0
    %v392 = vadd.f32 0.0, %v391
    %v393 = vpop.f32.mrf.mxu0
    %v394 = vpop.f32.mrf.mxu0
    %v395 = vadd.f32 0.0, %v394
    %v396 = vpop.f32.mrf.mxu0
    %397 = vmatprep.mubr.bf16.mxu0 %v200
    %398 = vmatmul.mubr.bf16.gmra.mxu0 %v199
    %v399 = vpop.f32.mrf.mxu0
    %v400 = vadd.f32 0.0, %v399
    %v401 = vpop.f32.mrf.mxu0
    %v402 = vpop.f32.mrf.mxu0
    %v403 = vadd.f32 0.0, %v402
    %v404 = vpop.f32.mrf.mxu0
    %405 = vmatprep.mubr.bf16.mxu0 %v202
    %406 = vmatmul.mubr.bf16.gmra.mxu0 %v201
    %v407 = vpop.f32.mrf.mxu0
    %v408 = vadd.f32 0.0, %v407
    %v409 = vpop.f32.mrf.mxu0
    %v410 = vpop.f32.mrf.mxu0
    %v411 = vadd.f32 0.0, %v410
    %v412 = vpop.f32.mrf.mxu0
    %413 = vmatprep.mubr.bf16.mxu0 %v204
    %414 = vmatmul.mubr.bf16.gmra.mxu0 %v203
    %v415 = vpop.f32.mrf.mxu0
    %v416 = vadd.f32 0.0, %v415
    %v417 = vpop.f32.mrf.mxu0
    %v418 = vpop.f32.mrf.mxu0
    %v419 = vadd.f32 0.0, %v418
    %v420 = vpop.f32.mrf.mxu0
    %421 = vmatprep.mubr.bf16.mxu0 %v206
    %422 = vmatmul.mubr.bf16.gmra.mxu0 %v205
    %v423 = vpop.f32.mrf.mxu0
    %v424 = vadd.f32 0.0, %v423
    %v425 = vpop.f32.mrf.mxu0
    %v426 = vpop.f32.mrf.mxu0
    %v427 = vadd.f32 0.0, %v426
    %v428 = vpop.f32.mrf.mxu0
    %429 = vmatprep.mubr.bf16.mxu0 %v208
    %430 = vmatmul.mubr.bf16.gmra.mxu0 %v207
    %v431 = vpop.f32.mrf.mxu0
    %v432 = vadd.f32 0.0, %v431
    %v433 = vpop.f32.mrf.mxu0
    %v434 = vpop.f32.mrf.mxu0
    %v435 = vadd.f32 0.0, %v434
    %v436 = vpop.f32.mrf.mxu0
    %437 = vmatprep.mubr.bf16.mxu0 %v210
    %438 = vmatmul.mubr.bf16.gmra.mxu0 %v209
    %v439 = vpop.f32.mrf.mxu0
    %v440 = vadd.f32 0.0, %v439
    %v441 = vpop.f32.mrf.mxu0
    %v442 = vpop.f32.mrf.mxu0
    %v443 = vadd.f32 0.0, %v442
    %v444 = vpop.f32.mrf.mxu0
    %445 = vmatprep.mubr.bf16.mxu0 %v212
    %446 = vmatmul.mubr.bf16.gmra.mxu0 %v211
    %v447 = vpop.f32.mrf.mxu0
    %v448 = vadd.f32 0.0, %v447
    %v449 = vpop.f32.mrf.mxu0
    %v450 = vpop.f32.mrf.mxu0
    %v451 = vadd.f32 0.0, %v450
    %v452 = vpop.f32.mrf.mxu0
    %453 = vmatprep.mubr.bf16.mxu0 %v214
    %454 = vmatmul.mubr.bf16.gmra.mxu0 %v213
    %v455 = vpop.f32.mrf.mxu0
    %v456 = vadd.f32 0.0, %v455
    %v457 = vpop.f32.mrf.mxu0
    %v458 = vpop.f32.mrf.mxu0
    %v459 = vadd.f32 0.0, %v458
    %v460 = vpop.f32.mrf.mxu0
    %461 = vmatprep.mubr.bf16.mxu0 %v216
    %462 = vmatmul.mubr.bf16.gmra.mxu0 %v215
    %v463 = vpop.f32.mrf.mxu0
    %v464 = vadd.f32 0.0, %v463
    %v465 = vpop.f32.mrf.mxu0
    %v466 = vpop.f32.mrf.mxu0
    %v467 = vadd.f32 0.0, %v466
    %v468 = vpop.f32.mrf.mxu0
    %469 = vmatprep.mubr.bf16.mxu0 %v218
    %470 = vmatmul.mubr.bf16.gmra.mxu0 %v217
    %v471 = vpop.f32.mrf.mxu0
    %v472 = vadd.f32 0.0, %v471
    %v473 = vpop.f32.mrf.mxu0
    %v474 = vpop.f32.mrf.mxu0
    %v475 = vadd.f32 0.0, %v474
    %v476 = vpop.f32.mrf.mxu0
    %477 = vmatprep.mubr.bf16.mxu0 %v220
    %478 = vmatmul.mubr.bf16.gmra.mxu0 %v219
    %v479 = vpop.f32.mrf.mxu0
    %v480 = vadd.f32 0.0, %v479
    %v481 = vpop.f32.mrf.mxu0
    %v482 = vpop.f32.mrf.mxu0
    %v483 = vadd.f32 0.0, %v482
    %v484 = vpop.f32.mrf.mxu0
    %485 = vmatprep.mubr.bf16.mxu0 %v222
    %486 = vmatmul.mubr.bf16.gmra.mxu0 %v221
    %v487 = vpop.f32.mrf.mxu0
    %v488 = vadd.f32 0.0, %v487
    %v489 = vpop.f32.mrf.mxu0
    %v490 = vpop.f32.mrf.mxu0
    %v491 = vadd.f32 0.0, %v490
    %v492 = vpop.f32.mrf.mxu0
    %493 = vmatprep.mubr.bf16.mxu0 %v224
    %494 = vmatmul.mubr.bf16.gmra.mxu0 %v223
    %v495 = vpop.f32.mrf.mxu0
    %v496 = vadd.f32 0.0, %v495
    %v497 = vpop.f32.mrf.mxu0
    %v498 = vpop.f32.mrf.mxu0
    %v499 = vadd.f32 0.0, %v498
    %v500 = vpop.f32.mrf.mxu0
    %501 = vmatprep.mubr.bf16.mxu0 %v226
    %502 = vmatmul.mubr.bf16.gmra.mxu0 %v225
    %v503 = vpop.f32.mrf.mxu0
    %v504 = vadd.f32 0.0, %v503
    %v505 = vpop.f32.mrf.mxu0
    %v506 = vpop.f32.mrf.mxu0
    %v507 = vadd.f32 0.0, %v506
    %v508 = vpop.f32.mrf.mxu0
    %509 = vmatprep.mubr.bf16.mxu0 %v228
    %510 = vmatmul.mubr.bf16.gmra.mxu0 %v227
    %v511 = vpop.f32.mrf.mxu0
    %v512 = vadd.f32 0.0, %v511
    %v513 = vpop.f32.mrf.mxu0
    %v514 = vpop.f32.mrf.mxu0
    %v515 = vadd.f32 0.0, %v514
    %v516 = vpop.f32.mrf.mxu0
    %517 = vdwg.mxu0
    %v518 = vpack.c.bf16 %v395, %v392
    %v519 = vpack.c.bf16 %v403, %v400
    %v520 = vpack.c.bf16 %v411, %v408
    %v521 = vpack.c.bf16 %v419, %v416
    %v522 = vpack.c.bf16 %v427, %v424
    %v523 = vpack.c.bf16 %v435, %v432
    %v524 = vpack.c.bf16 %v443, %v440
    %v525 = vpack.c.bf16 %v451, %v448
    %v526 = vpack.c.bf16 %v459, %v456
    %v527 = vpack.c.bf16 %v467, %v464
    %v528 = vpack.c.bf16 %v475, %v472
    %v529 = vpack.c.bf16 %v483, %v480
    %v530 = vpack.c.bf16 %v491, %v488
    %v531 = vpack.c.bf16 %v499, %v496
    %v532 = vpack.c.bf16 %v507, %v504
    %v533 = vpack.c.bf16 %v515, %v512
    %v534 = vld [vmem:[%s2] sm:$0xff]
    %v535 = vld [vmem:[%s2 + $0x8] sm:$0xff]
    %v536 = vld [vmem:[%s2 + $0x10] sm:$0xff]
    %v537 = vld [vmem:[%s2 + $0x18] sm:$0xff]
    %v538 = vld [vmem:[%s2 + $0x20] sm:$0xff]
    %v539 = vld [vmem:[%s2 + $0x28] sm:$0xff]
    %v540 = vld [vmem:[%s2 + $0x30] sm:$0xff]
    %v541 = vld [vmem:[%s2 + $0x38] sm:$0xff]
    %v542 = vld [vmem:[%s2 + $0x40] sm:$0xff]
    %v543 = vld [vmem:[%s2 + $0x48] sm:$0xff]
    %v544 = vld [vmem:[%s2 + $0x50] sm:$0xff]
    %v545 = vld [vmem:[%s2 + $0x58] sm:$0xff]
    %v546 = vld [vmem:[%s2 + $0x60] sm:$0xff]
    %v547 = vld [vmem:[%s2 + $0x68] sm:$0xff]
    %v548 = vld [vmem:[%s2 + $0x70] sm:$0xff]
    %v549 = vld [vmem:[%s2 + $0x78] sm:$0xff]
    %v550 = vld [vmem:[%s2 + $0x80] sm:$0xff]
    %v551 = vld [vmem:[%s2 + $0x88] sm:$0xff]
    %v552 = vld [vmem:[%s2 + $0x90] sm:$0xff]
    %v553 = vld [vmem:[%s2 + $0x98] sm:$0xff]
    %v554 = vld [vmem:[%s2 + $0xa0] sm:$0xff]
    %v555 = vld [vmem:[%s2 + $0xa8] sm:$0xff]
    %v556 = vld [vmem:[%s2 + $0xb0] sm:$0xff]
    %v557 = vld [vmem:[%s2 + $0xb8] sm:$0xff]
    %v558 = vld [vmem:[%s2 + $0xc0] sm:$0xff]
    %v559 = vld [vmem:[%s2 + $0xc8] sm:$0xff]
    %v560 = vld [vmem:[%s2 + $0xd0] sm:$0xff]
    %v561 = vld [vmem:[%s2 + $0xd8] sm:$0xff]
    %v562 = vld [vmem:[%s2 + $0xe0] sm:$0xff]
    %v563 = vld [vmem:[%s2 + $0xe8] sm:$0xff]
    %v564 = vld [vmem:[%s2 + $0xf0] sm:$0xff]
    %v565 = vld [vmem:[%s2 + $0xf8] sm:$0xff]
    %v566 = vld [vmem:[%s2 + $0x100] sm:$0xff]
    %v567 = vld [vmem:[%s2 + $0x108] sm:$0xff]
    %v568 = vld [vmem:[%s2 + $0x110] sm:$0xff]
    %v569 = vld [vmem:[%s2 + $0x118] sm:$0xff]
    %v570 = vld [vmem:[%s2 + $0x120] sm:$0xff]
    %v571 = vld [vmem:[%s2 + $0x128] sm:$0xff]
    %v572 = vld [vmem:[%s2 + $0x130] sm:$0xff]
    %v573 = vld [vmem:[%s2 + $0x138] sm:$0xff]
    %v574 = vld [vmem:[%s2 + $0x140] sm:$0xff]
    %v575 = vld [vmem:[%s2 + $0x148] sm:$0xff]
    %v576 = vld [vmem:[%s2 + $0x150] sm:$0xff]
    %v577 = vld [vmem:[%s2 + $0x158] sm:$0xff]
    %v578 = vld [vmem:[%s2 + $0x160] sm:$0xff]
    %v579 = vld [vmem:[%s2 + $0x168] sm:$0xff]
    %v580 = vld [vmem:[%s2 + $0x170] sm:$0xff]
    %v581 = vld [vmem:[%s2 + $0x178] sm:$0xff]
    %v582 = vld [vmem:[%s2 + $0x180] sm:$0xff]
    %v583 = vld [vmem:[%s2 + $0x188] sm:$0xff]
    %v584 = vld [vmem:[%s2 + $0x190] sm:$0xff]
    %v585 = vld [vmem:[%s2 + $0x198] sm:$0xff]
    %v586 = vld [vmem:[%s2 + $0x1a0] sm:$0xff]
    %v587 = vld [vmem:[%s2 + $0x1a8] sm:$0xff]
    %v588 = vld [vmem:[%s2 + $0x1b0] sm:$0xff]
    %v589 = vld [vmem:[%s2 + $0x1b8] sm:$0xff]
    %v590 = vld [vmem:[%s2 + $0x1c0] sm:$0xff]
    %v591 = vld [vmem:[%s2 + $0x1c8] sm:$0xff]
    %v592 = vld [vmem:[%s2 + $0x1d0] sm:$0xff]
    %v593 = vld [vmem:[%s2 + $0x1d8] sm:$0xff]
    %v594 = vld [vmem:[%s2 + $0x1e0] sm:$0xff]
    %v595 = vld [vmem:[%s2 + $0x1e8] sm:$0xff]
    %v596 = vld [vmem:[%s2 + $0x1f0] sm:$0xff]
    %v597 = vld [vmem:[%s2 + $0x1f8] sm:$0xff]
    %v598 = vld [vmem:[%s3] sm:$0xff]
    %v600 = vlaneseq
    %v601 = vshrl.u32 %v600, 7
    %v602 = vsub.s32 0, %v601
    %v603 = vrot.slane %v598, %v602
    %v604 = vlaneseq
    %v605 = vshrl.u32 %v604, 7
    %v606 = vsub.s32 1, %v605
    %v607 = vrot.slane %v598, %v606
    %v608 = vlaneseq
    %v609 = vshrl.u32 %v608, 7
    %v610 = vsub.s32 2, %v609
    %v611 = vrot.slane %v598, %v610
    %v612 = vlaneseq
    %v613 = vshrl.u32 %v612, 7
    %v614 = vsub.s32 3, %v613
    %v615 = vrot.slane %v598, %v614
    %v616 = vlaneseq
    %v617 = vshrl.u32 %v616, 7
    %v618 = vsub.s32 4, %v617
    %v619 = vrot.slane %v598, %v618
    %v620 = vlaneseq
    %v621 = vshrl.u32 %v620, 7
    %v622 = vsub.s32 5, %v621
    %v623 = vrot.slane %v598, %v622
    %v624 = vlaneseq
    %v625 = vshrl.u32 %v624, 7
    %v626 = vsub.s32 6, %v625
    %v627 = vrot.slane %v598, %v626
    %v628 = vlaneseq
    %v629 = vshrl.u32 %v628, 7
    %v630 = vsub.s32 7, %v629
    %v631 = vrot.slane %v598, %v630
    %v704 = vunpack.c.l.b16 %v534
    %v705 = vunpack.c.h.b16 %v534
    %v706 = vunpack.c.l.b16 %v535
    %v707 = vunpack.c.h.b16 %v535
    %v708 = vunpack.c.l.b16 %v536
    %v709 = vunpack.c.h.b16 %v536
    %v710 = vunpack.c.l.b16 %v537
    %v711 = vunpack.c.h.b16 %v537
    %v712 = vunpack.c.l.b16 %v538
    %v713 = vunpack.c.h.b16 %v538
    %v714 = vunpack.c.l.b16 %v539
    %v715 = vunpack.c.h.b16 %v539
    %v716 = vunpack.c.l.b16 %v540
    %v717 = vunpack.c.h.b16 %v540
    %v718 = vunpack.c.l.b16 %v541
    %v719 = vunpack.c.h.b16 %v541
    %v720 = vunpack.c.l.b16 %v542
    %v721 = vunpack.c.h.b16 %v542
    %v722 = vunpack.c.l.b16 %v543
    %v723 = vunpack.c.h.b16 %v543
    %v724 = vunpack.c.l.b16 %v544
    %v725 = vunpack.c.h.b16 %v544
    %v726 = vunpack.c.l.b16 %v545
    %v727 = vunpack.c.h.b16 %v545
    %v728 = vunpack.c.l.b16 %v546
    %v729 = vunpack.c.h.b16 %v546
    %v730 = vunpack.c.l.b16 %v547
    %v731 = vunpack.c.h.b16 %v547
    %v732 = vunpack.c.l.b16 %v548
    %v733 = vunpack.c.h.b16 %v548
    %v734 = vunpack.c.l.b16 %v549
    %v735 = vunpack.c.h.b16 %v549
    %v736 = vunpack.c.l.b16 %v550
    %v737 = vunpack.c.h.b16 %v550
    %v738 = vunpack.c.l.b16 %v551
    %v739 = vunpack.c.h.b16 %v551
    %v740 = vunpack.c.l.b16 %v552
    %v741 = vunpack.c.h.b16 %v552
    %v742 = vunpack.c.l.b16 %v553
    %v743 = vunpack.c.h.b16 %v553
    %v744 = vunpack.c.l.b16 %v554
    %v745 = vunpack.c.h.b16 %v554
    %v746 = vunpack.c.l.b16 %v555
    %v747 = vunpack.c.h.b16 %v555
    %v748 = vunpack.c.l.b16 %v556
    %v749 = vunpack.c.h.b16 %v556
    %v750 = vunpack.c.l.b16 %v557
    %v751 = vunpack.c.h.b16 %v557
    %v752 = vunpack.c.l.b16 %v558
    %v753 = vunpack.c.h.b16 %v558
    %v754 = vunpack.c.l.b16 %v559
    %v755 = vunpack.c.h.b16 %v559
    %v756 = vunpack.c.l.b16 %v560
    %v757 = vunpack.c.h.b16 %v560
    %v758 = vunpack.c.l.b16 %v561
    %v759 = vunpack.c.h.b16 %v561
    %v760 = vunpack.c.l.b16 %v562
    %v761 = vunpack.c.h.b16 %v562
    %v762 = vunpack.c.l.b16 %v563
    %v763 = vunpack.c.h.b16 %v563
    %v764 = vunpack.c.l.b16 %v564
    %v765 = vunpack.c.h.b16 %v564
    %v766 = vunpack.c.l.b16 %v565
    %v767 = vunpack.c.h.b16 %v565
    %v768 = vunpack.c.l.b16 %v566
    %v769 = vunpack.c.h.b16 %v566
    %v770 = vunpack.c.l.b16 %v567
    %v771 = vunpack.c.h.b16 %v567
    %v772 = vunpack.c.l.b16 %v568
    %v773 = vunpack.c.h.b16 %v568
    %v774 = vunpack.c.l.b16 %v569
    %v775 = vunpack.c.h.b16 %v569
    %v776 = vunpack.c.l.b16 %v570
    %v777 = vunpack.c.h.b16 %v570
    %v778 = vunpack.c.l.b16 %v571
    %v779 = vunpack.c.h.b16 %v571
    %v780 = vunpack.c.l.b16 %v572
    %v781 = vunpack.c.h.b16 %v572
    %v782 = vunpack.c.l.b16 %v573
    %v783 = vunpack.c.h.b16 %v573
    %v784 = vunpack.c.l.b16 %v574
    %v785 = vunpack.c.h.b16 %v574
    %v786 = vunpack.c.l.b16 %v575
    %v787 = vunpack.c.h.b16 %v575
    %v788 = vunpack.c.l.b16 %v576
    %v789 = vunpack.c.h.b16 %v576
    %v790 = vunpack.c.l.b16 %v577
    %v791 = vunpack.c.h.b16 %v577
    %v792 = vunpack.c.l.b16 %v578
    %v793 = vunpack.c.h.b16 %v578
    %v794 = vunpack.c.l.b16 %v579
    %v795 = vunpack.c.h.b16 %v579
    %v796 = vunpack.c.l.b16 %v580
    %v797 = vunpack.c.h.b16 %v580
    %v798 = vunpack.c.l.b16 %v581
    %v799 = vunpack.c.h.b16 %v581
    %v800 = vunpack.c.l.b16 %v582
    %v801 = vunpack.c.h.b16 %v582
    %v802 = vunpack.c.l.b16 %v583
    %v803 = vunpack.c.h.b16 %v583
    %v804 = vunpack.c.l.b16 %v584
    %v805 = vunpack.c.h.b16 %v584
    %v806 = vunpack.c.l.b16 %v585
    %v807 = vunpack.c.h.b16 %v585
    %v808 = vunpack.c.l.b16 %v586
    %v809 = vunpack.c.h.b16 %v586
    %v810 = vunpack.c.l.b16 %v587
    %v811 = vunpack.c.h.b16 %v587
    %v812 = vunpack.c.l.b16 %v588
    %v813 = vunpack.c.h.b16 %v588
    %v814 = vunpack.c.l.b16 %v589
    %v815 = vunpack.c.h.b16 %v589
    %v816 = vunpack.c.l.b16 %v590
    %v817 = vunpack.c.h.b16 %v590
    %v818 = vunpack.c.l.b16 %v591
    %v819 = vunpack.c.h.b16 %v591
    %v820 = vunpack.c.l.b16 %v592
    %v821 = vunpack.c.h.b16 %v592
    %v822 = vunpack.c.l.b16 %v593
    %v823 = vunpack.c.h.b16 %v593
    %v824 = vunpack.c.l.b16 %v594
    %v825 = vunpack.c.h.b16 %v594
    %v826 = vunpack.c.l.b16 %v595
    %v827 = vunpack.c.h.b16 %v595
    %v828 = vunpack.c.l.b16 %v596
    %v829 = vunpack.c.h.b16 %v596
    %v830 = vunpack.c.l.b16 %v597
    %v831 = vunpack.c.h.b16 %v597
    %v832 = vpack.c.b16 %v712, %v704
    %v833 = vpack.c.b16 %v713, %v705
    %v834 = vpack.c.b16 %v714, %v706
    %v835 = vpack.c.b16 %v715, %v707
    %v836 = vpack.c.b16 %v716, %v708
    %v837 = vpack.c.b16 %v717, %v709
    %v838 = vpack.c.b16 %v718, %v710
    %v839 = vpack.c.b16 %v719, %v711
    %v840 = vpack.c.b16 %v728, %v720
    %v841 = vpack.c.b16 %v729, %v721
    %v842 = vpack.c.b16 %v730, %v722
    %v843 = vpack.c.b16 %v731, %v723
    %v844 = vpack.c.b16 %v732, %v724
    %v845 = vpack.c.b16 %v733, %v725
    %v846 = vpack.c.b16 %v734, %v726
    %v847 = vpack.c.b16 %v735, %v727
    %v848 = vpack.c.b16 %v744, %v736
    %v849 = vpack.c.b16 %v745, %v737
    %v850 = vpack.c.b16 %v746, %v738
    %v851 = vpack.c.b16 %v747, %v739
    %v852 = vpack.c.b16 %v748, %v740
    %v853 = vpack.c.b16 %v749, %v741
    %v854 = vpack.c.b16 %v750, %v742
    %v855 = vpack.c.b16 %v751, %v743
    %v856 = vpack.c.b16 %v760, %v752
    %v857 = vpack.c.b16 %v761, %v753
    %v858 = vpack.c.b16 %v762, %v754
    %v859 = vpack.c.b16 %v763, %v755
    %v860 = vpack.c.b16 %v764, %v756
    %v861 = vpack.c.b16 %v765, %v757
    %v862 = vpack.c.b16 %v766, %v758
    %v863 = vpack.c.b16 %v767, %v759
    %v864 = vpack.c.b16 %v776, %v768
    %v865 = vpack.c.b16 %v777, %v769
    %v866 = vpack.c.b16 %v778, %v770
    %v867 = vpack.c.b16 %v779, %v771
    %v868 = vpack.c.b16 %v780, %v772
    %v869 = vpack.c.b16 %v781, %v773
    %v870 = vpack.c.b16 %v782, %v774
    %v871 = vpack.c.b16 %v783, %v775
    %v872 = vpack.c.b16 %v792, %v784
    %v873 = vpack.c.b16 %v793, %v785
    %v874 = vpack.c.b16 %v794, %v786
    %v875 = vpack.c.b16 %v795, %v787
    %v876 = vpack.c.b16 %v796, %v788
    %v877 = vpack.c.b16 %v797, %v789
    %v878 = vpack.c.b16 %v798, %v790
    %v879 = vpack.c.b16 %v799, %v791
    %v880 = vpack.c.b16 %v808, %v800
    %v881 = vpack.c.b16 %v809, %v801
    %v882 = vpack.c.b16 %v810, %v802
    %v883 = vpack.c.b16 %v811, %v803
    %v884 = vpack.c.b16 %v812, %v804
    %v885 = vpack.c.b16 %v813, %v805
    %v886 = vpack.c.b16 %v814, %v806
    %v887 = vpack.c.b16 %v815, %v807
    %v888 = vpack.c.b16 %v824, %v816
    %v889 = vpack.c.b16 %v825, %v817
    %v890 = vpack.c.b16 %v826, %v818
    %v891 = vpack.c.b16 %v827, %v819
    %v892 = vpack.c.b16 %v828, %v820
    %v893 = vpack.c.b16 %v829, %v821
    %v894 = vpack.c.b16 %v830, %v822
    %v895 = vpack.c.b16 %v831, %v823
    %960 = vmatprep.subr.bf16.mxu0 %v889
    %961 = vmatpush1.bf16.msra.mxu0 %v888
    %962 = vmatprep.subr.bf16.mxu0 %v881
    %963 = vmatpush1.bf16.msra.mxu0 %v880
    %964 = vmatprep.subr.bf16.mxu0 %v873
    %965 = vmatpush1.bf16.msra.mxu0 %v872
    %966 = vmatprep.subr.bf16.mxu0 %v865
    %967 = vmatpush1.bf16.msra.mxu0 %v864
    %968 = vmatprep.subr.bf16.mxu0 %v857
    %969 = vmatpush1.bf16.msra.mxu0 %v856
    %970 = vmatprep.subr.bf16.mxu0 %v849
    %971 = vmatpush1.bf16.msra.mxu0 %v848
    %972 = vmatprep.subr.bf16.mxu0 %v841
    %973 = vmatpush1.bf16.msra.mxu0 %v840
    %974 = vmatprep.subr.bf16.mxu0 %v833
    %975 = vmatpush1.bf16.msra.mxu0 %v832
    %976 = vmatprep.subr.bf16.mxu0 0
    %977 = vmatpush2.bf16.msra.mxu0 0
    %978 = vmatprep.subr.bf16.mxu0 0
    %979 = vmatpush2.bf16.msra.mxu0 0
    %980 = vmatprep.subr.bf16.mxu0 0
    %981 = vmatpush2.bf16.msra.mxu0 0
    %982 = vmatprep.subr.bf16.mxu0 0
    %983 = vmatpush2.bf16.msra.mxu0 0
    %984 = vmatprep.subr.bf16.mxu0 0
    %985 = vmatpush2.bf16.msra.mxu0 0
    %986 = vmatprep.subr.bf16.mxu0 0
    %987 = vmatpush2.bf16.msra.mxu0 0
    %988 = vmatprep.subr.bf16.mxu0 0
    %989 = vmatpush2.bf16.msra.mxu0 0
    %990 = vmatprep.subr.bf16.mxu0 0
    %991 = vmatpush2.bf16.msra.mxu0 0
    %992 = vmatprep.mubr.bf16.mxu0 0
    %993 = vmatmul.mubr.bf16.gmra.mxu0 %v518
    %v994 = vpop.f32.mrf.mxu0
    %v995 = vadd.f32 %v603, %v994
    %v996 = vpop.f32.mrf.mxu0
    %v997 = vadd.f32 %v607, %v996
    %v998 = vpop.f32.mrf.mxu0
    %v999 = vadd.f32 %v603, %v998
    %v1000 = vpop.f32.mrf.mxu0
    %v1001 = vadd.f32 %v607, %v1000
    %1002 = vmatprep.mubr.bf16.mxu0 0
    %1003 = vmatmul.mubr.bf16.gmra.mxu0 %v519
    %v1004 = vpop.f32.mrf.mxu0
    %v1005 = vadd.f32 %v603, %v1004
    %v1006 = vpop.f32.mrf.mxu0
    %v1007 = vadd.f32 %v607, %v1006
    %v1008 = vpop.f32.mrf.mxu0
    %v1009 = vadd.f32 %v603, %v1008
    %v1010 = vpop.f32.mrf.mxu0
    %v1011 = vadd.f32 %v607, %v1010
    %1012 = vmatprep.mubr.bf16.mxu0 0
    %1013 = vmatmul.mubr.bf16.gmra.mxu0 %v520
    %v1014 = vpop.f32.mrf.mxu0
    %v1015 = vadd.f32 %v603, %v1014
    %v1016 = vpop.f32.mrf.mxu0
    %v1017 = vadd.f32 %v607, %v1016
    %v1018 = vpop.f32.mrf.mxu0
    %v1019 = vadd.f32 %v603, %v1018
    %v1020 = vpop.f32.mrf.mxu0
    %v1021 = vadd.f32 %v607, %v1020
    %1022 = vmatprep.mubr.bf16.mxu0 0
    %1023 = vmatmul.mubr.bf16.gmra.mxu0 %v521
    %v1024 = vpop.f32.mrf.mxu0
    %v1025 = vadd.f32 %v603, %v1024
    %v1026 = vpop.f32.mrf.mxu0
    %v1027 = vadd.f32 %v607, %v1026
    %v1028 = vpop.f32.mrf.mxu0
    %v1029 = vadd.f32 %v603, %v1028
    %v1030 = vpop.f32.mrf.mxu0
    %v1031 = vadd.f32 %v607, %v1030
    %1032 = vmatprep.mubr.bf16.mxu0 0
    %1033 = vmatmul.mubr.bf16.gmra.mxu0 %v522
    %v1034 = vpop.f32.mrf.mxu0
    %v1035 = vadd.f32 %v603, %v1034
    %v1036 = vpop.f32.mrf.mxu0
    %v1037 = vadd.f32 %v607, %v1036
    %v1038 = vpop.f32.mrf.mxu0
    %v1039 = vadd.f32 %v603, %v1038
    %v1040 = vpop.f32.mrf.mxu0
    %v1041 = vadd.f32 %v607, %v1040
    %1042 = vmatprep.mubr.bf16.mxu0 0
    %1043 = vmatmul.mubr.bf16.gmra.mxu0 %v523
    %v1044 = vpop.f32.mrf.mxu0
    %v1045 = vadd.f32 %v603, %v1044
    %v1046 = vpop.f32.mrf.mxu0
    %v1047 = vadd.f32 %v607, %v1046
    %v1048 = vpop.f32.mrf.mxu0
    %v1049 = vadd.f32 %v603, %v1048
    %v1050 = vpop.f32.mrf.mxu0
    %v1051 = vadd.f32 %v607, %v1050
    %1052 = vmatprep.mubr.bf16.mxu0 0
    %1053 = vmatmul.mubr.bf16.gmra.mxu0 %v524
    %v1054 = vpop.f32.mrf.mxu0
    %v1055 = vadd.f32 %v603, %v1054
    %v1056 = vpop.f32.mrf.mxu0
    %v1057 = vadd.f32 %v607, %v1056
    %v1058 = vpop.f32.mrf.mxu0
    %v1059 = vadd.f32 %v603, %v1058
    %v1060 = vpop.f32.mrf.mxu0
    %v1061 = vadd.f32 %v607, %v1060
    %1062 = vmatprep.mubr.bf16.mxu0 0
    %1063 = vmatmul.mubr.bf16.gmra.mxu0 %v525
    %v1064 = vpop.f32.mrf.mxu0
    %v1065 = vadd.f32 %v603, %v1064
    %v1066 = vpop.f32.mrf.mxu0
    %v1067 = vadd.f32 %v607, %v1066
    %v1068 = vpop.f32.mrf.mxu0
    %v1069 = vadd.f32 %v603, %v1068
    %v1070 = vpop.f32.mrf.mxu0
    %v1071 = vadd.f32 %v607, %v1070
    %1072 = vmatprep.mubr.bf16.mxu0 0
    %1073 = vmatmul.mubr.bf16.gmra.mxu0 %v526
    %v1074 = vpop.f32.mrf.mxu0
    %v1075 = vadd.f32 %v603, %v1074
    %v1076 = vpop.f32.mrf.mxu0
    %v1077 = vadd.f32 %v607, %v1076
    %v1078 = vpop.f32.mrf.mxu0
    %v1079 = vadd.f32 %v603, %v1078
    %v1080 = vpop.f32.mrf.mxu0
    %v1081 = vadd.f32 %v607, %v1080
    %1082 = vmatprep.mubr.bf16.mxu0 0
    %1083 = vmatmul.mubr.bf16.gmra.mxu0 %v527
    %v1084 = vpop.f32.mrf.mxu0
    %v1085 = vadd.f32 %v603, %v1084
    %v1086 = vpop.f32.mrf.mxu0
    %v1087 = vadd.f32 %v607, %v1086
    %v1088 = vpop.f32.mrf.mxu0
    %v1089 = vadd.f32 %v603, %v1088
    %v1090 = vpop.f32.mrf.mxu0
    %v1091 = vadd.f32 %v607, %v1090
    %1092 = vmatprep.mubr.bf16.mxu0 0
    %1093 = vmatmul.mubr.bf16.gmra.mxu0 %v528
    %v1094 = vpop.f32.mrf.mxu0
    %v1095 = vadd.f32 %v603, %v1094
    %v1096 = vpop.f32.mrf.mxu0
    %v1097 = vadd.f32 %v607, %v1096
    %v1098 = vpop.f32.mrf.mxu0
    %v1099 = vadd.f32 %v603, %v1098
    %v1100 = vpop.f32.mrf.mxu0
    %v1101 = vadd.f32 %v607, %v1100
    %1102 = vmatprep.mubr.bf16.mxu0 0
    %1103 = vmatmul.mubr.bf16.gmra.mxu0 %v529
    %v1104 = vpop.f32.mrf.mxu0
    %v1105 = vadd.f32 %v603, %v1104
    %v1106 = vpop.f32.mrf.mxu0
    %v1107 = vadd.f32 %v607, %v1106
    %v1108 = vpop.f32.mrf.mxu0
    %v1109 = vadd.f32 %v603, %v1108
    %v1110 = vpop.f32.mrf.mxu0
    %v1111 = vadd.f32 %v607, %v1110
    %1112 = vmatprep.mubr.bf16.mxu0 0
    %1113 = vmatmul.mubr.bf16.gmra.mxu0 %v530
    %v1114 = vpop.f32.mrf.mxu0
    %v1115 = vadd.f32 %v603, %v1114
    %v1116 = vpop.f32.mrf.mxu0
    %v1117 = vadd.f32 %v607, %v1116
    %v1118 = vpop.f32.mrf.mxu0
    %v1119 = vadd.f32 %v603, %v1118
    %v1120 = vpop.f32.mrf.mxu0
    %v1121 = vadd.f32 %v607, %v1120
    %1122 = vmatprep.mubr.bf16.mxu0 0
    %1123 = vmatmul.mubr.bf16.gmra.mxu0 %v531
    %v1124 = vpop.f32.mrf.mxu0
    %v1125 = vadd.f32 %v603, %v1124
    %v1126 = vpop.f32.mrf.mxu0
    %v1127 = vadd.f32 %v607, %v1126
    %v1128 = vpop.f32.mrf.mxu0
    %v1129 = vadd.f32 %v603, %v1128
    %v1130 = vpop.f32.mrf.mxu0
    %v1131 = vadd.f32 %v607, %v1130
    %1132 = vmatprep.mubr.bf16.mxu0 0
    %1133 = vmatmul.mubr.bf16.gmra.mxu0 %v532
    %v1134 = vpop.f32.mrf.mxu0
    %v1135 = vadd.f32 %v603, %v1134
    %v1136 = vpop.f32.mrf.mxu0
    %v1137 = vadd.f32 %v607, %v1136
    %v1138 = vpop.f32.mrf.mxu0
    %v1139 = vadd.f32 %v603, %v1138
    %v1140 = vpop.f32.mrf.mxu0
    %v1141 = vadd.f32 %v607, %v1140
    %1142 = vmatprep.mubr.bf16.mxu0 0
    %1143 = vmatmul.mubr.bf16.gmra.mxu0 %v533
    %v1144 = vpop.f32.mrf.mxu0
    %v1145 = vadd.f32 %v603, %v1144
    %v1146 = vpop.f32.mrf.mxu0
    %v1147 = vadd.f32 %v607, %v1146
    %v1148 = vpop.f32.mrf.mxu0
    %v1149 = vadd.f32 %v603, %v1148
    %v1150 = vpop.f32.mrf.mxu0
    %v1151 = vadd.f32 %v607, %v1150
    %1152 = vdwg.mxu0
    %1153 = vmatprep.subr.bf16.mxu0 %v891
    %1154 = vmatpush1.bf16.msra.mxu0 %v890
    %1155 = vmatprep.subr.bf16.mxu0 %v883
    %1156 = vmatpush1.bf16.msra.mxu0 %v882
    %1157 = vmatprep.subr.bf16.mxu0 %v875
    %1158 = vmatpush1.bf16.msra.mxu0 %v874
    %1159 = vmatprep.subr.bf16.mxu0 %v867
    %1160 = vmatpush1.bf16.msra.mxu0 %v866
    %1161 = vmatprep.subr.bf16.mxu0 %v859
    %1162 = vmatpush1.bf16.msra.mxu0 %v858
    %1163 = vmatprep.subr.bf16.mxu0 %v851
    %1164 = vmatpush1.bf16.msra.mxu0 %v850
    %1165 = vmatprep.subr.bf16.mxu0 %v843
    %1166 = vmatpush1.bf16.msra.mxu0 %v842
    %1167 = vmatprep.subr.bf16.mxu0 %v835
    %1168 = vmatpush1.bf16.msra.mxu0 %v834
    %1169 = vmatprep.subr.bf16.mxu0 0
    %1170 = vmatpush2.bf16.msra.mxu0 0
    %1171 = vmatprep.subr.bf16.mxu0 0
    %1172 = vmatpush2.bf16.msra.mxu0 0
    %1173 = vmatprep.subr.bf16.mxu0 0
    %1174 = vmatpush2.bf16.msra.mxu0 0
    %1175 = vmatprep.subr.bf16.mxu0 0
    %1176 = vmatpush2.bf16.msra.mxu0 0
    %1177 = vmatprep.subr.bf16.mxu0 0
    %1178 = vmatpush2.bf16.msra.mxu0 0
    %1179 = vmatprep.subr.bf16.mxu0 0
    %1180 = vmatpush2.bf16.msra.mxu0 0
    %1181 = vmatprep.subr.bf16.mxu0 0
    %1182 = vmatpush2.bf16.msra.mxu0 0
    %1183 = vmatprep.subr.bf16.mxu0 0
    %1184 = vmatpush2.bf16.msra.mxu0 0
    %1185 = vmatprep.mubr.bf16.mxu0 0
    %1186 = vmatmul.mubr.bf16.gmra.mxu0 %v518
    %v1187 = vpop.f32.mrf.mxu0
    %v1188 = vadd.f32 %v611, %v1187
    %v1189 = vpop.f32.mrf.mxu0
    %v1190 = vadd.f32 %v615, %v1189
    %v1191 = vpop.f32.mrf.mxu0
    %v1192 = vadd.f32 %v611, %v1191
    %v1193 = vpop.f32.mrf.mxu0
    %v1194 = vadd.f32 %v615, %v1193
    %1195 = vmatprep.mubr.bf16.mxu0 0
    %1196 = vmatmul.mubr.bf16.gmra.mxu0 %v519
    %v1197 = vpop.f32.mrf.mxu0
    %v1198 = vadd.f32 %v611, %v1197
    %v1199 = vpop.f32.mrf.mxu0
    %v1200 = vadd.f32 %v615, %v1199
    %v1201 = vpop.f32.mrf.mxu0
    %v1202 = vadd.f32 %v611, %v1201
    %v1203 = vpop.f32.mrf.mxu0
    %v1204 = vadd.f32 %v615, %v1203
    %1205 = vmatprep.mubr.bf16.mxu0 0
    %1206 = vmatmul.mubr.bf16.gmra.mxu0 %v520
    %v1207 = vpop.f32.mrf.mxu0
    %v1208 = vadd.f32 %v611, %v1207
    %v1209 = vpop.f32.mrf.mxu0
    %v1210 = vadd.f32 %v615, %v1209
    %v1211 = vpop.f32.mrf.mxu0
    %v1212 = vadd.f32 %v611, %v1211
    %v1213 = vpop.f32.mrf.mxu0
    %v1214 = vadd.f32 %v615, %v1213
    %1215 = vmatprep.mubr.bf16.mxu0 0
    %1216 = vmatmul.mubr.bf16.gmra.mxu0 %v521
    %v1217 = vpop.f32.mrf.mxu0
    %v1218 = vadd.f32 %v611, %v1217
    %v1219 = vpop.f32.mrf.mxu0
    %v1220 = vadd.f32 %v615, %v1219
    %v1221 = vpop.f32.mrf.mxu0
    %v1222 = vadd.f32 %v611, %v1221
    %v1223 = vpop.f32.mrf.mxu0
    %v1224 = vadd.f32 %v615, %v1223
    %1225 = vmatprep.mubr.bf16.mxu0 0
    %1226 = vmatmul.mubr.bf16.gmra.mxu0 %v522
    %v1227 = vpop.f32.mrf.mxu0
    %v1228 = vadd.f32 %v611, %v1227
    %v1229 = vpop.f32.mrf.mxu0
    %v1230 = vadd.f32 %v615, %v1229
    %v1231 = vpop.f32.mrf.mxu0
    %v1232 = vadd.f32 %v611, %v1231
    %v1233 = vpop.f32.mrf.mxu0
    %v1234 = vadd.f32 %v615, %v1233
    %1235 = vmatprep.mubr.bf16.mxu0 0
    %1236 = vmatmul.mubr.bf16.gmra.mxu0 %v523
    %v1237 = vpop.f32.mrf.mxu0
    %v1238 = vadd.f32 %v611, %v1237
    %v1239 = vpop.f32.mrf.mxu0
    %v1240 = vadd.f32 %v615, %v1239
    %v1241 = vpop.f32.mrf.mxu0
    %v1242 = vadd.f32 %v611, %v1241
    %v1243 = vpop.f32.mrf.mxu0
    %v1244 = vadd.f32 %v615, %v1243
    %1245 = vmatprep.mubr.bf16.mxu0 0
    %1246 = vmatmul.mubr.bf16.gmra.mxu0 %v524
    %v1247 = vpop.f32.mrf.mxu0
    %v1248 = vadd.f32 %v611, %v1247
    %v1249 = vpop.f32.mrf.mxu0
    %v1250 = vadd.f32 %v615, %v1249
    %v1251 = vpop.f32.mrf.mxu0
    %v1252 = vadd.f32 %v611, %v1251
    %v1253 = vpop.f32.mrf.mxu0
    %v1254 = vadd.f32 %v615, %v1253
    %1255 = vmatprep.mubr.bf16.mxu0 0
    %1256 = vmatmul.mubr.bf16.gmra.mxu0 %v525
    %v1257 = vpop.f32.mrf.mxu0
    %v1258 = vadd.f32 %v611, %v1257
    %v1259 = vpop.f32.mrf.mxu0
    %v1260 = vadd.f32 %v615, %v1259
    %v1261 = vpop.f32.mrf.mxu0
    %v1262 = vadd.f32 %v611, %v1261
    %v1263 = vpop.f32.mrf.mxu0
    %v1264 = vadd.f32 %v615, %v1263
    %1265 = vmatprep.mubr.bf16.mxu0 0
    %1266 = vmatmul.mubr.bf16.gmra.mxu0 %v526
    %v1267 = vpop.f32.mrf.mxu0
    %v1268 = vadd.f32 %v611, %v1267
    %v1269 = vpop.f32.mrf.mxu0
    %v1270 = vadd.f32 %v615, %v1269
    %v1271 = vpop.f32.mrf.mxu0
    %v1272 = vadd.f32 %v611, %v1271
    %v1273 = vpop.f32.mrf.mxu0
    %v1274 = vadd.f32 %v615, %v1273
    %1275 = vmatprep.mubr.bf16.mxu0 0
    %1276 = vmatmul.mubr.bf16.gmra.mxu0 %v527
    %v1277 = vpop.f32.mrf.mxu0
    %v1278 = vadd.f32 %v611, %v1277
    %v1279 = vpop.f32.mrf.mxu0
    %v1280 = vadd.f32 %v615, %v1279
    %v1281 = vpop.f32.mrf.mxu0
    %v1282 = vadd.f32 %v611, %v1281
    %v1283 = vpop.f32.mrf.mxu0
    %v1284 = vadd.f32 %v615, %v1283
    %1285 = vmatprep.mubr.bf16.mxu0 0
    %1286 = vmatmul.mubr.bf16.gmra.mxu0 %v528
    %v1287 = vpop.f32.mrf.mxu0
    %v1288 = vadd.f32 %v611, %v1287
    %v1289 = vpop.f32.mrf.mxu0
    %v1290 = vadd.f32 %v615, %v1289
    %v1291 = vpop.f32.mrf.mxu0
    %v1292 = vadd.f32 %v611, %v1291
    %v1293 = vpop.f32.mrf.mxu0
    %v1294 = vadd.f32 %v615, %v1293
    %1295 = vmatprep.mubr.bf16.mxu0 0
    %1296 = vmatmul.mubr.bf16.gmra.mxu0 %v529
    %v1297 = vpop.f32.mrf.mxu0
    %v1298 = vadd.f32 %v611, %v1297
    %v1299 = vpop.f32.mrf.mxu0
    %v1300 = vadd.f32 %v615, %v1299
    %v1301 = vpop.f32.mrf.mxu0
    %v1302 = vadd.f32 %v611, %v1301
    %v1303 = vpop.f32.mrf.mxu0
    %v1304 = vadd.f32 %v615, %v1303
    %1305 = vmatprep.mubr.bf16.mxu0 0
    %1306 = vmatmul.mubr.bf16.gmra.mxu0 %v530
    %v1307 = vpop.f32.mrf.mxu0
    %v1308 = vadd.f32 %v611, %v1307
    %v1309 = vpop.f32.mrf.mxu0
    %v1310 = vadd.f32 %v615, %v1309
    %v1311 = vpop.f32.mrf.mxu0
    %v1312 = vadd.f32 %v611, %v1311
    %v1313 = vpop.f32.mrf.mxu0
    %v1314 = vadd.f32 %v615, %v1313
    %1315 = vmatprep.mubr.bf16.mxu0 0
    %1316 = vmatmul.mubr.bf16.gmra.mxu0 %v531
    %v1317 = vpop.f32.mrf.mxu0
    %v1318 = vadd.f32 %v611, %v1317
    %v1319 = vpop.f32.mrf.mxu0
    %v1320 = vadd.f32 %v615, %v1319
    %v1321 = vpop.f32.mrf.mxu0
    %v1322 = vadd.f32 %v611, %v1321
    %v1323 = vpop.f32.mrf.mxu0
    %v1324 = vadd.f32 %v615, %v1323
    %1325 = vmatprep.mubr.bf16.mxu0 0
    %1326 = vmatmul.mubr.bf16.gmra.mxu0 %v532
    %v1327 = vpop.f32.mrf.mxu0
    %v1328 = vadd.f32 %v611, %v1327
    %v1329 = vpop.f32.mrf.mxu0
    %v1330 = vadd.f32 %v615, %v1329
    %v1331 = vpop.f32.mrf.mxu0
    %v1332 = vadd.f32 %v611, %v1331
    %v1333 = vpop.f32.mrf.mxu0
    %v1334 = vadd.f32 %v615, %v1333
    %1335 = vmatprep.mubr.bf16.mxu0 0
    %1336 = vmatmul.mubr.bf16.gmra.mxu0 %v533
    %v1337 = vpop.f32.mrf.mxu0
    %v1338 = vadd.f32 %v611, %v1337
    %v1339 = vpop.f32.mrf.mxu0
    %v1340 = vadd.f32 %v615, %v1339
    %v1341 = vpop.f32.mrf.mxu0
    %v1342 = vadd.f32 %v611, %v1341
    %v1343 = vpop.f32.mrf.mxu0
    %v1344 = vadd.f32 %v615, %v1343
    %1345 = vdwg.mxu0
    %1346 = vmatprep.subr.bf16.mxu0 %v893
    %1347 = vmatpush1.bf16.msra.mxu0 %v892
    %1348 = vmatprep.subr.bf16.mxu0 %v885
    %1349 = vmatpush1.bf16.msra.mxu0 %v884
    %1350 = vmatprep.subr.bf16.mxu0 %v877
    %1351 = vmatpush1.bf16.msra.mxu0 %v876
    %1352 = vmatprep.subr.bf16.mxu0 %v869
    %1353 = vmatpush1.bf16.msra.mxu0 %v868
    %1354 = vmatprep.subr.bf16.mxu0 %v861
    %1355 = vmatpush1.bf16.msra.mxu0 %v860
    %1356 = vmatprep.subr.bf16.mxu0 %v853
    %1357 = vmatpush1.bf16.msra.mxu0 %v852
    %1358 = vmatprep.subr.bf16.mxu0 %v845
    %1359 = vmatpush1.bf16.msra.mxu0 %v844
    %1360 = vmatprep.subr.bf16.mxu0 %v837
    %1361 = vmatpush1.bf16.msra.mxu0 %v836
    %1362 = vmatprep.subr.bf16.mxu0 0
    %1363 = vmatpush2.bf16.msra.mxu0 0
    %1364 = vmatprep.subr.bf16.mxu0 0
    %1365 = vmatpush2.bf16.msra.mxu0 0
    %1366 = vmatprep.subr.bf16.mxu0 0
    %1367 = vmatpush2.bf16.msra.mxu0 0
    %1368 = vmatprep.subr.bf16.mxu0 0
    %1369 = vmatpush2.bf16.msra.mxu0 0
    %1370 = vmatprep.subr.bf16.mxu0 0
    %1371 = vmatpush2.bf16.msra.mxu0 0
    %1372 = vmatprep.subr.bf16.mxu0 0
    %1373 = vmatpush2.bf16.msra.mxu0 0
    %1374 = vmatprep.subr.bf16.mxu0 0
    %1375 = vmatpush2.bf16.msra.mxu0 0
    %1376 = vmatprep.subr.bf16.mxu0 0
    %1377 = vmatpush2.bf16.msra.mxu0 0
    %1378 = vmatprep.mubr.bf16.mxu0 0
    %1379 = vmatmul.mubr.bf16.gmra.mxu0 %v518
    %v1380 = vpop.f32.mrf.mxu0
    %v1381 = vadd.f32 %v619, %v1380
    %v1382 = vpop.f32.mrf.mxu0
    %v1383 = vadd.f32 %v623, %v1382
    %v1384 = vpop.f32.mrf.mxu0
    %v1385 = vadd.f32 %v619, %v1384
    %v1386 = vpop.f32.mrf.mxu0
    %v1387 = vadd.f32 %v623, %v1386
    %1388 = vmatprep.mubr.bf16.mxu0 0
    %1389 = vmatmul.mubr.bf16.gmra.mxu0 %v519
    %v1390 = vpop.f32.mrf.mxu0
    %v1391 = vadd.f32 %v619, %v1390
    %v1392 = vpop.f32.mrf.mxu0
    %v1393 = vadd.f32 %v623, %v1392
    %v1394 = vpop.f32.mrf.mxu0
    %v1395 = vadd.f32 %v619, %v1394
    %v1396 = vpop.f32.mrf.mxu0
    %v1397 = vadd.f32 %v623, %v1396
    %1398 = vmatprep.mubr.bf16.mxu0 0
    %1399 = vmatmul.mubr.bf16.gmra.mxu0 %v520
    %v1400 = vpop.f32.mrf.mxu0
    %v1401 = vadd.f32 %v619, %v1400
    %v1402 = vpop.f32.mrf.mxu0
    %v1403 = vadd.f32 %v623, %v1402
    %v1404 = vpop.f32.mrf.mxu0
    %v1405 = vadd.f32 %v619, %v1404
    %v1406 = vpop.f32.mrf.mxu0
    %v1407 = vadd.f32 %v623, %v1406
    %1408 = vmatprep.mubr.bf16.mxu0 0
    %1409 = vmatmul.mubr.bf16.gmra.mxu0 %v521
    %v1410 = vpop.f32.mrf.mxu0
    %v1411 = vadd.f32 %v619, %v1410
    %v1412 = vpop.f32.mrf.mxu0
    %v1413 = vadd.f32 %v623, %v1412
    %v1414 = vpop.f32.mrf.mxu0
    %v1415 = vadd.f32 %v619, %v1414
    %v1416 = vpop.f32.mrf.mxu0
    %v1417 = vadd.f32 %v623, %v1416
    %1418 = vmatprep.mubr.bf16.mxu0 0
    %1419 = vmatmul.mubr.bf16.gmra.mxu0 %v522
    %v1420 = vpop.f32.mrf.mxu0
    %v1421 = vadd.f32 %v619, %v1420
    %v1422 = vpop.f32.mrf.mxu0
    %v1423 = vadd.f32 %v623, %v1422
    %v1424 = vpop.f32.mrf.mxu0
    %v1425 = vadd.f32 %v619, %v1424
    %v1426 = vpop.f32.mrf.mxu0
    %v1427 = vadd.f32 %v623, %v1426
    %1428 = vmatprep.mubr.bf16.mxu0 0
    %1429 = vmatmul.mubr.bf16.gmra.mxu0 %v523
    %v1430 = vpop.f32.mrf.mxu0
    %v1431 = vadd.f32 %v619, %v1430
    %v1432 = vpop.f32.mrf.mxu0
    %v1433 = vadd.f32 %v623, %v1432
    %v1434 = vpop.f32.mrf.mxu0
    %v1435 = vadd.f32 %v619, %v1434
    %v1436 = vpop.f32.mrf.mxu0
    %v1437 = vadd.f32 %v623, %v1436
    %1438 = vmatprep.mubr.bf16.mxu0 0
    %1439 = vmatmul.mubr.bf16.gmra.mxu0 %v524
    %v1440 = vpop.f32.mrf.mxu0
    %v1441 = vadd.f32 %v619, %v1440
    %v1442 = vpop.f32.mrf.mxu0
    %v1443 = vadd.f32 %v623, %v1442
    %v1444 = vpop.f32.mrf.mxu0
    %v1445 = vadd.f32 %v619, %v1444
    %v1446 = vpop.f32.mrf.mxu0
    %v1447 = vadd.f32 %v623, %v1446
    %1448 = vmatprep.mubr.bf16.mxu0 0
    %1449 = vmatmul.mubr.bf16.gmra.mxu0 %v525
    %v1450 = vpop.f32.mrf.mxu0
    %v1451 = vadd.f32 %v619, %v1450
    %v1452 = vpop.f32.mrf.mxu0
    %v1453 = vadd.f32 %v623, %v1452
    %v1454 = vpop.f32.mrf.mxu0
    %v1455 = vadd.f32 %v619, %v1454
    %v1456 = vpop.f32.mrf.mxu0
    %v1457 = vadd.f32 %v623, %v1456
    %1458 = vmatprep.mubr.bf16.mxu0 0
    %1459 = vmatmul.mubr.bf16.gmra.mxu0 %v526
    %v1460 = vpop.f32.mrf.mxu0
    %v1461 = vadd.f32 %v619, %v1460
    %v1462 = vpop.f32.mrf.mxu0
    %v1463 = vadd.f32 %v623, %v1462
    %v1464 = vpop.f32.mrf.mxu0
    %v1465 = vadd.f32 %v619, %v1464
    %v1466 = vpop.f32.mrf.mxu0
    %v1467 = vadd.f32 %v623, %v1466
    %1468 = vmatprep.mubr.bf16.mxu0 0
    %1469 = vmatmul.mubr.bf16.gmra.mxu0 %v527
    %v1470 = vpop.f32.mrf.mxu0
    %v1471 = vadd.f32 %v619, %v1470
    %v1472 = vpop.f32.mrf.mxu0
    %v1473 = vadd.f32 %v623, %v1472
    %v1474 = vpop.f32.mrf.mxu0
    %v1475 = vadd.f32 %v619, %v1474
    %v1476 = vpop.f32.mrf.mxu0
    %v1477 = vadd.f32 %v623, %v1476
    %1478 = vmatprep.mubr.bf16.mxu0 0
    %1479 = vmatmul.mubr.bf16.gmra.mxu0 %v528
    %v1480 = vpop.f32.mrf.mxu0
    %v1481 = vadd.f32 %v619, %v1480
    %v1482 = vpop.f32.mrf.mxu0
    %v1483 = vadd.f32 %v623, %v1482
    %v1484 = vpop.f32.mrf.mxu0
    %v1485 = vadd.f32 %v619, %v1484
    %v1486 = vpop.f32.mrf.mxu0
    %v1487 = vadd.f32 %v623, %v1486
    %1488 = vmatprep.mubr.bf16.mxu0 0
    %1489 = vmatmul.mubr.bf16.gmra.mxu0 %v529
    %v1490 = vpop.f32.mrf.mxu0
    %v1491 = vadd.f32 %v619, %v1490
    %v1492 = vpop.f32.mrf.mxu0
    %v1493 = vadd.f32 %v623, %v1492
    %v1494 = vpop.f32.mrf.mxu0
    %v1495 = vadd.f32 %v619, %v1494
    %v1496 = vpop.f32.mrf.mxu0
    %v1497 = vadd.f32 %v623, %v1496
    %1498 = vmatprep.mubr.bf16.mxu0 0
    %1499 = vmatmul.mubr.bf16.gmra.mxu0 %v530
    %v1500 = vpop.f32.mrf.mxu0
    %v1501 = vadd.f32 %v619, %v1500
    %v1502 = vpop.f32.mrf.mxu0
    %v1503 = vadd.f32 %v623, %v1502
    %v1504 = vpop.f32.mrf.mxu0
    %v1505 = vadd.f32 %v619, %v1504
    %v1506 = vpop.f32.mrf.mxu0
    %v1507 = vadd.f32 %v623, %v1506
    %1508 = vmatprep.mubr.bf16.mxu0 0
    %1509 = vmatmul.mubr.bf16.gmra.mxu0 %v531
    %v1510 = vpop.f32.mrf.mxu0
    %v1511 = vadd.f32 %v619, %v1510
    %v1512 = vpop.f32.mrf.mxu0
    %v1513 = vadd.f32 %v623, %v1512
    %v1514 = vpop.f32.mrf.mxu0
    %v1515 = vadd.f32 %v619, %v1514
    %v1516 = vpop.f32.mrf.mxu0
    %v1517 = vadd.f32 %v623, %v1516
    %1518 = vmatprep.mubr.bf16.mxu0 0
    %1519 = vmatmul.mubr.bf16.gmra.mxu0 %v532
    %v1520 = vpop.f32.mrf.mxu0
    %v1521 = vadd.f32 %v619, %v1520
    %v1522 = vpop.f32.mrf.mxu0
    %v1523 = vadd.f32 %v623, %v1522
    %v1524 = vpop.f32.mrf.mxu0
    %v1525 = vadd.f32 %v619, %v1524
    %v1526 = vpop.f32.mrf.mxu0
    %v1527 = vadd.f32 %v623, %v1526
    %1528 = vmatprep.mubr.bf16.mxu0 0
    %1529 = vmatmul.mubr.bf16.gmra.mxu0 %v533
    %v1530 = vpop.f32.mrf.mxu0
    %v1531 = vadd.f32 %v619, %v1530
    %v1532 = vpop.f32.mrf.mxu0
    %v1533 = vadd.f32 %v623, %v1532
    %v1534 = vpop.f32.mrf.mxu0
    %v1535 = vadd.f32 %v619, %v1534
    %v1536 = vpop.f32.mrf.mxu0
    %v1537 = vadd.f32 %v623, %v1536
    %1538 = vdwg.mxu0
    %1539 = vmatprep.subr.bf16.mxu0 %v895
    %1540 = vmatpush1.bf16.msra.mxu0 %v894
    %1541 = vmatprep.subr.bf16.mxu0 %v887
    %1542 = vmatpush1.bf16.msra.mxu0 %v886
    %1543 = vmatprep.subr.bf16.mxu0 %v879
    %1544 = vmatpush1.bf16.msra.mxu0 %v878
    %1545 = vmatprep.subr.bf16.mxu0 %v871
    %1546 = vmatpush1.bf16.msra.mxu0 %v870
    %1547 = vmatprep.subr.bf16.mxu0 %v863
    %1548 = vmatpush1.bf16.msra.mxu0 %v862
    %1549 = vmatprep.subr.bf16.mxu0 %v855
    %1550 = vmatpush1.bf16.msra.mxu0 %v854
    %1551 = vmatprep.subr.bf16.mxu0 %v847
    %1552 = vmatpush1.bf16.msra.mxu0 %v846
    %1553 = vmatprep.subr.bf16.mxu0 %v839
    %1554 = vmatpush1.bf16.msra.mxu0 %v838
    %1555 = vmatprep.subr.bf16.mxu0 0
    %1556 = vmatpush2.bf16.msra.mxu0 0
    %1557 = vmatprep.subr.bf16.mxu0 0
    %1558 = vmatpush2.bf16.msra.mxu0 0
    %1559 = vmatprep.subr.bf16.mxu0 0
    %1560 = vmatpush2.bf16.msra.mxu0 0
    %1561 = vmatprep.subr.bf16.mxu0 0
    %1562 = vmatpush2.bf16.msra.mxu0 0
    %1563 = vmatprep.subr.bf16.mxu0 0
    %1564 = vmatpush2.bf16.msra.mxu0 0
    %1565 = vmatprep.subr.bf16.mxu0 0
    %1566 = vmatpush2.bf16.msra.mxu0 0
    %1567 = vmatprep.subr.bf16.mxu0 0
    %1568 = vmatpush2.bf16.msra.mxu0 0
    %1569 = vmatprep.subr.bf16.mxu0 0
    %1570 = vmatpush2.bf16.msra.mxu0 0
    %1571 = vmatprep.mubr.bf16.mxu0 0
    %1572 = vmatmul.mubr.bf16.gmra.mxu0 %v518
    %v1573 = vpop.f32.mrf.mxu0
    %v1574 = vadd.f32 %v627, %v1573
    %v1575 = vpop.f32.mrf.mxu0
    %v1576 = vadd.f32 %v631, %v1575
    %v1577 = vpop.f32.mrf.mxu0
    %v1578 = vadd.f32 %v627, %v1577
    %v1579 = vpop.f32.mrf.mxu0
    %v1580 = vadd.f32 %v631, %v1579
    %1581 = vmatprep.mubr.bf16.mxu0 0
    %1582 = vmatmul.mubr.bf16.gmra.mxu0 %v519
    %v1583 = vpop.f32.mrf.mxu0
    %v1584 = vadd.f32 %v627, %v1583
    %v1585 = vpop.f32.mrf.mxu0
    %v1586 = vadd.f32 %v631, %v1585
    %v1587 = vpop.f32.mrf.mxu0
    %v1588 = vadd.f32 %v627, %v1587
    %v1589 = vpop.f32.mrf.mxu0
    %v1590 = vadd.f32 %v631, %v1589
    %1591 = vmatprep.mubr.bf16.mxu0 0
    %1592 = vmatmul.mubr.bf16.gmra.mxu0 %v520
    %v1593 = vpop.f32.mrf.mxu0
    %v1594 = vadd.f32 %v627, %v1593
    %v1595 = vpop.f32.mrf.mxu0
    %v1596 = vadd.f32 %v631, %v1595
    %v1597 = vpop.f32.mrf.mxu0
    %v1598 = vadd.f32 %v627, %v1597
    %v1599 = vpop.f32.mrf.mxu0
    %v1600 = vadd.f32 %v631, %v1599
    %1601 = vmatprep.mubr.bf16.mxu0 0
    %1602 = vmatmul.mubr.bf16.gmra.mxu0 %v521
    %v1603 = vpop.f32.mrf.mxu0
    %v1604 = vadd.f32 %v627, %v1603
    %v1605 = vpop.f32.mrf.mxu0
    %v1606 = vadd.f32 %v631, %v1605
    %v1607 = vpop.f32.mrf.mxu0
    %v1608 = vadd.f32 %v627, %v1607
    %v1609 = vpop.f32.mrf.mxu0
    %v1610 = vadd.f32 %v631, %v1609
    %1611 = vmatprep.mubr.bf16.mxu0 0
    %1612 = vmatmul.mubr.bf16.gmra.mxu0 %v522
    %v1613 = vpop.f32.mrf.mxu0
    %v1614 = vadd.f32 %v627, %v1613
    %v1615 = vpop.f32.mrf.mxu0
    %v1616 = vadd.f32 %v631, %v1615
    %v1617 = vpop.f32.mrf.mxu0
    %v1618 = vadd.f32 %v627, %v1617
    %v1619 = vpop.f32.mrf.mxu0
    %v1620 = vadd.f32 %v631, %v1619
    %1621 = vmatprep.mubr.bf16.mxu0 0
    %1622 = vmatmul.mubr.bf16.gmra.mxu0 %v523
    %v1623 = vpop.f32.mrf.mxu0
    %v1624 = vadd.f32 %v627, %v1623
    %v1625 = vpop.f32.mrf.mxu0
    %v1626 = vadd.f32 %v631, %v1625
    %v1627 = vpop.f32.mrf.mxu0
    %v1628 = vadd.f32 %v627, %v1627
    %v1629 = vpop.f32.mrf.mxu0
    %v1630 = vadd.f32 %v631, %v1629
    %1631 = vmatprep.mubr.bf16.mxu0 0
    %1632 = vmatmul.mubr.bf16.gmra.mxu0 %v524
    %v1633 = vpop.f32.mrf.mxu0
    %v1634 = vadd.f32 %v627, %v1633
    %v1635 = vpop.f32.mrf.mxu0
    %v1636 = vadd.f32 %v631, %v1635
    %v1637 = vpop.f32.mrf.mxu0
    %v1638 = vadd.f32 %v627, %v1637
    %v1639 = vpop.f32.mrf.mxu0
    %v1640 = vadd.f32 %v631, %v1639
    %1641 = vmatprep.mubr.bf16.mxu0 0
    %1642 = vmatmul.mubr.bf16.gmra.mxu0 %v525
    %v1643 = vpop.f32.mrf.mxu0
    %v1644 = vadd.f32 %v627, %v1643
    %v1645 = vpop.f32.mrf.mxu0
    %v1646 = vadd.f32 %v631, %v1645
    %v1647 = vpop.f32.mrf.mxu0
    %v1648 = vadd.f32 %v627, %v1647
    %v1649 = vpop.f32.mrf.mxu0
    %v1650 = vadd.f32 %v631, %v1649
    %1651 = vmatprep.mubr.bf16.mxu0 0
    %1652 = vmatmul.mubr.bf16.gmra.mxu0 %v526
    %v1653 = vpop.f32.mrf.mxu0
    %v1654 = vadd.f32 %v627, %v1653
    %v1655 = vpop.f32.mrf.mxu0
    %v1656 = vadd.f32 %v631, %v1655
    %v1657 = vpop.f32.mrf.mxu0
    %v1658 = vadd.f32 %v627, %v1657
    %v1659 = vpop.f32.mrf.mxu0
    %v1660 = vadd.f32 %v631, %v1659
    %1661 = vmatprep.mubr.bf16.mxu0 0
    %1662 = vmatmul.mubr.bf16.gmra.mxu0 %v527
    %v1663 = vpop.f32.mrf.mxu0
    %v1664 = vadd.f32 %v627, %v1663
    %v1665 = vpop.f32.mrf.mxu0
    %v1666 = vadd.f32 %v631, %v1665
    %v1667 = vpop.f32.mrf.mxu0
    %v1668 = vadd.f32 %v627, %v1667
    %v1669 = vpop.f32.mrf.mxu0
    %v1670 = vadd.f32 %v631, %v1669
    %1671 = vmatprep.mubr.bf16.mxu0 0
    %1672 = vmatmul.mubr.bf16.gmra.mxu0 %v528
    %v1673 = vpop.f32.mrf.mxu0
    %v1674 = vadd.f32 %v627, %v1673
    %v1675 = vpop.f32.mrf.mxu0
    %v1676 = vadd.f32 %v631, %v1675
    %v1677 = vpop.f32.mrf.mxu0
    %v1678 = vadd.f32 %v627, %v1677
    %v1679 = vpop.f32.mrf.mxu0
    %v1680 = vadd.f32 %v631, %v1679
    %1681 = vmatprep.mubr.bf16.mxu0 0
    %1682 = vmatmul.mubr.bf16.gmra.mxu0 %v529
    %v1683 = vpop.f32.mrf.mxu0
    %v1684 = vadd.f32 %v627, %v1683
    %v1685 = vpop.f32.mrf.mxu0
    %v1686 = vadd.f32 %v631, %v1685
    %v1687 = vpop.f32.mrf.mxu0
    %v1688 = vadd.f32 %v627, %v1687
    %v1689 = vpop.f32.mrf.mxu0
    %v1690 = vadd.f32 %v631, %v1689
    %1691 = vmatprep.mubr.bf16.mxu0 0
    %1692 = vmatmul.mubr.bf16.gmra.mxu0 %v530
    %v1693 = vpop.f32.mrf.mxu0
    %v1694 = vadd.f32 %v627, %v1693
    %v1695 = vpop.f32.mrf.mxu0
    %v1696 = vadd.f32 %v631, %v1695
    %v1697 = vpop.f32.mrf.mxu0
    %v1698 = vadd.f32 %v627, %v1697
    %v1699 = vpop.f32.mrf.mxu0
    %v1700 = vadd.f32 %v631, %v1699
    %1701 = vmatprep.mubr.bf16.mxu0 0
    %1702 = vmatmul.mubr.bf16.gmra.mxu0 %v531
    %v1703 = vpop.f32.mrf.mxu0
    %v1704 = vadd.f32 %v627, %v1703
    %v1705 = vpop.f32.mrf.mxu0
    %v1706 = vadd.f32 %v631, %v1705
    %v1707 = vpop.f32.mrf.mxu0
    %v1708 = vadd.f32 %v627, %v1707
    %v1709 = vpop.f32.mrf.mxu0
    %v1710 = vadd.f32 %v631, %v1709
    %1711 = vmatprep.mubr.bf16.mxu0 0
    %1712 = vmatmul.mubr.bf16.gmra.mxu0 %v532
    %v1713 = vpop.f32.mrf.mxu0
    %v1714 = vadd.f32 %v627, %v1713
    %v1715 = vpop.f32.mrf.mxu0
    %v1716 = vadd.f32 %v631, %v1715
    %v1717 = vpop.f32.mrf.mxu0
    %v1718 = vadd.f32 %v627, %v1717
    %v1719 = vpop.f32.mrf.mxu0
    %v1720 = vadd.f32 %v631, %v1719
    %1721 = vmatprep.mubr.bf16.mxu0 0
    %1722 = vmatmul.mubr.bf16.gmra.mxu0 %v533
    %v1723 = vpop.f32.mrf.mxu0
    %v1724 = vadd.f32 %v627, %v1723
    %v1725 = vpop.f32.mrf.mxu0
    %v1726 = vadd.f32 %v631, %v1725
    %v1727 = vpop.f32.mrf.mxu0
    %v1728 = vadd.f32 %v627, %v1727
    %v1729 = vpop.f32.mrf.mxu0
    %v1730 = vadd.f32 %v631, %v1729
    %1731 = vdwg.mxu0
    %v1732 = vmax.f32 %v995, 0.0
    %v1733 = vmax.f32 %v997, 0.0
    %v1734 = vmax.f32 %v1188, 0.0
    %v1735 = vmax.f32 %v1190, 0.0
    %v1736 = vmax.f32 %v1381, 0.0
    %v1737 = vmax.f32 %v1383, 0.0
    %v1738 = vmax.f32 %v1574, 0.0
    %v1739 = vmax.f32 %v1576, 0.0
    %v1740 = vmax.f32 %v999, 0.0
    %v1741 = vmax.f32 %v1001, 0.0
    %v1742 = vmax.f32 %v1192, 0.0
    %v1743 = vmax.f32 %v1194, 0.0
    %v1744 = vmax.f32 %v1385, 0.0
    %v1745 = vmax.f32 %v1387, 0.0
    %v1746 = vmax.f32 %v1578, 0.0
    %v1747 = vmax.f32 %v1580, 0.0
    %v1748 = vmax.f32 %v1005, 0.0
    %v1749 = vmax.f32 %v1007, 0.0
    %v1750 = vmax.f32 %v1198, 0.0
    %v1751 = vmax.f32 %v1200, 0.0
    %v1752 = vmax.f32 %v1391, 0.0
    %v1753 = vmax.f32 %v1393, 0.0
    %v1754 = vmax.f32 %v1584, 0.0
    %v1755 = vmax.f32 %v1586, 0.0
    %v1756 = vmax.f32 %v1009, 0.0
    %v1757 = vmax.f32 %v1011, 0.0
    %v1758 = vmax.f32 %v1202, 0.0
    %v1759 = vmax.f32 %v1204, 0.0
    %v1760 = vmax.f32 %v1395, 0.0
    %v1761 = vmax.f32 %v1397, 0.0
    %v1762 = vmax.f32 %v1588, 0.0
    %v1763 = vmax.f32 %v1590, 0.0
    %v1764 = vmax.f32 %v1015, 0.0
    %v1765 = vmax.f32 %v1017, 0.0
    %v1766 = vmax.f32 %v1208, 0.0
    %v1767 = vmax.f32 %v1210, 0.0
    %v1768 = vmax.f32 %v1401, 0.0
    %v1769 = vmax.f32 %v1403, 0.0
    %v1770 = vmax.f32 %v1594, 0.0
    %v1771 = vmax.f32 %v1596, 0.0
    %v1772 = vmax.f32 %v1019, 0.0
    %v1773 = vmax.f32 %v1021, 0.0
    %v1774 = vmax.f32 %v1212, 0.0
    %v1775 = vmax.f32 %v1214, 0.0
    %v1776 = vmax.f32 %v1405, 0.0
    %v1777 = vmax.f32 %v1407, 0.0
    %v1778 = vmax.f32 %v1598, 0.0
    %v1779 = vmax.f32 %v1600, 0.0
    %v1780 = vmax.f32 %v1025, 0.0
    %v1781 = vmax.f32 %v1027, 0.0
    %v1782 = vmax.f32 %v1218, 0.0
    %v1783 = vmax.f32 %v1220, 0.0
    %v1784 = vmax.f32 %v1411, 0.0
    %v1785 = vmax.f32 %v1413, 0.0
    %v1786 = vmax.f32 %v1604, 0.0
    %v1787 = vmax.f32 %v1606, 0.0
    %v1788 = vmax.f32 %v1029, 0.0
    %v1789 = vmax.f32 %v1031, 0.0
    %v1790 = vmax.f32 %v1222, 0.0
    %v1791 = vmax.f32 %v1224, 0.0
    %v1792 = vmax.f32 %v1415, 0.0
    %v1793 = vmax.f32 %v1417, 0.0
    %v1794 = vmax.f32 %v1608, 0.0
    %v1795 = vmax.f32 %v1610, 0.0
    %v1796 = vmax.f32 %v1035, 0.0
    %v1797 = vmax.f32 %v1037, 0.0
    %v1798 = vmax.f32 %v1228, 0.0
    %v1799 = vmax.f32 %v1230, 0.0
    %v1800 = vmax.f32 %v1421, 0.0
    %v1801 = vmax.f32 %v1423, 0.0
    %v1802 = vmax.f32 %v1614, 0.0
    %v1803 = vmax.f32 %v1616, 0.0
    %v1804 = vmax.f32 %v1039, 0.0
    %v1805 = vmax.f32 %v1041, 0.0
    %v1806 = vmax.f32 %v1232, 0.0
    %v1807 = vmax.f32 %v1234, 0.0
    %v1808 = vmax.f32 %v1425, 0.0
    %v1809 = vmax.f32 %v1427, 0.0
    %v1810 = vmax.f32 %v1618, 0.0
    %v1811 = vmax.f32 %v1620, 0.0
    %v1812 = vmax.f32 %v1045, 0.0
    %v1813 = vmax.f32 %v1047, 0.0
    %v1814 = vmax.f32 %v1238, 0.0
    %v1815 = vmax.f32 %v1240, 0.0
    %v1816 = vmax.f32 %v1431, 0.0
    %v1817 = vmax.f32 %v1433, 0.0
    %v1818 = vmax.f32 %v1624, 0.0
    %v1819 = vmax.f32 %v1626, 0.0
    %v1820 = vmax.f32 %v1049, 0.0
    %v1821 = vmax.f32 %v1051, 0.0
    %v1822 = vmax.f32 %v1242, 0.0
    %v1823 = vmax.f32 %v1244, 0.0
    %v1824 = vmax.f32 %v1435, 0.0
    %v1825 = vmax.f32 %v1437, 0.0
    %v1826 = vmax.f32 %v1628, 0.0
    %v1827 = vmax.f32 %v1630, 0.0
    %v1828 = vmax.f32 %v1055, 0.0
    %v1829 = vmax.f32 %v1057, 0.0
    %v1830 = vmax.f32 %v1248, 0.0
    %v1831 = vmax.f32 %v1250, 0.0
    %v1832 = vmax.f32 %v1441, 0.0
    %v1833 = vmax.f32 %v1443, 0.0
    %v1834 = vmax.f32 %v1634, 0.0
    %v1835 = vmax.f32 %v1636, 0.0
    %v1836 = vmax.f32 %v1059, 0.0
    %v1837 = vmax.f32 %v1061, 0.0
    %v1838 = vmax.f32 %v1252, 0.0
    %v1839 = vmax.f32 %v1254, 0.0
    %v1840 = vmax.f32 %v1445, 0.0
    %v1841 = vmax.f32 %v1447, 0.0
    %v1842 = vmax.f32 %v1638, 0.0
    %v1843 = vmax.f32 %v1640, 0.0
    %v1844 = vmax.f32 %v1065, 0.0
    %v1845 = vmax.f32 %v1067, 0.0
    %v1846 = vmax.f32 %v1258, 0.0
    %v1847 = vmax.f32 %v1260, 0.0
    %v1848 = vmax.f32 %v1451, 0.0
    %v1849 = vmax.f32 %v1453, 0.0
    %v1850 = vmax.f32 %v1644, 0.0
    %v1851 = vmax.f32 %v1646, 0.0
    %v1852 = vmax.f32 %v1069, 0.0
    %v1853 = vmax.f32 %v1071, 0.0
    %v1854 = vmax.f32 %v1262, 0.0
    %v1855 = vmax.f32 %v1264, 0.0
    %v1856 = vmax.f32 %v1455, 0.0
    %v1857 = vmax.f32 %v1457, 0.0
    %v1858 = vmax.f32 %v1648, 0.0
    %v1859 = vmax.f32 %v1650, 0.0
    %v1860 = vmax.f32 %v1075, 0.0
    %v1861 = vmax.f32 %v1077, 0.0
    %v1862 = vmax.f32 %v1268, 0.0
    %v1863 = vmax.f32 %v1270, 0.0
    %v1864 = vmax.f32 %v1461, 0.0
    %v1865 = vmax.f32 %v1463, 0.0
    %v1866 = vmax.f32 %v1654, 0.0
    %v1867 = vmax.f32 %v1656, 0.0
    %v1868 = vmax.f32 %v1079, 0.0
    %v1869 = vmax.f32 %v1081, 0.0
    %v1870 = vmax.f32 %v1272, 0.0
    %v1871 = vmax.f32 %v1274, 0.0
    %v1872 = vmax.f32 %v1465, 0.0
    %v1873 = vmax.f32 %v1467, 0.0
    %v1874 = vmax.f32 %v1658, 0.0
    %v1875 = vmax.f32 %v1660, 0.0
    %v1876 = vmax.f32 %v1085, 0.0
    %v1877 = vmax.f32 %v1087, 0.0
    %v1878 = vmax.f32 %v1278, 0.0
    %v1879 = vmax.f32 %v1280, 0.0
    %v1880 = vmax.f32 %v1471, 0.0
    %v1881 = vmax.f32 %v1473, 0.0
    %v1882 = vmax.f32 %v1664, 0.0
    %v1883 = vmax.f32 %v1666, 0.0
    %v1884 = vmax.f32 %v1089, 0.0
    %v1885 = vmax.f32 %v1091, 0.0
    %v1886 = vmax.f32 %v1282, 0.0
    %v1887 = vmax.f32 %v1284, 0.0
    %v1888 = vmax.f32 %v1475, 0.0
    %v1889 = vmax.f32 %v1477, 0.0
    %v1890 = vmax.f32 %v1668, 0.0
    %v1891 = vmax.f32 %v1670, 0.0
    %v1892 = vmax.f32 %v1095, 0.0
    %v1893 = vmax.f32 %v1097, 0.0
    %v1894 = vmax.f32 %v1288, 0.0
    %v1895 = vmax.f32 %v1290, 0.0
    %v1896 = vmax.f32 %v1481, 0.0
    %v1897 = vmax.f32 %v1483, 0.0
    %v1898 = vmax.f32 %v1674, 0.0
    %v1899 = vmax.f32 %v1676, 0.0
    %v1900 = vmax.f32 %v1099, 0.0
    %v1901 = vmax.f32 %v1101, 0.0
    %v1902 = vmax.f32 %v1292, 0.0
    %v1903 = vmax.f32 %v1294, 0.0
    %v1904 = vmax.f32 %v1485, 0.0
    %v1905 = vmax.f32 %v1487, 0.0
    %v1906 = vmax.f32 %v1678, 0.0
    %v1907 = vmax.f32 %v1680, 0.0
    %v1908 = vmax.f32 %v1105, 0.0
    %v1909 = vmax.f32 %v1107, 0.0
    %v1910 = vmax.f32 %v1298, 0.0
    %v1911 = vmax.f32 %v1300, 0.0
    %v1912 = vmax.f32 %v1491, 0.0
    %v1913 = vmax.f32 %v1493, 0.0
    %v1914 = vmax.f32 %v1684, 0.0
    %v1915 = vmax.f32 %v1686, 0.0
    %v1916 = vmax.f32 %v1109, 0.0
    %v1917 = vmax.f32 %v1111, 0.0
    %v1918 = vmax.f32 %v1302, 0.0
    %v1919 = vmax.f32 %v1304, 0.0
    %v1920 = vmax.f32 %v1495, 0.0
    %v1921 = vmax.f32 %v1497, 0.0
    %v1922 = vmax.f32 %v1688, 0.0
    %v1923 = vmax.f32 %v1690, 0.0
    %v1924 = vmax.f32 %v1115, 0.0
    %v1925 = vmax.f32 %v1117, 0.0
    %v1926 = vmax.f32 %v1308, 0.0
    %v1927 = vmax.f32 %v1310, 0.0
    %v1928 = vmax.f32 %v1501, 0.0
    %v1929 = vmax.f32 %v1503, 0.0
    %v1930 = vmax.f32 %v1694, 0.0
    %v1931 = vmax.f32 %v1696, 0.0
    %v1932 = vmax.f32 %v1119, 0.0
    %v1933 = vmax.f32 %v1121, 0.0
    %v1934 = vmax.f32 %v1312, 0.0
    %v1935 = vmax.f32 %v1314, 0.0
    %v1936 = vmax.f32 %v1505, 0.0
    %v1937 = vmax.f32 %v1507, 0.0
    %v1938 = vmax.f32 %v1698, 0.0
    %v1939 = vmax.f32 %v1700, 0.0
    %v1940 = vmax.f32 %v1125, 0.0
    %v1941 = vmax.f32 %v1127, 0.0
    %v1942 = vmax.f32 %v1318, 0.0
    %v1943 = vmax.f32 %v1320, 0.0
    %v1944 = vmax.f32 %v1511, 0.0
    %v1945 = vmax.f32 %v1513, 0.0
    %v1946 = vmax.f32 %v1704, 0.0
    %v1947 = vmax.f32 %v1706, 0.0
    %v1948 = vmax.f32 %v1129, 0.0
    %v1949 = vmax.f32 %v1131, 0.0
    %v1950 = vmax.f32 %v1322, 0.0
    %v1951 = vmax.f32 %v1324, 0.0
    %v1952 = vmax.f32 %v1515, 0.0
    %v1953 = vmax.f32 %v1517, 0.0
    %v1954 = vmax.f32 %v1708, 0.0
    %v1955 = vmax.f32 %v1710, 0.0
    %v1956 = vmax.f32 %v1135, 0.0
    %v1957 = vmax.f32 %v1137, 0.0
    %v1958 = vmax.f32 %v1328, 0.0
    %v1959 = vmax.f32 %v1330, 0.0
    %v1960 = vmax.f32 %v1521, 0.0
    %v1961 = vmax.f32 %v1523, 0.0
    %v1962 = vmax.f32 %v1714, 0.0
    %v1963 = vmax.f32 %v1716, 0.0
    %v1964 = vmax.f32 %v1139, 0.0
    %v1965 = vmax.f32 %v1141, 0.0
    %v1966 = vmax.f32 %v1332, 0.0
    %v1967 = vmax.f32 %v1334, 0.0
    %v1968 = vmax.f32 %v1525, 0.0
    %v1969 = vmax.f32 %v1527, 0.0
    %v1970 = vmax.f32 %v1718, 0.0
    %v1971 = vmax.f32 %v1720, 0.0
    %v1972 = vmax.f32 %v1145, 0.0
    %v1973 = vmax.f32 %v1147, 0.0
    %v1974 = vmax.f32 %v1338, 0.0
    %v1975 = vmax.f32 %v1340, 0.0
    %v1976 = vmax.f32 %v1531, 0.0
    %v1977 = vmax.f32 %v1533, 0.0
    %v1978 = vmax.f32 %v1724, 0.0
    %v1979 = vmax.f32 %v1726, 0.0
    %v1980 = vmax.f32 %v1149, 0.0
    %v1981 = vmax.f32 %v1151, 0.0
    %v1982 = vmax.f32 %v1342, 0.0
    %v1983 = vmax.f32 %v1344, 0.0
    %v1984 = vmax.f32 %v1535, 0.0
    %v1985 = vmax.f32 %v1537, 0.0
    %v1986 = vmax.f32 %v1728, 0.0
    %v1987 = vmax.f32 %v1730, 0.0
    %v1988 = vpack.c.bf16 %v1740, %v1732
    %v1989 = vpack.c.bf16 %v1741, %v1733
    %v1990 = vpack.c.bf16 %v1742, %v1734
    %v1991 = vpack.c.bf16 %v1743, %v1735
    %v1992 = vpack.c.bf16 %v1744, %v1736
    %v1993 = vpack.c.bf16 %v1745, %v1737
    %v1994 = vpack.c.bf16 %v1746, %v1738
    %v1995 = vpack.c.bf16 %v1747, %v1739
    %v1996 = vpack.c.bf16 %v1756, %v1748
    %v1997 = vpack.c.bf16 %v1757, %v1749
    %v1998 = vpack.c.bf16 %v1758, %v1750
    %v1999 = vpack.c.bf16 %v1759, %v1751
    %v2000 = vpack.c.bf16 %v1760, %v1752
    %v2001 = vpack.c.bf16 %v1761, %v1753
    %v2002 = vpack.c.bf16 %v1762, %v1754
    %v2003 = vpack.c.bf16 %v1763, %v1755
    %v2004 = vpack.c.bf16 %v1772, %v1764
    %v2005 = vpack.c.bf16 %v1773, %v1765
    %v2006 = vpack.c.bf16 %v1774, %v1766
    %v2007 = vpack.c.bf16 %v1775, %v1767
    %v2008 = vpack.c.bf16 %v1776, %v1768
    %v2009 = vpack.c.bf16 %v1777, %v1769
    %v2010 = vpack.c.bf16 %v1778, %v1770
    %v2011 = vpack.c.bf16 %v1779, %v1771
    %v2012 = vpack.c.bf16 %v1788, %v1780
    %v2013 = vpack.c.bf16 %v1789, %v1781
    %v2014 = vpack.c.bf16 %v1790, %v1782
    %v2015 = vpack.c.bf16 %v1791, %v1783
    %v2016 = vpack.c.bf16 %v1792, %v1784
    %v2017 = vpack.c.bf16 %v1793, %v1785
    %v2018 = vpack.c.bf16 %v1794, %v1786
    %v2019 = vpack.c.bf16 %v1795, %v1787
    %v2020 = vpack.c.bf16 %v1804, %v1796
    %v2021 = vpack.c.bf16 %v1805, %v1797
    %v2022 = vpack.c.bf16 %v1806, %v1798
    %v2023 = vpack.c.bf16 %v1807, %v1799
    %v2024 = vpack.c.bf16 %v1808, %v1800
    %v2025 = vpack.c.bf16 %v1809, %v1801
    %v2026 = vpack.c.bf16 %v1810, %v1802
    %v2027 = vpack.c.bf16 %v1811, %v1803
    %v2028 = vpack.c.bf16 %v1820, %v1812
    %v2029 = vpack.c.bf16 %v1821, %v1813
    %v2030 = vpack.c.bf16 %v1822, %v1814
    %v2031 = vpack.c.bf16 %v1823, %v1815
    %v2032 = vpack.c.bf16 %v1824, %v1816
    %v2033 = vpack.c.bf16 %v1825, %v1817
    %v2034 = vpack.c.bf16 %v1826, %v1818
    %v2035 = vpack.c.bf16 %v1827, %v1819
    %v2036 = vpack.c.bf16 %v1836, %v1828
    %v2037 = vpack.c.bf16 %v1837, %v1829
    %v2038 = vpack.c.bf16 %v1838, %v1830
    %v2039 = vpack.c.bf16 %v1839, %v1831
    %v2040 = vpack.c.bf16 %v1840, %v1832
    %v2041 = vpack.c.bf16 %v1841, %v1833
    %v2042 = vpack.c.bf16 %v1842, %v1834
    %v2043 = vpack.c.bf16 %v1843, %v1835
    %v2044 = vpack.c.bf16 %v1852, %v1844
    %v2045 = vpack.c.bf16 %v1853, %v1845
    %v2046 = vpack.c.bf16 %v1854, %v1846
    %v2047 = vpack.c.bf16 %v1855, %v1847
    %v2048 = vpack.c.bf16 %v1856, %v1848
    %v2049 = vpack.c.bf16 %v1857, %v1849
    %v2050 = vpack.c.bf16 %v1858, %v1850
    %v2051 = vpack.c.bf16 %v1859, %v1851
    %v2052 = vpack.c.bf16 %v1868, %v1860
    %v2053 = vpack.c.bf16 %v1869, %v1861
    %v2054 = vpack.c.bf16 %v1870, %v1862
    %v2055 = vpack.c.bf16 %v1871, %v1863
    %v2056 = vpack.c.bf16 %v1872, %v1864
    %v2057 = vpack.c.bf16 %v1873, %v1865
    %v2058 = vpack.c.bf16 %v1874, %v1866
    %v2059 = vpack.c.bf16 %v1875, %v1867
    %v2060 = vpack.c.bf16 %v1884, %v1876
    %v2061 = vpack.c.bf16 %v1885, %v1877
    %v2062 = vpack.c.bf16 %v1886, %v1878
    %v2063 = vpack.c.bf16 %v1887, %v1879
    %v2064 = vpack.c.bf16 %v1888, %v1880
    %v2065 = vpack.c.bf16 %v1889, %v1881
    %v2066 = vpack.c.bf16 %v1890, %v1882
    %v2067 = vpack.c.bf16 %v1891, %v1883
    %v2068 = vpack.c.bf16 %v1900, %v1892
    %v2069 = vpack.c.bf16 %v1901, %v1893
    %v2070 = vpack.c.bf16 %v1902, %v1894
    %v2071 = vpack.c.bf16 %v1903, %v1895
    %v2072 = vpack.c.bf16 %v1904, %v1896
    %v2073 = vpack.c.bf16 %v1905, %v1897
    %v2074 = vpack.c.bf16 %v1906, %v1898
    %v2075 = vpack.c.bf16 %v1907, %v1899
    %v2076 = vpack.c.bf16 %v1916, %v1908
    %v2077 = vpack.c.bf16 %v1917, %v1909
    %v2078 = vpack.c.bf16 %v1918, %v1910
    %v2079 = vpack.c.bf16 %v1919, %v1911
    %v2080 = vpack.c.bf16 %v1920, %v1912
    %v2081 = vpack.c.bf16 %v1921, %v1913
    %v2082 = vpack.c.bf16 %v1922, %v1914
    %v2083 = vpack.c.bf16 %v1923, %v1915
    %v2084 = vpack.c.bf16 %v1932, %v1924
    %v2085 = vpack.c.bf16 %v1933, %v1925
    %v2086 = vpack.c.bf16 %v1934, %v1926
    %v2087 = vpack.c.bf16 %v1935, %v1927
    %v2088 = vpack.c.bf16 %v1936, %v1928
    %v2089 = vpack.c.bf16 %v1937, %v1929
    %v2090 = vpack.c.bf16 %v1938, %v1930
    %v2091 = vpack.c.bf16 %v1939, %v1931
    %v2092 = vpack.c.bf16 %v1948, %v1940
    %v2093 = vpack.c.bf16 %v1949, %v1941
    %v2094 = vpack.c.bf16 %v1950, %v1942
    %v2095 = vpack.c.bf16 %v1951, %v1943
    %v2096 = vpack.c.bf16 %v1952, %v1944
    %v2097 = vpack.c.bf16 %v1953, %v1945
    %v2098 = vpack.c.bf16 %v1954, %v1946
    %v2099 = vpack.c.bf16 %v1955, %v1947
    %v2100 = vpack.c.bf16 %v1964, %v1956
    %v2101 = vpack.c.bf16 %v1965, %v1957
    %v2102 = vpack.c.bf16 %v1966, %v1958
    %v2103 = vpack.c.bf16 %v1967, %v1959
    %v2104 = vpack.c.bf16 %v1968, %v1960
    %v2105 = vpack.c.bf16 %v1969, %v1961
    %v2106 = vpack.c.bf16 %v1970, %v1962
    %v2107 = vpack.c.bf16 %v1971, %v1963
    %v2108 = vpack.c.bf16 %v1980, %v1972
    %v2109 = vpack.c.bf16 %v1981, %v1973
    %v2110 = vpack.c.bf16 %v1982, %v1974
    %v2111 = vpack.c.bf16 %v1983, %v1975
    %v2112 = vpack.c.bf16 %v1984, %v1976
    %v2113 = vpack.c.bf16 %v1985, %v1977
    %v2114 = vpack.c.bf16 %v1986, %v1978
    %v2115 = vpack.c.bf16 %v1987, %v1979
    %v2116 = vld [vmem:[%s4] sm:$0xff]
    %v2117 = vld [vmem:[%s4 + $0x8] sm:$0xff]
    %v2118 = vld [vmem:[%s4 + $0x10] sm:$0xff]
    %v2119 = vld [vmem:[%s4 + $0x18] sm:$0xff]
    %v2120 = vld [vmem:[%s4 + $0x20] sm:$0xff]
    %v2121 = vld [vmem:[%s4 + $0x28] sm:$0xff]
    %v2122 = vld [vmem:[%s4 + $0x30] sm:$0xff]
    %v2123 = vld [vmem:[%s4 + $0x38] sm:$0xff]
    %v2124 = vld [vmem:[%s4 + $0x40] sm:$0xff]
    %v2125 = vld [vmem:[%s4 + $0x48] sm:$0xff]
    %v2126 = vld [vmem:[%s4 + $0x50] sm:$0xff]
    %v2127 = vld [vmem:[%s4 + $0x58] sm:$0xff]
    %v2128 = vld [vmem:[%s4 + $0x60] sm:$0xff]
    %v2129 = vld [vmem:[%s4 + $0x68] sm:$0xff]
    %v2130 = vld [vmem:[%s4 + $0x70] sm:$0xff]
    %v2131 = vld [vmem:[%s4 + $0x78] sm:$0xff]
    %v2132 = vld [vmem:[%s4 + $0x80] sm:$0xff]
    %v2133 = vld [vmem:[%s4 + $0x88] sm:$0xff]
    %v2134 = vld [vmem:[%s4 + $0x90] sm:$0xff]
    %v2135 = vld [vmem:[%s4 + $0x98] sm:$0xff]
    %v2136 = vld [vmem:[%s4 + $0xa0] sm:$0xff]
    %v2137 = vld [vmem:[%s4 + $0xa8] sm:$0xff]
    %v2138 = vld [vmem:[%s4 + $0xb0] sm:$0xff]
    %v2139 = vld [vmem:[%s4 + $0xb8] sm:$0xff]
    %v2140 = vld [vmem:[%s4 + $0xc0] sm:$0xff]
    %v2141 = vld [vmem:[%s4 + $0xc8] sm:$0xff]
    %v2142 = vld [vmem:[%s4 + $0xd0] sm:$0xff]
    %v2143 = vld [vmem:[%s4 + $0xd8] sm:$0xff]
    %v2144 = vld [vmem:[%s4 + $0xe0] sm:$0xff]
    %v2145 = vld [vmem:[%s4 + $0xe8] sm:$0xff]
    %v2146 = vld [vmem:[%s4 + $0xf0] sm:$0xff]
    %v2147 = vld [vmem:[%s4 + $0xf8] sm:$0xff]
    %v2148 = vld [vmem:[%s4 + $0x100] sm:$0xff]
    %v2149 = vld [vmem:[%s4 + $0x108] sm:$0xff]
    %v2150 = vld [vmem:[%s4 + $0x110] sm:$0xff]
    %v2151 = vld [vmem:[%s4 + $0x118] sm:$0xff]
    %v2152 = vld [vmem:[%s4 + $0x120] sm:$0xff]
    %v2153 = vld [vmem:[%s4 + $0x128] sm:$0xff]
    %v2154 = vld [vmem:[%s4 + $0x130] sm:$0xff]
    %v2155 = vld [vmem:[%s4 + $0x138] sm:$0xff]
    %v2156 = vld [vmem:[%s4 + $0x140] sm:$0xff]
    %v2157 = vld [vmem:[%s4 + $0x148] sm:$0xff]
    %v2158 = vld [vmem:[%s4 + $0x150] sm:$0xff]
    %v2159 = vld [vmem:[%s4 + $0x158] sm:$0xff]
    %v2160 = vld [vmem:[%s4 + $0x160] sm:$0xff]
    %v2161 = vld [vmem:[%s4 + $0x168] sm:$0xff]
    %v2162 = vld [vmem:[%s4 + $0x170] sm:$0xff]
    %v2163 = vld [vmem:[%s4 + $0x178] sm:$0xff]
    %v2164 = vld [vmem:[%s4 + $0x180] sm:$0xff]
    %v2165 = vld [vmem:[%s4 + $0x188] sm:$0xff]
    %v2166 = vld [vmem:[%s4 + $0x190] sm:$0xff]
    %v2167 = vld [vmem:[%s4 + $0x198] sm:$0xff]
    %v2168 = vld [vmem:[%s4 + $0x1a0] sm:$0xff]
    %v2169 = vld [vmem:[%s4 + $0x1a8] sm:$0xff]
    %v2170 = vld [vmem:[%s4 + $0x1b0] sm:$0xff]
    %v2171 = vld [vmem:[%s4 + $0x1b8] sm:$0xff]
    %v2172 = vld [vmem:[%s4 + $0x1c0] sm:$0xff]
    %v2173 = vld [vmem:[%s4 + $0x1c8] sm:$0xff]
    %v2174 = vld [vmem:[%s4 + $0x1d0] sm:$0xff]
    %v2175 = vld [vmem:[%s4 + $0x1d8] sm:$0xff]
    %v2176 = vld [vmem:[%s4 + $0x1e0] sm:$0xff]
    %v2177 = vld [vmem:[%s4 + $0x1e8] sm:$0xff]
    %v2178 = vld [vmem:[%s4 + $0x1f0] sm:$0xff]
    %v2179 = vld [vmem:[%s4 + $0x1f8] sm:$0xff]
    %v2180 = vld [vmem:[%s4 + $0x200] sm:$0xff]
    %v2181 = vld [vmem:[%s4 + $0x208] sm:$0xff]
    %v2182 = vld [vmem:[%s4 + $0x210] sm:$0xff]
    %v2183 = vld [vmem:[%s4 + $0x218] sm:$0xff]
    %v2184 = vld [vmem:[%s4 + $0x220] sm:$0xff]
    %v2185 = vld [vmem:[%s4 + $0x228] sm:$0xff]
    %v2186 = vld [vmem:[%s4 + $0x230] sm:$0xff]
    %v2187 = vld [vmem:[%s4 + $0x238] sm:$0xff]
    %v2188 = vld [vmem:[%s4 + $0x240] sm:$0xff]
    %v2189 = vld [vmem:[%s4 + $0x248] sm:$0xff]
    %v2190 = vld [vmem:[%s4 + $0x250] sm:$0xff]
    %v2191 = vld [vmem:[%s4 + $0x258] sm:$0xff]
    %v2192 = vld [vmem:[%s4 + $0x260] sm:$0xff]
    %v2193 = vld [vmem:[%s4 + $0x268] sm:$0xff]
    %v2194 = vld [vmem:[%s4 + $0x270] sm:$0xff]
    %v2195 = vld [vmem:[%s4 + $0x278] sm:$0xff]
    %v2196 = vld [vmem:[%s4 + $0x280] sm:$0xff]
    %v2197 = vld [vmem:[%s4 + $0x288] sm:$0xff]
    %v2198 = vld [vmem:[%s4 + $0x290] sm:$0xff]
    %v2199 = vld [vmem:[%s4 + $0x298] sm:$0xff]
    %v2200 = vld [vmem:[%s4 + $0x2a0] sm:$0xff]
    %v2201 = vld [vmem:[%s4 + $0x2a8] sm:$0xff]
    %v2202 = vld [vmem:[%s4 + $0x2b0] sm:$0xff]
    %v2203 = vld [vmem:[%s4 + $0x2b8] sm:$0xff]
    %v2204 = vld [vmem:[%s4 + $0x2c0] sm:$0xff]
    %v2205 = vld [vmem:[%s4 + $0x2c8] sm:$0xff]
    %v2206 = vld [vmem:[%s4 + $0x2d0] sm:$0xff]
    %v2207 = vld [vmem:[%s4 + $0x2d8] sm:$0xff]
    %v2208 = vld [vmem:[%s4 + $0x2e0] sm:$0xff]
    %v2209 = vld [vmem:[%s4 + $0x2e8] sm:$0xff]
    %v2210 = vld [vmem:[%s4 + $0x2f0] sm:$0xff]
    %v2211 = vld [vmem:[%s4 + $0x2f8] sm:$0xff]
    %v2212 = vld [vmem:[%s4 + $0x300] sm:$0xff]
    %v2213 = vld [vmem:[%s4 + $0x308] sm:$0xff]
    %v2214 = vld [vmem:[%s4 + $0x310] sm:$0xff]
    %v2215 = vld [vmem:[%s4 + $0x318] sm:$0xff]
    %v2216 = vld [vmem:[%s4 + $0x320] sm:$0xff]
    %v2217 = vld [vmem:[%s4 + $0x328] sm:$0xff]
    %v2218 = vld [vmem:[%s4 + $0x330] sm:$0xff]
    %v2219 = vld [vmem:[%s4 + $0x338] sm:$0xff]
    %v2220 = vld [vmem:[%s4 + $0x340] sm:$0xff]
    %v2221 = vld [vmem:[%s4 + $0x348] sm:$0xff]
    %v2222 = vld [vmem:[%s4 + $0x350] sm:$0xff]
    %v2223 = vld [vmem:[%s4 + $0x358] sm:$0xff]
    %v2224 = vld [vmem:[%s4 + $0x360] sm:$0xff]
    %v2225 = vld [vmem:[%s4 + $0x368] sm:$0xff]
    %v2226 = vld [vmem:[%s4 + $0x370] sm:$0xff]
    %v2227 = vld [vmem:[%s4 + $0x378] sm:$0xff]
    %v2228 = vld [vmem:[%s4 + $0x380] sm:$0xff]
    %v2229 = vld [vmem:[%s4 + $0x388] sm:$0xff]
    %v2230 = vld [vmem:[%s4 + $0x390] sm:$0xff]
    %v2231 = vld [vmem:[%s4 + $0x398] sm:$0xff]
    %v2232 = vld [vmem:[%s4 + $0x3a0] sm:$0xff]
    %v2233 = vld [vmem:[%s4 + $0x3a8] sm:$0xff]
    %v2234 = vld [vmem:[%s4 + $0x3b0] sm:$0xff]
    %v2235 = vld [vmem:[%s4 + $0x3b8] sm:$0xff]
    %v2236 = vld [vmem:[%s4 + $0x3c0] sm:$0xff]
    %v2237 = vld [vmem:[%s4 + $0x3c8] sm:$0xff]
    %v2238 = vld [vmem:[%s4 + $0x3d0] sm:$0xff]
    %v2239 = vld [vmem:[%s4 + $0x3d8] sm:$0xff]
    %v2240 = vld [vmem:[%s4 + $0x3e0] sm:$0xff]
    %v2241 = vld [vmem:[%s4 + $0x3e8] sm:$0xff]
    %v2242 = vld [vmem:[%s4 + $0x3f0] sm:$0xff]
    %v2243 = vld [vmem:[%s4 + $0x3f8] sm:$0xff]
    %v2244 = vld [vmem:[%s4 + $0x400] sm:$0xff]
    %v2245 = vld [vmem:[%s4 + $0x408] sm:$0xff]
    %v2246 = vld [vmem:[%s4 + $0x410] sm:$0xff]
    %v2247 = vld [vmem:[%s4 + $0x418] sm:$0xff]
    %v2248 = vld [vmem:[%s4 + $0x420] sm:$0xff]
    %v2249 = vld [vmem:[%s4 + $0x428] sm:$0xff]
    %v2250 = vld [vmem:[%s4 + $0x430] sm:$0xff]
    %v2251 = vld [vmem:[%s4 + $0x438] sm:$0xff]
    %v2252 = vld [vmem:[%s4 + $0x440] sm:$0xff]
    %v2253 = vld [vmem:[%s4 + $0x448] sm:$0xff]
    %v2254 = vld [vmem:[%s4 + $0x450] sm:$0xff]
    %v2255 = vld [vmem:[%s4 + $0x458] sm:$0xff]
    %v2256 = vld [vmem:[%s4 + $0x460] sm:$0xff]
    %v2257 = vld [vmem:[%s4 + $0x468] sm:$0xff]
    %v2258 = vld [vmem:[%s4 + $0x470] sm:$0xff]
    %v2259 = vld [vmem:[%s4 + $0x478] sm:$0xff]
    %v2260 = vld [vmem:[%s4 + $0x480] sm:$0xff]
    %v2261 = vld [vmem:[%s4 + $0x488] sm:$0xff]
    %v2262 = vld [vmem:[%s4 + $0x490] sm:$0xff]
    %v2263 = vld [vmem:[%s4 + $0x498] sm:$0xff]
    %v2264 = vld [vmem:[%s4 + $0x4a0] sm:$0xff]
    %v2265 = vld [vmem:[%s4 + $0x4a8] sm:$0xff]
    %v2266 = vld [vmem:[%s4 + $0x4b0] sm:$0xff]
    %v2267 = vld [vmem:[%s4 + $0x4b8] sm:$0xff]
    %v2268 = vld [vmem:[%s4 + $0x4c0] sm:$0xff]
    %v2269 = vld [vmem:[%s4 + $0x4c8] sm:$0xff]
    %v2270 = vld [vmem:[%s4 + $0x4d0] sm:$0xff]
    %v2271 = vld [vmem:[%s4 + $0x4d8] sm:$0xff]
    %v2272 = vld [vmem:[%s4 + $0x4e0] sm:$0xff]
    %v2273 = vld [vmem:[%s4 + $0x4e8] sm:$0xff]
    %v2274 = vld [vmem:[%s4 + $0x4f0] sm:$0xff]
    %v2275 = vld [vmem:[%s4 + $0x4f8] sm:$0xff]
    %v2276 = vld [vmem:[%s4 + $0x500] sm:$0xff]
    %v2277 = vld [vmem:[%s4 + $0x508] sm:$0xff]
    %v2278 = vld [vmem:[%s4 + $0x510] sm:$0xff]
    %v2279 = vld [vmem:[%s4 + $0x518] sm:$0xff]
    %v2280 = vld [vmem:[%s4 + $0x520] sm:$0xff]
    %v2281 = vld [vmem:[%s4 + $0x528] sm:$0xff]
    %v2282 = vld [vmem:[%s4 + $0x530] sm:$0xff]
    %v2283 = vld [vmem:[%s4 + $0x538] sm:$0xff]
    %v2284 = vld [vmem:[%s4 + $0x540] sm:$0xff]
    %v2285 = vld [vmem:[%s4 + $0x548] sm:$0xff]
    %v2286 = vld [vmem:[%s4 + $0x550] sm:$0xff]
    %v2287 = vld [vmem:[%s4 + $0x558] sm:$0xff]
    %v2288 = vld [vmem:[%s4 + $0x560] sm:$0xff]
    %v2289 = vld [vmem:[%s4 + $0x568] sm:$0xff]
    %v2290 = vld [vmem:[%s4 + $0x570] sm:$0xff]
    %v2291 = vld [vmem:[%s4 + $0x578] sm:$0xff]
    %v2292 = vld [vmem:[%s4 + $0x580] sm:$0xff]
    %v2293 = vld [vmem:[%s4 + $0x588] sm:$0xff]
    %v2294 = vld [vmem:[%s4 + $0x590] sm:$0xff]
    %v2295 = vld [vmem:[%s4 + $0x598] sm:$0xff]
    %v2296 = vld [vmem:[%s4 + $0x5a0] sm:$0xff]
    %v2297 = vld [vmem:[%s4 + $0x5a8] sm:$0xff]
    %v2298 = vld [vmem:[%s4 + $0x5b0] sm:$0xff]
    %v2299 = vld [vmem:[%s4 + $0x5b8] sm:$0xff]
    %v2300 = vld [vmem:[%s4 + $0x5c0] sm:$0xff]
    %v2301 = vld [vmem:[%s4 + $0x5c8] sm:$0xff]
    %v2302 = vld [vmem:[%s4 + $0x5d0] sm:$0xff]
    %v2303 = vld [vmem:[%s4 + $0x5d8] sm:$0xff]
    %v2304 = vld [vmem:[%s4 + $0x5e0] sm:$0xff]
    %v2305 = vld [vmem:[%s4 + $0x5e8] sm:$0xff]
    %v2306 = vld [vmem:[%s4 + $0x5f0] sm:$0xff]
    %v2307 = vld [vmem:[%s4 + $0x5f8] sm:$0xff]
    %v2308 = vld [vmem:[%s4 + $0x600] sm:$0xff]
    %v2309 = vld [vmem:[%s4 + $0x608] sm:$0xff]
    %v2310 = vld [vmem:[%s4 + $0x610] sm:$0xff]
    %v2311 = vld [vmem:[%s4 + $0x618] sm:$0xff]
    %v2312 = vld [vmem:[%s4 + $0x620] sm:$0xff]
    %v2313 = vld [vmem:[%s4 + $0x628] sm:$0xff]
    %v2314 = vld [vmem:[%s4 + $0x630] sm:$0xff]
    %v2315 = vld [vmem:[%s4 + $0x638] sm:$0xff]
    %v2316 = vld [vmem:[%s4 + $0x640] sm:$0xff]
    %v2317 = vld [vmem:[%s4 + $0x648] sm:$0xff]
    %v2318 = vld [vmem:[%s4 + $0x650] sm:$0xff]
    %v2319 = vld [vmem:[%s4 + $0x658] sm:$0xff]
    %v2320 = vld [vmem:[%s4 + $0x660] sm:$0xff]
    %v2321 = vld [vmem:[%s4 + $0x668] sm:$0xff]
    %v2322 = vld [vmem:[%s4 + $0x670] sm:$0xff]
    %v2323 = vld [vmem:[%s4 + $0x678] sm:$0xff]
    %v2324 = vld [vmem:[%s4 + $0x680] sm:$0xff]
    %v2325 = vld [vmem:[%s4 + $0x688] sm:$0xff]
    %v2326 = vld [vmem:[%s4 + $0x690] sm:$0xff]
    %v2327 = vld [vmem:[%s4 + $0x698] sm:$0xff]
    %v2328 = vld [vmem:[%s4 + $0x6a0] sm:$0xff]
    %v2329 = vld [vmem:[%s4 + $0x6a8] sm:$0xff]
    %v2330 = vld [vmem:[%s4 + $0x6b0] sm:$0xff]
    %v2331 = vld [vmem:[%s4 + $0x6b8] sm:$0xff]
    %v2332 = vld [vmem:[%s4 + $0x6c0] sm:$0xff]
    %v2333 = vld [vmem:[%s4 + $0x6c8] sm:$0xff]
    %v2334 = vld [vmem:[%s4 + $0x6d0] sm:$0xff]
    %v2335 = vld [vmem:[%s4 + $0x6d8] sm:$0xff]
    %v2336 = vld [vmem:[%s4 + $0x6e0] sm:$0xff]
    %v2337 = vld [vmem:[%s4 + $0x6e8] sm:$0xff]
    %v2338 = vld [vmem:[%s4 + $0x6f0] sm:$0xff]
    %v2339 = vld [vmem:[%s4 + $0x6f8] sm:$0xff]
    %v2340 = vld [vmem:[%s4 + $0x700] sm:$0xff]
    %v2341 = vld [vmem:[%s4 + $0x708] sm:$0xff]
    %v2342 = vld [vmem:[%s4 + $0x710] sm:$0xff]
    %v2343 = vld [vmem:[%s4 + $0x718] sm:$0xff]
    %v2344 = vld [vmem:[%s4 + $0x720] sm:$0xff]
    %v2345 = vld [vmem:[%s4 + $0x728] sm:$0xff]
    %v2346 = vld [vmem:[%s4 + $0x730] sm:$0xff]
    %v2347 = vld [vmem:[%s4 + $0x738] sm:$0xff]
    %v2348 = vld [vmem:[%s4 + $0x740] sm:$0xff]
    %v2349 = vld [vmem:[%s4 + $0x748] sm:$0xff]
    %v2350 = vld [vmem:[%s4 + $0x750] sm:$0xff]
    %v2351 = vld [vmem:[%s4 + $0x758] sm:$0xff]
    %v2352 = vld [vmem:[%s4 + $0x760] sm:$0xff]
    %v2353 = vld [vmem:[%s4 + $0x768] sm:$0xff]
    %v2354 = vld [vmem:[%s4 + $0x770] sm:$0xff]
    %v2355 = vld [vmem:[%s4 + $0x778] sm:$0xff]
    %v2356 = vld [vmem:[%s4 + $0x780] sm:$0xff]
    %v2357 = vld [vmem:[%s4 + $0x788] sm:$0xff]
    %v2358 = vld [vmem:[%s4 + $0x790] sm:$0xff]
    %v2359 = vld [vmem:[%s4 + $0x798] sm:$0xff]
    %v2360 = vld [vmem:[%s4 + $0x7a0] sm:$0xff]
    %v2361 = vld [vmem:[%s4 + $0x7a8] sm:$0xff]
    %v2362 = vld [vmem:[%s4 + $0x7b0] sm:$0xff]
    %v2363 = vld [vmem:[%s4 + $0x7b8] sm:$0xff]
    %v2364 = vld [vmem:[%s4 + $0x7c0] sm:$0xff]
    %v2365 = vld [vmem:[%s4 + $0x7c8] sm:$0xff]
    %v2366 = vld [vmem:[%s4 + $0x7d0] sm:$0xff]
    %v2367 = vld [vmem:[%s4 + $0x7d8] sm:$0xff]
    %v2368 = vld [vmem:[%s4 + $0x7e0] sm:$0xff]
    %v2369 = vld [vmem:[%s4 + $0x7e8] sm:$0xff]
    %v2370 = vld [vmem:[%s4 + $0x7f0] sm:$0xff]
    %v2371 = vld [vmem:[%s4 + $0x7f8] sm:$0xff]
    %v2372 = vld [vmem:[%s4 + $0x800] sm:$0xff]
    %v2373 = vld [vmem:[%s4 + $0x808] sm:$0xff]
    %v2374 = vld [vmem:[%s4 + $0x810] sm:$0xff]
    %v2375 = vld [vmem:[%s4 + $0x818] sm:$0xff]
    %v2376 = vld [vmem:[%s4 + $0x820] sm:$0xff]
    %v2377 = vld [vmem:[%s4 + $0x828] sm:$0xff]
    %v2378 = vld [vmem:[%s4 + $0x830] sm:$0xff]
    %v2379 = vld [vmem:[%s4 + $0x838] sm:$0xff]
    %v2380 = vld [vmem:[%s4 + $0x840] sm:$0xff]
    %v2381 = vld [vmem:[%s4 + $0x848] sm:$0xff]
    %v2382 = vld [vmem:[%s4 + $0x850] sm:$0xff]
    %v2383 = vld [vmem:[%s4 + $0x858] sm:$0xff]
    %v2384 = vld [vmem:[%s4 + $0x860] sm:$0xff]
    %v2385 = vld [vmem:[%s4 + $0x868] sm:$0xff]
    %v2386 = vld [vmem:[%s4 + $0x870] sm:$0xff]
    %v2387 = vld [vmem:[%s4 + $0x878] sm:$0xff]
    %v2388 = vld [vmem:[%s4 + $0x880] sm:$0xff]
    %v2389 = vld [vmem:[%s4 + $0x888] sm:$0xff]
    %v2390 = vld [vmem:[%s4 + $0x890] sm:$0xff]
    %v2391 = vld [vmem:[%s4 + $0x898] sm:$0xff]
    %v2392 = vld [vmem:[%s4 + $0x8a0] sm:$0xff]
    %v2393 = vld [vmem:[%s4 + $0x8a8] sm:$0xff]
    %v2394 = vld [vmem:[%s4 + $0x8b0] sm:$0xff]
    %v2395 = vld [vmem:[%s4 + $0x8b8] sm:$0xff]
    %v2396 = vld [vmem:[%s4 + $0x8c0] sm:$0xff]
    %v2397 = vld [vmem:[%s4 + $0x8c8] sm:$0xff]
    %v2398 = vld [vmem:[%s4 + $0x8d0] sm:$0xff]
    %v2399 = vld [vmem:[%s4 + $0x8d8] sm:$0xff]
    %v2400 = vld [vmem:[%s4 + $0x8e0] sm:$0xff]
    %v2401 = vld [vmem:[%s4 + $0x8e8] sm:$0xff]
    %v2402 = vld [vmem:[%s4 + $0x8f0] sm:$0xff]
    %v2403 = vld [vmem:[%s4 + $0x8f8] sm:$0xff]
    %v2404 = vld [vmem:[%s4 + $0x900] sm:$0xff]
    %v2405 = vld [vmem:[%s4 + $0x908] sm:$0xff]
    %v2406 = vld [vmem:[%s4 + $0x910] sm:$0xff]
    %v2407 = vld [vmem:[%s4 + $0x918] sm:$0xff]
    %v2408 = vld [vmem:[%s4 + $0x920] sm:$0xff]
    %v2409 = vld [vmem:[%s4 + $0x928] sm:$0xff]
    %v2410 = vld [vmem:[%s4 + $0x930] sm:$0xff]
    %v2411 = vld [vmem:[%s4 + $0x938] sm:$0xff]
    %v2412 = vld [vmem:[%s4 + $0x940] sm:$0xff]
    %v2413 = vld [vmem:[%s4 + $0x948] sm:$0xff]
    %v2414 = vld [vmem:[%s4 + $0x950] sm:$0xff]
    %v2415 = vld [vmem:[%s4 + $0x958] sm:$0xff]
    %v2416 = vld [vmem:[%s4 + $0x960] sm:$0xff]
    %v2417 = vld [vmem:[%s4 + $0x968] sm:$0xff]
    %v2418 = vld [vmem:[%s4 + $0x970] sm:$0xff]
    %v2419 = vld [vmem:[%s4 + $0x978] sm:$0xff]
    %v2420 = vld [vmem:[%s4 + $0x980] sm:$0xff]
    %v2421 = vld [vmem:[%s4 + $0x988] sm:$0xff]
    %v2422 = vld [vmem:[%s4 + $0x990] sm:$0xff]
    %v2423 = vld [vmem:[%s4 + $0x998] sm:$0xff]
    %v2424 = vld [vmem:[%s4 + $0x9a0] sm:$0xff]
    %v2425 = vld [vmem:[%s4 + $0x9a8] sm:$0xff]
    %v2426 = vld [vmem:[%s4 + $0x9b0] sm:$0xff]
    %v2427 = vld [vmem:[%s4 + $0x9b8] sm:$0xff]
    %v2428 = vld [vmem:[%s4 + $0x9c0] sm:$0xff]
    %v2429 = vld [vmem:[%s4 + $0x9c8] sm:$0xff]
    %v2430 = vld [vmem:[%s4 + $0x9d0] sm:$0xff]
    %v2431 = vld [vmem:[%s4 + $0x9d8] sm:$0xff]
    %v2432 = vld [vmem:[%s4 + $0x9e0] sm:$0xff]
    %v2433 = vld [vmem:[%s4 + $0x9e8] sm:$0xff]
    %v2434 = vld [vmem:[%s4 + $0x9f0] sm:$0xff]
    %v2435 = vld [vmem:[%s4 + $0x9f8] sm:$0xff]
    %v2436 = vld [vmem:[%s4 + $0xa00] sm:$0xff]
    %v2437 = vld [vmem:[%s4 + $0xa08] sm:$0xff]
    %v2438 = vld [vmem:[%s4 + $0xa10] sm:$0xff]
    %v2439 = vld [vmem:[%s4 + $0xa18] sm:$0xff]
    %v2440 = vld [vmem:[%s4 + $0xa20] sm:$0xff]
    %v2441 = vld [vmem:[%s4 + $0xa28] sm:$0xff]
    %v2442 = vld [vmem:[%s4 + $0xa30] sm:$0xff]
    %v2443 = vld [vmem:[%s4 + $0xa38] sm:$0xff]
    %v2444 = vld [vmem:[%s4 + $0xa40] sm:$0xff]
    %v2445 = vld [vmem:[%s4 + $0xa48] sm:$0xff]
    %v2446 = vld [vmem:[%s4 + $0xa50] sm:$0xff]
    %v2447 = vld [vmem:[%s4 + $0xa58] sm:$0xff]
    %v2448 = vld [vmem:[%s4 + $0xa60] sm:$0xff]
    %v2449 = vld [vmem:[%s4 + $0xa68] sm:$0xff]
    %v2450 = vld [vmem:[%s4 + $0xa70] sm:$0xff]
    %v2451 = vld [vmem:[%s4 + $0xa78] sm:$0xff]
    %v2452 = vld [vmem:[%s4 + $0xa80] sm:$0xff]
    %v2453 = vld [vmem:[%s4 + $0xa88] sm:$0xff]
    %v2454 = vld [vmem:[%s4 + $0xa90] sm:$0xff]
    %v2455 = vld [vmem:[%s4 + $0xa98] sm:$0xff]
    %v2456 = vld [vmem:[%s4 + $0xaa0] sm:$0xff]
    %v2457 = vld [vmem:[%s4 + $0xaa8] sm:$0xff]
    %v2458 = vld [vmem:[%s4 + $0xab0] sm:$0xff]
    %v2459 = vld [vmem:[%s4 + $0xab8] sm:$0xff]
    %v2460 = vld [vmem:[%s4 + $0xac0] sm:$0xff]
    %v2461 = vld [vmem:[%s4 + $0xac8] sm:$0xff]
    %v2462 = vld [vmem:[%s4 + $0xad0] sm:$0xff]
    %v2463 = vld [vmem:[%s4 + $0xad8] sm:$0xff]
    %v2464 = vld [vmem:[%s4 + $0xae0] sm:$0xff]
    %v2465 = vld [vmem:[%s4 + $0xae8] sm:$0xff]
    %v2466 = vld [vmem:[%s4 + $0xaf0] sm:$0xff]
    %v2467 = vld [vmem:[%s4 + $0xaf8] sm:$0xff]
    %v2468 = vld [vmem:[%s4 + $0xb00] sm:$0xff]
    %v2469 = vld [vmem:[%s4 + $0xb08] sm:$0xff]
    %v2470 = vld [vmem:[%s4 + $0xb10] sm:$0xff]
    %v2471 = vld [vmem:[%s4 + $0xb18] sm:$0xff]
    %v2472 = vld [vmem:[%s4 + $0xb20] sm:$0xff]
    %v2473 = vld [vmem:[%s4 + $0xb28] sm:$0xff]
    %v2474 = vld [vmem:[%s4 + $0xb30] sm:$0xff]
    %v2475 = vld [vmem:[%s4 + $0xb38] sm:$0xff]
    %v2476 = vld [vmem:[%s4 + $0xb40] sm:$0xff]
    %v2477 = vld [vmem:[%s4 + $0xb48] sm:$0xff]
    %v2478 = vld [vmem:[%s4 + $0xb50] sm:$0xff]
    %v2479 = vld [vmem:[%s4 + $0xb58] sm:$0xff]
    %v2480 = vld [vmem:[%s4 + $0xb60] sm:$0xff]
    %v2481 = vld [vmem:[%s4 + $0xb68] sm:$0xff]
    %v2482 = vld [vmem:[%s4 + $0xb70] sm:$0xff]
    %v2483 = vld [vmem:[%s4 + $0xb78] sm:$0xff]
    %v2484 = vld [vmem:[%s4 + $0xb80] sm:$0xff]
    %v2485 = vld [vmem:[%s4 + $0xb88] sm:$0xff]
    %v2486 = vld [vmem:[%s4 + $0xb90] sm:$0xff]
    %v2487 = vld [vmem:[%s4 + $0xb98] sm:$0xff]
    %v2488 = vld [vmem:[%s4 + $0xba0] sm:$0xff]
    %v2489 = vld [vmem:[%s4 + $0xba8] sm:$0xff]
    %v2490 = vld [vmem:[%s4 + $0xbb0] sm:$0xff]
    %v2491 = vld [vmem:[%s4 + $0xbb8] sm:$0xff]
    %v2492 = vld [vmem:[%s4 + $0xbc0] sm:$0xff]
    %v2493 = vld [vmem:[%s4 + $0xbc8] sm:$0xff]
    %v2494 = vld [vmem:[%s4 + $0xbd0] sm:$0xff]
    %v2495 = vld [vmem:[%s4 + $0xbd8] sm:$0xff]
    %v2496 = vld [vmem:[%s4 + $0xbe0] sm:$0xff]
    %v2497 = vld [vmem:[%s4 + $0xbe8] sm:$0xff]
    %v2498 = vld [vmem:[%s4 + $0xbf0] sm:$0xff]
    %v2499 = vld [vmem:[%s4 + $0xbf8] sm:$0xff]
    %v2884 = vunpack.c.l.b16 %v2116
    %v2885 = vunpack.c.h.b16 %v2116
    %v2886 = vunpack.c.l.b16 %v2117
    %v2887 = vunpack.c.h.b16 %v2117
    %v2888 = vunpack.c.l.b16 %v2118
    %v2889 = vunpack.c.h.b16 %v2118
    %v2890 = vunpack.c.l.b16 %v2119
    %v2891 = vunpack.c.h.b16 %v2119
    %v2892 = vunpack.c.l.b16 %v2120
    %v2893 = vunpack.c.h.b16 %v2120
    %v2894 = vunpack.c.l.b16 %v2121
    %v2895 = vunpack.c.h.b16 %v2121
    %v2896 = vunpack.c.l.b16 %v2122
    %v2897 = vunpack.c.h.b16 %v2122
    %v2898 = vunpack.c.l.b16 %v2123
    %v2899 = vunpack.c.h.b16 %v2123
    %v2900 = vunpack.c.l.b16 %v2124
    %v2901 = vunpack.c.h.b16 %v2124
    %v2902 = vunpack.c.l.b16 %v2125
    %v2903 = vunpack.c.h.b16 %v2125
    %v2904 = vunpack.c.l.b16 %v2126
    %v2905 = vunpack.c.h.b16 %v2126
    %v2906 = vunpack.c.l.b16 %v2127
    %v2907 = vunpack.c.h.b16 %v2127
    %v2908 = vunpack.c.l.b16 %v2128
    %v2909 = vunpack.c.h.b16 %v2128
    %v2910 = vunpack.c.l.b16 %v2129
    %v2911 = vunpack.c.h.b16 %v2129
    %v2912 = vunpack.c.l.b16 %v2130
    %v2913 = vunpack.c.h.b16 %v2130
    %v2914 = vunpack.c.l.b16 %v2131
    %v2915 = vunpack.c.h.b16 %v2131
    %v2916 = vunpack.c.l.b16 %v2132
    %v2917 = vunpack.c.h.b16 %v2132
    %v2918 = vunpack.c.l.b16 %v2133
    %v2919 = vunpack.c.h.b16 %v2133
    %v2920 = vunpack.c.l.b16 %v2134
    %v2921 = vunpack.c.h.b16 %v2134
    %v2922 = vunpack.c.l.b16 %v2135
    %v2923 = vunpack.c.h.b16 %v2135
    %v2924 = vunpack.c.l.b16 %v2136
    %v2925 = vunpack.c.h.b16 %v2136
    %v2926 = vunpack.c.l.b16 %v2137
    %v2927 = vunpack.c.h.b16 %v2137
    %v2928 = vunpack.c.l.b16 %v2138
    %v2929 = vunpack.c.h.b16 %v2138
    %v2930 = vunpack.c.l.b16 %v2139
    %v2931 = vunpack.c.h.b16 %v2139
    %v2932 = vunpack.c.l.b16 %v2140
    %v2933 = vunpack.c.h.b16 %v2140
    %v2934 = vunpack.c.l.b16 %v2141
    %v2935 = vunpack.c.h.b16 %v2141
    %v2936 = vunpack.c.l.b16 %v2142
    %v2937 = vunpack.c.h.b16 %v2142
    %v2938 = vunpack.c.l.b16 %v2143
    %v2939 = vunpack.c.h.b16 %v2143
    %v2940 = vunpack.c.l.b16 %v2144
    %v2941 = vunpack.c.h.b16 %v2144
    %v2942 = vunpack.c.l.b16 %v2145
    %v2943 = vunpack.c.h.b16 %v2145
    %v2944 = vunpack.c.l.b16 %v2146
    %v2945 = vunpack.c.h.b16 %v2146
    %v2946 = vunpack.c.l.b16 %v2147
    %v2947 = vunpack.c.h.b16 %v2147
    %v2948 = vunpack.c.l.b16 %v2148
    %v2949 = vunpack.c.h.b16 %v2148
    %v2950 = vunpack.c.l.b16 %v2149
    %v2951 = vunpack.c.h.b16 %v2149
    %v2952 = vunpack.c.l.b16 %v2150
    %v2953 = vunpack.c.h.b16 %v2150
    %v2954 = vunpack.c.l.b16 %v2151
    %v2955 = vunpack.c.h.b16 %v2151
    %v2956 = vunpack.c.l.b16 %v2152
    %v2957 = vunpack.c.h.b16 %v2152
    %v2958 = vunpack.c.l.b16 %v2153
    %v2959 = vunpack.c.h.b16 %v2153
    %v2960 = vunpack.c.l.b16 %v2154
    %v2961 = vunpack.c.h.b16 %v2154
    %v2962 = vunpack.c.l.b16 %v2155
    %v2963 = vunpack.c.h.b16 %v2155
    %v2964 = vunpack.c.l.b16 %v2156
    %v2965 = vunpack.c.h.b16 %v2156
    %v2966 = vunpack.c.l.b16 %v2157
    %v2967 = vunpack.c.h.b16 %v2157
    %v2968 = vunpack.c.l.b16 %v2158
    %v2969 = vunpack.c.h.b16 %v2158
    %v2970 = vunpack.c.l.b16 %v2159
    %v2971 = vunpack.c.h.b16 %v2159
    %v2972 = vunpack.c.l.b16 %v2160
    %v2973 = vunpack.c.h.b16 %v2160
    %v2974 = vunpack.c.l.b16 %v2161
    %v2975 = vunpack.c.h.b16 %v2161
    %v2976 = vunpack.c.l.b16 %v2162
    %v2977 = vunpack.c.h.b16 %v2162
    %v2978 = vunpack.c.l.b16 %v2163
    %v2979 = vunpack.c.h.b16 %v2163
    %v2980 = vunpack.c.l.b16 %v2164
    %v2981 = vunpack.c.h.b16 %v2164
    %v2982 = vunpack.c.l.b16 %v2165
    %v2983 = vunpack.c.h.b16 %v2165
    %v2984 = vunpack.c.l.b16 %v2166
    %v2985 = vunpack.c.h.b16 %v2166
    %v2986 = vunpack.c.l.b16 %v2167
    %v2987 = vunpack.c.h.b16 %v2167
    %v2988 = vunpack.c.l.b16 %v2168
    %v2989 = vunpack.c.h.b16 %v2168
    %v2990 = vunpack.c.l.b16 %v2169
    %v2991 = vunpack.c.h.b16 %v2169
    %v2992 = vunpack.c.l.b16 %v2170
    %v2993 = vunpack.c.h.b16 %v2170
    %v2994 = vunpack.c.l.b16 %v2171
    %v2995 = vunpack.c.h.b16 %v2171
    %v2996 = vunpack.c.l.b16 %v2172
    %v2997 = vunpack.c.h.b16 %v2172
    %v2998 = vunpack.c.l.b16 %v2173
    %v2999 = vunpack.c.h.b16 %v2173
    %v3000 = vunpack.c.l.b16 %v2174
    %v3001 = vunpack.c.h.b16 %v2174
    %v3002 = vunpack.c.l.b16 %v2175
    %v3003 = vunpack.c.h.b16 %v2175
    %v3004 = vunpack.c.l.b16 %v2176
    %v3005 = vunpack.c.h.b16 %v2176
    %v3006 = vunpack.c.l.b16 %v2177
    %v3007 = vunpack.c.h.b16 %v2177
    %v3008 = vunpack.c.l.b16 %v2178
    %v3009 = vunpack.c.h.b16 %v2178
    %v3010 = vunpack.c.l.b16 %v2179
    %v3011 = vunpack.c.h.b16 %v2179
    %v3012 = vunpack.c.l.b16 %v2180
    %v3013 = vunpack.c.h.b16 %v2180
    %v3014 = vunpack.c.l.b16 %v2181
    %v3015 = vunpack.c.h.b16 %v2181
    %v3016 = vunpack.c.l.b16 %v2182
    %v3017 = vunpack.c.h.b16 %v2182
    %v3018 = vunpack.c.l.b16 %v2183
    %v3019 = vunpack.c.h.b16 %v2183
    %v3020 = vunpack.c.l.b16 %v2184
    %v3021 = vunpack.c.h.b16 %v2184
    %v3022 = vunpack.c.l.b16 %v2185
    %v3023 = vunpack.c.h.b16 %v2185
    %v3024 = vunpack.c.l.b16 %v2186
    %v3025 = vunpack.c.h.b16 %v2186
    %v3026 = vunpack.c.l.b16 %v2187
    %v3027 = vunpack.c.h.b16 %v2187
    %v3028 = vunpack.c.l.b16 %v2188
    %v3029 = vunpack.c.h.b16 %v2188
    %v3030 = vunpack.c.l.b16 %v2189
    %v3031 = vunpack.c.h.b16 %v2189
    %v3032 = vunpack.c.l.b16 %v2190
    %v3033 = vunpack.c.h.b16 %v2190
    %v3034 = vunpack.c.l.b16 %v2191
    %v3035 = vunpack.c.h.b16 %v2191
    %v3036 = vunpack.c.l.b16 %v2192
    %v3037 = vunpack.c.h.b16 %v2192
    %v3038 = vunpack.c.l.b16 %v2193
    %v3039 = vunpack.c.h.b16 %v2193
    %v3040 = vunpack.c.l.b16 %v2194
    %v3041 = vunpack.c.h.b16 %v2194
    %v3042 = vunpack.c.l.b16 %v2195
    %v3043 = vunpack.c.h.b16 %v2195
    %v3044 = vunpack.c.l.b16 %v2196
    %v3045 = vunpack.c.h.b16 %v2196
    %v3046 = vunpack.c.l.b16 %v2197
    %v3047 = vunpack.c.h.b16 %v2197
    %v3048 = vunpack.c.l.b16 %v2198
    %v3049 = vunpack.c.h.b16 %v2198
    %v3050 = vunpack.c.l.b16 %v2199
    %v3051 = vunpack.c.h.b16 %v2199
    %v3052 = vunpack.c.l.b16 %v2200
    %v3053 = vunpack.c.h.b16 %v2200
    %v3054 = vunpack.c.l.b16 %v2201
    %v3055 = vunpack.c.h.b16 %v2201
    %v3056 = vunpack.c.l.b16 %v2202
    %v3057 = vunpack.c.h.b16 %v2202
    %v3058 = vunpack.c.l.b16 %v2203
    %v3059 = vunpack.c.h.b16 %v2203
    %v3060 = vunpack.c.l.b16 %v2204
    %v3061 = vunpack.c.h.b16 %v2204
    %v3062 = vunpack.c.l.b16 %v2205
    %v3063 = vunpack.c.h.b16 %v2205
    %v3064 = vunpack.c.l.b16 %v2206
    %v3065 = vunpack.c.h.b16 %v2206
    %v3066 = vunpack.c.l.b16 %v2207
    %v3067 = vunpack.c.h.b16 %v2207
    %v3068 = vunpack.c.l.b16 %v2208
    %v3069 = vunpack.c.h.b16 %v2208
    %v3070 = vunpack.c.l.b16 %v2209
    %v3071 = vunpack.c.h.b16 %v2209
    %v3072 = vunpack.c.l.b16 %v2210
    %v3073 = vunpack.c.h.b16 %v2210
    %v3074 = vunpack.c.l.b16 %v2211
    %v3075 = vunpack.c.h.b16 %v2211
    %v3076 = vunpack.c.l.b16 %v2212
    %v3077 = vunpack.c.h.b16 %v2212
    %v3078 = vunpack.c.l.b16 %v2213
    %v3079 = vunpack.c.h.b16 %v2213
    %v3080 = vunpack.c.l.b16 %v2214
    %v3081 = vunpack.c.h.b16 %v2214
    %v3082 = vunpack.c.l.b16 %v2215
    %v3083 = vunpack.c.h.b16 %v2215
    %v3084 = vunpack.c.l.b16 %v2216
    %v3085 = vunpack.c.h.b16 %v2216
    %v3086 = vunpack.c.l.b16 %v2217
    %v3087 = vunpack.c.h.b16 %v2217
    %v3088 = vunpack.c.l.b16 %v2218
    %v3089 = vunpack.c.h.b16 %v2218
    %v3090 = vunpack.c.l.b16 %v2219
    %v3091 = vunpack.c.h.b16 %v2219
    %v3092 = vunpack.c.l.b16 %v2220
    %v3093 = vunpack.c.h.b16 %v2220
    %v3094 = vunpack.c.l.b16 %v2221
    %v3095 = vunpack.c.h.b16 %v2221
    %v3096 = vunpack.c.l.b16 %v2222
    %v3097 = vunpack.c.h.b16 %v2222
    %v3098 = vunpack.c.l.b16 %v2223
    %v3099 = vunpack.c.h.b16 %v2223
    %v3100 = vunpack.c.l.b16 %v2224
    %v3101 = vunpack.c.h.b16 %v2224
    %v3102 = vunpack.c.l.b16 %v2225
    %v3103 = vunpack.c.h.b16 %v2225
    %v3104 = vunpack.c.l.b16 %v2226
    %v3105 = vunpack.c.h.b16 %v2226
    %v3106 = vunpack.c.l.b16 %v2227
    %v3107 = vunpack.c.h.b16 %v2227
    %v3108 = vunpack.c.l.b16 %v2228
    %v3109 = vunpack.c.h.b16 %v2228
    %v3110 = vunpack.c.l.b16 %v2229
    %v3111 = vunpack.c.h.b16 %v2229
    %v3112 = vunpack.c.l.b16 %v2230
    %v3113 = vunpack.c.h.b16 %v2230
    %v3114 = vunpack.c.l.b16 %v2231
    %v3115 = vunpack.c.h.b16 %v2231
    %v3116 = vunpack.c.l.b16 %v2232
    %v3117 = vunpack.c.h.b16 %v2232
    %v3118 = vunpack.c.l.b16 %v2233
    %v3119 = vunpack.c.h.b16 %v2233
    %v3120 = vunpack.c.l.b16 %v2234
    %v3121 = vunpack.c.h.b16 %v2234
    %v3122 = vunpack.c.l.b16 %v2235
    %v3123 = vunpack.c.h.b16 %v2235
    %v3124 = vunpack.c.l.b16 %v2236
    %v3125 = vunpack.c.h.b16 %v2236
    %v3126 = vunpack.c.l.b16 %v2237
    %v3127 = vunpack.c.h.b16 %v2237
    %v3128 = vunpack.c.l.b16 %v2238
    %v3129 = vunpack.c.h.b16 %v2238
    %v3130 = vunpack.c.l.b16 %v2239
    %v3131 = vunpack.c.h.b16 %v2239
    %v3132 = vunpack.c.l.b16 %v2240
    %v3133 = vunpack.c.h.b16 %v2240
    %v3134 = vunpack.c.l.b16 %v2241
    %v3135 = vunpack.c.h.b16 %v2241
    %v3136 = vunpack.c.l.b16 %v2242
    %v3137 = vunpack.c.h.b16 %v2242
    %v3138 = vunpack.c.l.b16 %v2243
    %v3139 = vunpack.c.h.b16 %v2243
    %v3140 = vunpack.c.l.b16 %v2244
    %v3141 = vunpack.c.h.b16 %v2244
    %v3142 = vunpack.c.l.b16 %v2245
    %v3143 = vunpack.c.h.b16 %v2245
    %v3144 = vunpack.c.l.b16 %v2246
    %v3145 = vunpack.c.h.b16 %v2246
    %v3146 = vunpack.c.l.b16 %v2247
    %v3147 = vunpack.c.h.b16 %v2247
    %v3148 = vunpack.c.l.b16 %v2248
    %v3149 = vunpack.c.h.b16 %v2248
    %v3150 = vunpack.c.l.b16 %v2249
    %v3151 = vunpack.c.h.b16 %v2249
    %v3152 = vunpack.c.l.b16 %v2250
    %v3153 = vunpack.c.h.b16 %v2250
    %v3154 = vunpack.c.l.b16 %v2251
    %v3155 = vunpack.c.h.b16 %v2251
    %v3156 = vunpack.c.l.b16 %v2252
    %v3157 = vunpack.c.h.b16 %v2252
    %v3158 = vunpack.c.l.b16 %v2253
    %v3159 = vunpack.c.h.b16 %v2253
    %v3160 = vunpack.c.l.b16 %v2254
    %v3161 = vunpack.c.h.b16 %v2254
    %v3162 = vunpack.c.l.b16 %v2255
    %v3163 = vunpack.c.h.b16 %v2255
    %v3164 = vunpack.c.l.b16 %v2256
    %v3165 = vunpack.c.h.b16 %v2256
    %v3166 = vunpack.c.l.b16 %v2257
    %v3167 = vunpack.c.h.b16 %v2257
    %v3168 = vunpack.c.l.b16 %v2258
    %v3169 = vunpack.c.h.b16 %v2258
    %v3170 = vunpack.c.l.b16 %v2259
    %v3171 = vunpack.c.h.b16 %v2259
    %v3172 = vunpack.c.l.b16 %v2260
    %v3173 = vunpack.c.h.b16 %v2260
    %v3174 = vunpack.c.l.b16 %v2261
    %v3175 = vunpack.c.h.b16 %v2261
    %v3176 = vunpack.c.l.b16 %v2262
    %v3177 = vunpack.c.h.b16 %v2262
    %v3178 = vunpack.c.l.b16 %v2263
    %v3179 = vunpack.c.h.b16 %v2263
    %v3180 = vunpack.c.l.b16 %v2264
    %v3181 = vunpack.c.h.b16 %v2264
    %v3182 = vunpack.c.l.b16 %v2265
    %v3183 = vunpack.c.h.b16 %v2265
    %v3184 = vunpack.c.l.b16 %v2266
    %v3185 = vunpack.c.h.b16 %v2266
    %v3186 = vunpack.c.l.b16 %v2267
    %v3187 = vunpack.c.h.b16 %v2267
    %v3188 = vunpack.c.l.b16 %v2268
    %v3189 = vunpack.c.h.b16 %v2268
    %v3190 = vunpack.c.l.b16 %v2269
    %v3191 = vunpack.c.h.b16 %v2269
    %v3192 = vunpack.c.l.b16 %v2270
    %v3193 = vunpack.c.h.b16 %v2270
    %v3194 = vunpack.c.l.b16 %v2271
    %v3195 = vunpack.c.h.b16 %v2271
    %v3196 = vunpack.c.l.b16 %v2272
    %v3197 = vunpack.c.h.b16 %v2272
    %v3198 = vunpack.c.l.b16 %v2273
    %v3199 = vunpack.c.h.b16 %v2273
    %v3200 = vunpack.c.l.b16 %v2274
    %v3201 = vunpack.c.h.b16 %v2274
    %v3202 = vunpack.c.l.b16 %v2275
    %v3203 = vunpack.c.h.b16 %v2275
    %v3204 = vunpack.c.l.b16 %v2276
    %v3205 = vunpack.c.h.b16 %v2276
    %v3206 = vunpack.c.l.b16 %v2277
    %v3207 = vunpack.c.h.b16 %v2277
    %v3208 = vunpack.c.l.b16 %v2278
    %v3209 = vunpack.c.h.b16 %v2278
    %v3210 = vunpack.c.l.b16 %v2279
    %v3211 = vunpack.c.h.b16 %v2279
    %v3212 = vunpack.c.l.b16 %v2280
    %v3213 = vunpack.c.h.b16 %v2280
    %v3214 = vunpack.c.l.b16 %v2281
    %v3215 = vunpack.c.h.b16 %v2281
    %v3216 = vunpack.c.l.b16 %v2282
    %v3217 = vunpack.c.h.b16 %v2282
    %v3218 = vunpack.c.l.b16 %v2283
    %v3219 = vunpack.c.h.b16 %v2283
    %v3220 = vunpack.c.l.b16 %v2284
    %v3221 = vunpack.c.h.b16 %v2284
    %v3222 = vunpack.c.l.b16 %v2285
    %v3223 = vunpack.c.h.b16 %v2285
    %v3224 = vunpack.c.l.b16 %v2286
    %v3225 = vunpack.c.h.b16 %v2286
    %v3226 = vunpack.c.l.b16 %v2287
    %v3227 = vunpack.c.h.b16 %v2287
    %v3228 = vunpack.c.l.b16 %v2288
    %v3229 = vunpack.c.h.b16 %v2288
    %v3230 = vunpack.c.l.b16 %v2289
    %v3231 = vunpack.c.h.b16 %v2289
    %v3232 = vunpack.c.l.b16 %v2290
    %v3233 = vunpack.c.h.b16 %v2290
    %v3234 = vunpack.c.l.b16 %v2291
    %v3235 = vunpack.c.h.b16 %v2291
    %v3236 = vunpack.c.l.b16 %v2292
    %v3237 = vunpack.c.h.b16 %v2292
    %v3238 = vunpack.c.l.b16 %v2293
    %v3239 = vunpack.c.h.b16 %v2293
    %v3240 = vunpack.c.l.b16 %v2294
    %v3241 = vunpack.c.h.b16 %v2294
    %v3242 = vunpack.c.l.b16 %v2295
    %v3243 = vunpack.c.h.b16 %v2295
    %v3244 = vunpack.c.l.b16 %v2296
    %v3245 = vunpack.c.h.b16 %v2296
    %v3246 = vunpack.c.l.b16 %v2297
    %v3247 = vunpack.c.h.b16 %v2297
    %v3248 = vunpack.c.l.b16 %v2298
    %v3249 = vunpack.c.h.b16 %v2298
    %v3250 = vunpack.c.l.b16 %v2299
    %v3251 = vunpack.c.h.b16 %v2299
    %v3252 = vunpack.c.l.b16 %v2300
    %v3253 = vunpack.c.h.b16 %v2300
    %v3254 = vunpack.c.l.b16 %v2301
    %v3255 = vunpack.c.h.b16 %v2301
    %v3256 = vunpack.c.l.b16 %v2302
    %v3257 = vunpack.c.h.b16 %v2302
    %v3258 = vunpack.c.l.b16 %v2303
    %v3259 = vunpack.c.h.b16 %v2303
    %v3260 = vunpack.c.l.b16 %v2304
    %v3261 = vunpack.c.h.b16 %v2304
    %v3262 = vunpack.c.l.b16 %v2305
    %v3263 = vunpack.c.h.b16 %v2305
    %v3264 = vunpack.c.l.b16 %v2306
    %v3265 = vunpack.c.h.b16 %v2306
    %v3266 = vunpack.c.l.b16 %v2307
    %v3267 = vunpack.c.h.b16 %v2307
    %v3268 = vunpack.c.l.b16 %v2308
    %v3269 = vunpack.c.h.b16 %v2308
    %v3270 = vunpack.c.l.b16 %v2309
    %v3271 = vunpack.c.h.b16 %v2309
    %v3272 = vunpack.c.l.b16 %v2310
    %v3273 = vunpack.c.h.b16 %v2310
    %v3274 = vunpack.c.l.b16 %v2311
    %v3275 = vunpack.c.h.b16 %v2311
    %v3276 = vunpack.c.l.b16 %v2312
    %v3277 = vunpack.c.h.b16 %v2312
    %v3278 = vunpack.c.l.b16 %v2313
    %v3279 = vunpack.c.h.b16 %v2313
    %v3280 = vunpack.c.l.b16 %v2314
    %v3281 = vunpack.c.h.b16 %v2314
    %v3282 = vunpack.c.l.b16 %v2315
    %v3283 = vunpack.c.h.b16 %v2315
    %v3284 = vunpack.c.l.b16 %v2316
    %v3285 = vunpack.c.h.b16 %v2316
    %v3286 = vunpack.c.l.b16 %v2317
    %v3287 = vunpack.c.h.b16 %v2317
    %v3288 = vunpack.c.l.b16 %v2318
    %v3289 = vunpack.c.h.b16 %v2318
    %v3290 = vunpack.c.l.b16 %v2319
    %v3291 = vunpack.c.h.b16 %v2319
    %v3292 = vunpack.c.l.b16 %v2320
    %v3293 = vunpack.c.h.b16 %v2320
    %v3294 = vunpack.c.l.b16 %v2321
    %v3295 = vunpack.c.h.b16 %v2321
    %v3296 = vunpack.c.l.b16 %v2322
    %v3297 = vunpack.c.h.b16 %v2322
    %v3298 = vunpack.c.l.b16 %v2323
    %v3299 = vunpack.c.h.b16 %v2323
    %v3300 = vunpack.c.l.b16 %v2324
    %v3301 = vunpack.c.h.b16 %v2324
    %v3302 = vunpack.c.l.b16 %v2325
    %v3303 = vunpack.c.h.b16 %v2325
    %v3304 = vunpack.c.l.b16 %v2326
    %v3305 = vunpack.c.h.b16 %v2326
    %v3306 = vunpack.c.l.b16 %v2327
    %v3307 = vunpack.c.h.b16 %v2327
    %v3308 = vunpack.c.l.b16 %v2328
    %v3309 = vunpack.c.h.b16 %v2328
    %v3310 = vunpack.c.l.b16 %v2329
    %v3311 = vunpack.c.h.b16 %v2329
    %v3312 = vunpack.c.l.b16 %v2330
    %v3313 = vunpack.c.h.b16 %v2330
    %v3314 = vunpack.c.l.b16 %v2331
    %v3315 = vunpack.c.h.b16 %v2331
    %v3316 = vunpack.c.l.b16 %v2332
    %v3317 = vunpack.c.h.b16 %v2332
    %v3318 = vunpack.c.l.b16 %v2333
    %v3319 = vunpack.c.h.b16 %v2333
    %v3320 = vunpack.c.l.b16 %v2334
    %v3321 = vunpack.c.h.b16 %v2334
    %v3322 = vunpack.c.l.b16 %v2335
    %v3323 = vunpack.c.h.b16 %v2335
    %v3324 = vunpack.c.l.b16 %v2336
    %v3325 = vunpack.c.h.b16 %v2336
    %v3326 = vunpack.c.l.b16 %v2337
    %v3327 = vunpack.c.h.b16 %v2337
    %v3328 = vunpack.c.l.b16 %v2338
    %v3329 = vunpack.c.h.b16 %v2338
    %v3330 = vunpack.c.l.b16 %v2339
    %v3331 = vunpack.c.h.b16 %v2339
    %v3332 = vunpack.c.l.b16 %v2340
    %v3333 = vunpack.c.h.b16 %v2340
    %v3334 = vunpack.c.l.b16 %v2341
    %v3335 = vunpack.c.h.b16 %v2341
    %v3336 = vunpack.c.l.b16 %v2342
    %v3337 = vunpack.c.h.b16 %v2342
    %v3338 = vunpack.c.l.b16 %v2343
    %v3339 = vunpack.c.h.b16 %v2343
    %v3340 = vunpack.c.l.b16 %v2344
    %v3341 = vunpack.c.h.b16 %v2344
    %v3342 = vunpack.c.l.b16 %v2345
    %v3343 = vunpack.c.h.b16 %v2345
    %v3344 = vunpack.c.l.b16 %v2346
    %v3345 = vunpack.c.h.b16 %v2346
    %v3346 = vunpack.c.l.b16 %v2347
    %v3347 = vunpack.c.h.b16 %v2347
    %v3348 = vunpack.c.l.b16 %v2348
    %v3349 = vunpack.c.h.b16 %v2348
    %v3350 = vunpack.c.l.b16 %v2349
    %v3351 = vunpack.c.h.b16 %v2349
    %v3352 = vunpack.c.l.b16 %v2350
    %v3353 = vunpack.c.h.b16 %v2350
    %v3354 = vunpack.c.l.b16 %v2351
    %v3355 = vunpack.c.h.b16 %v2351
    %v3356 = vunpack.c.l.b16 %v2352
    %v3357 = vunpack.c.h.b16 %v2352
    %v3358 = vunpack.c.l.b16 %v2353
    %v3359 = vunpack.c.h.b16 %v2353
    %v3360 = vunpack.c.l.b16 %v2354
    %v3361 = vunpack.c.h.b16 %v2354
    %v3362 = vunpack.c.l.b16 %v2355
    %v3363 = vunpack.c.h.b16 %v2355
    %v3364 = vunpack.c.l.b16 %v2356
    %v3365 = vunpack.c.h.b16 %v2356
    %v3366 = vunpack.c.l.b16 %v2357
    %v3367 = vunpack.c.h.b16 %v2357
    %v3368 = vunpack.c.l.b16 %v2358
    %v3369 = vunpack.c.h.b16 %v2358
    %v3370 = vunpack.c.l.b16 %v2359
    %v3371 = vunpack.c.h.b16 %v2359
    %v3372 = vunpack.c.l.b16 %v2360
    %v3373 = vunpack.c.h.b16 %v2360
    %v3374 = vunpack.c.l.b16 %v2361
    %v3375 = vunpack.c.h.b16 %v2361
    %v3376 = vunpack.c.l.b16 %v2362
    %v3377 = vunpack.c.h.b16 %v2362
    %v3378 = vunpack.c.l.b16 %v2363
    %v3379 = vunpack.c.h.b16 %v2363
    %v3380 = vunpack.c.l.b16 %v2364
    %v3381 = vunpack.c.h.b16 %v2364
    %v3382 = vunpack.c.l.b16 %v2365
    %v3383 = vunpack.c.h.b16 %v2365
    %v3384 = vunpack.c.l.b16 %v2366
    %v3385 = vunpack.c.h.b16 %v2366
    %v3386 = vunpack.c.l.b16 %v2367
    %v3387 = vunpack.c.h.b16 %v2367
    %v3388 = vunpack.c.l.b16 %v2368
    %v3389 = vunpack.c.h.b16 %v2368
    %v3390 = vunpack.c.l.b16 %v2369
    %v3391 = vunpack.c.h.b16 %v2369
    %v3392 = vunpack.c.l.b16 %v2370
    %v3393 = vunpack.c.h.b16 %v2370
    %v3394 = vunpack.c.l.b16 %v2371
    %v3395 = vunpack.c.h.b16 %v2371
    %v3396 = vunpack.c.l.b16 %v2372
    %v3397 = vunpack.c.h.b16 %v2372
    %v3398 = vunpack.c.l.b16 %v2373
    %v3399 = vunpack.c.h.b16 %v2373
    %v3400 = vunpack.c.l.b16 %v2374
    %v3401 = vunpack.c.h.b16 %v2374
    %v3402 = vunpack.c.l.b16 %v2375
    %v3403 = vunpack.c.h.b16 %v2375
    %v3404 = vunpack.c.l.b16 %v2376
    %v3405 = vunpack.c.h.b16 %v2376
    %v3406 = vunpack.c.l.b16 %v2377
    %v3407 = vunpack.c.h.b16 %v2377
    %v3408 = vunpack.c.l.b16 %v2378
    %v3409 = vunpack.c.h.b16 %v2378
    %v3410 = vunpack.c.l.b16 %v2379
    %v3411 = vunpack.c.h.b16 %v2379
    %v3412 = vunpack.c.l.b16 %v2380
    %v3413 = vunpack.c.h.b16 %v2380
    %v3414 = vunpack.c.l.b16 %v2381
    %v3415 = vunpack.c.h.b16 %v2381
    %v3416 = vunpack.c.l.b16 %v2382
    %v3417 = vunpack.c.h.b16 %v2382
    %v3418 = vunpack.c.l.b16 %v2383
    %v3419 = vunpack.c.h.b16 %v2383
    %v3420 = vunpack.c.l.b16 %v2384
    %v3421 = vunpack.c.h.b16 %v2384
    %v3422 = vunpack.c.l.b16 %v2385
    %v3423 = vunpack.c.h.b16 %v2385
    %v3424 = vunpack.c.l.b16 %v2386
    %v3425 = vunpack.c.h.b16 %v2386
    %v3426 = vunpack.c.l.b16 %v2387
    %v3427 = vunpack.c.h.b16 %v2387
    %v3428 = vunpack.c.l.b16 %v2388
    %v3429 = vunpack.c.h.b16 %v2388
    %v3430 = vunpack.c.l.b16 %v2389
    %v3431 = vunpack.c.h.b16 %v2389
    %v3432 = vunpack.c.l.b16 %v2390
    %v3433 = vunpack.c.h.b16 %v2390
    %v3434 = vunpack.c.l.b16 %v2391
    %v3435 = vunpack.c.h.b16 %v2391
    %v3436 = vunpack.c.l.b16 %v2392
    %v3437 = vunpack.c.h.b16 %v2392
    %v3438 = vunpack.c.l.b16 %v2393
    %v3439 = vunpack.c.h.b16 %v2393
    %v3440 = vunpack.c.l.b16 %v2394
    %v3441 = vunpack.c.h.b16 %v2394
    %v3442 = vunpack.c.l.b16 %v2395
    %v3443 = vunpack.c.h.b16 %v2395
    %v3444 = vunpack.c.l.b16 %v2396
    %v3445 = vunpack.c.h.b16 %v2396
    %v3446 = vunpack.c.l.b16 %v2397
    %v3447 = vunpack.c.h.b16 %v2397
    %v3448 = vunpack.c.l.b16 %v2398
    %v3449 = vunpack.c.h.b16 %v2398
    %v3450 = vunpack.c.l.b16 %v2399
    %v3451 = vunpack.c.h.b16 %v2399
    %v3452 = vunpack.c.l.b16 %v2400
    %v3453 = vunpack.c.h.b16 %v2400
    %v3454 = vunpack.c.l.b16 %v2401
    %v3455 = vunpack.c.h.b16 %v2401
    %v3456 = vunpack.c.l.b16 %v2402
    %v3457 = vunpack.c.h.b16 %v2402
    %v3458 = vunpack.c.l.b16 %v2403
    %v3459 = vunpack.c.h.b16 %v2403
    %v3460 = vunpack.c.l.b16 %v2404
    %v3461 = vunpack.c.h.b16 %v2404
    %v3462 = vunpack.c.l.b16 %v2405
    %v3463 = vunpack.c.h.b16 %v2405
    %v3464 = vunpack.c.l.b16 %v2406
    %v3465 = vunpack.c.h.b16 %v2406
    %v3466 = vunpack.c.l.b16 %v2407
    %v3467 = vunpack.c.h.b16 %v2407
    %v3468 = vunpack.c.l.b16 %v2408
    %v3469 = vunpack.c.h.b16 %v2408
    %v3470 = vunpack.c.l.b16 %v2409
    %v3471 = vunpack.c.h.b16 %v2409
    %v3472 = vunpack.c.l.b16 %v2410
    %v3473 = vunpack.c.h.b16 %v2410
    %v3474 = vunpack.c.l.b16 %v2411
    %v3475 = vunpack.c.h.b16 %v2411
    %v3476 = vunpack.c.l.b16 %v2412
    %v3477 = vunpack.c.h.b16 %v2412
    %v3478 = vunpack.c.l.b16 %v2413
    %v3479 = vunpack.c.h.b16 %v2413
    %v3480 = vunpack.c.l.b16 %v2414
    %v3481 = vunpack.c.h.b16 %v2414
    %v3482 = vunpack.c.l.b16 %v2415
    %v3483 = vunpack.c.h.b16 %v2415
    %v3484 = vunpack.c.l.b16 %v2416
    %v3485 = vunpack.c.h.b16 %v2416
    %v3486 = vunpack.c.l.b16 %v2417
    %v3487 = vunpack.c.h.b16 %v2417
    %v3488 = vunpack.c.l.b16 %v2418
    %v3489 = vunpack.c.h.b16 %v2418
    %v3490 = vunpack.c.l.b16 %v2419
    %v3491 = vunpack.c.h.b16 %v2419
    %v3492 = vunpack.c.l.b16 %v2420
    %v3493 = vunpack.c.h.b16 %v2420
    %v3494 = vunpack.c.l.b16 %v2421
    %v3495 = vunpack.c.h.b16 %v2421
    %v3496 = vunpack.c.l.b16 %v2422
    %v3497 = vunpack.c.h.b16 %v2422
    %v3498 = vunpack.c.l.b16 %v2423
    %v3499 = vunpack.c.h.b16 %v2423
    %v3500 = vunpack.c.l.b16 %v2424
    %v3501 = vunpack.c.h.b16 %v2424
    %v3502 = vunpack.c.l.b16 %v2425
    %v3503 = vunpack.c.h.b16 %v2425
    %v3504 = vunpack.c.l.b16 %v2426
    %v3505 = vunpack.c.h.b16 %v2426
    %v3506 = vunpack.c.l.b16 %v2427
    %v3507 = vunpack.c.h.b16 %v2427
    %v3508 = vunpack.c.l.b16 %v2428
    %v3509 = vunpack.c.h.b16 %v2428
    %v3510 = vunpack.c.l.b16 %v2429
    %v3511 = vunpack.c.h.b16 %v2429
    %v3512 = vunpack.c.l.b16 %v2430
    %v3513 = vunpack.c.h.b16 %v2430
    %v3514 = vunpack.c.l.b16 %v2431
    %v3515 = vunpack.c.h.b16 %v2431
    %v3516 = vunpack.c.l.b16 %v2432
    %v3517 = vunpack.c.h.b16 %v2432
    %v3518 = vunpack.c.l.b16 %v2433
    %v3519 = vunpack.c.h.b16 %v2433
    %v3520 = vunpack.c.l.b16 %v2434
    %v3521 = vunpack.c.h.b16 %v2434
    %v3522 = vunpack.c.l.b16 %v2435
    %v3523 = vunpack.c.h.b16 %v2435
    %v3524 = vunpack.c.l.b16 %v2436
    %v3525 = vunpack.c.h.b16 %v2436
    %v3526 = vunpack.c.l.b16 %v2437
    %v3527 = vunpack.c.h.b16 %v2437
    %v3528 = vunpack.c.l.b16 %v2438
    %v3529 = vunpack.c.h.b16 %v2438
    %v3530 = vunpack.c.l.b16 %v2439
    %v3531 = vunpack.c.h.b16 %v2439
    %v3532 = vunpack.c.l.b16 %v2440
    %v3533 = vunpack.c.h.b16 %v2440
    %v3534 = vunpack.c.l.b16 %v2441
    %v3535 = vunpack.c.h.b16 %v2441
    %v3536 = vunpack.c.l.b16 %v2442
    %v3537 = vunpack.c.h.b16 %v2442
    %v3538 = vunpack.c.l.b16 %v2443
    %v3539 = vunpack.c.h.b16 %v2443
    %v3540 = vunpack.c.l.b16 %v2444
    %v3541 = vunpack.c.h.b16 %v2444
    %v3542 = vunpack.c.l.b16 %v2445
    %v3543 = vunpack.c.h.b16 %v2445
    %v3544 = vunpack.c.l.b16 %v2446
    %v3545 = vunpack.c.h.b16 %v2446
    %v3546 = vunpack.c.l.b16 %v2447
    %v3547 = vunpack.c.h.b16 %v2447
    %v3548 = vunpack.c.l.b16 %v2448
    %v3549 = vunpack.c.h.b16 %v2448
    %v3550 = vunpack.c.l.b16 %v2449
    %v3551 = vunpack.c.h.b16 %v2449
    %v3552 = vunpack.c.l.b16 %v2450
    %v3553 = vunpack.c.h.b16 %v2450
    %v3554 = vunpack.c.l.b16 %v2451
    %v3555 = vunpack.c.h.b16 %v2451
    %v3556 = vunpack.c.l.b16 %v2452
    %v3557 = vunpack.c.h.b16 %v2452
    %v3558 = vunpack.c.l.b16 %v2453
    %v3559 = vunpack.c.h.b16 %v2453
    %v3560 = vunpack.c.l.b16 %v2454
    %v3561 = vunpack.c.h.b16 %v2454
    %v3562 = vunpack.c.l.b16 %v2455
    %v3563 = vunpack.c.h.b16 %v2455
    %v3564 = vunpack.c.l.b16 %v2456
    %v3565 = vunpack.c.h.b16 %v2456
    %v3566 = vunpack.c.l.b16 %v2457
    %v3567 = vunpack.c.h.b16 %v2457
    %v3568 = vunpack.c.l.b16 %v2458
    %v3569 = vunpack.c.h.b16 %v2458
    %v3570 = vunpack.c.l.b16 %v2459
    %v3571 = vunpack.c.h.b16 %v2459
    %v3572 = vunpack.c.l.b16 %v2460
    %v3573 = vunpack.c.h.b16 %v2460
    %v3574 = vunpack.c.l.b16 %v2461
    %v3575 = vunpack.c.h.b16 %v2461
    %v3576 = vunpack.c.l.b16 %v2462
    %v3577 = vunpack.c.h.b16 %v2462
    %v3578 = vunpack.c.l.b16 %v2463
    %v3579 = vunpack.c.h.b16 %v2463
    %v3580 = vunpack.c.l.b16 %v2464
    %v3581 = vunpack.c.h.b16 %v2464
    %v3582 = vunpack.c.l.b16 %v2465
    %v3583 = vunpack.c.h.b16 %v2465
    %v3584 = vunpack.c.l.b16 %v2466
    %v3585 = vunpack.c.h.b16 %v2466
    %v3586 = vunpack.c.l.b16 %v2467
    %v3587 = vunpack.c.h.b16 %v2467
    %v3588 = vunpack.c.l.b16 %v2468
    %v3589 = vunpack.c.h.b16 %v2468
    %v3590 = vunpack.c.l.b16 %v2469
    %v3591 = vunpack.c.h.b16 %v2469
    %v3592 = vunpack.c.l.b16 %v2470
    %v3593 = vunpack.c.h.b16 %v2470
    %v3594 = vunpack.c.l.b16 %v2471
    %v3595 = vunpack.c.h.b16 %v2471
    %v3596 = vunpack.c.l.b16 %v2472
    %v3597 = vunpack.c.h.b16 %v2472
    %v3598 = vunpack.c.l.b16 %v2473
    %v3599 = vunpack.c.h.b16 %v2473
    %v3600 = vunpack.c.l.b16 %v2474
    %v3601 = vunpack.c.h.b16 %v2474
    %v3602 = vunpack.c.l.b16 %v2475
    %v3603 = vunpack.c.h.b16 %v2475
    %v3604 = vunpack.c.l.b16 %v2476
    %v3605 = vunpack.c.h.b16 %v2476
    %v3606 = vunpack.c.l.b16 %v2477
    %v3607 = vunpack.c.h.b16 %v2477
    %v3608 = vunpack.c.l.b16 %v2478
    %v3609 = vunpack.c.h.b16 %v2478
    %v3610 = vunpack.c.l.b16 %v2479
    %v3611 = vunpack.c.h.b16 %v2479
    %v3612 = vunpack.c.l.b16 %v2480
    %v3613 = vunpack.c.h.b16 %v2480
    %v3614 = vunpack.c.l.b16 %v2481
    %v3615 = vunpack.c.h.b16 %v2481
    %v3616 = vunpack.c.l.b16 %v2482
    %v3617 = vunpack.c.h.b16 %v2482
    %v3618 = vunpack.c.l.b16 %v2483
    %v3619 = vunpack.c.h.b16 %v2483
    %v3620 = vunpack.c.l.b16 %v2484
    %v3621 = vunpack.c.h.b16 %v2484
    %v3622 = vunpack.c.l.b16 %v2485
    %v3623 = vunpack.c.h.b16 %v2485
    %v3624 = vunpack.c.l.b16 %v2486
    %v3625 = vunpack.c.h.b16 %v2486
    %v3626 = vunpack.c.l.b16 %v2487
    %v3627 = vunpack.c.h.b16 %v2487
    %v3628 = vunpack.c.l.b16 %v2488
    %v3629 = vunpack.c.h.b16 %v2488
    %v3630 = vunpack.c.l.b16 %v2489
    %v3631 = vunpack.c.h.b16 %v2489
    %v3632 = vunpack.c.l.b16 %v2490
    %v3633 = vunpack.c.h.b16 %v2490
    %v3634 = vunpack.c.l.b16 %v2491
    %v3635 = vunpack.c.h.b16 %v2491
    %v3636 = vunpack.c.l.b16 %v2492
    %v3637 = vunpack.c.h.b16 %v2492
    %v3638 = vunpack.c.l.b16 %v2493
    %v3639 = vunpack.c.h.b16 %v2493
    %v3640 = vunpack.c.l.b16 %v2494
    %v3641 = vunpack.c.h.b16 %v2494
    %v3642 = vunpack.c.l.b16 %v2495
    %v3643 = vunpack.c.h.b16 %v2495
    %v3644 = vunpack.c.l.b16 %v2496
    %v3645 = vunpack.c.h.b16 %v2496
    %v3646 = vunpack.c.l.b16 %v2497
    %v3647 = vunpack.c.h.b16 %v2497
    %v3648 = vunpack.c.l.b16 %v2498
    %v3649 = vunpack.c.h.b16 %v2498
    %v3650 = vunpack.c.l.b16 %v2499
    %v3651 = vunpack.c.h.b16 %v2499
    %v3652 = vpack.c.b16 %v2890, %v2884
    %v3653 = vpack.c.b16 %v2891, %v2885
    %v3654 = vpack.c.b16 %v2892, %v2886
    %v3655 = vpack.c.b16 %v2893, %v2887
    %v3656 = vpack.c.b16 %v2894, %v2888
    %v3657 = vpack.c.b16 %v2895, %v2889
    %v3658 = vpack.c.b16 %v2902, %v2896
    %v3659 = vpack.c.b16 %v2903, %v2897
    %v3660 = vpack.c.b16 %v2904, %v2898
    %v3661 = vpack.c.b16 %v2905, %v2899
    %v3662 = vpack.c.b16 %v2906, %v2900
    %v3663 = vpack.c.b16 %v2907, %v2901
    %v3664 = vpack.c.b16 %v2914, %v2908
    %v3665 = vpack.c.b16 %v2915, %v2909
    %v3666 = vpack.c.b16 %v2916, %v2910
    %v3667 = vpack.c.b16 %v2917, %v2911
    %v3668 = vpack.c.b16 %v2918, %v2912
    %v3669 = vpack.c.b16 %v2919, %v2913
    %v3670 = vpack.c.b16 %v2926, %v2920
    %v3671 = vpack.c.b16 %v2927, %v2921
    %v3672 = vpack.c.b16 %v2928, %v2922
    %v3673 = vpack.c.b16 %v2929, %v2923
    %v3674 = vpack.c.b16 %v2930, %v2924
    %v3675 = vpack.c.b16 %v2931, %v2925
    %v3676 = vpack.c.b16 %v2938, %v2932
    %v3677 = vpack.c.b16 %v2939, %v2933
    %v3678 = vpack.c.b16 %v2940, %v2934
    %v3679 = vpack.c.b16 %v2941, %v2935
    %v3680 = vpack.c.b16 %v2942, %v2936
    %v3681 = vpack.c.b16 %v2943, %v2937
    %v3682 = vpack.c.b16 %v2950, %v2944
    %v3683 = vpack.c.b16 %v2951, %v2945
    %v3684 = vpack.c.b16 %v2952, %v2946
    %v3685 = vpack.c.b16 %v2953, %v2947
    %v3686 = vpack.c.b16 %v2954, %v2948
    %v3687 = vpack.c.b16 %v2955, %v2949
    %v3688 = vpack.c.b16 %v2962, %v2956
    %v3689 = vpack.c.b16 %v2963, %v2957
    %v3690 = vpack.c.b16 %v2964, %v2958
    %v3691 = vpack.c.b16 %v2965, %v2959
    %v3692 = vpack.c.b16 %v2966, %v2960
    %v3693 = vpack.c.b16 %v2967, %v2961
    %v3694 = vpack.c.b16 %v2974, %v2968
    %v3695 = vpack.c.b16 %v2975, %v2969
    %v3696 = vpack.c.b16 %v2976, %v2970
    %v3697 = vpack.c.b16 %v2977, %v2971
    %v3698 = vpack.c.b16 %v2978, %v2972
    %v3699 = vpack.c.b16 %v2979, %v2973
    %v3700 = vpack.c.b16 %v2986, %v2980
    %v3701 = vpack.c.b16 %v2987, %v2981
    %v3702 = vpack.c.b16 %v2988, %v2982
    %v3703 = vpack.c.b16 %v2989, %v2983
    %v3704 = vpack.c.b16 %v2990, %v2984
    %v3705 = vpack.c.b16 %v2991, %v2985
    %v3706 = vpack.c.b16 %v2998, %v2992
    %v3707 = vpack.c.b16 %v2999, %v2993
    %v3708 = vpack.c.b16 %v3000, %v2994
    %v3709 = vpack.c.b16 %v3001, %v2995
    %v3710 = vpack.c.b16 %v3002, %v2996
    %v3711 = vpack.c.b16 %v3003, %v2997
    %v3712 = vpack.c.b16 %v3010, %v3004
    %v3713 = vpack.c.b16 %v3011, %v3005
    %v3714 = vpack.c.b16 %v3012, %v3006
    %v3715 = vpack.c.b16 %v3013, %v3007
    %v3716 = vpack.c.b16 %v3014, %v3008
    %v3717 = vpack.c.b16 %v3015, %v3009
    %v3718 = vpack.c.b16 %v3022, %v3016
    %v3719 = vpack.c.b16 %v3023, %v3017
    %v3720 = vpack.c.b16 %v3024, %v3018
    %v3721 = vpack.c.b16 %v3025, %v3019
    %v3722 = vpack.c.b16 %v3026, %v3020
    %v3723 = vpack.c.b16 %v3027, %v3021
    %v3724 = vpack.c.b16 %v3034, %v3028
    %v3725 = vpack.c.b16 %v3035, %v3029
    %v3726 = vpack.c.b16 %v3036, %v3030
    %v3727 = vpack.c.b16 %v3037, %v3031
    %v3728 = vpack.c.b16 %v3038, %v3032
    %v3729 = vpack.c.b16 %v3039, %v3033
    %v3730 = vpack.c.b16 %v3046, %v3040
    %v3731 = vpack.c.b16 %v3047, %v3041
    %v3732 = vpack.c.b16 %v3048, %v3042
    %v3733 = vpack.c.b16 %v3049, %v3043
    %v3734 = vpack.c.b16 %v3050, %v3044
    %v3735 = vpack.c.b16 %v3051, %v3045
    %v3736 = vpack.c.b16 %v3058, %v3052
    %v3737 = vpack.c.b16 %v3059, %v3053
    %v3738 = vpack.c.b16 %v3060, %v3054
    %v3739 = vpack.c.b16 %v3061, %v3055
    %v3740 = vpack.c.b16 %v3062, %v3056
    %v3741 = vpack.c.b16 %v3063, %v3057
    %v3742 = vpack.c.b16 %v3070, %v3064
    %v3743 = vpack.c.b16 %v3071, %v3065
    %v3744 = vpack.c.b16 %v3072, %v3066
    %v3745 = vpack.c.b16 %v3073, %v3067
    %v3746 = vpack.c.b16 %v3074, %v3068
    %v3747 = vpack.c.b16 %v3075, %v3069
    %v3748 = vpack.c.b16 %v3082, %v3076
    %v3749 = vpack.c.b16 %v3083, %v3077
    %v3750 = vpack.c.b16 %v3084, %v3078
    %v3751 = vpack.c.b16 %v3085, %v3079
    %v3752 = vpack.c.b16 %v3086, %v3080
    %v3753 = vpack.c.b16 %v3087, %v3081
    %v3754 = vpack.c.b16 %v3094, %v3088
    %v3755 = vpack.c.b16 %v3095, %v3089
    %v3756 = vpack.c.b16 %v3096, %v3090
    %v3757 = vpack.c.b16 %v3097, %v3091
    %v3758 = vpack.c.b16 %v3098, %v3092
    %v3759 = vpack.c.b16 %v3099, %v3093
    %v3760 = vpack.c.b16 %v3106, %v3100
    %v3761 = vpack.c.b16 %v3107, %v3101
    %v3762 = vpack.c.b16 %v3108, %v3102
    %v3763 = vpack.c.b16 %v3109, %v3103
    %v3764 = vpack.c.b16 %v3110, %v3104
    %v3765 = vpack.c.b16 %v3111, %v3105
    %v3766 = vpack.c.b16 %v3118, %v3112
    %v3767 = vpack.c.b16 %v3119, %v3113
    %v3768 = vpack.c.b16 %v3120, %v3114
    %v3769 = vpack.c.b16 %v3121, %v3115
    %v3770 = vpack.c.b16 %v3122, %v3116
    %v3771 = vpack.c.b16 %v3123, %v3117
    %v3772 = vpack.c.b16 %v3130, %v3124
    %v3773 = vpack.c.b16 %v3131, %v3125
    %v3774 = vpack.c.b16 %v3132, %v3126
    %v3775 = vpack.c.b16 %v3133, %v3127
    %v3776 = vpack.c.b16 %v3134, %v3128
    %v3777 = vpack.c.b16 %v3135, %v3129
    %v3778 = vpack.c.b16 %v3142, %v3136
    %v3779 = vpack.c.b16 %v3143, %v3137
    %v3780 = vpack.c.b16 %v3144, %v3138
    %v3781 = vpack.c.b16 %v3145, %v3139
    %v3782 = vpack.c.b16 %v3146, %v3140
    %v3783 = vpack.c.b16 %v3147, %v3141
    %v3784 = vpack.c.b16 %v3154, %v3148
    %v3785 = vpack.c.b16 %v3155, %v3149
    %v3786 = vpack.c.b16 %v3156, %v3150
    %v3787 = vpack.c.b16 %v3157, %v3151
    %v3788 = vpack.c.b16 %v3158, %v3152
    %v3789 = vpack.c.b16 %v3159, %v3153
    %v3790 = vpack.c.b16 %v3166, %v3160
    %v3791 = vpack.c.b16 %v3167, %v3161
    %v3792 = vpack.c.b16 %v3168, %v3162
    %v3793 = vpack.c.b16 %v3169, %v3163
    %v3794 = vpack.c.b16 %v3170, %v3164
    %v3795 = vpack.c.b16 %v3171, %v3165
    %v3796 = vpack.c.b16 %v3178, %v3172
    %v3797 = vpack.c.b16 %v3179, %v3173
    %v3798 = vpack.c.b16 %v3180, %v3174
    %v3799 = vpack.c.b16 %v3181, %v3175
    %v3800 = vpack.c.b16 %v3182, %v3176
    %v3801 = vpack.c.b16 %v3183, %v3177
    %v3802 = vpack.c.b16 %v3190, %v3184
    %v3803 = vpack.c.b16 %v3191, %v3185
    %v3804 = vpack.c.b16 %v3192, %v3186
    %v3805 = vpack.c.b16 %v3193, %v3187
    %v3806 = vpack.c.b16 %v3194, %v3188
    %v3807 = vpack.c.b16 %v3195, %v3189
    %v3808 = vpack.c.b16 %v3202, %v3196
    %v3809 = vpack.c.b16 %v3203, %v3197
    %v3810 = vpack.c.b16 %v3204, %v3198
    %v3811 = vpack.c.b16 %v3205, %v3199
    %v3812 = vpack.c.b16 %v3206, %v3200
    %v3813 = vpack.c.b16 %v3207, %v3201
    %v3814 = vpack.c.b16 %v3214, %v3208
    %v3815 = vpack.c.b16 %v3215, %v3209
    %v3816 = vpack.c.b16 %v3216, %v3210
    %v3817 = vpack.c.b16 %v3217, %v3211
    %v3818 = vpack.c.b16 %v3218, %v3212
    %v3819 = vpack.c.b16 %v3219, %v3213
    %v3820 = vpack.c.b16 %v3226, %v3220
    %v3821 = vpack.c.b16 %v3227, %v3221
    %v3822 = vpack.c.b16 %v3228, %v3222
    %v3823 = vpack.c.b16 %v3229, %v3223
    %v3824 = vpack.c.b16 %v3230, %v3224
    %v3825 = vpack.c.b16 %v3231, %v3225
    %v3826 = vpack.c.b16 %v3238, %v3232
    %v3827 = vpack.c.b16 %v3239, %v3233
    %v3828 = vpack.c.b16 %v3240, %v3234
    %v3829 = vpack.c.b16 %v3241, %v3235
    %v3830 = vpack.c.b16 %v3242, %v3236
    %v3831 = vpack.c.b16 %v3243, %v3237
    %v3832 = vpack.c.b16 %v3250, %v3244
    %v3833 = vpack.c.b16 %v3251, %v3245
    %v3834 = vpack.c.b16 %v3252, %v3246
    %v3835 = vpack.c.b16 %v3253, %v3247
    %v3836 = vpack.c.b16 %v3254, %v3248
    %v3837 = vpack.c.b16 %v3255, %v3249
    %v3838 = vpack.c.b16 %v3262, %v3256
    %v3839 = vpack.c.b16 %v3263, %v3257
    %v3840 = vpack.c.b16 %v3264, %v3258
    %v3841 = vpack.c.b16 %v3265, %v3259
    %v3842 = vpack.c.b16 %v3266, %v3260
    %v3843 = vpack.c.b16 %v3267, %v3261
    %v3844 = vpack.c.b16 %v3274, %v3268
    %v3845 = vpack.c.b16 %v3275, %v3269
    %v3846 = vpack.c.b16 %v3276, %v3270
    %v3847 = vpack.c.b16 %v3277, %v3271
    %v3848 = vpack.c.b16 %v3278, %v3272
    %v3849 = vpack.c.b16 %v3279, %v3273
    %v3850 = vpack.c.b16 %v3286, %v3280
    %v3851 = vpack.c.b16 %v3287, %v3281
    %v3852 = vpack.c.b16 %v3288, %v3282
    %v3853 = vpack.c.b16 %v3289, %v3283
    %v3854 = vpack.c.b16 %v3290, %v3284
    %v3855 = vpack.c.b16 %v3291, %v3285
    %v3856 = vpack.c.b16 %v3298, %v3292
    %v3857 = vpack.c.b16 %v3299, %v3293
    %v3858 = vpack.c.b16 %v3300, %v3294
    %v3859 = vpack.c.b16 %v3301, %v3295
    %v3860 = vpack.c.b16 %v3302, %v3296
    %v3861 = vpack.c.b16 %v3303, %v3297
    %v3862 = vpack.c.b16 %v3310, %v3304
    %v3863 = vpack.c.b16 %v3311, %v3305
    %v3864 = vpack.c.b16 %v3312, %v3306
    %v3865 = vpack.c.b16 %v3313, %v3307
    %v3866 = vpack.c.b16 %v3314, %v3308
    %v3867 = vpack.c.b16 %v3315, %v3309
    %v3868 = vpack.c.b16 %v3322, %v3316
    %v3869 = vpack.c.b16 %v3323, %v3317
    %v3870 = vpack.c.b16 %v3324, %v3318
    %v3871 = vpack.c.b16 %v3325, %v3319
    %v3872 = vpack.c.b16 %v3326, %v3320
    %v3873 = vpack.c.b16 %v3327, %v3321
    %v3874 = vpack.c.b16 %v3334, %v3328
    %v3875 = vpack.c.b16 %v3335, %v3329
    %v3876 = vpack.c.b16 %v3336, %v3330
    %v3877 = vpack.c.b16 %v3337, %v3331
    %v3878 = vpack.c.b16 %v3338, %v3332
    %v3879 = vpack.c.b16 %v3339, %v3333
    %v3880 = vpack.c.b16 %v3346, %v3340
    %v3881 = vpack.c.b16 %v3347, %v3341
    %v3882 = vpack.c.b16 %v3348, %v3342
    %v3883 = vpack.c.b16 %v3349, %v3343
    %v3884 = vpack.c.b16 %v3350, %v3344
    %v3885 = vpack.c.b16 %v3351, %v3345
    %v3886 = vpack.c.b16 %v3358, %v3352
    %v3887 = vpack.c.b16 %v3359, %v3353
    %v3888 = vpack.c.b16 %v3360, %v3354
    %v3889 = vpack.c.b16 %v3361, %v3355
    %v3890 = vpack.c.b16 %v3362, %v3356
    %v3891 = vpack.c.b16 %v3363, %v3357
    %v3892 = vpack.c.b16 %v3370, %v3364
    %v3893 = vpack.c.b16 %v3371, %v3365
    %v3894 = vpack.c.b16 %v3372, %v3366
    %v3895 = vpack.c.b16 %v3373, %v3367
    %v3896 = vpack.c.b16 %v3374, %v3368
    %v3897 = vpack.c.b16 %v3375, %v3369
    %v3898 = vpack.c.b16 %v3382, %v3376
    %v3899 = vpack.c.b16 %v3383, %v3377
    %v3900 = vpack.c.b16 %v3384, %v3378
    %v3901 = vpack.c.b16 %v3385, %v3379
    %v3902 = vpack.c.b16 %v3386, %v3380
    %v3903 = vpack.c.b16 %v3387, %v3381
    %v3904 = vpack.c.b16 %v3394, %v3388
    %v3905 = vpack.c.b16 %v3395, %v3389
    %v3906 = vpack.c.b16 %v3396, %v3390
    %v3907 = vpack.c.b16 %v3397, %v3391
    %v3908 = vpack.c.b16 %v3398, %v3392
    %v3909 = vpack.c.b16 %v3399, %v3393
    %v3910 = vpack.c.b16 %v3406, %v3400
    %v3911 = vpack.c.b16 %v3407, %v3401
    %v3912 = vpack.c.b16 %v3408, %v3402
    %v3913 = vpack.c.b16 %v3409, %v3403
    %v3914 = vpack.c.b16 %v3410, %v3404
    %v3915 = vpack.c.b16 %v3411, %v3405
    %v3916 = vpack.c.b16 %v3418, %v3412
    %v3917 = vpack.c.b16 %v3419, %v3413
    %v3918 = vpack.c.b16 %v3420, %v3414
    %v3919 = vpack.c.b16 %v3421, %v3415
    %v3920 = vpack.c.b16 %v3422, %v3416
    %v3921 = vpack.c.b16 %v3423, %v3417
    %v3922 = vpack.c.b16 %v3430, %v3424
    %v3923 = vpack.c.b16 %v3431, %v3425
    %v3924 = vpack.c.b16 %v3432, %v3426
    %v3925 = vpack.c.b16 %v3433, %v3427
    %v3926 = vpack.c.b16 %v3434, %v3428
    %v3927 = vpack.c.b16 %v3435, %v3429
    %v3928 = vpack.c.b16 %v3442, %v3436
    %v3929 = vpack.c.b16 %v3443, %v3437
    %v3930 = vpack.c.b16 %v3444, %v3438
    %v3931 = vpack.c.b16 %v3445, %v3439
    %v3932 = vpack.c.b16 %v3446, %v3440
    %v3933 = vpack.c.b16 %v3447, %v3441
    %v3934 = vpack.c.b16 %v3454, %v3448
    %v3935 = vpack.c.b16 %v3455, %v3449
    %v3936 = vpack.c.b16 %v3456, %v3450
    %v3937 = vpack.c.b16 %v3457, %v3451
    %v3938 = vpack.c.b16 %v3458, %v3452
    %v3939 = vpack.c.b16 %v3459, %v3453
    %v3940 = vpack.c.b16 %v3466, %v3460
    %v3941 = vpack.c.b16 %v3467, %v3461
    %v3942 = vpack.c.b16 %v3468, %v3462
    %v3943 = vpack.c.b16 %v3469, %v3463
    %v3944 = vpack.c.b16 %v3470, %v3464
    %v3945 = vpack.c.b16 %v3471, %v3465
    %v3946 = vpack.c.b16 %v3478, %v3472
    %v3947 = vpack.c.b16 %v3479, %v3473
    %v3948 = vpack.c.b16 %v3480, %v3474
    %v3949 = vpack.c.b16 %v3481, %v3475
    %v3950 = vpack.c.b16 %v3482, %v3476
    %v3951 = vpack.c.b16 %v3483, %v3477
    %v3952 = vpack.c.b16 %v3490, %v3484
    %v3953 = vpack.c.b16 %v3491, %v3485
    %v3954 = vpack.c.b16 %v3492, %v3486
    %v3955 = vpack.c.b16 %v3493, %v3487
    %v3956 = vpack.c.b16 %v3494, %v3488
    %v3957 = vpack.c.b16 %v3495, %v3489
    %v3958 = vpack.c.b16 %v3502, %v3496
    %v3959 = vpack.c.b16 %v3503, %v3497
    %v3960 = vpack.c.b16 %v3504, %v3498
    %v3961 = vpack.c.b16 %v3505, %v3499
    %v3962 = vpack.c.b16 %v3506, %v3500
    %v3963 = vpack.c.b16 %v3507, %v3501
    %v3964 = vpack.c.b16 %v3514, %v3508
    %v3965 = vpack.c.b16 %v3515, %v3509
    %v3966 = vpack.c.b16 %v3516, %v3510
    %v3967 = vpack.c.b16 %v3517, %v3511
    %v3968 = vpack.c.b16 %v3518, %v3512
    %v3969 = vpack.c.b16 %v3519, %v3513
    %v3970 = vpack.c.b16 %v3526, %v3520
    %v3971 = vpack.c.b16 %v3527, %v3521
    %v3972 = vpack.c.b16 %v3528, %v3522
    %v3973 = vpack.c.b16 %v3529, %v3523
    %v3974 = vpack.c.b16 %v3530, %v3524
    %v3975 = vpack.c.b16 %v3531, %v3525
    %v3976 = vpack.c.b16 %v3538, %v3532
    %v3977 = vpack.c.b16 %v3539, %v3533
    %v3978 = vpack.c.b16 %v3540, %v3534
    %v3979 = vpack.c.b16 %v3541, %v3535
    %v3980 = vpack.c.b16 %v3542, %v3536
    %v3981 = vpack.c.b16 %v3543, %v3537
    %v3982 = vpack.c.b16 %v3550, %v3544
    %v3983 = vpack.c.b16 %v3551, %v3545
    %v3984 = vpack.c.b16 %v3552, %v3546
    %v3985 = vpack.c.b16 %v3553, %v3547
    %v3986 = vpack.c.b16 %v3554, %v3548
    %v3987 = vpack.c.b16 %v3555, %v3549
    %v3988 = vpack.c.b16 %v3562, %v3556
    %v3989 = vpack.c.b16 %v3563, %v3557
    %v3990 = vpack.c.b16 %v3564, %v3558
    %v3991 = vpack.c.b16 %v3565, %v3559
    %v3992 = vpack.c.b16 %v3566, %v3560
    %v3993 = vpack.c.b16 %v3567, %v3561
    %v3994 = vpack.c.b16 %v3574, %v3568
    %v3995 = vpack.c.b16 %v3575, %v3569
    %v3996 = vpack.c.b16 %v3576, %v3570
    %v3997 = vpack.c.b16 %v3577, %v3571
    %v3998 = vpack.c.b16 %v3578, %v3572
    %v3999 = vpack.c.b16 %v3579, %v3573
    %v4000 = vpack.c.b16 %v3586, %v3580
    %v4001 = vpack.c.b16 %v3587, %v3581
    %v4002 = vpack.c.b16 %v3588, %v3582
    %v4003 = vpack.c.b16 %v3589, %v3583
    %v4004 = vpack.c.b16 %v3590, %v3584
    %v4005 = vpack.c.b16 %v3591, %v3585
    %v4006 = vpack.c.b16 %v3598, %v3592
    %v4007 = vpack.c.b16 %v3599, %v3593
    %v4008 = vpack.c.b16 %v3600, %v3594
    %v4009 = vpack.c.b16 %v3601, %v3595
    %v4010 = vpack.c.b16 %v3602, %v3596
    %v4011 = vpack.c.b16 %v3603, %v3597
    %v4012 = vpack.c.b16 %v3610, %v3604
    %v4013 = vpack.c.b16 %v3611, %v3605
    %v4014 = vpack.c.b16 %v3612, %v3606
    %v4015 = vpack.c.b16 %v3613, %v3607
    %v4016 = vpack.c.b16 %v3614, %v3608
    %v4017 = vpack.c.b16 %v3615, %v3609
    %v4018 = vpack.c.b16 %v3622, %v3616
    %v4019 = vpack.c.b16 %v3623, %v3617
    %v4020 = vpack.c.b16 %v3624, %v3618
    %v4021 = vpack.c.b16 %v3625, %v3619
    %v4022 = vpack.c.b16 %v3626, %v3620
    %v4023 = vpack.c.b16 %v3627, %v3621
    %v4024 = vpack.c.b16 %v3634, %v3628
    %v4025 = vpack.c.b16 %v3635, %v3629
    %v4026 = vpack.c.b16 %v3636, %v3630
    %v4027 = vpack.c.b16 %v3637, %v3631
    %v4028 = vpack.c.b16 %v3638, %v3632
    %v4029 = vpack.c.b16 %v3639, %v3633
    %v4030 = vpack.c.b16 %v3646, %v3640
    %v4031 = vpack.c.b16 %v3647, %v3641
    %v4032 = vpack.c.b16 %v3648, %v3642
    %v4033 = vpack.c.b16 %v3649, %v3643
    %v4034 = vpack.c.b16 %v3650, %v3644
    %v4035 = vpack.c.b16 %v3651, %v3645
    %4420 = vmatprep.subr.bf16.mxu0 %v3695
    %4421 = vmatpush1.bf16.msra.mxu0 %v3694
    %4422 = vmatprep.subr.bf16.mxu0 %v3689
    %4423 = vmatpush1.bf16.msra.mxu0 %v3688
    %4424 = vmatprep.subr.bf16.mxu0 %v3683
    %4425 = vmatpush1.bf16.msra.mxu0 %v3682
    %4426 = vmatprep.subr.bf16.mxu0 %v3677
    %4427 = vmatpush1.bf16.msra.mxu0 %v3676
    %4428 = vmatprep.subr.bf16.mxu0 %v3671
    %4429 = vmatpush1.bf16.msra.mxu0 %v3670
    %4430 = vmatprep.subr.bf16.mxu0 %v3665
    %4431 = vmatpush1.bf16.msra.mxu0 %v3664
    %4432 = vmatprep.subr.bf16.mxu0 %v3659
    %4433 = vmatpush1.bf16.msra.mxu0 %v3658
    %4434 = vmatprep.subr.bf16.mxu0 %v3653
    %4435 = vmatpush1.bf16.msra.mxu0 %v3652
    %4436 = vmatprep.subr.bf16.mxu0 %v3743
    %4437 = vmatpush2.bf16.msra.mxu0 %v3742
    %4438 = vmatprep.subr.bf16.mxu0 %v3737
    %4439 = vmatpush2.bf16.msra.mxu0 %v3736
    %4440 = vmatprep.subr.bf16.mxu0 %v3731
    %4441 = vmatpush2.bf16.msra.mxu0 %v3730
    %4442 = vmatprep.subr.bf16.mxu0 %v3725
    %4443 = vmatpush2.bf16.msra.mxu0 %v3724
    %4444 = vmatprep.subr.bf16.mxu0 %v3719
    %4445 = vmatpush2.bf16.msra.mxu0 %v3718
    %4446 = vmatprep.subr.bf16.mxu0 %v3713
    %4447 = vmatpush2.bf16.msra.mxu0 %v3712
    %4448 = vmatprep.subr.bf16.mxu0 %v3707
    %4449 = vmatpush2.bf16.msra.mxu0 %v3706
    %4450 = vmatprep.subr.bf16.mxu0 %v3701
    %4451 = vmatpush2.bf16.msra.mxu0 %v3700
    %4452 = vmatprep.mubr.bf16.mxu0 %v1989
    %4453 = vmatmul.mubr.bf16.gmra.mxu0 %v1988
    %v4454 = vpop.f32.mrf.mxu0
    %v4455 = vadd.f32 0.0, %v4454
    %v4456 = vpop.f32.mrf.mxu0
    %v4457 = vadd.f32 0.0, %v4456
    %v4458 = vpop.f32.mrf.mxu0
    %v4459 = vadd.f32 0.0, %v4458
    %v4460 = vpop.f32.mrf.mxu0
    %v4461 = vadd.f32 0.0, %v4460
    %4462 = vmatprep.mubr.bf16.mxu0 %v1997
    %4463 = vmatmul.mubr.bf16.gmra.mxu0 %v1996
    %v4464 = vpop.f32.mrf.mxu0
    %v4465 = vadd.f32 0.0, %v4464
    %v4466 = vpop.f32.mrf.mxu0
    %v4467 = vadd.f32 0.0, %v4466
    %v4468 = vpop.f32.mrf.mxu0
    %v4469 = vadd.f32 0.0, %v4468
    %v4470 = vpop.f32.mrf.mxu0
    %v4471 = vadd.f32 0.0, %v4470
    %4472 = vmatprep.mubr.bf16.mxu0 %v2005
    %4473 = vmatmul.mubr.bf16.gmra.mxu0 %v2004
    %v4474 = vpop.f32.mrf.mxu0
    %v4475 = vadd.f32 0.0, %v4474
    %v4476 = vpop.f32.mrf.mxu0
    %v4477 = vadd.f32 0.0, %v4476
    %v4478 = vpop.f32.mrf.mxu0
    %v4479 = vadd.f32 0.0, %v4478
    %v4480 = vpop.f32.mrf.mxu0
    %v4481 = vadd.f32 0.0, %v4480
    %4482 = vmatprep.mubr.bf16.mxu0 %v2013
    %4483 = vmatmul.mubr.bf16.gmra.mxu0 %v2012
    %v4484 = vpop.f32.mrf.mxu0
    %v4485 = vadd.f32 0.0, %v4484
    %v4486 = vpop.f32.mrf.mxu0
    %v4487 = vadd.f32 0.0, %v4486
    %v4488 = vpop.f32.mrf.mxu0
    %v4489 = vadd.f32 0.0, %v4488
    %v4490 = vpop.f32.mrf.mxu0
    %v4491 = vadd.f32 0.0, %v4490
    %4492 = vmatprep.mubr.bf16.mxu0 %v2021
    %4493 = vmatmul.mubr.bf16.gmra.mxu0 %v2020
    %v4494 = vpop.f32.mrf.mxu0
    %v4495 = vadd.f32 0.0, %v4494
    %v4496 = vpop.f32.mrf.mxu0
    %v4497 = vadd.f32 0.0, %v4496
    %v4498 = vpop.f32.mrf.mxu0
    %v4499 = vadd.f32 0.0, %v4498
    %v4500 = vpop.f32.mrf.mxu0
    %v4501 = vadd.f32 0.0, %v4500
    %4502 = vmatprep.mubr.bf16.mxu0 %v2029
    %4503 = vmatmul.mubr.bf16.gmra.mxu0 %v2028
    %v4504 = vpop.f32.mrf.mxu0
    %v4505 = vadd.f32 0.0, %v4504
    %v4506 = vpop.f32.mrf.mxu0
    %v4507 = vadd.f32 0.0, %v4506
    %v4508 = vpop.f32.mrf.mxu0
    %v4509 = vadd.f32 0.0, %v4508
    %v4510 = vpop.f32.mrf.mxu0
    %v4511 = vadd.f32 0.0, %v4510
    %4512 = vmatprep.mubr.bf16.mxu0 %v2037
    %4513 = vmatmul.mubr.bf16.gmra.mxu0 %v2036
    %v4514 = vpop.f32.mrf.mxu0
    %v4515 = vadd.f32 0.0, %v4514
    %v4516 = vpop.f32.mrf.mxu0
    %v4517 = vadd.f32 0.0, %v4516
    %v4518 = vpop.f32.mrf.mxu0
    %v4519 = vadd.f32 0.0, %v4518
    %v4520 = vpop.f32.mrf.mxu0
    %v4521 = vadd.f32 0.0, %v4520
    %4522 = vmatprep.mubr.bf16.mxu0 %v2045
    %4523 = vmatmul.mubr.bf16.gmra.mxu0 %v2044
    %v4524 = vpop.f32.mrf.mxu0
    %v4525 = vadd.f32 0.0, %v4524
    %v4526 = vpop.f32.mrf.mxu0
    %v4527 = vadd.f32 0.0, %v4526
    %v4528 = vpop.f32.mrf.mxu0
    %v4529 = vadd.f32 0.0, %v4528
    %v4530 = vpop.f32.mrf.mxu0
    %v4531 = vadd.f32 0.0, %v4530
    %4532 = vmatprep.mubr.bf16.mxu0 %v2053
    %4533 = vmatmul.mubr.bf16.gmra.mxu0 %v2052
    %v4534 = vpop.f32.mrf.mxu0
    %v4535 = vadd.f32 0.0, %v4534
    %v4536 = vpop.f32.mrf.mxu0
    %v4537 = vadd.f32 0.0, %v4536
    %v4538 = vpop.f32.mrf.mxu0
    %v4539 = vadd.f32 0.0, %v4538
    %v4540 = vpop.f32.mrf.mxu0
    %v4541 = vadd.f32 0.0, %v4540
    %4542 = vmatprep.mubr.bf16.mxu0 %v2061
    %4543 = vmatmul.mubr.bf16.gmra.mxu0 %v2060
    %v4544 = vpop.f32.mrf.mxu0
    %v4545 = vadd.f32 0.0, %v4544
    %v4546 = vpop.f32.mrf.mxu0
    %v4547 = vadd.f32 0.0, %v4546
    %v4548 = vpop.f32.mrf.mxu0
    %v4549 = vadd.f32 0.0, %v4548
    %v4550 = vpop.f32.mrf.mxu0
    %v4551 = vadd.f32 0.0, %v4550
    %4552 = vmatprep.mubr.bf16.mxu0 %v2069
    %4553 = vmatmul.mubr.bf16.gmra.mxu0 %v2068
    %v4554 = vpop.f32.mrf.mxu0
    %v4555 = vadd.f32 0.0, %v4554
    %v4556 = vpop.f32.mrf.mxu0
    %v4557 = vadd.f32 0.0, %v4556
    %v4558 = vpop.f32.mrf.mxu0
    %v4559 = vadd.f32 0.0, %v4558
    %v4560 = vpop.f32.mrf.mxu0
    %v4561 = vadd.f32 0.0, %v4560
    %4562 = vmatprep.mubr.bf16.mxu0 %v2077
    %4563 = vmatmul.mubr.bf16.gmra.mxu0 %v2076
    %v4564 = vpop.f32.mrf.mxu0
    %v4565 = vadd.f32 0.0, %v4564
    %v4566 = vpop.f32.mrf.mxu0
    %v4567 = vadd.f32 0.0, %v4566
    %v4568 = vpop.f32.mrf.mxu0
    %v4569 = vadd.f32 0.0, %v4568
    %v4570 = vpop.f32.mrf.mxu0
    %v4571 = vadd.f32 0.0, %v4570
    %4572 = vmatprep.mubr.bf16.mxu0 %v2085
    %4573 = vmatmul.mubr.bf16.gmra.mxu0 %v2084
    %v4574 = vpop.f32.mrf.mxu0
    %v4575 = vadd.f32 0.0, %v4574
    %v4576 = vpop.f32.mrf.mxu0
    %v4577 = vadd.f32 0.0, %v4576
    %v4578 = vpop.f32.mrf.mxu0
    %v4579 = vadd.f32 0.0, %v4578
    %v4580 = vpop.f32.mrf.mxu0
    %v4581 = vadd.f32 0.0, %v4580
    %4582 = vmatprep.mubr.bf16.mxu0 %v2093
    %4583 = vmatmul.mubr.bf16.gmra.mxu0 %v2092
    %v4584 = vpop.f32.mrf.mxu0
    %v4585 = vadd.f32 0.0, %v4584
    %v4586 = vpop.f32.mrf.mxu0
    %v4587 = vadd.f32 0.0, %v4586
    %v4588 = vpop.f32.mrf.mxu0
    %v4589 = vadd.f32 0.0, %v4588
    %v4590 = vpop.f32.mrf.mxu0
    %v4591 = vadd.f32 0.0, %v4590
    %4592 = vmatprep.mubr.bf16.mxu0 %v2101
    %4593 = vmatmul.mubr.bf16.gmra.mxu0 %v2100
    %v4594 = vpop.f32.mrf.mxu0
    %v4595 = vadd.f32 0.0, %v4594
    %v4596 = vpop.f32.mrf.mxu0
    %v4597 = vadd.f32 0.0, %v4596
    %v4598 = vpop.f32.mrf.mxu0
    %v4599 = vadd.f32 0.0, %v4598
    %v4600 = vpop.f32.mrf.mxu0
    %v4601 = vadd.f32 0.0, %v4600
    %4602 = vmatprep.mubr.bf16.mxu0 %v2109
    %4603 = vmatmul.mubr.bf16.gmra.mxu0 %v2108
    %v4604 = vpop.f32.mrf.mxu0
    %v4605 = vadd.f32 0.0, %v4604
    %v4606 = vpop.f32.mrf.mxu0
    %v4607 = vadd.f32 0.0, %v4606
    %v4608 = vpop.f32.mrf.mxu0
    %v4609 = vadd.f32 0.0, %v4608
    %v4610 = vpop.f32.mrf.mxu0
    %v4611 = vadd.f32 0.0, %v4610
    %4612 = vdwg.mxu0
    %4613 = vmatprep.subr.bf16.mxu0 %v3791
    %4614 = vmatpush1.bf16.msra.mxu0 %v3790
    %4615 = vmatprep.subr.bf16.mxu0 %v3785
    %4616 = vmatpush1.bf16.msra.mxu0 %v3784
    %4617 = vmatprep.subr.bf16.mxu0 %v3779
    %4618 = vmatpush1.bf16.msra.mxu0 %v3778
    %4619 = vmatprep.subr.bf16.mxu0 %v3773
    %4620 = vmatpush1.bf16.msra.mxu0 %v3772
    %4621 = vmatprep.subr.bf16.mxu0 %v3767
    %4622 = vmatpush1.bf16.msra.mxu0 %v3766
    %4623 = vmatprep.subr.bf16.mxu0 %v3761
    %4624 = vmatpush1.bf16.msra.mxu0 %v3760
    %4625 = vmatprep.subr.bf16.mxu0 %v3755
    %4626 = vmatpush1.bf16.msra.mxu0 %v3754
    %4627 = vmatprep.subr.bf16.mxu0 %v3749
    %4628 = vmatpush1.bf16.msra.mxu0 %v3748
    %4629 = vmatprep.subr.bf16.mxu0 %v3839
    %4630 = vmatpush2.bf16.msra.mxu0 %v3838
    %4631 = vmatprep.subr.bf16.mxu0 %v3833
    %4632 = vmatpush2.bf16.msra.mxu0 %v3832
    %4633 = vmatprep.subr.bf16.mxu0 %v3827
    %4634 = vmatpush2.bf16.msra.mxu0 %v3826
    %4635 = vmatprep.subr.bf16.mxu0 %v3821
    %4636 = vmatpush2.bf16.msra.mxu0 %v3820
    %4637 = vmatprep.subr.bf16.mxu0 %v3815
    %4638 = vmatpush2.bf16.msra.mxu0 %v3814
    %4639 = vmatprep.subr.bf16.mxu0 %v3809
    %4640 = vmatpush2.bf16.msra.mxu0 %v3808
    %4641 = vmatprep.subr.bf16.mxu0 %v3803
    %4642 = vmatpush2.bf16.msra.mxu0 %v3802
    %4643 = vmatprep.subr.bf16.mxu0 %v3797
    %4644 = vmatpush2.bf16.msra.mxu0 %v3796
    %4645 = vmatprep.mubr.bf16.mxu0 %v1991
    %4646 = vmatmul.mubr.bf16.gmra.mxu0 %v1990
    %v4647 = vpop.f32.mrf.mxu0
    %v4648 = vadd.f32 %v4455, %v4647
    %v4649 = vpop.f32.mrf.mxu0
    %v4650 = vadd.f32 %v4457, %v4649
    %v4651 = vpop.f32.mrf.mxu0
    %v4652 = vadd.f32 %v4459, %v4651
    %v4653 = vpop.f32.mrf.mxu0
    %v4654 = vadd.f32 %v4461, %v4653
    %4655 = vmatprep.mubr.bf16.mxu0 %v1999
    %4656 = vmatmul.mubr.bf16.gmra.mxu0 %v1998
    %v4657 = vpop.f32.mrf.mxu0
    %v4658 = vadd.f32 %v4465, %v4657
    %v4659 = vpop.f32.mrf.mxu0
    %v4660 = vadd.f32 %v4467, %v4659
    %v4661 = vpop.f32.mrf.mxu0
    %v4662 = vadd.f32 %v4469, %v4661
    %v4663 = vpop.f32.mrf.mxu0
    %v4664 = vadd.f32 %v4471, %v4663
    %4665 = vmatprep.mubr.bf16.mxu0 %v2007
    %4666 = vmatmul.mubr.bf16.gmra.mxu0 %v2006
    %v4667 = vpop.f32.mrf.mxu0
    %v4668 = vadd.f32 %v4475, %v4667
    %v4669 = vpop.f32.mrf.mxu0
    %v4670 = vadd.f32 %v4477, %v4669
    %v4671 = vpop.f32.mrf.mxu0
    %v4672 = vadd.f32 %v4479, %v4671
    %v4673 = vpop.f32.mrf.mxu0
    %v4674 = vadd.f32 %v4481, %v4673
    %4675 = vmatprep.mubr.bf16.mxu0 %v2015
    %4676 = vmatmul.mubr.bf16.gmra.mxu0 %v2014
    %v4677 = vpop.f32.mrf.mxu0
    %v4678 = vadd.f32 %v4485, %v4677
    %v4679 = vpop.f32.mrf.mxu0
    %v4680 = vadd.f32 %v4487, %v4679
    %v4681 = vpop.f32.mrf.mxu0
    %v4682 = vadd.f32 %v4489, %v4681
    %v4683 = vpop.f32.mrf.mxu0
    %v4684 = vadd.f32 %v4491, %v4683
    %4685 = vmatprep.mubr.bf16.mxu0 %v2023
    %4686 = vmatmul.mubr.bf16.gmra.mxu0 %v2022
    %v4687 = vpop.f32.mrf.mxu0
    %v4688 = vadd.f32 %v4495, %v4687
    %v4689 = vpop.f32.mrf.mxu0
    %v4690 = vadd.f32 %v4497, %v4689
    %v4691 = vpop.f32.mrf.mxu0
    %v4692 = vadd.f32 %v4499, %v4691
    %v4693 = vpop.f32.mrf.mxu0
    %v4694 = vadd.f32 %v4501, %v4693
    %4695 = vmatprep.mubr.bf16.mxu0 %v2031
    %4696 = vmatmul.mubr.bf16.gmra.mxu0 %v2030
    %v4697 = vpop.f32.mrf.mxu0
    %v4698 = vadd.f32 %v4505, %v4697
    %v4699 = vpop.f32.mrf.mxu0
    %v4700 = vadd.f32 %v4507, %v4699
    %v4701 = vpop.f32.mrf.mxu0
    %v4702 = vadd.f32 %v4509, %v4701
    %v4703 = vpop.f32.mrf.mxu0
    %v4704 = vadd.f32 %v4511, %v4703
    %4705 = vmatprep.mubr.bf16.mxu0 %v2039
    %4706 = vmatmul.mubr.bf16.gmra.mxu0 %v2038
    %v4707 = vpop.f32.mrf.mxu0
    %v4708 = vadd.f32 %v4515, %v4707
    %v4709 = vpop.f32.mrf.mxu0
    %v4710 = vadd.f32 %v4517, %v4709
    %v4711 = vpop.f32.mrf.mxu0
    %v4712 = vadd.f32 %v4519, %v4711
    %v4713 = vpop.f32.mrf.mxu0
    %v4714 = vadd.f32 %v4521, %v4713
    %4715 = vmatprep.mubr.bf16.mxu0 %v2047
    %4716 = vmatmul.mubr.bf16.gmra.mxu0 %v2046
    %v4717 = vpop.f32.mrf.mxu0
    %v4718 = vadd.f32 %v4525, %v4717
    %v4719 = vpop.f32.mrf.mxu0
    %v4720 = vadd.f32 %v4527, %v4719
    %v4721 = vpop.f32.mrf.mxu0
    %v4722 = vadd.f32 %v4529, %v4721
    %v4723 = vpop.f32.mrf.mxu0
    %v4724 = vadd.f32 %v4531, %v4723
    %4725 = vmatprep.mubr.bf16.mxu0 %v2055
    %4726 = vmatmul.mubr.bf16.gmra.mxu0 %v2054
    %v4727 = vpop.f32.mrf.mxu0
    %v4728 = vadd.f32 %v4535, %v4727
    %v4729 = vpop.f32.mrf.mxu0
    %v4730 = vadd.f32 %v4537, %v4729
    %v4731 = vpop.f32.mrf.mxu0
    %v4732 = vadd.f32 %v4539, %v4731
    %v4733 = vpop.f32.mrf.mxu0
    %v4734 = vadd.f32 %v4541, %v4733
    %4735 = vmatprep.mubr.bf16.mxu0 %v2063
    %4736 = vmatmul.mubr.bf16.gmra.mxu0 %v2062
    %v4737 = vpop.f32.mrf.mxu0
    %v4738 = vadd.f32 %v4545, %v4737
    %v4739 = vpop.f32.mrf.mxu0
    %v4740 = vadd.f32 %v4547, %v4739
    %v4741 = vpop.f32.mrf.mxu0
    %v4742 = vadd.f32 %v4549, %v4741
    %v4743 = vpop.f32.mrf.mxu0
    %v4744 = vadd.f32 %v4551, %v4743
    %4745 = vmatprep.mubr.bf16.mxu0 %v2071
    %4746 = vmatmul.mubr.bf16.gmra.mxu0 %v2070
    %v4747 = vpop.f32.mrf.mxu0
    %v4748 = vadd.f32 %v4555, %v4747
    %v4749 = vpop.f32.mrf.mxu0
    %v4750 = vadd.f32 %v4557, %v4749
    %v4751 = vpop.f32.mrf.mxu0
    %v4752 = vadd.f32 %v4559, %v4751
    %v4753 = vpop.f32.mrf.mxu0
    %v4754 = vadd.f32 %v4561, %v4753
    %4755 = vmatprep.mubr.bf16.mxu0 %v2079
    %4756 = vmatmul.mubr.bf16.gmra.mxu0 %v2078
    %v4757 = vpop.f32.mrf.mxu0
    %v4758 = vadd.f32 %v4565, %v4757
    %v4759 = vpop.f32.mrf.mxu0
    %v4760 = vadd.f32 %v4567, %v4759
    %v4761 = vpop.f32.mrf.mxu0
    %v4762 = vadd.f32 %v4569, %v4761
    %v4763 = vpop.f32.mrf.mxu0
    %v4764 = vadd.f32 %v4571, %v4763
    %4765 = vmatprep.mubr.bf16.mxu0 %v2087
    %4766 = vmatmul.mubr.bf16.gmra.mxu0 %v2086
    %v4767 = vpop.f32.mrf.mxu0
    %v4768 = vadd.f32 %v4575, %v4767
    %v4769 = vpop.f32.mrf.mxu0
    %v4770 = vadd.f32 %v4577, %v4769
    %v4771 = vpop.f32.mrf.mxu0
    %v4772 = vadd.f32 %v4579, %v4771
    %v4773 = vpop.f32.mrf.mxu0
    %v4774 = vadd.f32 %v4581, %v4773
    %4775 = vmatprep.mubr.bf16.mxu0 %v2095
    %4776 = vmatmul.mubr.bf16.gmra.mxu0 %v2094
    %v4777 = vpop.f32.mrf.mxu0
    %v4778 = vadd.f32 %v4585, %v4777
    %v4779 = vpop.f32.mrf.mxu0
    %v4780 = vadd.f32 %v4587, %v4779
    %v4781 = vpop.f32.mrf.mxu0
    %v4782 = vadd.f32 %v4589, %v4781
    %v4783 = vpop.f32.mrf.mxu0
    %v4784 = vadd.f32 %v4591, %v4783
    %4785 = vmatprep.mubr.bf16.mxu0 %v2103
    %4786 = vmatmul.mubr.bf16.gmra.mxu0 %v2102
    %v4787 = vpop.f32.mrf.mxu0
    %v4788 = vadd.f32 %v4595, %v4787
    %v4789 = vpop.f32.mrf.mxu0
    %v4790 = vadd.f32 %v4597, %v4789
    %v4791 = vpop.f32.mrf.mxu0
    %v4792 = vadd.f32 %v4599, %v4791
    %v4793 = vpop.f32.mrf.mxu0
    %v4794 = vadd.f32 %v4601, %v4793
    %4795 = vmatprep.mubr.bf16.mxu0 %v2111
    %4796 = vmatmul.mubr.bf16.gmra.mxu0 %v2110
    %v4797 = vpop.f32.mrf.mxu0
    %v4798 = vadd.f32 %v4605, %v4797
    %v4799 = vpop.f32.mrf.mxu0
    %v4800 = vadd.f32 %v4607, %v4799
    %v4801 = vpop.f32.mrf.mxu0
    %v4802 = vadd.f32 %v4609, %v4801
    %v4803 = vpop.f32.mrf.mxu0
    %v4804 = vadd.f32 %v4611, %v4803
    %4805 = vdwg.mxu0
    %4806 = vmatprep.subr.bf16.mxu0 %v3887
    %4807 = vmatpush1.bf16.msra.mxu0 %v3886
    %4808 = vmatprep.subr.bf16.mxu0 %v3881
    %4809 = vmatpush1.bf16.msra.mxu0 %v3880
    %4810 = vmatprep.subr.bf16.mxu0 %v3875
    %4811 = vmatpush1.bf16.msra.mxu0 %v3874
    %4812 = vmatprep.subr.bf16.mxu0 %v3869
    %4813 = vmatpush1.bf16.msra.mxu0 %v3868
    %4814 = vmatprep.subr.bf16.mxu0 %v3863
    %4815 = vmatpush1.bf16.msra.mxu0 %v3862
    %4816 = vmatprep.subr.bf16.mxu0 %v3857
    %4817 = vmatpush1.bf16.msra.mxu0 %v3856
    %4818 = vmatprep.subr.bf16.mxu0 %v3851
    %4819 = vmatpush1.bf16.msra.mxu0 %v3850
    %4820 = vmatprep.subr.bf16.mxu0 %v3845
    %4821 = vmatpush1.bf16.msra.mxu0 %v3844
    %4822 = vmatprep.subr.bf16.mxu0 %v3935
    %4823 = vmatpush2.bf16.msra.mxu0 %v3934
    %4824 = vmatprep.subr.bf16.mxu0 %v3929
    %4825 = vmatpush2.bf16.msra.mxu0 %v3928
    %4826 = vmatprep.subr.bf16.mxu0 %v3923
    %4827 = vmatpush2.bf16.msra.mxu0 %v3922
    %4828 = vmatprep.subr.bf16.mxu0 %v3917
    %4829 = vmatpush2.bf16.msra.mxu0 %v3916
    %4830 = vmatprep.subr.bf16.mxu0 %v3911
    %4831 = vmatpush2.bf16.msra.mxu0 %v3910
    %4832 = vmatprep.subr.bf16.mxu0 %v3905
    %4833 = vmatpush2.bf16.msra.mxu0 %v3904
    %4834 = vmatprep.subr.bf16.mxu0 %v3899
    %4835 = vmatpush2.bf16.msra.mxu0 %v3898
    %4836 = vmatprep.subr.bf16.mxu0 %v3893
    %4837 = vmatpush2.bf16.msra.mxu0 %v3892
    %4838 = vmatprep.mubr.bf16.mxu0 %v1993
    %4839 = vmatmul.mubr.bf16.gmra.mxu0 %v1992
    %v4840 = vpop.f32.mrf.mxu0
    %v4841 = vadd.f32 %v4648, %v4840
    %v4842 = vpop.f32.mrf.mxu0
    %v4843 = vadd.f32 %v4650, %v4842
    %v4844 = vpop.f32.mrf.mxu0
    %v4845 = vadd.f32 %v4652, %v4844
    %v4846 = vpop.f32.mrf.mxu0
    %v4847 = vadd.f32 %v4654, %v4846
    %4848 = vmatprep.mubr.bf16.mxu0 %v2001
    %4849 = vmatmul.mubr.bf16.gmra.mxu0 %v2000
    %v4850 = vpop.f32.mrf.mxu0
    %v4851 = vadd.f32 %v4658, %v4850
    %v4852 = vpop.f32.mrf.mxu0
    %v4853 = vadd.f32 %v4660, %v4852
    %v4854 = vpop.f32.mrf.mxu0
    %v4855 = vadd.f32 %v4662, %v4854
    %v4856 = vpop.f32.mrf.mxu0
    %v4857 = vadd.f32 %v4664, %v4856
    %4858 = vmatprep.mubr.bf16.mxu0 %v2009
    %4859 = vmatmul.mubr.bf16.gmra.mxu0 %v2008
    %v4860 = vpop.f32.mrf.mxu0
    %v4861 = vadd.f32 %v4668, %v4860
    %v4862 = vpop.f32.mrf.mxu0
    %v4863 = vadd.f32 %v4670, %v4862
    %v4864 = vpop.f32.mrf.mxu0
    %v4865 = vadd.f32 %v4672, %v4864
    %v4866 = vpop.f32.mrf.mxu0
    %v4867 = vadd.f32 %v4674, %v4866
    %4868 = vmatprep.mubr.bf16.mxu0 %v2017
    %4869 = vmatmul.mubr.bf16.gmra.mxu0 %v2016
    %v4870 = vpop.f32.mrf.mxu0
    %v4871 = vadd.f32 %v4678, %v4870
    %v4872 = vpop.f32.mrf.mxu0
    %v4873 = vadd.f32 %v4680, %v4872
    %v4874 = vpop.f32.mrf.mxu0
    %v4875 = vadd.f32 %v4682, %v4874
    %v4876 = vpop.f32.mrf.mxu0
    %v4877 = vadd.f32 %v4684, %v4876
    %4878 = vmatprep.mubr.bf16.mxu0 %v2025
    %4879 = vmatmul.mubr.bf16.gmra.mxu0 %v2024
    %v4880 = vpop.f32.mrf.mxu0
    %v4881 = vadd.f32 %v4688, %v4880
    %v4882 = vpop.f32.mrf.mxu0
    %v4883 = vadd.f32 %v4690, %v4882
    %v4884 = vpop.f32.mrf.mxu0
    %v4885 = vadd.f32 %v4692, %v4884
    %v4886 = vpop.f32.mrf.mxu0
    %v4887 = vadd.f32 %v4694, %v4886
    %4888 = vmatprep.mubr.bf16.mxu0 %v2033
    %4889 = vmatmul.mubr.bf16.gmra.mxu0 %v2032
    %v4890 = vpop.f32.mrf.mxu0
    %v4891 = vadd.f32 %v4698, %v4890
    %v4892 = vpop.f32.mrf.mxu0
    %v4893 = vadd.f32 %v4700, %v4892
    %v4894 = vpop.f32.mrf.mxu0
    %v4895 = vadd.f32 %v4702, %v4894
    %v4896 = vpop.f32.mrf.mxu0
    %v4897 = vadd.f32 %v4704, %v4896
    %4898 = vmatprep.mubr.bf16.mxu0 %v2041
    %4899 = vmatmul.mubr.bf16.gmra.mxu0 %v2040
    %v4900 = vpop.f32.mrf.mxu0
    %v4901 = vadd.f32 %v4708, %v4900
    %v4902 = vpop.f32.mrf.mxu0
    %v4903 = vadd.f32 %v4710, %v4902
    %v4904 = vpop.f32.mrf.mxu0
    %v4905 = vadd.f32 %v4712, %v4904
    %v4906 = vpop.f32.mrf.mxu0
    %v4907 = vadd.f32 %v4714, %v4906
    %4908 = vmatprep.mubr.bf16.mxu0 %v2049
    %4909 = vmatmul.mubr.bf16.gmra.mxu0 %v2048
    %v4910 = vpop.f32.mrf.mxu0
    %v4911 = vadd.f32 %v4718, %v4910
    %v4912 = vpop.f32.mrf.mxu0
    %v4913 = vadd.f32 %v4720, %v4912
    %v4914 = vpop.f32.mrf.mxu0
    %v4915 = vadd.f32 %v4722, %v4914
    %v4916 = vpop.f32.mrf.mxu0
    %v4917 = vadd.f32 %v4724, %v4916
    %4918 = vmatprep.mubr.bf16.mxu0 %v2057
    %4919 = vmatmul.mubr.bf16.gmra.mxu0 %v2056
    %v4920 = vpop.f32.mrf.mxu0
    %v4921 = vadd.f32 %v4728, %v4920
    %v4922 = vpop.f32.mrf.mxu0
    %v4923 = vadd.f32 %v4730, %v4922
    %v4924 = vpop.f32.mrf.mxu0
    %v4925 = vadd.f32 %v4732, %v4924
    %v4926 = vpop.f32.mrf.mxu0
    %v4927 = vadd.f32 %v4734, %v4926
    %4928 = vmatprep.mubr.bf16.mxu0 %v2065
    %4929 = vmatmul.mubr.bf16.gmra.mxu0 %v2064
    %v4930 = vpop.f32.mrf.mxu0
    %v4931 = vadd.f32 %v4738, %v4930
    %v4932 = vpop.f32.mrf.mxu0
    %v4933 = vadd.f32 %v4740, %v4932
    %v4934 = vpop.f32.mrf.mxu0
    %v4935 = vadd.f32 %v4742, %v4934
    %v4936 = vpop.f32.mrf.mxu0
    %v4937 = vadd.f32 %v4744, %v4936
    %4938 = vmatprep.mubr.bf16.mxu0 %v2073
    %4939 = vmatmul.mubr.bf16.gmra.mxu0 %v2072
    %v4940 = vpop.f32.mrf.mxu0
    %v4941 = vadd.f32 %v4748, %v4940
    %v4942 = vpop.f32.mrf.mxu0
    %v4943 = vadd.f32 %v4750, %v4942
    %v4944 = vpop.f32.mrf.mxu0
    %v4945 = vadd.f32 %v4752, %v4944
    %v4946 = vpop.f32.mrf.mxu0
    %v4947 = vadd.f32 %v4754, %v4946
    %4948 = vmatprep.mubr.bf16.mxu0 %v2081
    %4949 = vmatmul.mubr.bf16.gmra.mxu0 %v2080
    %v4950 = vpop.f32.mrf.mxu0
    %v4951 = vadd.f32 %v4758, %v4950
    %v4952 = vpop.f32.mrf.mxu0
    %v4953 = vadd.f32 %v4760, %v4952
    %v4954 = vpop.f32.mrf.mxu0
    %v4955 = vadd.f32 %v4762, %v4954
    %v4956 = vpop.f32.mrf.mxu0
    %v4957 = vadd.f32 %v4764, %v4956
    %4958 = vmatprep.mubr.bf16.mxu0 %v2089
    %4959 = vmatmul.mubr.bf16.gmra.mxu0 %v2088
    %v4960 = vpop.f32.mrf.mxu0
    %v4961 = vadd.f32 %v4768, %v4960
    %v4962 = vpop.f32.mrf.mxu0
    %v4963 = vadd.f32 %v4770, %v4962
    %v4964 = vpop.f32.mrf.mxu0
    %v4965 = vadd.f32 %v4772, %v4964
    %v4966 = vpop.f32.mrf.mxu0
    %v4967 = vadd.f32 %v4774, %v4966
    %4968 = vmatprep.mubr.bf16.mxu0 %v2097
    %4969 = vmatmul.mubr.bf16.gmra.mxu0 %v2096
    %v4970 = vpop.f32.mrf.mxu0
    %v4971 = vadd.f32 %v4778, %v4970
    %v4972 = vpop.f32.mrf.mxu0
    %v4973 = vadd.f32 %v4780, %v4972
    %v4974 = vpop.f32.mrf.mxu0
    %v4975 = vadd.f32 %v4782, %v4974
    %v4976 = vpop.f32.mrf.mxu0
    %v4977 = vadd.f32 %v4784, %v4976
    %4978 = vmatprep.mubr.bf16.mxu0 %v2105
    %4979 = vmatmul.mubr.bf16.gmra.mxu0 %v2104
    %v4980 = vpop.f32.mrf.mxu0
    %v4981 = vadd.f32 %v4788, %v4980
    %v4982 = vpop.f32.mrf.mxu0
    %v4983 = vadd.f32 %v4790, %v4982
    %v4984 = vpop.f32.mrf.mxu0
    %v4985 = vadd.f32 %v4792, %v4984
    %v4986 = vpop.f32.mrf.mxu0
    %v4987 = vadd.f32 %v4794, %v4986
    %4988 = vmatprep.mubr.bf16.mxu0 %v2113
    %4989 = vmatmul.mubr.bf16.gmra.mxu0 %v2112
    %v4990 = vpop.f32.mrf.mxu0
    %v4991 = vadd.f32 %v4798, %v4990
    %v4992 = vpop.f32.mrf.mxu0
    %v4993 = vadd.f32 %v4800, %v4992
    %v4994 = vpop.f32.mrf.mxu0
    %v4995 = vadd.f32 %v4802, %v4994
    %v4996 = vpop.f32.mrf.mxu0
    %v4997 = vadd.f32 %v4804, %v4996
    %4998 = vdwg.mxu0
    %4999 = vmatprep.subr.bf16.mxu0 %v3983
    %5000 = vmatpush1.bf16.msra.mxu0 %v3982
    %5001 = vmatprep.subr.bf16.mxu0 %v3977
    %5002 = vmatpush1.bf16.msra.mxu0 %v3976
    %5003 = vmatprep.subr.bf16.mxu0 %v3971
    %5004 = vmatpush1.bf16.msra.mxu0 %v3970
    %5005 = vmatprep.subr.bf16.mxu0 %v3965
    %5006 = vmatpush1.bf16.msra.mxu0 %v3964
    %5007 = vmatprep.subr.bf16.mxu0 %v3959
    %5008 = vmatpush1.bf16.msra.mxu0 %v3958
    %5009 = vmatprep.subr.bf16.mxu0 %v3953
    %5010 = vmatpush1.bf16.msra.mxu0 %v3952
    %5011 = vmatprep.subr.bf16.mxu0 %v3947
    %5012 = vmatpush1.bf16.msra.mxu0 %v3946
    %5013 = vmatprep.subr.bf16.mxu0 %v3941
    %5014 = vmatpush1.bf16.msra.mxu0 %v3940
    %5015 = vmatprep.subr.bf16.mxu0 %v4031
    %5016 = vmatpush2.bf16.msra.mxu0 %v4030
    %5017 = vmatprep.subr.bf16.mxu0 %v4025
    %5018 = vmatpush2.bf16.msra.mxu0 %v4024
    %5019 = vmatprep.subr.bf16.mxu0 %v4019
    %5020 = vmatpush2.bf16.msra.mxu0 %v4018
    %5021 = vmatprep.subr.bf16.mxu0 %v4013
    %5022 = vmatpush2.bf16.msra.mxu0 %v4012
    %5023 = vmatprep.subr.bf16.mxu0 %v4007
    %5024 = vmatpush2.bf16.msra.mxu0 %v4006
    %5025 = vmatprep.subr.bf16.mxu0 %v4001
    %5026 = vmatpush2.bf16.msra.mxu0 %v4000
    %5027 = vmatprep.subr.bf16.mxu0 %v3995
    %5028 = vmatpush2.bf16.msra.mxu0 %v3994
    %5029 = vmatprep.subr.bf16.mxu0 %v3989
    %5030 = vmatpush2.bf16.msra.mxu0 %v3988
    %5031 = vmatprep.mubr.bf16.mxu0 %v1995
    %5032 = vmatmul.mubr.bf16.gmra.mxu0 %v1994
    %v5033 = vpop.f32.mrf.mxu0
    %v5034 = vadd.f32 %v4841, %v5033
    %v5035 = vpop.f32.mrf.mxu0
    %v5036 = vadd.f32 %v4843, %v5035
    %v5037 = vpop.f32.mrf.mxu0
    %v5038 = vadd.f32 %v4845, %v5037
    %v5039 = vpop.f32.mrf.mxu0
    %v5040 = vadd.f32 %v4847, %v5039
    %5041 = vmatprep.mubr.bf16.mxu0 %v2003
    %5042 = vmatmul.mubr.bf16.gmra.mxu0 %v2002
    %v5043 = vpop.f32.mrf.mxu0
    %v5044 = vadd.f32 %v4851, %v5043
    %v5045 = vpop.f32.mrf.mxu0
    %v5046 = vadd.f32 %v4853, %v5045
    %v5047 = vpop.f32.mrf.mxu0
    %v5048 = vadd.f32 %v4855, %v5047
    %v5049 = vpop.f32.mrf.mxu0
    %v5050 = vadd.f32 %v4857, %v5049
    %5051 = vmatprep.mubr.bf16.mxu0 %v2011
    %5052 = vmatmul.mubr.bf16.gmra.mxu0 %v2010
    %v5053 = vpop.f32.mrf.mxu0
    %v5054 = vadd.f32 %v4861, %v5053
    %v5055 = vpop.f32.mrf.mxu0
    %v5056 = vadd.f32 %v4863, %v5055
    %v5057 = vpop.f32.mrf.mxu0
    %v5058 = vadd.f32 %v4865, %v5057
    %v5059 = vpop.f32.mrf.mxu0
    %v5060 = vadd.f32 %v4867, %v5059
    %5061 = vmatprep.mubr.bf16.mxu0 %v2019
    %5062 = vmatmul.mubr.bf16.gmra.mxu0 %v2018
    %v5063 = vpop.f32.mrf.mxu0
    %v5064 = vadd.f32 %v4871, %v5063
    %v5065 = vpop.f32.mrf.mxu0
    %v5066 = vadd.f32 %v4873, %v5065
    %v5067 = vpop.f32.mrf.mxu0
    %v5068 = vadd.f32 %v4875, %v5067
    %v5069 = vpop.f32.mrf.mxu0
    %v5070 = vadd.f32 %v4877, %v5069
    %5071 = vmatprep.mubr.bf16.mxu0 %v2027
    %5072 = vmatmul.mubr.bf16.gmra.mxu0 %v2026
    %v5073 = vpop.f32.mrf.mxu0
    %v5074 = vadd.f32 %v4881, %v5073
    %v5075 = vpop.f32.mrf.mxu0
    %v5076 = vadd.f32 %v4883, %v5075
    %v5077 = vpop.f32.mrf.mxu0
    %v5078 = vadd.f32 %v4885, %v5077
    %v5079 = vpop.f32.mrf.mxu0
    %v5080 = vadd.f32 %v4887, %v5079
    %5081 = vmatprep.mubr.bf16.mxu0 %v2035
    %5082 = vmatmul.mubr.bf16.gmra.mxu0 %v2034
    %v5083 = vpop.f32.mrf.mxu0
    %v5084 = vadd.f32 %v4891, %v5083
    %v5085 = vpop.f32.mrf.mxu0
    %v5086 = vadd.f32 %v4893, %v5085
    %v5087 = vpop.f32.mrf.mxu0
    %v5088 = vadd.f32 %v4895, %v5087
    %v5089 = vpop.f32.mrf.mxu0
    %v5090 = vadd.f32 %v4897, %v5089
    %5091 = vmatprep.mubr.bf16.mxu0 %v2043
    %5092 = vmatmul.mubr.bf16.gmra.mxu0 %v2042
    %v5093 = vpop.f32.mrf.mxu0
    %v5094 = vadd.f32 %v4901, %v5093
    %v5095 = vpop.f32.mrf.mxu0
    %v5096 = vadd.f32 %v4903, %v5095
    %v5097 = vpop.f32.mrf.mxu0
    %v5098 = vadd.f32 %v4905, %v5097
    %v5099 = vpop.f32.mrf.mxu0
    %v5100 = vadd.f32 %v4907, %v5099
    %5101 = vmatprep.mubr.bf16.mxu0 %v2051
    %5102 = vmatmul.mubr.bf16.gmra.mxu0 %v2050
    %v5103 = vpop.f32.mrf.mxu0
    %v5104 = vadd.f32 %v4911, %v5103
    %v5105 = vpop.f32.mrf.mxu0
    %v5106 = vadd.f32 %v4913, %v5105
    %v5107 = vpop.f32.mrf.mxu0
    %v5108 = vadd.f32 %v4915, %v5107
    %v5109 = vpop.f32.mrf.mxu0
    %v5110 = vadd.f32 %v4917, %v5109
    %5111 = vmatprep.mubr.bf16.mxu0 %v2059
    %5112 = vmatmul.mubr.bf16.gmra.mxu0 %v2058
    %v5113 = vpop.f32.mrf.mxu0
    %v5114 = vadd.f32 %v4921, %v5113
    %v5115 = vpop.f32.mrf.mxu0
    %v5116 = vadd.f32 %v4923, %v5115
    %v5117 = vpop.f32.mrf.mxu0
    %v5118 = vadd.f32 %v4925, %v5117
    %v5119 = vpop.f32.mrf.mxu0
    %v5120 = vadd.f32 %v4927, %v5119
    %5121 = vmatprep.mubr.bf16.mxu0 %v2067
    %5122 = vmatmul.mubr.bf16.gmra.mxu0 %v2066
    %v5123 = vpop.f32.mrf.mxu0
    %v5124 = vadd.f32 %v4931, %v5123
    %v5125 = vpop.f32.mrf.mxu0
    %v5126 = vadd.f32 %v4933, %v5125
    %v5127 = vpop.f32.mrf.mxu0
    %v5128 = vadd.f32 %v4935, %v5127
    %v5129 = vpop.f32.mrf.mxu0
    %v5130 = vadd.f32 %v4937, %v5129
    %5131 = vmatprep.mubr.bf16.mxu0 %v2075
    %5132 = vmatmul.mubr.bf16.gmra.mxu0 %v2074
    %v5133 = vpop.f32.mrf.mxu0
    %v5134 = vadd.f32 %v4941, %v5133
    %v5135 = vpop.f32.mrf.mxu0
    %v5136 = vadd.f32 %v4943, %v5135
    %v5137 = vpop.f32.mrf.mxu0
    %v5138 = vadd.f32 %v4945, %v5137
    %v5139 = vpop.f32.mrf.mxu0
    %v5140 = vadd.f32 %v4947, %v5139
    %5141 = vmatprep.mubr.bf16.mxu0 %v2083
    %5142 = vmatmul.mubr.bf16.gmra.mxu0 %v2082
    %v5143 = vpop.f32.mrf.mxu0
    %v5144 = vadd.f32 %v4951, %v5143
    %v5145 = vpop.f32.mrf.mxu0
    %v5146 = vadd.f32 %v4953, %v5145
    %v5147 = vpop.f32.mrf.mxu0
    %v5148 = vadd.f32 %v4955, %v5147
    %v5149 = vpop.f32.mrf.mxu0
    %v5150 = vadd.f32 %v4957, %v5149
    %5151 = vmatprep.mubr.bf16.mxu0 %v2091
    %5152 = vmatmul.mubr.bf16.gmra.mxu0 %v2090
    %v5153 = vpop.f32.mrf.mxu0
    %v5154 = vadd.f32 %v4961, %v5153
    %v5155 = vpop.f32.mrf.mxu0
    %v5156 = vadd.f32 %v4963, %v5155
    %v5157 = vpop.f32.mrf.mxu0
    %v5158 = vadd.f32 %v4965, %v5157
    %v5159 = vpop.f32.mrf.mxu0
    %v5160 = vadd.f32 %v4967, %v5159
    %5161 = vmatprep.mubr.bf16.mxu0 %v2099
    %5162 = vmatmul.mubr.bf16.gmra.mxu0 %v2098
    %v5163 = vpop.f32.mrf.mxu0
    %v5164 = vadd.f32 %v4971, %v5163
    %v5165 = vpop.f32.mrf.mxu0
    %v5166 = vadd.f32 %v4973, %v5165
    %v5167 = vpop.f32.mrf.mxu0
    %v5168 = vadd.f32 %v4975, %v5167
    %v5169 = vpop.f32.mrf.mxu0
    %v5170 = vadd.f32 %v4977, %v5169
    %5171 = vmatprep.mubr.bf16.mxu0 %v2107
    %5172 = vmatmul.mubr.bf16.gmra.mxu0 %v2106
    %v5173 = vpop.f32.mrf.mxu0
    %v5174 = vadd.f32 %v4981, %v5173
    %v5175 = vpop.f32.mrf.mxu0
    %v5176 = vadd.f32 %v4983, %v5175
    %v5177 = vpop.f32.mrf.mxu0
    %v5178 = vadd.f32 %v4985, %v5177
    %v5179 = vpop.f32.mrf.mxu0
    %v5180 = vadd.f32 %v4987, %v5179
    %5181 = vmatprep.mubr.bf16.mxu0 %v2115
    %5182 = vmatmul.mubr.bf16.gmra.mxu0 %v2114
    %v5183 = vpop.f32.mrf.mxu0
    %v5184 = vadd.f32 %v4991, %v5183
    %v5185 = vpop.f32.mrf.mxu0
    %v5186 = vadd.f32 %v4993, %v5185
    %v5187 = vpop.f32.mrf.mxu0
    %v5188 = vadd.f32 %v4995, %v5187
    %v5189 = vpop.f32.mrf.mxu0
    %v5190 = vadd.f32 %v4997, %v5189
    %5191 = vdwg.mxu0
    %5192 = vmatprep.subr.bf16.mxu0 %v3697
    %5193 = vmatpush1.bf16.msra.mxu0 %v3696
    %5194 = vmatprep.subr.bf16.mxu0 %v3691
    %5195 = vmatpush1.bf16.msra.mxu0 %v3690
    %5196 = vmatprep.subr.bf16.mxu0 %v3685
    %5197 = vmatpush1.bf16.msra.mxu0 %v3684
    %5198 = vmatprep.subr.bf16.mxu0 %v3679
    %5199 = vmatpush1.bf16.msra.mxu0 %v3678
    %5200 = vmatprep.subr.bf16.mxu0 %v3673
    %5201 = vmatpush1.bf16.msra.mxu0 %v3672
    %5202 = vmatprep.subr.bf16.mxu0 %v3667
    %5203 = vmatpush1.bf16.msra.mxu0 %v3666
    %5204 = vmatprep.subr.bf16.mxu0 %v3661
    %5205 = vmatpush1.bf16.msra.mxu0 %v3660
    %5206 = vmatprep.subr.bf16.mxu0 %v3655
    %5207 = vmatpush1.bf16.msra.mxu0 %v3654
    %5208 = vmatprep.subr.bf16.mxu0 %v3745
    %5209 = vmatpush2.bf16.msra.mxu0 %v3744
    %5210 = vmatprep.subr.bf16.mxu0 %v3739
    %5211 = vmatpush2.bf16.msra.mxu0 %v3738
    %5212 = vmatprep.subr.bf16.mxu0 %v3733
    %5213 = vmatpush2.bf16.msra.mxu0 %v3732
    %5214 = vmatprep.subr.bf16.mxu0 %v3727
    %5215 = vmatpush2.bf16.msra.mxu0 %v3726
    %5216 = vmatprep.subr.bf16.mxu0 %v3721
    %5217 = vmatpush2.bf16.msra.mxu0 %v3720
    %5218 = vmatprep.subr.bf16.mxu0 %v3715
    %5219 = vmatpush2.bf16.msra.mxu0 %v3714
    %5220 = vmatprep.subr.bf16.mxu0 %v3709
    %5221 = vmatpush2.bf16.msra.mxu0 %v3708
    %5222 = vmatprep.subr.bf16.mxu0 %v3703
    %5223 = vmatpush2.bf16.msra.mxu0 %v3702
    %5224 = vmatprep.mubr.bf16.mxu0 %v1989
    %5225 = vmatmul.mubr.bf16.gmra.mxu0 %v1988
    %v5226 = vpop.f32.mrf.mxu0
    %v5227 = vadd.f32 0.0, %v5226
    %v5228 = vpop.f32.mrf.mxu0
    %v5229 = vadd.f32 0.0, %v5228
    %v5230 = vpop.f32.mrf.mxu0
    %v5231 = vadd.f32 0.0, %v5230
    %v5232 = vpop.f32.mrf.mxu0
    %v5233 = vadd.f32 0.0, %v5232
    %5234 = vmatprep.mubr.bf16.mxu0 %v1997
    %5235 = vmatmul.mubr.bf16.gmra.mxu0 %v1996
    %v5236 = vpop.f32.mrf.mxu0
    %v5237 = vadd.f32 0.0, %v5236
    %v5238 = vpop.f32.mrf.mxu0
    %v5239 = vadd.f32 0.0, %v5238
    %v5240 = vpop.f32.mrf.mxu0
    %v5241 = vadd.f32 0.0, %v5240
    %v5242 = vpop.f32.mrf.mxu0
    %v5243 = vadd.f32 0.0, %v5242
    %5244 = vmatprep.mubr.bf16.mxu0 %v2005
    %5245 = vmatmul.mubr.bf16.gmra.mxu0 %v2004
    %v5246 = vpop.f32.mrf.mxu0
    %v5247 = vadd.f32 0.0, %v5246
    %v5248 = vpop.f32.mrf.mxu0
    %v5249 = vadd.f32 0.0, %v5248
    %v5250 = vpop.f32.mrf.mxu0
    %v5251 = vadd.f32 0.0, %v5250
    %v5252 = vpop.f32.mrf.mxu0
    %v5253 = vadd.f32 0.0, %v5252
    %5254 = vmatprep.mubr.bf16.mxu0 %v2013
    %5255 = vmatmul.mubr.bf16.gmra.mxu0 %v2012
    %v5256 = vpop.f32.mrf.mxu0
    %v5257 = vadd.f32 0.0, %v5256
    %v5258 = vpop.f32.mrf.mxu0
    %v5259 = vadd.f32 0.0, %v5258
    %v5260 = vpop.f32.mrf.mxu0
    %v5261 = vadd.f32 0.0, %v5260
    %v5262 = vpop.f32.mrf.mxu0
    %v5263 = vadd.f32 0.0, %v5262
    %5264 = vmatprep.mubr.bf16.mxu0 %v2021
    %5265 = vmatmul.mubr.bf16.gmra.mxu0 %v2020
    %v5266 = vpop.f32.mrf.mxu0
    %v5267 = vadd.f32 0.0, %v5266
    %v5268 = vpop.f32.mrf.mxu0
    %v5269 = vadd.f32 0.0, %v5268
    %v5270 = vpop.f32.mrf.mxu0
    %v5271 = vadd.f32 0.0, %v5270
    %v5272 = vpop.f32.mrf.mxu0
    %v5273 = vadd.f32 0.0, %v5272
    %5274 = vmatprep.mubr.bf16.mxu0 %v2029
    %5275 = vmatmul.mubr.bf16.gmra.mxu0 %v2028
    %v5276 = vpop.f32.mrf.mxu0
    %v5277 = vadd.f32 0.0, %v5276
    %v5278 = vpop.f32.mrf.mxu0
    %v5279 = vadd.f32 0.0, %v5278
    %v5280 = vpop.f32.mrf.mxu0
    %v5281 = vadd.f32 0.0, %v5280
    %v5282 = vpop.f32.mrf.mxu0
    %v5283 = vadd.f32 0.0, %v5282
    %5284 = vmatprep.mubr.bf16.mxu0 %v2037
    %5285 = vmatmul.mubr.bf16.gmra.mxu0 %v2036
    %v5286 = vpop.f32.mrf.mxu0
    %v5287 = vadd.f32 0.0, %v5286
    %v5288 = vpop.f32.mrf.mxu0
    %v5289 = vadd.f32 0.0, %v5288
    %v5290 = vpop.f32.mrf.mxu0
    %v5291 = vadd.f32 0.0, %v5290
    %v5292 = vpop.f32.mrf.mxu0
    %v5293 = vadd.f32 0.0, %v5292
    %5294 = vmatprep.mubr.bf16.mxu0 %v2045
    %5295 = vmatmul.mubr.bf16.gmra.mxu0 %v2044
    %v5296 = vpop.f32.mrf.mxu0
    %v5297 = vadd.f32 0.0, %v5296
    %v5298 = vpop.f32.mrf.mxu0
    %v5299 = vadd.f32 0.0, %v5298
    %v5300 = vpop.f32.mrf.mxu0
    %v5301 = vadd.f32 0.0, %v5300
    %v5302 = vpop.f32.mrf.mxu0
    %v5303 = vadd.f32 0.0, %v5302
    %5304 = vmatprep.mubr.bf16.mxu0 %v2053
    %5305 = vmatmul.mubr.bf16.gmra.mxu0 %v2052
    %v5306 = vpop.f32.mrf.mxu0
    %v5307 = vadd.f32 0.0, %v5306
    %v5308 = vpop.f32.mrf.mxu0
    %v5309 = vadd.f32 0.0, %v5308
    %v5310 = vpop.f32.mrf.mxu0
    %v5311 = vadd.f32 0.0, %v5310
    %v5312 = vpop.f32.mrf.mxu0
    %v5313 = vadd.f32 0.0, %v5312
    %5314 = vmatprep.mubr.bf16.mxu0 %v2061
    %5315 = vmatmul.mubr.bf16.gmra.mxu0 %v2060
    %v5316 = vpop.f32.mrf.mxu0
    %v5317 = vadd.f32 0.0, %v5316
    %v5318 = vpop.f32.mrf.mxu0
    %v5319 = vadd.f32 0.0, %v5318
    %v5320 = vpop.f32.mrf.mxu0
    %v5321 = vadd.f32 0.0, %v5320
    %v5322 = vpop.f32.mrf.mxu0
    %v5323 = vadd.f32 0.0, %v5322
    %5324 = vmatprep.mubr.bf16.mxu0 %v2069
    %5325 = vmatmul.mubr.bf16.gmra.mxu0 %v2068
    %v5326 = vpop.f32.mrf.mxu0
    %v5327 = vadd.f32 0.0, %v5326
    %v5328 = vpop.f32.mrf.mxu0
    %v5329 = vadd.f32 0.0, %v5328
    %v5330 = vpop.f32.mrf.mxu0
    %v5331 = vadd.f32 0.0, %v5330
    %v5332 = vpop.f32.mrf.mxu0
    %v5333 = vadd.f32 0.0, %v5332
    %5334 = vmatprep.mubr.bf16.mxu0 %v2077
    %5335 = vmatmul.mubr.bf16.gmra.mxu0 %v2076
    %v5336 = vpop.f32.mrf.mxu0
    %v5337 = vadd.f32 0.0, %v5336
    %v5338 = vpop.f32.mrf.mxu0
    %v5339 = vadd.f32 0.0, %v5338
    %v5340 = vpop.f32.mrf.mxu0
    %v5341 = vadd.f32 0.0, %v5340
    %v5342 = vpop.f32.mrf.mxu0
    %v5343 = vadd.f32 0.0, %v5342
    %5344 = vmatprep.mubr.bf16.mxu0 %v2085
    %5345 = vmatmul.mubr.bf16.gmra.mxu0 %v2084
    %v5346 = vpop.f32.mrf.mxu0
    %v5347 = vadd.f32 0.0, %v5346
    %v5348 = vpop.f32.mrf.mxu0
    %v5349 = vadd.f32 0.0, %v5348
    %v5350 = vpop.f32.mrf.mxu0
    %v5351 = vadd.f32 0.0, %v5350
    %v5352 = vpop.f32.mrf.mxu0
    %v5353 = vadd.f32 0.0, %v5352
    %5354 = vmatprep.mubr.bf16.mxu0 %v2093
    %5355 = vmatmul.mubr.bf16.gmra.mxu0 %v2092
    %v5356 = vpop.f32.mrf.mxu0
    %v5357 = vadd.f32 0.0, %v5356
    %v5358 = vpop.f32.mrf.mxu0
    %v5359 = vadd.f32 0.0, %v5358
    %v5360 = vpop.f32.mrf.mxu0
    %v5361 = vadd.f32 0.0, %v5360
    %v5362 = vpop.f32.mrf.mxu0
    %v5363 = vadd.f32 0.0, %v5362
    %5364 = vmatprep.mubr.bf16.mxu0 %v2101
    %5365 = vmatmul.mubr.bf16.gmra.mxu0 %v2100
    %v5366 = vpop.f32.mrf.mxu0
    %v5367 = vadd.f32 0.0, %v5366
    %v5368 = vpop.f32.mrf.mxu0
    %v5369 = vadd.f32 0.0, %v5368
    %v5370 = vpop.f32.mrf.mxu0
    %v5371 = vadd.f32 0.0, %v5370
    %v5372 = vpop.f32.mrf.mxu0
    %v5373 = vadd.f32 0.0, %v5372
    %5374 = vmatprep.mubr.bf16.mxu0 %v2109
    %5375 = vmatmul.mubr.bf16.gmra.mxu0 %v2108
    %v5376 = vpop.f32.mrf.mxu0
    %v5377 = vadd.f32 0.0, %v5376
    %v5378 = vpop.f32.mrf.mxu0
    %v5379 = vadd.f32 0.0, %v5378
    %v5380 = vpop.f32.mrf.mxu0
    %v5381 = vadd.f32 0.0, %v5380
    %v5382 = vpop.f32.mrf.mxu0
    %v5383 = vadd.f32 0.0, %v5382
    %5384 = vdwg.mxu0
    %5385 = vmatprep.subr.bf16.mxu0 %v3793
    %5386 = vmatpush1.bf16.msra.mxu0 %v3792
    %5387 = vmatprep.subr.bf16.mxu0 %v3787
    %5388 = vmatpush1.bf16.msra.mxu0 %v3786
    %5389 = vmatprep.subr.bf16.mxu0 %v3781
    %5390 = vmatpush1.bf16.msra.mxu0 %v3780
    %5391 = vmatprep.subr.bf16.mxu0 %v3775
    %5392 = vmatpush1.bf16.msra.mxu0 %v3774
    %5393 = vmatprep.subr.bf16.mxu0 %v3769
    %5394 = vmatpush1.bf16.msra.mxu0 %v3768
    %5395 = vmatprep.subr.bf16.mxu0 %v3763
    %5396 = vmatpush1.bf16.msra.mxu0 %v3762
    %5397 = vmatprep.subr.bf16.mxu0 %v3757
    %5398 = vmatpush1.bf16.msra.mxu0 %v3756
    %5399 = vmatprep.subr.bf16.mxu0 %v3751
    %5400 = vmatpush1.bf16.msra.mxu0 %v3750
    %5401 = vmatprep.subr.bf16.mxu0 %v3841
    %5402 = vmatpush2.bf16.msra.mxu0 %v3840
    %5403 = vmatprep.subr.bf16.mxu0 %v3835
    %5404 = vmatpush2.bf16.msra.mxu0 %v3834
    %5405 = vmatprep.subr.bf16.mxu0 %v3829
    %5406 = vmatpush2.bf16.msra.mxu0 %v3828
    %5407 = vmatprep.subr.bf16.mxu0 %v3823
    %5408 = vmatpush2.bf16.msra.mxu0 %v3822
    %5409 = vmatprep.subr.bf16.mxu0 %v3817
    %5410 = vmatpush2.bf16.msra.mxu0 %v3816
    %5411 = vmatprep.subr.bf16.mxu0 %v3811
    %5412 = vmatpush2.bf16.msra.mxu0 %v3810
    %5413 = vmatprep.subr.bf16.mxu0 %v3805
    %5414 = vmatpush2.bf16.msra.mxu0 %v3804
    %5415 = vmatprep.subr.bf16.mxu0 %v3799
    %5416 = vmatpush2.bf16.msra.mxu0 %v3798
    %5417 = vmatprep.mubr.bf16.mxu0 %v1991
    %5418 = vmatmul.mubr.bf16.gmra.mxu0 %v1990
    %v5419 = vpop.f32.mrf.mxu0
    %v5420 = vadd.f32 %v5227, %v5419
    %v5421 = vpop.f32.mrf.mxu0
    %v5422 = vadd.f32 %v5229, %v5421
    %v5423 = vpop.f32.mrf.mxu0
    %v5424 = vadd.f32 %v5231, %v5423
    %v5425 = vpop.f32.mrf.mxu0
    %v5426 = vadd.f32 %v5233, %v5425
    %5427 = vmatprep.mubr.bf16.mxu0 %v1999
    %5428 = vmatmul.mubr.bf16.gmra.mxu0 %v1998
    %v5429 = vpop.f32.mrf.mxu0
    %v5430 = vadd.f32 %v5237, %v5429
    %v5431 = vpop.f32.mrf.mxu0
    %v5432 = vadd.f32 %v5239, %v5431
    %v5433 = vpop.f32.mrf.mxu0
    %v5434 = vadd.f32 %v5241, %v5433
    %v5435 = vpop.f32.mrf.mxu0
    %v5436 = vadd.f32 %v5243, %v5435
    %5437 = vmatprep.mubr.bf16.mxu0 %v2007
    %5438 = vmatmul.mubr.bf16.gmra.mxu0 %v2006
    %v5439 = vpop.f32.mrf.mxu0
    %v5440 = vadd.f32 %v5247, %v5439
    %v5441 = vpop.f32.mrf.mxu0
    %v5442 = vadd.f32 %v5249, %v5441
    %v5443 = vpop.f32.mrf.mxu0
    %v5444 = vadd.f32 %v5251, %v5443
    %v5445 = vpop.f32.mrf.mxu0
    %v5446 = vadd.f32 %v5253, %v5445
    %5447 = vmatprep.mubr.bf16.mxu0 %v2015
    %5448 = vmatmul.mubr.bf16.gmra.mxu0 %v2014
    %v5449 = vpop.f32.mrf.mxu0
    %v5450 = vadd.f32 %v5257, %v5449
    %v5451 = vpop.f32.mrf.mxu0
    %v5452 = vadd.f32 %v5259, %v5451
    %v5453 = vpop.f32.mrf.mxu0
    %v5454 = vadd.f32 %v5261, %v5453
    %v5455 = vpop.f32.mrf.mxu0
    %v5456 = vadd.f32 %v5263, %v5455
    %5457 = vmatprep.mubr.bf16.mxu0 %v2023
    %5458 = vmatmul.mubr.bf16.gmra.mxu0 %v2022
    %v5459 = vpop.f32.mrf.mxu0
    %v5460 = vadd.f32 %v5267, %v5459
    %v5461 = vpop.f32.mrf.mxu0
    %v5462 = vadd.f32 %v5269, %v5461
    %v5463 = vpop.f32.mrf.mxu0
    %v5464 = vadd.f32 %v5271, %v5463
    %v5465 = vpop.f32.mrf.mxu0
    %v5466 = vadd.f32 %v5273, %v5465
    %5467 = vmatprep.mubr.bf16.mxu0 %v2031
    %5468 = vmatmul.mubr.bf16.gmra.mxu0 %v2030
    %v5469 = vpop.f32.mrf.mxu0
    %v5470 = vadd.f32 %v5277, %v5469
    %v5471 = vpop.f32.mrf.mxu0
    %v5472 = vadd.f32 %v5279, %v5471
    %v5473 = vpop.f32.mrf.mxu0
    %v5474 = vadd.f32 %v5281, %v5473
    %v5475 = vpop.f32.mrf.mxu0
    %v5476 = vadd.f32 %v5283, %v5475
    %5477 = vmatprep.mubr.bf16.mxu0 %v2039
    %5478 = vmatmul.mubr.bf16.gmra.mxu0 %v2038
    %v5479 = vpop.f32.mrf.mxu0
    %v5480 = vadd.f32 %v5287, %v5479
    %v5481 = vpop.f32.mrf.mxu0
    %v5482 = vadd.f32 %v5289, %v5481
    %v5483 = vpop.f32.mrf.mxu0
    %v5484 = vadd.f32 %v5291, %v5483
    %v5485 = vpop.f32.mrf.mxu0
    %v5486 = vadd.f32 %v5293, %v5485
    %5487 = vmatprep.mubr.bf16.mxu0 %v2047
    %5488 = vmatmul.mubr.bf16.gmra.mxu0 %v2046
    %v5489 = vpop.f32.mrf.mxu0
    %v5490 = vadd.f32 %v5297, %v5489
    %v5491 = vpop.f32.mrf.mxu0
    %v5492 = vadd.f32 %v5299, %v5491
    %v5493 = vpop.f32.mrf.mxu0
    %v5494 = vadd.f32 %v5301, %v5493
    %v5495 = vpop.f32.mrf.mxu0
    %v5496 = vadd.f32 %v5303, %v5495
    %5497 = vmatprep.mubr.bf16.mxu0 %v2055
    %5498 = vmatmul.mubr.bf16.gmra.mxu0 %v2054
    %v5499 = vpop.f32.mrf.mxu0
    %v5500 = vadd.f32 %v5307, %v5499
    %v5501 = vpop.f32.mrf.mxu0
    %v5502 = vadd.f32 %v5309, %v5501
    %v5503 = vpop.f32.mrf.mxu0
    %v5504 = vadd.f32 %v5311, %v5503
    %v5505 = vpop.f32.mrf.mxu0
    %v5506 = vadd.f32 %v5313, %v5505
    %5507 = vmatprep.mubr.bf16.mxu0 %v2063
    %5508 = vmatmul.mubr.bf16.gmra.mxu0 %v2062
    %v5509 = vpop.f32.mrf.mxu0
    %v5510 = vadd.f32 %v5317, %v5509
    %v5511 = vpop.f32.mrf.mxu0
    %v5512 = vadd.f32 %v5319, %v5511
    %v5513 = vpop.f32.mrf.mxu0
    %v5514 = vadd.f32 %v5321, %v5513
    %v5515 = vpop.f32.mrf.mxu0
    %v5516 = vadd.f32 %v5323, %v5515
    %5517 = vmatprep.mubr.bf16.mxu0 %v2071
    %5518 = vmatmul.mubr.bf16.gmra.mxu0 %v2070
    %v5519 = vpop.f32.mrf.mxu0
    %v5520 = vadd.f32 %v5327, %v5519
    %v5521 = vpop.f32.mrf.mxu0
    %v5522 = vadd.f32 %v5329, %v5521
    %v5523 = vpop.f32.mrf.mxu0
    %v5524 = vadd.f32 %v5331, %v5523
    %v5525 = vpop.f32.mrf.mxu0
    %v5526 = vadd.f32 %v5333, %v5525
    %5527 = vmatprep.mubr.bf16.mxu0 %v2079
    %5528 = vmatmul.mubr.bf16.gmra.mxu0 %v2078
    %v5529 = vpop.f32.mrf.mxu0
    %v5530 = vadd.f32 %v5337, %v5529
    %v5531 = vpop.f32.mrf.mxu0
    %v5532 = vadd.f32 %v5339, %v5531
    %v5533 = vpop.f32.mrf.mxu0
    %v5534 = vadd.f32 %v5341, %v5533
    %v5535 = vpop.f32.mrf.mxu0
    %v5536 = vadd.f32 %v5343, %v5535
    %5537 = vmatprep.mubr.bf16.mxu0 %v2087
    %5538 = vmatmul.mubr.bf16.gmra.mxu0 %v2086
    %v5539 = vpop.f32.mrf.mxu0
    %v5540 = vadd.f32 %v5347, %v5539
    %v5541 = vpop.f32.mrf.mxu0
    %v5542 = vadd.f32 %v5349, %v5541
    %v5543 = vpop.f32.mrf.mxu0
    %v5544 = vadd.f32 %v5351, %v5543
    %v5545 = vpop.f32.mrf.mxu0
    %v5546 = vadd.f32 %v5353, %v5545
    %5547 = vmatprep.mubr.bf16.mxu0 %v2095
    %5548 = vmatmul.mubr.bf16.gmra.mxu0 %v2094
    %v5549 = vpop.f32.mrf.mxu0
    %v5550 = vadd.f32 %v5357, %v5549
    %v5551 = vpop.f32.mrf.mxu0
    %v5552 = vadd.f32 %v5359, %v5551
    %v5553 = vpop.f32.mrf.mxu0
    %v5554 = vadd.f32 %v5361, %v5553
    %v5555 = vpop.f32.mrf.mxu0
    %v5556 = vadd.f32 %v5363, %v5555
    %5557 = vmatprep.mubr.bf16.mxu0 %v2103
    %5558 = vmatmul.mubr.bf16.gmra.mxu0 %v2102
    %v5559 = vpop.f32.mrf.mxu0
    %v5560 = vadd.f32 %v5367, %v5559
    %v5561 = vpop.f32.mrf.mxu0
    %v5562 = vadd.f32 %v5369, %v5561
    %v5563 = vpop.f32.mrf.mxu0
    %v5564 = vadd.f32 %v5371, %v5563
    %v5565 = vpop.f32.mrf.mxu0
    %v5566 = vadd.f32 %v5373, %v5565
    %5567 = vmatprep.mubr.bf16.mxu0 %v2111
    %5568 = vmatmul.mubr.bf16.gmra.mxu0 %v2110
    %v5569 = vpop.f32.mrf.mxu0
    %v5570 = vadd.f32 %v5377, %v5569
    %v5571 = vpop.f32.mrf.mxu0
    %v5572 = vadd.f32 %v5379, %v5571
    %v5573 = vpop.f32.mrf.mxu0
    %v5574 = vadd.f32 %v5381, %v5573
    %v5575 = vpop.f32.mrf.mxu0
    %v5576 = vadd.f32 %v5383, %v5575
    %5577 = vdwg.mxu0
    %5578 = vmatprep.subr.bf16.mxu0 %v3889
    %5579 = vmatpush1.bf16.msra.mxu0 %v3888
    %5580 = vmatprep.subr.bf16.mxu0 %v3883
    %5581 = vmatpush1.bf16.msra.mxu0 %v3882
    %5582 = vmatprep.subr.bf16.mxu0 %v3877
    %5583 = vmatpush1.bf16.msra.mxu0 %v3876
    %5584 = vmatprep.subr.bf16.mxu0 %v3871
    %5585 = vmatpush1.bf16.msra.mxu0 %v3870
    %5586 = vmatprep.subr.bf16.mxu0 %v3865
    %5587 = vmatpush1.bf16.msra.mxu0 %v3864
    %5588 = vmatprep.subr.bf16.mxu0 %v3859
    %5589 = vmatpush1.bf16.msra.mxu0 %v3858
    %5590 = vmatprep.subr.bf16.mxu0 %v3853
    %5591 = vmatpush1.bf16.msra.mxu0 %v3852
    %5592 = vmatprep.subr.bf16.mxu0 %v3847
    %5593 = vmatpush1.bf16.msra.mxu0 %v3846
    %5594 = vmatprep.subr.bf16.mxu0 %v3937
    %5595 = vmatpush2.bf16.msra.mxu0 %v3936
    %5596 = vmatprep.subr.bf16.mxu0 %v3931
    %5597 = vmatpush2.bf16.msra.mxu0 %v3930
    %5598 = vmatprep.subr.bf16.mxu0 %v3925
    %5599 = vmatpush2.bf16.msra.mxu0 %v3924
    %5600 = vmatprep.subr.bf16.mxu0 %v3919
    %5601 = vmatpush2.bf16.msra.mxu0 %v3918
    %5602 = vmatprep.subr.bf16.mxu0 %v3913
    %5603 = vmatpush2.bf16.msra.mxu0 %v3912
    %5604 = vmatprep.subr.bf16.mxu0 %v3907
    %5605 = vmatpush2.bf16.msra.mxu0 %v3906
    %5606 = vmatprep.subr.bf16.mxu0 %v3901
    %5607 = vmatpush2.bf16.msra.mxu0 %v3900
    %5608 = vmatprep.subr.bf16.mxu0 %v3895
    %5609 = vmatpush2.bf16.msra.mxu0 %v3894
    %5610 = vmatprep.mubr.bf16.mxu0 %v1993
    %5611 = vmatmul.mubr.bf16.gmra.mxu0 %v1992
    %v5612 = vpop.f32.mrf.mxu0
    %v5613 = vadd.f32 %v5420, %v5612
    %v5614 = vpop.f32.mrf.mxu0
    %v5615 = vadd.f32 %v5422, %v5614
    %v5616 = vpop.f32.mrf.mxu0
    %v5617 = vadd.f32 %v5424, %v5616
    %v5618 = vpop.f32.mrf.mxu0
    %v5619 = vadd.f32 %v5426, %v5618
    %5620 = vmatprep.mubr.bf16.mxu0 %v2001
    %5621 = vmatmul.mubr.bf16.gmra.mxu0 %v2000
    %v5622 = vpop.f32.mrf.mxu0
    %v5623 = vadd.f32 %v5430, %v5622
    %v5624 = vpop.f32.mrf.mxu0
    %v5625 = vadd.f32 %v5432, %v5624
    %v5626 = vpop.f32.mrf.mxu0
    %v5627 = vadd.f32 %v5434, %v5626
    %v5628 = vpop.f32.mrf.mxu0
    %v5629 = vadd.f32 %v5436, %v5628
    %5630 = vmatprep.mubr.bf16.mxu0 %v2009
    %5631 = vmatmul.mubr.bf16.gmra.mxu0 %v2008
    %v5632 = vpop.f32.mrf.mxu0
    %v5633 = vadd.f32 %v5440, %v5632
    %v5634 = vpop.f32.mrf.mxu0
    %v5635 = vadd.f32 %v5442, %v5634
    %v5636 = vpop.f32.mrf.mxu0
    %v5637 = vadd.f32 %v5444, %v5636
    %v5638 = vpop.f32.mrf.mxu0
    %v5639 = vadd.f32 %v5446, %v5638
    %5640 = vmatprep.mubr.bf16.mxu0 %v2017
    %5641 = vmatmul.mubr.bf16.gmra.mxu0 %v2016
    %v5642 = vpop.f32.mrf.mxu0
    %v5643 = vadd.f32 %v5450, %v5642
    %v5644 = vpop.f32.mrf.mxu0
    %v5645 = vadd.f32 %v5452, %v5644
    %v5646 = vpop.f32.mrf.mxu0
    %v5647 = vadd.f32 %v5454, %v5646
    %v5648 = vpop.f32.mrf.mxu0
    %v5649 = vadd.f32 %v5456, %v5648
    %5650 = vmatprep.mubr.bf16.mxu0 %v2025
    %5651 = vmatmul.mubr.bf16.gmra.mxu0 %v2024
    %v5652 = vpop.f32.mrf.mxu0
    %v5653 = vadd.f32 %v5460, %v5652
    %v5654 = vpop.f32.mrf.mxu0
    %v5655 = vadd.f32 %v5462, %v5654
    %v5656 = vpop.f32.mrf.mxu0
    %v5657 = vadd.f32 %v5464, %v5656
    %v5658 = vpop.f32.mrf.mxu0
    %v5659 = vadd.f32 %v5466, %v5658
    %5660 = vmatprep.mubr.bf16.mxu0 %v2033
    %5661 = vmatmul.mubr.bf16.gmra.mxu0 %v2032
    %v5662 = vpop.f32.mrf.mxu0
    %v5663 = vadd.f32 %v5470, %v5662
    %v5664 = vpop.f32.mrf.mxu0
    %v5665 = vadd.f32 %v5472, %v5664
    %v5666 = vpop.f32.mrf.mxu0
    %v5667 = vadd.f32 %v5474, %v5666
    %v5668 = vpop.f32.mrf.mxu0
    %v5669 = vadd.f32 %v5476, %v5668
    %5670 = vmatprep.mubr.bf16.mxu0 %v2041
    %5671 = vmatmul.mubr.bf16.gmra.mxu0 %v2040
    %v5672 = vpop.f32.mrf.mxu0
    %v5673 = vadd.f32 %v5480, %v5672
    %v5674 = vpop.f32.mrf.mxu0
    %v5675 = vadd.f32 %v5482, %v5674
    %v5676 = vpop.f32.mrf.mxu0
    %v5677 = vadd.f32 %v5484, %v5676
    %v5678 = vpop.f32.mrf.mxu0
    %v5679 = vadd.f32 %v5486, %v5678
    %5680 = vmatprep.mubr.bf16.mxu0 %v2049
    %5681 = vmatmul.mubr.bf16.gmra.mxu0 %v2048
    %v5682 = vpop.f32.mrf.mxu0
    %v5683 = vadd.f32 %v5490, %v5682
    %v5684 = vpop.f32.mrf.mxu0
    %v5685 = vadd.f32 %v5492, %v5684
    %v5686 = vpop.f32.mrf.mxu0
    %v5687 = vadd.f32 %v5494, %v5686
    %v5688 = vpop.f32.mrf.mxu0
    %v5689 = vadd.f32 %v5496, %v5688
    %5690 = vmatprep.mubr.bf16.mxu0 %v2057
    %5691 = vmatmul.mubr.bf16.gmra.mxu0 %v2056
    %v5692 = vpop.f32.mrf.mxu0
    %v5693 = vadd.f32 %v5500, %v5692
    %v5694 = vpop.f32.mrf.mxu0
    %v5695 = vadd.f32 %v5502, %v5694
    %v5696 = vpop.f32.mrf.mxu0
    %v5697 = vadd.f32 %v5504, %v5696
    %v5698 = vpop.f32.mrf.mxu0
    %v5699 = vadd.f32 %v5506, %v5698
    %5700 = vmatprep.mubr.bf16.mxu0 %v2065
    %5701 = vmatmul.mubr.bf16.gmra.mxu0 %v2064
    %v5702 = vpop.f32.mrf.mxu0
    %v5703 = vadd.f32 %v5510, %v5702
    %v5704 = vpop.f32.mrf.mxu0
    %v5705 = vadd.f32 %v5512, %v5704
    %v5706 = vpop.f32.mrf.mxu0
    %v5707 = vadd.f32 %v5514, %v5706
    %v5708 = vpop.f32.mrf.mxu0
    %v5709 = vadd.f32 %v5516, %v5708
    %5710 = vmatprep.mubr.bf16.mxu0 %v2073
    %5711 = vmatmul.mubr.bf16.gmra.mxu0 %v2072
    %v5712 = vpop.f32.mrf.mxu0
    %v5713 = vadd.f32 %v5520, %v5712
    %v5714 = vpop.f32.mrf.mxu0
    %v5715 = vadd.f32 %v5522, %v5714
    %v5716 = vpop.f32.mrf.mxu0
    %v5717 = vadd.f32 %v5524, %v5716
    %v5718 = vpop.f32.mrf.mxu0
    %v5719 = vadd.f32 %v5526, %v5718
    %5720 = vmatprep.mubr.bf16.mxu0 %v2081
    %5721 = vmatmul.mubr.bf16.gmra.mxu0 %v2080
    %v5722 = vpop.f32.mrf.mxu0
    %v5723 = vadd.f32 %v5530, %v5722
    %v5724 = vpop.f32.mrf.mxu0
    %v5725 = vadd.f32 %v5532, %v5724
    %v5726 = vpop.f32.mrf.mxu0
    %v5727 = vadd.f32 %v5534, %v5726
    %v5728 = vpop.f32.mrf.mxu0
    %v5729 = vadd.f32 %v5536, %v5728
    %5730 = vmatprep.mubr.bf16.mxu0 %v2089
    %5731 = vmatmul.mubr.bf16.gmra.mxu0 %v2088
    %v5732 = vpop.f32.mrf.mxu0
    %v5733 = vadd.f32 %v5540, %v5732
    %v5734 = vpop.f32.mrf.mxu0
    %v5735 = vadd.f32 %v5542, %v5734
    %v5736 = vpop.f32.mrf.mxu0
    %v5737 = vadd.f32 %v5544, %v5736
    %v5738 = vpop.f32.mrf.mxu0
    %v5739 = vadd.f32 %v5546, %v5738
    %5740 = vmatprep.mubr.bf16.mxu0 %v2097
    %5741 = vmatmul.mubr.bf16.gmra.mxu0 %v2096
    %v5742 = vpop.f32.mrf.mxu0
    %v5743 = vadd.f32 %v5550, %v5742
    %v5744 = vpop.f32.mrf.mxu0
    %v5745 = vadd.f32 %v5552, %v5744
    %v5746 = vpop.f32.mrf.mxu0
    %v5747 = vadd.f32 %v5554, %v5746
    %v5748 = vpop.f32.mrf.mxu0
    %v5749 = vadd.f32 %v5556, %v5748
    %5750 = vmatprep.mubr.bf16.mxu0 %v2105
    %5751 = vmatmul.mubr.bf16.gmra.mxu0 %v2104
    %v5752 = vpop.f32.mrf.mxu0
    %v5753 = vadd.f32 %v5560, %v5752
    %v5754 = vpop.f32.mrf.mxu0
    %v5755 = vadd.f32 %v5562, %v5754
    %v5756 = vpop.f32.mrf.mxu0
    %v5757 = vadd.f32 %v5564, %v5756
    %v5758 = vpop.f32.mrf.mxu0
    %v5759 = vadd.f32 %v5566, %v5758
    %5760 = vmatprep.mubr.bf16.mxu0 %v2113
    %5761 = vmatmul.mubr.bf16.gmra.mxu0 %v2112
    %v5762 = vpop.f32.mrf.mxu0
    %v5763 = vadd.f32 %v5570, %v5762
    %v5764 = vpop.f32.mrf.mxu0
    %v5765 = vadd.f32 %v5572, %v5764
    %v5766 = vpop.f32.mrf.mxu0
    %v5767 = vadd.f32 %v5574, %v5766
    %v5768 = vpop.f32.mrf.mxu0
    %v5769 = vadd.f32 %v5576, %v5768
    %5770 = vdwg.mxu0
    %5771 = vmatprep.subr.bf16.mxu0 %v3985
    %5772 = vmatpush1.bf16.msra.mxu0 %v3984
    %5773 = vmatprep.subr.bf16.mxu0 %v3979
    %5774 = vmatpush1.bf16.msra.mxu0 %v3978
    %5775 = vmatprep.subr.bf16.mxu0 %v3973
    %5776 = vmatpush1.bf16.msra.mxu0 %v3972
    %5777 = vmatprep.subr.bf16.mxu0 %v3967
    %5778 = vmatpush1.bf16.msra.mxu0 %v3966
    %5779 = vmatprep.subr.bf16.mxu0 %v3961
    %5780 = vmatpush1.bf16.msra.mxu0 %v3960
    %5781 = vmatprep.subr.bf16.mxu0 %v3955
    %5782 = vmatpush1.bf16.msra.mxu0 %v3954
    %5783 = vmatprep.subr.bf16.mxu0 %v3949
    %5784 = vmatpush1.bf16.msra.mxu0 %v3948
    %5785 = vmatprep.subr.bf16.mxu0 %v3943
    %5786 = vmatpush1.bf16.msra.mxu0 %v3942
    %5787 = vmatprep.subr.bf16.mxu0 %v4033
    %5788 = vmatpush2.bf16.msra.mxu0 %v4032
    %5789 = vmatprep.subr.bf16.mxu0 %v4027
    %5790 = vmatpush2.bf16.msra.mxu0 %v4026
    %5791 = vmatprep.subr.bf16.mxu0 %v4021
    %5792 = vmatpush2.bf16.msra.mxu0 %v4020
    %5793 = vmatprep.subr.bf16.mxu0 %v4015
    %5794 = vmatpush2.bf16.msra.mxu0 %v4014
    %5795 = vmatprep.subr.bf16.mxu0 %v4009
    %5796 = vmatpush2.bf16.msra.mxu0 %v4008
    %5797 = vmatprep.subr.bf16.mxu0 %v4003
    %5798 = vmatpush2.bf16.msra.mxu0 %v4002
    %5799 = vmatprep.subr.bf16.mxu0 %v3997
    %5800 = vmatpush2.bf16.msra.mxu0 %v3996
    %5801 = vmatprep.subr.bf16.mxu0 %v3991
    %5802 = vmatpush2.bf16.msra.mxu0 %v3990
    %5803 = vmatprep.mubr.bf16.mxu0 %v1995
    %5804 = vmatmul.mubr.bf16.gmra.mxu0 %v1994
    %v5805 = vpop.f32.mrf.mxu0
    %v5806 = vadd.f32 %v5613, %v5805
    %v5807 = vpop.f32.mrf.mxu0
    %v5808 = vadd.f32 %v5615, %v5807
    %v5809 = vpop.f32.mrf.mxu0
    %v5810 = vadd.f32 %v5617, %v5809
    %v5811 = vpop.f32.mrf.mxu0
    %v5812 = vadd.f32 %v5619, %v5811
    %5813 = vmatprep.mubr.bf16.mxu0 %v2003
    %5814 = vmatmul.mubr.bf16.gmra.mxu0 %v2002
    %v5815 = vpop.f32.mrf.mxu0
    %v5816 = vadd.f32 %v5623, %v5815
    %v5817 = vpop.f32.mrf.mxu0
    %v5818 = vadd.f32 %v5625, %v5817
    %v5819 = vpop.f32.mrf.mxu0
    %v5820 = vadd.f32 %v5627, %v5819
    %v5821 = vpop.f32.mrf.mxu0
    %v5822 = vadd.f32 %v5629, %v5821
    %5823 = vmatprep.mubr.bf16.mxu0 %v2011
    %5824 = vmatmul.mubr.bf16.gmra.mxu0 %v2010
    %v5825 = vpop.f32.mrf.mxu0
    %v5826 = vadd.f32 %v5633, %v5825
    %v5827 = vpop.f32.mrf.mxu0
    %v5828 = vadd.f32 %v5635, %v5827
    %v5829 = vpop.f32.mrf.mxu0
    %v5830 = vadd.f32 %v5637, %v5829
    %v5831 = vpop.f32.mrf.mxu0
    %v5832 = vadd.f32 %v5639, %v5831
    %5833 = vmatprep.mubr.bf16.mxu0 %v2019
    %5834 = vmatmul.mubr.bf16.gmra.mxu0 %v2018
    %v5835 = vpop.f32.mrf.mxu0
    %v5836 = vadd.f32 %v5643, %v5835
    %v5837 = vpop.f32.mrf.mxu0
    %v5838 = vadd.f32 %v5645, %v5837
    %v5839 = vpop.f32.mrf.mxu0
    %v5840 = vadd.f32 %v5647, %v5839
    %v5841 = vpop.f32.mrf.mxu0
    %v5842 = vadd.f32 %v5649, %v5841
    %5843 = vmatprep.mubr.bf16.mxu0 %v2027
    %5844 = vmatmul.mubr.bf16.gmra.mxu0 %v2026
    %v5845 = vpop.f32.mrf.mxu0
    %v5846 = vadd.f32 %v5653, %v5845
    %v5847 = vpop.f32.mrf.mxu0
    %v5848 = vadd.f32 %v5655, %v5847
    %v5849 = vpop.f32.mrf.mxu0
    %v5850 = vadd.f32 %v5657, %v5849
    %v5851 = vpop.f32.mrf.mxu0
    %v5852 = vadd.f32 %v5659, %v5851
    %5853 = vmatprep.mubr.bf16.mxu0 %v2035
    %5854 = vmatmul.mubr.bf16.gmra.mxu0 %v2034
    %v5855 = vpop.f32.mrf.mxu0
    %v5856 = vadd.f32 %v5663, %v5855
    %v5857 = vpop.f32.mrf.mxu0
    %v5858 = vadd.f32 %v5665, %v5857
    %v5859 = vpop.f32.mrf.mxu0
    %v5860 = vadd.f32 %v5667, %v5859
    %v5861 = vpop.f32.mrf.mxu0
    %v5862 = vadd.f32 %v5669, %v5861
    %5863 = vmatprep.mubr.bf16.mxu0 %v2043
    %5864 = vmatmul.mubr.bf16.gmra.mxu0 %v2042
    %v5865 = vpop.f32.mrf.mxu0
    %v5866 = vadd.f32 %v5673, %v5865
    %v5867 = vpop.f32.mrf.mxu0
    %v5868 = vadd.f32 %v5675, %v5867
    %v5869 = vpop.f32.mrf.mxu0
    %v5870 = vadd.f32 %v5677, %v5869
    %v5871 = vpop.f32.mrf.mxu0
    %v5872 = vadd.f32 %v5679, %v5871
    %5873 = vmatprep.mubr.bf16.mxu0 %v2051
    %5874 = vmatmul.mubr.bf16.gmra.mxu0 %v2050
    %v5875 = vpop.f32.mrf.mxu0
    %v5876 = vadd.f32 %v5683, %v5875
    %v5877 = vpop.f32.mrf.mxu0
    %v5878 = vadd.f32 %v5685, %v5877
    %v5879 = vpop.f32.mrf.mxu0
    %v5880 = vadd.f32 %v5687, %v5879
    %v5881 = vpop.f32.mrf.mxu0
    %v5882 = vadd.f32 %v5689, %v5881
    %5883 = vmatprep.mubr.bf16.mxu0 %v2059
    %5884 = vmatmul.mubr.bf16.gmra.mxu0 %v2058
    %v5885 = vpop.f32.mrf.mxu0
    %v5886 = vadd.f32 %v5693, %v5885
    %v5887 = vpop.f32.mrf.mxu0
    %v5888 = vadd.f32 %v5695, %v5887
    %v5889 = vpop.f32.mrf.mxu0
    %v5890 = vadd.f32 %v5697, %v5889
    %v5891 = vpop.f32.mrf.mxu0
    %v5892 = vadd.f32 %v5699, %v5891
    %5893 = vmatprep.mubr.bf16.mxu0 %v2067
    %5894 = vmatmul.mubr.bf16.gmra.mxu0 %v2066
    %v5895 = vpop.f32.mrf.mxu0
    %v5896 = vadd.f32 %v5703, %v5895
    %v5897 = vpop.f32.mrf.mxu0
    %v5898 = vadd.f32 %v5705, %v5897
    %v5899 = vpop.f32.mrf.mxu0
    %v5900 = vadd.f32 %v5707, %v5899
    %v5901 = vpop.f32.mrf.mxu0
    %v5902 = vadd.f32 %v5709, %v5901
    %5903 = vmatprep.mubr.bf16.mxu0 %v2075
    %5904 = vmatmul.mubr.bf16.gmra.mxu0 %v2074
    %v5905 = vpop.f32.mrf.mxu0
    %v5906 = vadd.f32 %v5713, %v5905
    %v5907 = vpop.f32.mrf.mxu0
    %v5908 = vadd.f32 %v5715, %v5907
    %v5909 = vpop.f32.mrf.mxu0
    %v5910 = vadd.f32 %v5717, %v5909
    %v5911 = vpop.f32.mrf.mxu0
    %v5912 = vadd.f32 %v5719, %v5911
    %5913 = vmatprep.mubr.bf16.mxu0 %v2083
    %5914 = vmatmul.mubr.bf16.gmra.mxu0 %v2082
    %v5915 = vpop.f32.mrf.mxu0
    %v5916 = vadd.f32 %v5723, %v5915
    %v5917 = vpop.f32.mrf.mxu0
    %v5918 = vadd.f32 %v5725, %v5917
    %v5919 = vpop.f32.mrf.mxu0
    %v5920 = vadd.f32 %v5727, %v5919
    %v5921 = vpop.f32.mrf.mxu0
    %v5922 = vadd.f32 %v5729, %v5921
    %5923 = vmatprep.mubr.bf16.mxu0 %v2091
    %5924 = vmatmul.mubr.bf16.gmra.mxu0 %v2090
    %v5925 = vpop.f32.mrf.mxu0
    %v5926 = vadd.f32 %v5733, %v5925
    %v5927 = vpop.f32.mrf.mxu0
    %v5928 = vadd.f32 %v5735, %v5927
    %v5929 = vpop.f32.mrf.mxu0
    %v5930 = vadd.f32 %v5737, %v5929
    %v5931 = vpop.f32.mrf.mxu0
    %v5932 = vadd.f32 %v5739, %v5931
    %5933 = vmatprep.mubr.bf16.mxu0 %v2099
    %5934 = vmatmul.mubr.bf16.gmra.mxu0 %v2098
    %v5935 = vpop.f32.mrf.mxu0
    %v5936 = vadd.f32 %v5743, %v5935
    %v5937 = vpop.f32.mrf.mxu0
    %v5938 = vadd.f32 %v5745, %v5937
    %v5939 = vpop.f32.mrf.mxu0
    %v5940 = vadd.f32 %v5747, %v5939
    %v5941 = vpop.f32.mrf.mxu0
    %v5942 = vadd.f32 %v5749, %v5941
    %5943 = vmatprep.mubr.bf16.mxu0 %v2107
    %5944 = vmatmul.mubr.bf16.gmra.mxu0 %v2106
    %v5945 = vpop.f32.mrf.mxu0
    %v5946 = vadd.f32 %v5753, %v5945
    %v5947 = vpop.f32.mrf.mxu0
    %v5948 = vadd.f32 %v5755, %v5947
    %v5949 = vpop.f32.mrf.mxu0
    %v5950 = vadd.f32 %v5757, %v5949
    %v5951 = vpop.f32.mrf.mxu0
    %v5952 = vadd.f32 %v5759, %v5951
    %5953 = vmatprep.mubr.bf16.mxu0 %v2115
    %5954 = vmatmul.mubr.bf16.gmra.mxu0 %v2114
    %v5955 = vpop.f32.mrf.mxu0
    %v5956 = vadd.f32 %v5763, %v5955
    %v5957 = vpop.f32.mrf.mxu0
    %v5958 = vadd.f32 %v5765, %v5957
    %v5959 = vpop.f32.mrf.mxu0
    %v5960 = vadd.f32 %v5767, %v5959
    %v5961 = vpop.f32.mrf.mxu0
    %v5962 = vadd.f32 %v5769, %v5961
    %5963 = vdwg.mxu0
    %5964 = vmatprep.subr.bf16.mxu0 %v3699
    %5965 = vmatpush1.bf16.msra.mxu0 %v3698
    %5966 = vmatprep.subr.bf16.mxu0 %v3693
    %5967 = vmatpush1.bf16.msra.mxu0 %v3692
    %5968 = vmatprep.subr.bf16.mxu0 %v3687
    %5969 = vmatpush1.bf16.msra.mxu0 %v3686
    %5970 = vmatprep.subr.bf16.mxu0 %v3681
    %5971 = vmatpush1.bf16.msra.mxu0 %v3680
    %5972 = vmatprep.subr.bf16.mxu0 %v3675
    %5973 = vmatpush1.bf16.msra.mxu0 %v3674
    %5974 = vmatprep.subr.bf16.mxu0 %v3669
    %5975 = vmatpush1.bf16.msra.mxu0 %v3668
    %5976 = vmatprep.subr.bf16.mxu0 %v3663
    %5977 = vmatpush1.bf16.msra.mxu0 %v3662
    %5978 = vmatprep.subr.bf16.mxu0 %v3657
    %5979 = vmatpush1.bf16.msra.mxu0 %v3656
    %5980 = vmatprep.subr.bf16.mxu0 %v3747
    %5981 = vmatpush2.bf16.msra.mxu0 %v3746
    %5982 = vmatprep.subr.bf16.mxu0 %v3741
    %5983 = vmatpush2.bf16.msra.mxu0 %v3740
    %5984 = vmatprep.subr.bf16.mxu0 %v3735
    %5985 = vmatpush2.bf16.msra.mxu0 %v3734
    %5986 = vmatprep.subr.bf16.mxu0 %v3729
    %5987 = vmatpush2.bf16.msra.mxu0 %v3728
    %5988 = vmatprep.subr.bf16.mxu0 %v3723
    %5989 = vmatpush2.bf16.msra.mxu0 %v3722
    %5990 = vmatprep.subr.bf16.mxu0 %v3717
    %5991 = vmatpush2.bf16.msra.mxu0 %v3716
    %5992 = vmatprep.subr.bf16.mxu0 %v3711
    %5993 = vmatpush2.bf16.msra.mxu0 %v3710
    %5994 = vmatprep.subr.bf16.mxu0 %v3705
    %5995 = vmatpush2.bf16.msra.mxu0 %v3704
    %5996 = vmatprep.mubr.bf16.mxu0 %v1989
    %5997 = vmatmul.mubr.bf16.gmra.mxu0 %v1988
    %v5998 = vpop.f32.mrf.mxu0
    %v5999 = vadd.f32 0.0, %v5998
    %v6000 = vpop.f32.mrf.mxu0
    %v6001 = vadd.f32 0.0, %v6000
    %v6002 = vpop.f32.mrf.mxu0
    %v6003 = vadd.f32 0.0, %v6002
    %v6004 = vpop.f32.mrf.mxu0
    %v6005 = vadd.f32 0.0, %v6004
    %6006 = vmatprep.mubr.bf16.mxu0 %v1997
    %6007 = vmatmul.mubr.bf16.gmra.mxu0 %v1996
    %v6008 = vpop.f32.mrf.mxu0
    %v6009 = vadd.f32 0.0, %v6008
    %v6010 = vpop.f32.mrf.mxu0
    %v6011 = vadd.f32 0.0, %v6010
    %v6012 = vpop.f32.mrf.mxu0
    %v6013 = vadd.f32 0.0, %v6012
    %v6014 = vpop.f32.mrf.mxu0
    %v6015 = vadd.f32 0.0, %v6014
    %6016 = vmatprep.mubr.bf16.mxu0 %v2005
    %6017 = vmatmul.mubr.bf16.gmra.mxu0 %v2004
    %v6018 = vpop.f32.mrf.mxu0
    %v6019 = vadd.f32 0.0, %v6018
    %v6020 = vpop.f32.mrf.mxu0
    %v6021 = vadd.f32 0.0, %v6020
    %v6022 = vpop.f32.mrf.mxu0
    %v6023 = vadd.f32 0.0, %v6022
    %v6024 = vpop.f32.mrf.mxu0
    %v6025 = vadd.f32 0.0, %v6024
    %6026 = vmatprep.mubr.bf16.mxu0 %v2013
    %6027 = vmatmul.mubr.bf16.gmra.mxu0 %v2012
    %v6028 = vpop.f32.mrf.mxu0
    %v6029 = vadd.f32 0.0, %v6028
    %v6030 = vpop.f32.mrf.mxu0
    %v6031 = vadd.f32 0.0, %v6030
    %v6032 = vpop.f32.mrf.mxu0
    %v6033 = vadd.f32 0.0, %v6032
    %v6034 = vpop.f32.mrf.mxu0
    %v6035 = vadd.f32 0.0, %v6034
    %6036 = vmatprep.mubr.bf16.mxu0 %v2021
    %6037 = vmatmul.mubr.bf16.gmra.mxu0 %v2020
    %v6038 = vpop.f32.mrf.mxu0
    %v6039 = vadd.f32 0.0, %v6038
    %v6040 = vpop.f32.mrf.mxu0
    %v6041 = vadd.f32 0.0, %v6040
    %v6042 = vpop.f32.mrf.mxu0
    %v6043 = vadd.f32 0.0, %v6042
    %v6044 = vpop.f32.mrf.mxu0
    %v6045 = vadd.f32 0.0, %v6044
    %6046 = vmatprep.mubr.bf16.mxu0 %v2029
    %6047 = vmatmul.mubr.bf16.gmra.mxu0 %v2028
    %v6048 = vpop.f32.mrf.mxu0
    %v6049 = vadd.f32 0.0, %v6048
    %v6050 = vpop.f32.mrf.mxu0
    %v6051 = vadd.f32 0.0, %v6050
    %v6052 = vpop.f32.mrf.mxu0
    %v6053 = vadd.f32 0.0, %v6052
    %v6054 = vpop.f32.mrf.mxu0
    %v6055 = vadd.f32 0.0, %v6054
    %6056 = vmatprep.mubr.bf16.mxu0 %v2037
    %6057 = vmatmul.mubr.bf16.gmra.mxu0 %v2036
    %v6058 = vpop.f32.mrf.mxu0
    %v6059 = vadd.f32 0.0, %v6058
    %v6060 = vpop.f32.mrf.mxu0
    %v6061 = vadd.f32 0.0, %v6060
    %v6062 = vpop.f32.mrf.mxu0
    %v6063 = vadd.f32 0.0, %v6062
    %v6064 = vpop.f32.mrf.mxu0
    %v6065 = vadd.f32 0.0, %v6064
    %6066 = vmatprep.mubr.bf16.mxu0 %v2045
    %6067 = vmatmul.mubr.bf16.gmra.mxu0 %v2044
    %v6068 = vpop.f32.mrf.mxu0
    %v6069 = vadd.f32 0.0, %v6068
    %v6070 = vpop.f32.mrf.mxu0
    %v6071 = vadd.f32 0.0, %v6070
    %v6072 = vpop.f32.mrf.mxu0
    %v6073 = vadd.f32 0.0, %v6072
    %v6074 = vpop.f32.mrf.mxu0
    %v6075 = vadd.f32 0.0, %v6074
    %6076 = vmatprep.mubr.bf16.mxu0 %v2053
    %6077 = vmatmul.mubr.bf16.gmra.mxu0 %v2052
    %v6078 = vpop.f32.mrf.mxu0
    %v6079 = vadd.f32 0.0, %v6078
    %v6080 = vpop.f32.mrf.mxu0
    %v6081 = vadd.f32 0.0, %v6080
    %v6082 = vpop.f32.mrf.mxu0
    %v6083 = vadd.f32 0.0, %v6082
    %v6084 = vpop.f32.mrf.mxu0
    %v6085 = vadd.f32 0.0, %v6084
    %6086 = vmatprep.mubr.bf16.mxu0 %v2061
    %6087 = vmatmul.mubr.bf16.gmra.mxu0 %v2060
    %v6088 = vpop.f32.mrf.mxu0
    %v6089 = vadd.f32 0.0, %v6088
    %v6090 = vpop.f32.mrf.mxu0
    %v6091 = vadd.f32 0.0, %v6090
    %v6092 = vpop.f32.mrf.mxu0
    %v6093 = vadd.f32 0.0, %v6092
    %v6094 = vpop.f32.mrf.mxu0
    %v6095 = vadd.f32 0.0, %v6094
    %6096 = vmatprep.mubr.bf16.mxu0 %v2069
    %6097 = vmatmul.mubr.bf16.gmra.mxu0 %v2068
    %v6098 = vpop.f32.mrf.mxu0
    %v6099 = vadd.f32 0.0, %v6098
    %v6100 = vpop.f32.mrf.mxu0
    %v6101 = vadd.f32 0.0, %v6100
    %v6102 = vpop.f32.mrf.mxu0
    %v6103 = vadd.f32 0.0, %v6102
    %v6104 = vpop.f32.mrf.mxu0
    %v6105 = vadd.f32 0.0, %v6104
    %6106 = vmatprep.mubr.bf16.mxu0 %v2077
    %6107 = vmatmul.mubr.bf16.gmra.mxu0 %v2076
    %v6108 = vpop.f32.mrf.mxu0
    %v6109 = vadd.f32 0.0, %v6108
    %v6110 = vpop.f32.mrf.mxu0
    %v6111 = vadd.f32 0.0, %v6110
    %v6112 = vpop.f32.mrf.mxu0
    %v6113 = vadd.f32 0.0, %v6112
    %v6114 = vpop.f32.mrf.mxu0
    %v6115 = vadd.f32 0.0, %v6114
    %6116 = vmatprep.mubr.bf16.mxu0 %v2085
    %6117 = vmatmul.mubr.bf16.gmra.mxu0 %v2084
    %v6118 = vpop.f32.mrf.mxu0
    %v6119 = vadd.f32 0.0, %v6118
    %v6120 = vpop.f32.mrf.mxu0
    %v6121 = vadd.f32 0.0, %v6120
    %v6122 = vpop.f32.mrf.mxu0
    %v6123 = vadd.f32 0.0, %v6122
    %v6124 = vpop.f32.mrf.mxu0
    %v6125 = vadd.f32 0.0, %v6124
    %6126 = vmatprep.mubr.bf16.mxu0 %v2093
    %6127 = vmatmul.mubr.bf16.gmra.mxu0 %v2092
    %v6128 = vpop.f32.mrf.mxu0
    %v6129 = vadd.f32 0.0, %v6128
    %v6130 = vpop.f32.mrf.mxu0
    %v6131 = vadd.f32 0.0, %v6130
    %v6132 = vpop.f32.mrf.mxu0
    %v6133 = vadd.f32 0.0, %v6132
    %v6134 = vpop.f32.mrf.mxu0
    %v6135 = vadd.f32 0.0, %v6134
    %6136 = vmatprep.mubr.bf16.mxu0 %v2101
    %6137 = vmatmul.mubr.bf16.gmra.mxu0 %v2100
    %v6138 = vpop.f32.mrf.mxu0
    %v6139 = vadd.f32 0.0, %v6138
    %v6140 = vpop.f32.mrf.mxu0
    %v6141 = vadd.f32 0.0, %v6140
    %v6142 = vpop.f32.mrf.mxu0
    %v6143 = vadd.f32 0.0, %v6142
    %v6144 = vpop.f32.mrf.mxu0
    %v6145 = vadd.f32 0.0, %v6144
    %6146 = vmatprep.mubr.bf16.mxu0 %v2109
    %6147 = vmatmul.mubr.bf16.gmra.mxu0 %v2108
    %v6148 = vpop.f32.mrf.mxu0
    %v6149 = vadd.f32 0.0, %v6148
    %v6150 = vpop.f32.mrf.mxu0
    %v6151 = vadd.f32 0.0, %v6150
    %v6152 = vpop.f32.mrf.mxu0
    %v6153 = vadd.f32 0.0, %v6152
    %v6154 = vpop.f32.mrf.mxu0
    %v6155 = vadd.f32 0.0, %v6154
    %6156 = vdwg.mxu0
    %6157 = vmatprep.subr.bf16.mxu0 %v3795
    %6158 = vmatpush1.bf16.msra.mxu0 %v3794
    %6159 = vmatprep.subr.bf16.mxu0 %v3789
    %6160 = vmatpush1.bf16.msra.mxu0 %v3788
    %6161 = vmatprep.subr.bf16.mxu0 %v3783
    %6162 = vmatpush1.bf16.msra.mxu0 %v3782
    %6163 = vmatprep.subr.bf16.mxu0 %v3777
    %6164 = vmatpush1.bf16.msra.mxu0 %v3776
    %6165 = vmatprep.subr.bf16.mxu0 %v3771
    %6166 = vmatpush1.bf16.msra.mxu0 %v3770
    %6167 = vmatprep.subr.bf16.mxu0 %v3765
    %6168 = vmatpush1.bf16.msra.mxu0 %v3764
    %6169 = vmatprep.subr.bf16.mxu0 %v3759
    %6170 = vmatpush1.bf16.msra.mxu0 %v3758
    %6171 = vmatprep.subr.bf16.mxu0 %v3753
    %6172 = vmatpush1.bf16.msra.mxu0 %v3752
    %6173 = vmatprep.subr.bf16.mxu0 %v3843
    %6174 = vmatpush2.bf16.msra.mxu0 %v3842
    %6175 = vmatprep.subr.bf16.mxu0 %v3837
    %6176 = vmatpush2.bf16.msra.mxu0 %v3836
    %6177 = vmatprep.subr.bf16.mxu0 %v3831
    %6178 = vmatpush2.bf16.msra.mxu0 %v3830
    %6179 = vmatprep.subr.bf16.mxu0 %v3825
    %6180 = vmatpush2.bf16.msra.mxu0 %v3824
    %6181 = vmatprep.subr.bf16.mxu0 %v3819
    %6182 = vmatpush2.bf16.msra.mxu0 %v3818
    %6183 = vmatprep.subr.bf16.mxu0 %v3813
    %6184 = vmatpush2.bf16.msra.mxu0 %v3812
    %6185 = vmatprep.subr.bf16.mxu0 %v3807
    %6186 = vmatpush2.bf16.msra.mxu0 %v3806
    %6187 = vmatprep.subr.bf16.mxu0 %v3801
    %6188 = vmatpush2.bf16.msra.mxu0 %v3800
    %6189 = vmatprep.mubr.bf16.mxu0 %v1991
    %6190 = vmatmul.mubr.bf16.gmra.mxu0 %v1990
    %v6191 = vpop.f32.mrf.mxu0
    %v6192 = vadd.f32 %v5999, %v6191
    %v6193 = vpop.f32.mrf.mxu0
    %v6194 = vadd.f32 %v6001, %v6193
    %v6195 = vpop.f32.mrf.mxu0
    %v6196 = vadd.f32 %v6003, %v6195
    %v6197 = vpop.f32.mrf.mxu0
    %v6198 = vadd.f32 %v6005, %v6197
    %6199 = vmatprep.mubr.bf16.mxu0 %v1999
    %6200 = vmatmul.mubr.bf16.gmra.mxu0 %v1998
    %v6201 = vpop.f32.mrf.mxu0
    %v6202 = vadd.f32 %v6009, %v6201
    %v6203 = vpop.f32.mrf.mxu0
    %v6204 = vadd.f32 %v6011, %v6203
    %v6205 = vpop.f32.mrf.mxu0
    %v6206 = vadd.f32 %v6013, %v6205
    %v6207 = vpop.f32.mrf.mxu0
    %v6208 = vadd.f32 %v6015, %v6207
    %6209 = vmatprep.mubr.bf16.mxu0 %v2007
    %6210 = vmatmul.mubr.bf16.gmra.mxu0 %v2006
    %v6211 = vpop.f32.mrf.mxu0
    %v6212 = vadd.f32 %v6019, %v6211
    %v6213 = vpop.f32.mrf.mxu0
    %v6214 = vadd.f32 %v6021, %v6213
    %v6215 = vpop.f32.mrf.mxu0
    %v6216 = vadd.f32 %v6023, %v6215
    %v6217 = vpop.f32.mrf.mxu0
    %v6218 = vadd.f32 %v6025, %v6217
    %6219 = vmatprep.mubr.bf16.mxu0 %v2015
    %6220 = vmatmul.mubr.bf16.gmra.mxu0 %v2014
    %v6221 = vpop.f32.mrf.mxu0
    %v6222 = vadd.f32 %v6029, %v6221
    %v6223 = vpop.f32.mrf.mxu0
    %v6224 = vadd.f32 %v6031, %v6223
    %v6225 = vpop.f32.mrf.mxu0
    %v6226 = vadd.f32 %v6033, %v6225
    %v6227 = vpop.f32.mrf.mxu0
    %v6228 = vadd.f32 %v6035, %v6227
    %6229 = vmatprep.mubr.bf16.mxu0 %v2023
    %6230 = vmatmul.mubr.bf16.gmra.mxu0 %v2022
    %v6231 = vpop.f32.mrf.mxu0
    %v6232 = vadd.f32 %v6039, %v6231
    %v6233 = vpop.f32.mrf.mxu0
    %v6234 = vadd.f32 %v6041, %v6233
    %v6235 = vpop.f32.mrf.mxu0
    %v6236 = vadd.f32 %v6043, %v6235
    %v6237 = vpop.f32.mrf.mxu0
    %v6238 = vadd.f32 %v6045, %v6237
    %6239 = vmatprep.mubr.bf16.mxu0 %v2031
    %6240 = vmatmul.mubr.bf16.gmra.mxu0 %v2030
    %v6241 = vpop.f32.mrf.mxu0
    %v6242 = vadd.f32 %v6049, %v6241
    %v6243 = vpop.f32.mrf.mxu0
    %v6244 = vadd.f32 %v6051, %v6243
    %v6245 = vpop.f32.mrf.mxu0
    %v6246 = vadd.f32 %v6053, %v6245
    %v6247 = vpop.f32.mrf.mxu0
    %v6248 = vadd.f32 %v6055, %v6247
    %6249 = vmatprep.mubr.bf16.mxu0 %v2039
    %6250 = vmatmul.mubr.bf16.gmra.mxu0 %v2038
    %v6251 = vpop.f32.mrf.mxu0
    %v6252 = vadd.f32 %v6059, %v6251
    %v6253 = vpop.f32.mrf.mxu0
    %v6254 = vadd.f32 %v6061, %v6253
    %v6255 = vpop.f32.mrf.mxu0
    %v6256 = vadd.f32 %v6063, %v6255
    %v6257 = vpop.f32.mrf.mxu0
    %v6258 = vadd.f32 %v6065, %v6257
    %6259 = vmatprep.mubr.bf16.mxu0 %v2047
    %6260 = vmatmul.mubr.bf16.gmra.mxu0 %v2046
    %v6261 = vpop.f32.mrf.mxu0
    %v6262 = vadd.f32 %v6069, %v6261
    %v6263 = vpop.f32.mrf.mxu0
    %v6264 = vadd.f32 %v6071, %v6263
    %v6265 = vpop.f32.mrf.mxu0
    %v6266 = vadd.f32 %v6073, %v6265
    %v6267 = vpop.f32.mrf.mxu0
    %v6268 = vadd.f32 %v6075, %v6267
    %6269 = vmatprep.mubr.bf16.mxu0 %v2055
    %6270 = vmatmul.mubr.bf16.gmra.mxu0 %v2054
    %v6271 = vpop.f32.mrf.mxu0
    %v6272 = vadd.f32 %v6079, %v6271
    %v6273 = vpop.f32.mrf.mxu0
    %v6274 = vadd.f32 %v6081, %v6273
    %v6275 = vpop.f32.mrf.mxu0
    %v6276 = vadd.f32 %v6083, %v6275
    %v6277 = vpop.f32.mrf.mxu0
    %v6278 = vadd.f32 %v6085, %v6277
    %6279 = vmatprep.mubr.bf16.mxu0 %v2063
    %6280 = vmatmul.mubr.bf16.gmra.mxu0 %v2062
    %v6281 = vpop.f32.mrf.mxu0
    %v6282 = vadd.f32 %v6089, %v6281
    %v6283 = vpop.f32.mrf.mxu0
    %v6284 = vadd.f32 %v6091, %v6283
    %v6285 = vpop.f32.mrf.mxu0
    %v6286 = vadd.f32 %v6093, %v6285
    %v6287 = vpop.f32.mrf.mxu0
    %v6288 = vadd.f32 %v6095, %v6287
    %6289 = vmatprep.mubr.bf16.mxu0 %v2071
    %6290 = vmatmul.mubr.bf16.gmra.mxu0 %v2070
    %v6291 = vpop.f32.mrf.mxu0
    %v6292 = vadd.f32 %v6099, %v6291
    %v6293 = vpop.f32.mrf.mxu0
    %v6294 = vadd.f32 %v6101, %v6293
    %v6295 = vpop.f32.mrf.mxu0
    %v6296 = vadd.f32 %v6103, %v6295
    %v6297 = vpop.f32.mrf.mxu0
    %v6298 = vadd.f32 %v6105, %v6297
    %6299 = vmatprep.mubr.bf16.mxu0 %v2079
    %6300 = vmatmul.mubr.bf16.gmra.mxu0 %v2078
    %v6301 = vpop.f32.mrf.mxu0
    %v6302 = vadd.f32 %v6109, %v6301
    %v6303 = vpop.f32.mrf.mxu0
    %v6304 = vadd.f32 %v6111, %v6303
    %v6305 = vpop.f32.mrf.mxu0
    %v6306 = vadd.f32 %v6113, %v6305
    %v6307 = vpop.f32.mrf.mxu0
    %v6308 = vadd.f32 %v6115, %v6307
    %6309 = vmatprep.mubr.bf16.mxu0 %v2087
    %6310 = vmatmul.mubr.bf16.gmra.mxu0 %v2086
    %v6311 = vpop.f32.mrf.mxu0
    %v6312 = vadd.f32 %v6119, %v6311
    %v6313 = vpop.f32.mrf.mxu0
    %v6314 = vadd.f32 %v6121, %v6313
    %v6315 = vpop.f32.mrf.mxu0
    %v6316 = vadd.f32 %v6123, %v6315
    %v6317 = vpop.f32.mrf.mxu0
    %v6318 = vadd.f32 %v6125, %v6317
    %6319 = vmatprep.mubr.bf16.mxu0 %v2095
    %6320 = vmatmul.mubr.bf16.gmra.mxu0 %v2094
    %v6321 = vpop.f32.mrf.mxu0
    %v6322 = vadd.f32 %v6129, %v6321
    %v6323 = vpop.f32.mrf.mxu0
    %v6324 = vadd.f32 %v6131, %v6323
    %v6325 = vpop.f32.mrf.mxu0
    %v6326 = vadd.f32 %v6133, %v6325
    %v6327 = vpop.f32.mrf.mxu0
    %v6328 = vadd.f32 %v6135, %v6327
    %6329 = vmatprep.mubr.bf16.mxu0 %v2103
    %6330 = vmatmul.mubr.bf16.gmra.mxu0 %v2102
    %v6331 = vpop.f32.mrf.mxu0
    %v6332 = vadd.f32 %v6139, %v6331
    %v6333 = vpop.f32.mrf.mxu0
    %v6334 = vadd.f32 %v6141, %v6333
    %v6335 = vpop.f32.mrf.mxu0
    %v6336 = vadd.f32 %v6143, %v6335
    %v6337 = vpop.f32.mrf.mxu0
    %v6338 = vadd.f32 %v6145, %v6337
    %6339 = vmatprep.mubr.bf16.mxu0 %v2111
    %6340 = vmatmul.mubr.bf16.gmra.mxu0 %v2110
    %v6341 = vpop.f32.mrf.mxu0
    %v6342 = vadd.f32 %v6149, %v6341
    %v6343 = vpop.f32.mrf.mxu0
    %v6344 = vadd.f32 %v6151, %v6343
    %v6345 = vpop.f32.mrf.mxu0
    %v6346 = vadd.f32 %v6153, %v6345
    %v6347 = vpop.f32.mrf.mxu0
    %v6348 = vadd.f32 %v6155, %v6347
    %6349 = vdwg.mxu0
    %6350 = vmatprep.subr.bf16.mxu0 %v3891
    %6351 = vmatpush1.bf16.msra.mxu0 %v3890
    %6352 = vmatprep.subr.bf16.mxu0 %v3885
    %6353 = vmatpush1.bf16.msra.mxu0 %v3884
    %6354 = vmatprep.subr.bf16.mxu0 %v3879
    %6355 = vmatpush1.bf16.msra.mxu0 %v3878
    %6356 = vmatprep.subr.bf16.mxu0 %v3873
    %6357 = vmatpush1.bf16.msra.mxu0 %v3872
    %6358 = vmatprep.subr.bf16.mxu0 %v3867
    %6359 = vmatpush1.bf16.msra.mxu0 %v3866
    %6360 = vmatprep.subr.bf16.mxu0 %v3861
    %6361 = vmatpush1.bf16.msra.mxu0 %v3860
    %6362 = vmatprep.subr.bf16.mxu0 %v3855
    %6363 = vmatpush1.bf16.msra.mxu0 %v3854
    %6364 = vmatprep.subr.bf16.mxu0 %v3849
    %6365 = vmatpush1.bf16.msra.mxu0 %v3848
    %6366 = vmatprep.subr.bf16.mxu0 %v3939
    %6367 = vmatpush2.bf16.msra.mxu0 %v3938
    %6368 = vmatprep.subr.bf16.mxu0 %v3933
    %6369 = vmatpush2.bf16.msra.mxu0 %v3932
    %6370 = vmatprep.subr.bf16.mxu0 %v3927
    %6371 = vmatpush2.bf16.msra.mxu0 %v3926
    %6372 = vmatprep.subr.bf16.mxu0 %v3921
    %6373 = vmatpush2.bf16.msra.mxu0 %v3920
    %6374 = vmatprep.subr.bf16.mxu0 %v3915
    %6375 = vmatpush2.bf16.msra.mxu0 %v3914
    %6376 = vmatprep.subr.bf16.mxu0 %v3909
    %6377 = vmatpush2.bf16.msra.mxu0 %v3908
    %6378 = vmatprep.subr.bf16.mxu0 %v3903
    %6379 = vmatpush2.bf16.msra.mxu0 %v3902
    %6380 = vmatprep.subr.bf16.mxu0 %v3897
    %6381 = vmatpush2.bf16.msra.mxu0 %v3896
    %6382 = vmatprep.mubr.bf16.mxu0 %v1993
    %6383 = vmatmul.mubr.bf16.gmra.mxu0 %v1992
    %v6384 = vpop.f32.mrf.mxu0
    %v6385 = vadd.f32 %v6192, %v6384
    %v6386 = vpop.f32.mrf.mxu0
    %v6387 = vadd.f32 %v6194, %v6386
    %v6388 = vpop.f32.mrf.mxu0
    %v6389 = vadd.f32 %v6196, %v6388
    %v6390 = vpop.f32.mrf.mxu0
    %v6391 = vadd.f32 %v6198, %v6390
    %6392 = vmatprep.mubr.bf16.mxu0 %v2001
    %6393 = vmatmul.mubr.bf16.gmra.mxu0 %v2000
    %v6394 = vpop.f32.mrf.mxu0
    %v6395 = vadd.f32 %v6202, %v6394
    %v6396 = vpop.f32.mrf.mxu0
    %v6397 = vadd.f32 %v6204, %v6396
    %v6398 = vpop.f32.mrf.mxu0
    %v6399 = vadd.f32 %v6206, %v6398
    %v6400 = vpop.f32.mrf.mxu0
    %v6401 = vadd.f32 %v6208, %v6400
    %6402 = vmatprep.mubr.bf16.mxu0 %v2009
    %6403 = vmatmul.mubr.bf16.gmra.mxu0 %v2008
    %v6404 = vpop.f32.mrf.mxu0
    %v6405 = vadd.f32 %v6212, %v6404
    %v6406 = vpop.f32.mrf.mxu0
    %v6407 = vadd.f32 %v6214, %v6406
    %v6408 = vpop.f32.mrf.mxu0
    %v6409 = vadd.f32 %v6216, %v6408
    %v6410 = vpop.f32.mrf.mxu0
    %v6411 = vadd.f32 %v6218, %v6410
    %6412 = vmatprep.mubr.bf16.mxu0 %v2017
    %6413 = vmatmul.mubr.bf16.gmra.mxu0 %v2016
    %v6414 = vpop.f32.mrf.mxu0
    %v6415 = vadd.f32 %v6222, %v6414
    %v6416 = vpop.f32.mrf.mxu0
    %v6417 = vadd.f32 %v6224, %v6416
    %v6418 = vpop.f32.mrf.mxu0
    %v6419 = vadd.f32 %v6226, %v6418
    %v6420 = vpop.f32.mrf.mxu0
    %v6421 = vadd.f32 %v6228, %v6420
    %6422 = vmatprep.mubr.bf16.mxu0 %v2025
    %6423 = vmatmul.mubr.bf16.gmra.mxu0 %v2024
    %v6424 = vpop.f32.mrf.mxu0
    %v6425 = vadd.f32 %v6232, %v6424
    %v6426 = vpop.f32.mrf.mxu0
    %v6427 = vadd.f32 %v6234, %v6426
    %v6428 = vpop.f32.mrf.mxu0
    %v6429 = vadd.f32 %v6236, %v6428
    %v6430 = vpop.f32.mrf.mxu0
    %v6431 = vadd.f32 %v6238, %v6430
    %6432 = vmatprep.mubr.bf16.mxu0 %v2033
    %6433 = vmatmul.mubr.bf16.gmra.mxu0 %v2032
    %v6434 = vpop.f32.mrf.mxu0
    %v6435 = vadd.f32 %v6242, %v6434
    %v6436 = vpop.f32.mrf.mxu0
    %v6437 = vadd.f32 %v6244, %v6436
    %v6438 = vpop.f32.mrf.mxu0
    %v6439 = vadd.f32 %v6246, %v6438
    %v6440 = vpop.f32.mrf.mxu0
    %v6441 = vadd.f32 %v6248, %v6440
    %6442 = vmatprep.mubr.bf16.mxu0 %v2041
    %6443 = vmatmul.mubr.bf16.gmra.mxu0 %v2040
    %v6444 = vpop.f32.mrf.mxu0
    %v6445 = vadd.f32 %v6252, %v6444
    %v6446 = vpop.f32.mrf.mxu0
    %v6447 = vadd.f32 %v6254, %v6446
    %v6448 = vpop.f32.mrf.mxu0
    %v6449 = vadd.f32 %v6256, %v6448
    %v6450 = vpop.f32.mrf.mxu0
    %v6451 = vadd.f32 %v6258, %v6450
    %6452 = vmatprep.mubr.bf16.mxu0 %v2049
    %6453 = vmatmul.mubr.bf16.gmra.mxu0 %v2048
    %v6454 = vpop.f32.mrf.mxu0
    %v6455 = vadd.f32 %v6262, %v6454
    %v6456 = vpop.f32.mrf.mxu0
    %v6457 = vadd.f32 %v6264, %v6456
    %v6458 = vpop.f32.mrf.mxu0
    %v6459 = vadd.f32 %v6266, %v6458
    %v6460 = vpop.f32.mrf.mxu0
    %v6461 = vadd.f32 %v6268, %v6460
    %6462 = vmatprep.mubr.bf16.mxu0 %v2057
    %6463 = vmatmul.mubr.bf16.gmra.mxu0 %v2056
    %v6464 = vpop.f32.mrf.mxu0
    %v6465 = vadd.f32 %v6272, %v6464
    %v6466 = vpop.f32.mrf.mxu0
    %v6467 = vadd.f32 %v6274, %v6466
    %v6468 = vpop.f32.mrf.mxu0
    %v6469 = vadd.f32 %v6276, %v6468
    %v6470 = vpop.f32.mrf.mxu0
    %v6471 = vadd.f32 %v6278, %v6470
    %6472 = vmatprep.mubr.bf16.mxu0 %v2065
    %6473 = vmatmul.mubr.bf16.gmra.mxu0 %v2064
    %v6474 = vpop.f32.mrf.mxu0
    %v6475 = vadd.f32 %v6282, %v6474
    %v6476 = vpop.f32.mrf.mxu0
    %v6477 = vadd.f32 %v6284, %v6476
    %v6478 = vpop.f32.mrf.mxu0
    %v6479 = vadd.f32 %v6286, %v6478
    %v6480 = vpop.f32.mrf.mxu0
    %v6481 = vadd.f32 %v6288, %v6480
    %6482 = vmatprep.mubr.bf16.mxu0 %v2073
    %6483 = vmatmul.mubr.bf16.gmra.mxu0 %v2072
    %v6484 = vpop.f32.mrf.mxu0
    %v6485 = vadd.f32 %v6292, %v6484
    %v6486 = vpop.f32.mrf.mxu0
    %v6487 = vadd.f32 %v6294, %v6486
    %v6488 = vpop.f32.mrf.mxu0
    %v6489 = vadd.f32 %v6296, %v6488
    %v6490 = vpop.f32.mrf.mxu0
    %v6491 = vadd.f32 %v6298, %v6490
    %6492 = vmatprep.mubr.bf16.mxu0 %v2081
    %6493 = vmatmul.mubr.bf16.gmra.mxu0 %v2080
    %v6494 = vpop.f32.mrf.mxu0
    %v6495 = vadd.f32 %v6302, %v6494
    %v6496 = vpop.f32.mrf.mxu0
    %v6497 = vadd.f32 %v6304, %v6496
    %v6498 = vpop.f32.mrf.mxu0
    %v6499 = vadd.f32 %v6306, %v6498
    %v6500 = vpop.f32.mrf.mxu0
    %v6501 = vadd.f32 %v6308, %v6500
    %6502 = vmatprep.mubr.bf16.mxu0 %v2089
    %6503 = vmatmul.mubr.bf16.gmra.mxu0 %v2088
    %v6504 = vpop.f32.mrf.mxu0
    %v6505 = vadd.f32 %v6312, %v6504
    %v6506 = vpop.f32.mrf.mxu0
    %v6507 = vadd.f32 %v6314, %v6506
    %v6508 = vpop.f32.mrf.mxu0
    %v6509 = vadd.f32 %v6316, %v6508
    %v6510 = vpop.f32.mrf.mxu0
    %v6511 = vadd.f32 %v6318, %v6510
    %6512 = vmatprep.mubr.bf16.mxu0 %v2097
    %6513 = vmatmul.mubr.bf16.gmra.mxu0 %v2096
    %v6514 = vpop.f32.mrf.mxu0
    %v6515 = vadd.f32 %v6322, %v6514
    %v6516 = vpop.f32.mrf.mxu0
    %v6517 = vadd.f32 %v6324, %v6516
    %v6518 = vpop.f32.mrf.mxu0
    %v6519 = vadd.f32 %v6326, %v6518
    %v6520 = vpop.f32.mrf.mxu0
    %v6521 = vadd.f32 %v6328, %v6520
    %6522 = vmatprep.mubr.bf16.mxu0 %v2105
    %6523 = vmatmul.mubr.bf16.gmra.mxu0 %v2104
    %v6524 = vpop.f32.mrf.mxu0
    %v6525 = vadd.f32 %v6332, %v6524
    %v6526 = vpop.f32.mrf.mxu0
    %v6527 = vadd.f32 %v6334, %v6526
    %v6528 = vpop.f32.mrf.mxu0
    %v6529 = vadd.f32 %v6336, %v6528
    %v6530 = vpop.f32.mrf.mxu0
    %v6531 = vadd.f32 %v6338, %v6530
    %6532 = vmatprep.mubr.bf16.mxu0 %v2113
    %6533 = vmatmul.mubr.bf16.gmra.mxu0 %v2112
    %v6534 = vpop.f32.mrf.mxu0
    %v6535 = vadd.f32 %v6342, %v6534
    %v6536 = vpop.f32.mrf.mxu0
    %v6537 = vadd.f32 %v6344, %v6536
    %v6538 = vpop.f32.mrf.mxu0
    %v6539 = vadd.f32 %v6346, %v6538
    %v6540 = vpop.f32.mrf.mxu0
    %v6541 = vadd.f32 %v6348, %v6540
    %6542 = vdwg.mxu0
    %6543 = vmatprep.subr.bf16.mxu0 %v3987
    %6544 = vmatpush1.bf16.msra.mxu0 %v3986
    %6545 = vmatprep.subr.bf16.mxu0 %v3981
    %6546 = vmatpush1.bf16.msra.mxu0 %v3980
    %6547 = vmatprep.subr.bf16.mxu0 %v3975
    %6548 = vmatpush1.bf16.msra.mxu0 %v3974
    %6549 = vmatprep.subr.bf16.mxu0 %v3969
    %6550 = vmatpush1.bf16.msra.mxu0 %v3968
    %6551 = vmatprep.subr.bf16.mxu0 %v3963
    %6552 = vmatpush1.bf16.msra.mxu0 %v3962
    %6553 = vmatprep.subr.bf16.mxu0 %v3957
    %6554 = vmatpush1.bf16.msra.mxu0 %v3956
    %6555 = vmatprep.subr.bf16.mxu0 %v3951
    %6556 = vmatpush1.bf16.msra.mxu0 %v3950
    %6557 = vmatprep.subr.bf16.mxu0 %v3945
    %6558 = vmatpush1.bf16.msra.mxu0 %v3944
    %6559 = vmatprep.subr.bf16.mxu0 %v4035
    %6560 = vmatpush2.bf16.msra.mxu0 %v4034
    %6561 = vmatprep.subr.bf16.mxu0 %v4029
    %6562 = vmatpush2.bf16.msra.mxu0 %v4028
    %6563 = vmatprep.subr.bf16.mxu0 %v4023
    %6564 = vmatpush2.bf16.msra.mxu0 %v4022
    %6565 = vmatprep.subr.bf16.mxu0 %v4017
    %6566 = vmatpush2.bf16.msra.mxu0 %v4016
    %6567 = vmatprep.subr.bf16.mxu0 %v4011
    %6568 = vmatpush2.bf16.msra.mxu0 %v4010
    %6569 = vmatprep.subr.bf16.mxu0 %v4005
    %6570 = vmatpush2.bf16.msra.mxu0 %v4004
    %6571 = vmatprep.subr.bf16.mxu0 %v3999
    %6572 = vmatpush2.bf16.msra.mxu0 %v3998
    %6573 = vmatprep.subr.bf16.mxu0 %v3993
    %6574 = vmatpush2.bf16.msra.mxu0 %v3992
    %6575 = vmatprep.mubr.bf16.mxu0 %v1995
    %6576 = vmatmul.mubr.bf16.gmra.mxu0 %v1994
    %v6577 = vpop.f32.mrf.mxu0
    %v6578 = vadd.f32 %v6385, %v6577
    %v6579 = vpop.f32.mrf.mxu0
    %v6580 = vadd.f32 %v6387, %v6579
    %v6581 = vpop.f32.mrf.mxu0
    %v6582 = vadd.f32 %v6389, %v6581
    %v6583 = vpop.f32.mrf.mxu0
    %v6584 = vadd.f32 %v6391, %v6583
    %6585 = vmatprep.mubr.bf16.mxu0 %v2003
    %6586 = vmatmul.mubr.bf16.gmra.mxu0 %v2002
    %v6587 = vpop.f32.mrf.mxu0
    %v6588 = vadd.f32 %v6395, %v6587
    %v6589 = vpop.f32.mrf.mxu0
    %v6590 = vadd.f32 %v6397, %v6589
    %v6591 = vpop.f32.mrf.mxu0
    %v6592 = vadd.f32 %v6399, %v6591
    %v6593 = vpop.f32.mrf.mxu0
    %v6594 = vadd.f32 %v6401, %v6593
    %6595 = vmatprep.mubr.bf16.mxu0 %v2011
    %6596 = vmatmul.mubr.bf16.gmra.mxu0 %v2010
    %v6597 = vpop.f32.mrf.mxu0
    %v6598 = vadd.f32 %v6405, %v6597
    %v6599 = vpop.f32.mrf.mxu0
    %v6600 = vadd.f32 %v6407, %v6599
    %v6601 = vpop.f32.mrf.mxu0
    %v6602 = vadd.f32 %v6409, %v6601
    %v6603 = vpop.f32.mrf.mxu0
    %v6604 = vadd.f32 %v6411, %v6603
    %6605 = vmatprep.mubr.bf16.mxu0 %v2019
    %6606 = vmatmul.mubr.bf16.gmra.mxu0 %v2018
    %v6607 = vpop.f32.mrf.mxu0
    %v6608 = vadd.f32 %v6415, %v6607
    %v6609 = vpop.f32.mrf.mxu0
    %v6610 = vadd.f32 %v6417, %v6609
    %v6611 = vpop.f32.mrf.mxu0
    %v6612 = vadd.f32 %v6419, %v6611
    %v6613 = vpop.f32.mrf.mxu0
    %v6614 = vadd.f32 %v6421, %v6613
    %6615 = vmatprep.mubr.bf16.mxu0 %v2027
    %6616 = vmatmul.mubr.bf16.gmra.mxu0 %v2026
    %v6617 = vpop.f32.mrf.mxu0
    %v6618 = vadd.f32 %v6425, %v6617
    %v6619 = vpop.f32.mrf.mxu0
    %v6620 = vadd.f32 %v6427, %v6619
    %v6621 = vpop.f32.mrf.mxu0
    %v6622 = vadd.f32 %v6429, %v6621
    %v6623 = vpop.f32.mrf.mxu0
    %v6624 = vadd.f32 %v6431, %v6623
    %6625 = vmatprep.mubr.bf16.mxu0 %v2035
    %6626 = vmatmul.mubr.bf16.gmra.mxu0 %v2034
    %v6627 = vpop.f32.mrf.mxu0
    %v6628 = vadd.f32 %v6435, %v6627
    %v6629 = vpop.f32.mrf.mxu0
    %v6630 = vadd.f32 %v6437, %v6629
    %v6631 = vpop.f32.mrf.mxu0
    %v6632 = vadd.f32 %v6439, %v6631
    %v6633 = vpop.f32.mrf.mxu0
    %v6634 = vadd.f32 %v6441, %v6633
    %6635 = vmatprep.mubr.bf16.mxu0 %v2043
    %6636 = vmatmul.mubr.bf16.gmra.mxu0 %v2042
    %v6637 = vpop.f32.mrf.mxu0
    %v6638 = vadd.f32 %v6445, %v6637
    %v6639 = vpop.f32.mrf.mxu0
    %v6640 = vadd.f32 %v6447, %v6639
    %v6641 = vpop.f32.mrf.mxu0
    %v6642 = vadd.f32 %v6449, %v6641
    %v6643 = vpop.f32.mrf.mxu0
    %v6644 = vadd.f32 %v6451, %v6643
    %6645 = vmatprep.mubr.bf16.mxu0 %v2051
    %6646 = vmatmul.mubr.bf16.gmra.mxu0 %v2050
    %v6647 = vpop.f32.mrf.mxu0
    %v6648 = vadd.f32 %v6455, %v6647
    %v6649 = vpop.f32.mrf.mxu0
    %v6650 = vadd.f32 %v6457, %v6649
    %v6651 = vpop.f32.mrf.mxu0
    %v6652 = vadd.f32 %v6459, %v6651
    %v6653 = vpop.f32.mrf.mxu0
    %v6654 = vadd.f32 %v6461, %v6653
    %6655 = vmatprep.mubr.bf16.mxu0 %v2059
    %6656 = vmatmul.mubr.bf16.gmra.mxu0 %v2058
    %v6657 = vpop.f32.mrf.mxu0
    %v6658 = vadd.f32 %v6465, %v6657
    %v6659 = vpop.f32.mrf.mxu0
    %v6660 = vadd.f32 %v6467, %v6659
    %v6661 = vpop.f32.mrf.mxu0
    %v6662 = vadd.f32 %v6469, %v6661
    %v6663 = vpop.f32.mrf.mxu0
    %v6664 = vadd.f32 %v6471, %v6663
    %6665 = vmatprep.mubr.bf16.mxu0 %v2067
    %6666 = vmatmul.mubr.bf16.gmra.mxu0 %v2066
    %v6667 = vpop.f32.mrf.mxu0
    %v6668 = vadd.f32 %v6475, %v6667
    %v6669 = vpop.f32.mrf.mxu0
    %v6670 = vadd.f32 %v6477, %v6669
    %v6671 = vpop.f32.mrf.mxu0
    %v6672 = vadd.f32 %v6479, %v6671
    %v6673 = vpop.f32.mrf.mxu0
    %v6674 = vadd.f32 %v6481, %v6673
    %6675 = vmatprep.mubr.bf16.mxu0 %v2075
    %6676 = vmatmul.mubr.bf16.gmra.mxu0 %v2074
    %v6677 = vpop.f32.mrf.mxu0
    %v6678 = vadd.f32 %v6485, %v6677
    %v6679 = vpop.f32.mrf.mxu0
    %v6680 = vadd.f32 %v6487, %v6679
    %v6681 = vpop.f32.mrf.mxu0
    %v6682 = vadd.f32 %v6489, %v6681
    %v6683 = vpop.f32.mrf.mxu0
    %v6684 = vadd.f32 %v6491, %v6683
    %6685 = vmatprep.mubr.bf16.mxu0 %v2083
    %6686 = vmatmul.mubr.bf16.gmra.mxu0 %v2082
    %v6687 = vpop.f32.mrf.mxu0
    %v6688 = vadd.f32 %v6495, %v6687
    %v6689 = vpop.f32.mrf.mxu0
    %v6690 = vadd.f32 %v6497, %v6689
    %v6691 = vpop.f32.mrf.mxu0
    %v6692 = vadd.f32 %v6499, %v6691
    %v6693 = vpop.f32.mrf.mxu0
    %v6694 = vadd.f32 %v6501, %v6693
    %6695 = vmatprep.mubr.bf16.mxu0 %v2091
    %6696 = vmatmul.mubr.bf16.gmra.mxu0 %v2090
    %v6697 = vpop.f32.mrf.mxu0
    %v6698 = vadd.f32 %v6505, %v6697
    %v6699 = vpop.f32.mrf.mxu0
    %v6700 = vadd.f32 %v6507, %v6699
    %v6701 = vpop.f32.mrf.mxu0
    %v6702 = vadd.f32 %v6509, %v6701
    %v6703 = vpop.f32.mrf.mxu0
    %v6704 = vadd.f32 %v6511, %v6703
    %6705 = vmatprep.mubr.bf16.mxu0 %v2099
    %6706 = vmatmul.mubr.bf16.gmra.mxu0 %v2098
    %v6707 = vpop.f32.mrf.mxu0
    %v6708 = vadd.f32 %v6515, %v6707
    %v6709 = vpop.f32.mrf.mxu0
    %v6710 = vadd.f32 %v6517, %v6709
    %v6711 = vpop.f32.mrf.mxu0
    %v6712 = vadd.f32 %v6519, %v6711
    %v6713 = vpop.f32.mrf.mxu0
    %v6714 = vadd.f32 %v6521, %v6713
    %6715 = vmatprep.mubr.bf16.mxu0 %v2107
    %6716 = vmatmul.mubr.bf16.gmra.mxu0 %v2106
    %v6717 = vpop.f32.mrf.mxu0
    %v6718 = vadd.f32 %v6525, %v6717
    %v6719 = vpop.f32.mrf.mxu0
    %v6720 = vadd.f32 %v6527, %v6719
    %v6721 = vpop.f32.mrf.mxu0
    %v6722 = vadd.f32 %v6529, %v6721
    %v6723 = vpop.f32.mrf.mxu0
    %v6724 = vadd.f32 %v6531, %v6723
    %6725 = vmatprep.mubr.bf16.mxu0 %v2115
    %6726 = vmatmul.mubr.bf16.gmra.mxu0 %v2114
    %v6727 = vpop.f32.mrf.mxu0
    %v6728 = vadd.f32 %v6535, %v6727
    %v6729 = vpop.f32.mrf.mxu0
    %v6730 = vadd.f32 %v6537, %v6729
    %v6731 = vpop.f32.mrf.mxu0
    %v6732 = vadd.f32 %v6539, %v6731
    %v6733 = vpop.f32.mrf.mxu0
    %v6734 = vadd.f32 %v6541, %v6733
    %6735 = vdwg.mxu0
    %v6736 = vpack.c.bf16 %v5038, %v5034
    %v6737 = vpack.c.bf16 %v5040, %v5036
    %v6738 = vpack.c.bf16 %v5810, %v5806
    %v6739 = vpack.c.bf16 %v5812, %v5808
    %v6740 = vpack.c.bf16 %v6582, %v6578
    %v6741 = vpack.c.bf16 %v6584, %v6580
    %v6742 = vpack.c.bf16 %v5048, %v5044
    %v6743 = vpack.c.bf16 %v5050, %v5046
    %v6744 = vpack.c.bf16 %v5820, %v5816
    %v6745 = vpack.c.bf16 %v5822, %v5818
    %v6746 = vpack.c.bf16 %v6592, %v6588
    %v6747 = vpack.c.bf16 %v6594, %v6590
    %v6748 = vpack.c.bf16 %v5058, %v5054
    %v6749 = vpack.c.bf16 %v5060, %v5056
    %v6750 = vpack.c.bf16 %v5830, %v5826
    %v6751 = vpack.c.bf16 %v5832, %v5828
    %v6752 = vpack.c.bf16 %v6602, %v6598
    %v6753 = vpack.c.bf16 %v6604, %v6600
    %v6754 = vpack.c.bf16 %v5068, %v5064
    %v6755 = vpack.c.bf16 %v5070, %v5066
    %v6756 = vpack.c.bf16 %v5840, %v5836
    %v6757 = vpack.c.bf16 %v5842, %v5838
    %v6758 = vpack.c.bf16 %v6612, %v6608
    %v6759 = vpack.c.bf16 %v6614, %v6610
    %v6760 = vpack.c.bf16 %v5078, %v5074
    %v6761 = vpack.c.bf16 %v5080, %v5076
    %v6762 = vpack.c.bf16 %v5850, %v5846
    %v6763 = vpack.c.bf16 %v5852, %v5848
    %v6764 = vpack.c.bf16 %v6622, %v6618
    %v6765 = vpack.c.bf16 %v6624, %v6620
    %v6766 = vpack.c.bf16 %v5088, %v5084
    %v6767 = vpack.c.bf16 %v5090, %v5086
    %v6768 = vpack.c.bf16 %v5860, %v5856
    %v6769 = vpack.c.bf16 %v5862, %v5858
    %v6770 = vpack.c.bf16 %v6632, %v6628
    %v6771 = vpack.c.bf16 %v6634, %v6630
    %v6772 = vpack.c.bf16 %v5098, %v5094
    %v6773 = vpack.c.bf16 %v5100, %v5096
    %v6774 = vpack.c.bf16 %v5870, %v5866
    %v6775 = vpack.c.bf16 %v5872, %v5868
    %v6776 = vpack.c.bf16 %v6642, %v6638
    %v6777 = vpack.c.bf16 %v6644, %v6640
    %v6778 = vpack.c.bf16 %v5108, %v5104
    %v6779 = vpack.c.bf16 %v5110, %v5106
    %v6780 = vpack.c.bf16 %v5880, %v5876
    %v6781 = vpack.c.bf16 %v5882, %v5878
    %v6782 = vpack.c.bf16 %v6652, %v6648
    %v6783 = vpack.c.bf16 %v6654, %v6650
    %v6784 = vpack.c.bf16 %v5118, %v5114
    %v6785 = vpack.c.bf16 %v5120, %v5116
    %v6786 = vpack.c.bf16 %v5890, %v5886
    %v6787 = vpack.c.bf16 %v5892, %v5888
    %v6788 = vpack.c.bf16 %v6662, %v6658
    %v6789 = vpack.c.bf16 %v6664, %v6660
    %v6790 = vpack.c.bf16 %v5128, %v5124
    %v6791 = vpack.c.bf16 %v5130, %v5126
    %v6792 = vpack.c.bf16 %v5900, %v5896
    %v6793 = vpack.c.bf16 %v5902, %v5898
    %v6794 = vpack.c.bf16 %v6672, %v6668
    %v6795 = vpack.c.bf16 %v6674, %v6670
    %v6796 = vpack.c.bf16 %v5138, %v5134
    %v6797 = vpack.c.bf16 %v5140, %v5136
    %v6798 = vpack.c.bf16 %v5910, %v5906
    %v6799 = vpack.c.bf16 %v5912, %v5908
    %v6800 = vpack.c.bf16 %v6682, %v6678
    %v6801 = vpack.c.bf16 %v6684, %v6680
    %v6802 = vpack.c.bf16 %v5148, %v5144
    %v6803 = vpack.c.bf16 %v5150, %v5146
    %v6804 = vpack.c.bf16 %v5920, %v5916
    %v6805 = vpack.c.bf16 %v5922, %v5918
    %v6806 = vpack.c.bf16 %v6692, %v6688
    %v6807 = vpack.c.bf16 %v6694, %v6690
    %v6808 = vpack.c.bf16 %v5158, %v5154
    %v6809 = vpack.c.bf16 %v5160, %v5156
    %v6810 = vpack.c.bf16 %v5930, %v5926
    %v6811 = vpack.c.bf16 %v5932, %v5928
    %v6812 = vpack.c.bf16 %v6702, %v6698
    %v6813 = vpack.c.bf16 %v6704, %v6700
    %v6814 = vpack.c.bf16 %v5168, %v5164
    %v6815 = vpack.c.bf16 %v5170, %v5166
    %v6816 = vpack.c.bf16 %v5940, %v5936
    %v6817 = vpack.c.bf16 %v5942, %v5938
    %v6818 = vpack.c.bf16 %v6712, %v6708
    %v6819 = vpack.c.bf16 %v6714, %v6710
    %v6820 = vpack.c.bf16 %v5178, %v5174
    %v6821 = vpack.c.bf16 %v5180, %v5176
    %v6822 = vpack.c.bf16 %v5950, %v5946
    %v6823 = vpack.c.bf16 %v5952, %v5948
    %v6824 = vpack.c.bf16 %v6722, %v6718
    %v6825 = vpack.c.bf16 %v6724, %v6720
    %v6826 = vpack.c.bf16 %v5188, %v5184
    %v6827 = vpack.c.bf16 %v5190, %v5186
    %v6828 = vpack.c.bf16 %v5960, %v5956
    %v6829 = vpack.c.bf16 %v5962, %v5958
    %v6830 = vpack.c.bf16 %v6732, %v6728
    %v6831 = vpack.c.bf16 %v6734, %v6730
    %v6832 = vld [vmem:[%s5] sm:$0x3f]
    %v6834 = vlaneseq
    %v6835 = vshrl.u32 %v6834, 7
    %v6836 = vsub.s32 0, %v6835
    %v6837 = vrot.slane %v6832, %v6836
    %v6838 = vlaneseq
    %v6839 = vshrl.u32 %v6838, 7
    %v6840 = vsub.s32 1, %v6839
    %v6841 = vrot.slane %v6832, %v6840
    %v6842 = vlaneseq
    %v6843 = vshrl.u32 %v6842, 7
    %v6844 = vsub.s32 2, %v6843
    %v6845 = vrot.slane %v6832, %v6844
    %v6846 = vlaneseq
    %v6847 = vshrl.u32 %v6846, 7
    %v6848 = vsub.s32 3, %v6847
    %v6849 = vrot.slane %v6832, %v6848
    %v6850 = vlaneseq
    %v6851 = vshrl.u32 %v6850, 7
    %v6852 = vsub.s32 4, %v6851
    %v6853 = vrot.slane %v6832, %v6852
    %v6854 = vlaneseq
    %v6855 = vshrl.u32 %v6854, 7
    %v6856 = vsub.s32 5, %v6855
    %v6857 = vrot.slane %v6832, %v6856
    %6864 = vmatprep.subr.bf16.mxu0 %v6779
    %6865 = vmatpush1.bf16.msra.mxu0 %v6778
    %6866 = vmatprep.subr.bf16.mxu0 %v6773
    %6867 = vmatpush1.bf16.msra.mxu0 %v6772
    %6868 = vmatprep.subr.bf16.mxu0 %v6767
    %6869 = vmatpush1.bf16.msra.mxu0 %v6766
    %6870 = vmatprep.subr.bf16.mxu0 %v6761
    %6871 = vmatpush1.bf16.msra.mxu0 %v6760
    %6872 = vmatprep.subr.bf16.mxu0 %v6755
    %6873 = vmatpush1.bf16.msra.mxu0 %v6754
    %6874 = vmatprep.subr.bf16.mxu0 %v6749
    %6875 = vmatpush1.bf16.msra.mxu0 %v6748
    %6876 = vmatprep.subr.bf16.mxu0 %v6743
    %6877 = vmatpush1.bf16.msra.mxu0 %v6742
    %6878 = vmatprep.subr.bf16.mxu0 %v6737
    %6879 = vmatpush1.bf16.msra.mxu0 %v6736
    %6880 = vmatprep.subr.bf16.mxu0 %v6827
    %6881 = vmatpush2.bf16.msra.mxu0 %v6826
    %6882 = vmatprep.subr.bf16.mxu0 %v6821
    %6883 = vmatpush2.bf16.msra.mxu0 %v6820
    %6884 = vmatprep.subr.bf16.mxu0 %v6815
    %6885 = vmatpush2.bf16.msra.mxu0 %v6814
    %6886 = vmatprep.subr.bf16.mxu0 %v6809
    %6887 = vmatpush2.bf16.msra.mxu0 %v6808
    %6888 = vmatprep.subr.bf16.mxu0 %v6803
    %6889 = vmatpush2.bf16.msra.mxu0 %v6802
    %6890 = vmatprep.subr.bf16.mxu0 %v6797
    %6891 = vmatpush2.bf16.msra.mxu0 %v6796
    %6892 = vmatprep.subr.bf16.mxu0 %v6791
    %6893 = vmatpush2.bf16.msra.mxu0 %v6790
    %6894 = vmatprep.subr.bf16.mxu0 %v6785
    %6895 = vmatpush2.bf16.msra.mxu0 %v6784
    %6896 = vmatprep.mubr.bf16.mxu0 %v198
    %6897 = vmatmul.mubr.bf16.gmra.mxu0 %v197
    %v6898 = vpop.f32.mrf.mxu0
    %v6899 = vadd.f32 %v6837, %v6898
    %v6900 = vpop.f32.mrf.mxu0
    %v6901 = vadd.f32 %v6841, %v6900
    %v6902 = vpop.f32.mrf.mxu0
    %v6903 = vadd.f32 %v6837, %v6902
    %v6904 = vpop.f32.mrf.mxu0
    %v6905 = vadd.f32 %v6841, %v6904
    %6906 = vmatprep.mubr.bf16.mxu0 %v200
    %6907 = vmatmul.mubr.bf16.gmra.mxu0 %v199
    %v6908 = vpop.f32.mrf.mxu0
    %v6909 = vadd.f32 %v6837, %v6908
    %v6910 = vpop.f32.mrf.mxu0
    %v6911 = vadd.f32 %v6841, %v6910
    %v6912 = vpop.f32.mrf.mxu0
    %v6913 = vadd.f32 %v6837, %v6912
    %v6914 = vpop.f32.mrf.mxu0
    %v6915 = vadd.f32 %v6841, %v6914
    %6916 = vmatprep.mubr.bf16.mxu0 %v202
    %6917 = vmatmul.mubr.bf16.gmra.mxu0 %v201
    %v6918 = vpop.f32.mrf.mxu0
    %v6919 = vadd.f32 %v6837, %v6918
    %v6920 = vpop.f32.mrf.mxu0
    %v6921 = vadd.f32 %v6841, %v6920
    %v6922 = vpop.f32.mrf.mxu0
    %v6923 = vadd.f32 %v6837, %v6922
    %v6924 = vpop.f32.mrf.mxu0
    %v6925 = vadd.f32 %v6841, %v6924
    %6926 = vmatprep.mubr.bf16.mxu0 %v204
    %6927 = vmatmul.mubr.bf16.gmra.mxu0 %v203
    %v6928 = vpop.f32.mrf.mxu0
    %v6929 = vadd.f32 %v6837, %v6928
    %v6930 = vpop.f32.mrf.mxu0
    %v6931 = vadd.f32 %v6841, %v6930
    %v6932 = vpop.f32.mrf.mxu0
    %v6933 = vadd.f32 %v6837, %v6932
    %v6934 = vpop.f32.mrf.mxu0
    %v6935 = vadd.f32 %v6841, %v6934
    %6936 = vmatprep.mubr.bf16.mxu0 %v206
    %6937 = vmatmul.mubr.bf16.gmra.mxu0 %v205
    %v6938 = vpop.f32.mrf.mxu0
    %v6939 = vadd.f32 %v6837, %v6938
    %v6940 = vpop.f32.mrf.mxu0
    %v6941 = vadd.f32 %v6841, %v6940
    %v6942 = vpop.f32.mrf.mxu0
    %v6943 = vadd.f32 %v6837, %v6942
    %v6944 = vpop.f32.mrf.mxu0
    %v6945 = vadd.f32 %v6841, %v6944
    %6946 = vmatprep.mubr.bf16.mxu0 %v208
    %6947 = vmatmul.mubr.bf16.gmra.mxu0 %v207
    %v6948 = vpop.f32.mrf.mxu0
    %v6949 = vadd.f32 %v6837, %v6948
    %v6950 = vpop.f32.mrf.mxu0
    %v6951 = vadd.f32 %v6841, %v6950
    %v6952 = vpop.f32.mrf.mxu0
    %v6953 = vadd.f32 %v6837, %v6952
    %v6954 = vpop.f32.mrf.mxu0
    %v6955 = vadd.f32 %v6841, %v6954
    %6956 = vmatprep.mubr.bf16.mxu0 %v210
    %6957 = vmatmul.mubr.bf16.gmra.mxu0 %v209
    %v6958 = vpop.f32.mrf.mxu0
    %v6959 = vadd.f32 %v6837, %v6958
    %v6960 = vpop.f32.mrf.mxu0
    %v6961 = vadd.f32 %v6841, %v6960
    %v6962 = vpop.f32.mrf.mxu0
    %v6963 = vadd.f32 %v6837, %v6962
    %v6964 = vpop.f32.mrf.mxu0
    %v6965 = vadd.f32 %v6841, %v6964
    %6966 = vmatprep.mubr.bf16.mxu0 %v212
    %6967 = vmatmul.mubr.bf16.gmra.mxu0 %v211
    %v6968 = vpop.f32.mrf.mxu0
    %v6969 = vadd.f32 %v6837, %v6968
    %v6970 = vpop.f32.mrf.mxu0
    %v6971 = vadd.f32 %v6841, %v6970
    %v6972 = vpop.f32.mrf.mxu0
    %v6973 = vadd.f32 %v6837, %v6972
    %v6974 = vpop.f32.mrf.mxu0
    %v6975 = vadd.f32 %v6841, %v6974
    %6976 = vmatprep.mubr.bf16.mxu0 %v214
    %6977 = vmatmul.mubr.bf16.gmra.mxu0 %v213
    %v6978 = vpop.f32.mrf.mxu0
    %v6979 = vadd.f32 %v6837, %v6978
    %v6980 = vpop.f32.mrf.mxu0
    %v6981 = vadd.f32 %v6841, %v6980
    %v6982 = vpop.f32.mrf.mxu0
    %v6983 = vadd.f32 %v6837, %v6982
    %v6984 = vpop.f32.mrf.mxu0
    %v6985 = vadd.f32 %v6841, %v6984
    %6986 = vmatprep.mubr.bf16.mxu0 %v216
    %6987 = vmatmul.mubr.bf16.gmra.mxu0 %v215
    %v6988 = vpop.f32.mrf.mxu0
    %v6989 = vadd.f32 %v6837, %v6988
    %v6990 = vpop.f32.mrf.mxu0
    %v6991 = vadd.f32 %v6841, %v6990
    %v6992 = vpop.f32.mrf.mxu0
    %v6993 = vadd.f32 %v6837, %v6992
    %v6994 = vpop.f32.mrf.mxu0
    %v6995 = vadd.f32 %v6841, %v6994
    %6996 = vmatprep.mubr.bf16.mxu0 %v218
    %6997 = vmatmul.mubr.bf16.gmra.mxu0 %v217
    %v6998 = vpop.f32.mrf.mxu0
    %v6999 = vadd.f32 %v6837, %v6998
    %v7000 = vpop.f32.mrf.mxu0
    %v7001 = vadd.f32 %v6841, %v7000
    %v7002 = vpop.f32.mrf.mxu0
    %v7003 = vadd.f32 %v6837, %v7002
    %v7004 = vpop.f32.mrf.mxu0
    %v7005 = vadd.f32 %v6841, %v7004
    %7006 = vmatprep.mubr.bf16.mxu0 %v220
    %7007 = vmatmul.mubr.bf16.gmra.mxu0 %v219
    %v7008 = vpop.f32.mrf.mxu0
    %v7009 = vadd.f32 %v6837, %v7008
    %v7010 = vpop.f32.mrf.mxu0
    %v7011 = vadd.f32 %v6841, %v7010
    %v7012 = vpop.f32.mrf.mxu0
    %v7013 = vadd.f32 %v6837, %v7012
    %v7014 = vpop.f32.mrf.mxu0
    %v7015 = vadd.f32 %v6841, %v7014
    %7016 = vmatprep.mubr.bf16.mxu0 %v222
    %7017 = vmatmul.mubr.bf16.gmra.mxu0 %v221
    %v7018 = vpop.f32.mrf.mxu0
    %v7019 = vadd.f32 %v6837, %v7018
    %v7020 = vpop.f32.mrf.mxu0
    %v7021 = vadd.f32 %v6841, %v7020
    %v7022 = vpop.f32.mrf.mxu0
    %v7023 = vadd.f32 %v6837, %v7022
    %v7024 = vpop.f32.mrf.mxu0
    %v7025 = vadd.f32 %v6841, %v7024
    %7026 = vmatprep.mubr.bf16.mxu0 %v224
    %7027 = vmatmul.mubr.bf16.gmra.mxu0 %v223
    %v7028 = vpop.f32.mrf.mxu0
    %v7029 = vadd.f32 %v6837, %v7028
    %v7030 = vpop.f32.mrf.mxu0
    %v7031 = vadd.f32 %v6841, %v7030
    %v7032 = vpop.f32.mrf.mxu0
    %v7033 = vadd.f32 %v6837, %v7032
    %v7034 = vpop.f32.mrf.mxu0
    %v7035 = vadd.f32 %v6841, %v7034
    %7036 = vmatprep.mubr.bf16.mxu0 %v226
    %7037 = vmatmul.mubr.bf16.gmra.mxu0 %v225
    %v7038 = vpop.f32.mrf.mxu0
    %v7039 = vadd.f32 %v6837, %v7038
    %v7040 = vpop.f32.mrf.mxu0
    %v7041 = vadd.f32 %v6841, %v7040
    %v7042 = vpop.f32.mrf.mxu0
    %v7043 = vadd.f32 %v6837, %v7042
    %v7044 = vpop.f32.mrf.mxu0
    %v7045 = vadd.f32 %v6841, %v7044
    %7046 = vmatprep.mubr.bf16.mxu0 %v228
    %7047 = vmatmul.mubr.bf16.gmra.mxu0 %v227
    %v7048 = vpop.f32.mrf.mxu0
    %v7049 = vadd.f32 %v6837, %v7048
    %v7050 = vpop.f32.mrf.mxu0
    %v7051 = vadd.f32 %v6841, %v7050
    %v7052 = vpop.f32.mrf.mxu0
    %v7053 = vadd.f32 %v6837, %v7052
    %v7054 = vpop.f32.mrf.mxu0
    %v7055 = vadd.f32 %v6841, %v7054
    %7056 = vdwg.mxu0
    %7057 = vmatprep.subr.bf16.mxu0 %v6781
    %7058 = vmatpush1.bf16.msra.mxu0 %v6780
    %7059 = vmatprep.subr.bf16.mxu0 %v6775
    %7060 = vmatpush1.bf16.msra.mxu0 %v6774
    %7061 = vmatprep.subr.bf16.mxu0 %v6769
    %7062 = vmatpush1.bf16.msra.mxu0 %v6768
    %7063 = vmatprep.subr.bf16.mxu0 %v6763
    %7064 = vmatpush1.bf16.msra.mxu0 %v6762
    %7065 = vmatprep.subr.bf16.mxu0 %v6757
    %7066 = vmatpush1.bf16.msra.mxu0 %v6756
    %7067 = vmatprep.subr.bf16.mxu0 %v6751
    %7068 = vmatpush1.bf16.msra.mxu0 %v6750
    %7069 = vmatprep.subr.bf16.mxu0 %v6745
    %7070 = vmatpush1.bf16.msra.mxu0 %v6744
    %7071 = vmatprep.subr.bf16.mxu0 %v6739
    %7072 = vmatpush1.bf16.msra.mxu0 %v6738
    %7073 = vmatprep.subr.bf16.mxu0 %v6829
    %7074 = vmatpush2.bf16.msra.mxu0 %v6828
    %7075 = vmatprep.subr.bf16.mxu0 %v6823
    %7076 = vmatpush2.bf16.msra.mxu0 %v6822
    %7077 = vmatprep.subr.bf16.mxu0 %v6817
    %7078 = vmatpush2.bf16.msra.mxu0 %v6816
    %7079 = vmatprep.subr.bf16.mxu0 %v6811
    %7080 = vmatpush2.bf16.msra.mxu0 %v6810
    %7081 = vmatprep.subr.bf16.mxu0 %v6805
    %7082 = vmatpush2.bf16.msra.mxu0 %v6804
    %7083 = vmatprep.subr.bf16.mxu0 %v6799
    %7084 = vmatpush2.bf16.msra.mxu0 %v6798
    %7085 = vmatprep.subr.bf16.mxu0 %v6793
    %7086 = vmatpush2.bf16.msra.mxu0 %v6792
    %7087 = vmatprep.subr.bf16.mxu0 %v6787
    %7088 = vmatpush2.bf16.msra.mxu0 %v6786
    %7089 = vmatprep.mubr.bf16.mxu0 %v198
    %7090 = vmatmul.mubr.bf16.gmra.mxu0 %v197
    %v7091 = vpop.f32.mrf.mxu0
    %v7092 = vadd.f32 %v6845, %v7091
    %v7093 = vpop.f32.mrf.mxu0
    %v7094 = vadd.f32 %v6849, %v7093
    %v7095 = vpop.f32.mrf.mxu0
    %v7096 = vadd.f32 %v6845, %v7095
    %v7097 = vpop.f32.mrf.mxu0
    %v7098 = vadd.f32 %v6849, %v7097
    %7099 = vmatprep.mubr.bf16.mxu0 %v200
    %7100 = vmatmul.mubr.bf16.gmra.mxu0 %v199
    %v7101 = vpop.f32.mrf.mxu0
    %v7102 = vadd.f32 %v6845, %v7101
    %v7103 = vpop.f32.mrf.mxu0
    %v7104 = vadd.f32 %v6849, %v7103
    %v7105 = vpop.f32.mrf.mxu0
    %v7106 = vadd.f32 %v6845, %v7105
    %v7107 = vpop.f32.mrf.mxu0
    %v7108 = vadd.f32 %v6849, %v7107
    %7109 = vmatprep.mubr.bf16.mxu0 %v202
    %7110 = vmatmul.mubr.bf16.gmra.mxu0 %v201
    %v7111 = vpop.f32.mrf.mxu0
    %v7112 = vadd.f32 %v6845, %v7111
    %v7113 = vpop.f32.mrf.mxu0
    %v7114 = vadd.f32 %v6849, %v7113
    %v7115 = vpop.f32.mrf.mxu0
    %v7116 = vadd.f32 %v6845, %v7115
    %v7117 = vpop.f32.mrf.mxu0
    %v7118 = vadd.f32 %v6849, %v7117
    %7119 = vmatprep.mubr.bf16.mxu0 %v204
    %7120 = vmatmul.mubr.bf16.gmra.mxu0 %v203
    %v7121 = vpop.f32.mrf.mxu0
    %v7122 = vadd.f32 %v6845, %v7121
    %v7123 = vpop.f32.mrf.mxu0
    %v7124 = vadd.f32 %v6849, %v7123
    %v7125 = vpop.f32.mrf.mxu0
    %v7126 = vadd.f32 %v6845, %v7125
    %v7127 = vpop.f32.mrf.mxu0
    %v7128 = vadd.f32 %v6849, %v7127
    %7129 = vmatprep.mubr.bf16.mxu0 %v206
    %7130 = vmatmul.mubr.bf16.gmra.mxu0 %v205
    %v7131 = vpop.f32.mrf.mxu0
    %v7132 = vadd.f32 %v6845, %v7131
    %v7133 = vpop.f32.mrf.mxu0
    %v7134 = vadd.f32 %v6849, %v7133
    %v7135 = vpop.f32.mrf.mxu0
    %v7136 = vadd.f32 %v6845, %v7135
    %v7137 = vpop.f32.mrf.mxu0
    %v7138 = vadd.f32 %v6849, %v7137
    %7139 = vmatprep.mubr.bf16.mxu0 %v208
    %7140 = vmatmul.mubr.bf16.gmra.mxu0 %v207
    %v7141 = vpop.f32.mrf.mxu0
    %v7142 = vadd.f32 %v6845, %v7141
    %v7143 = vpop.f32.mrf.mxu0
    %v7144 = vadd.f32 %v6849, %v7143
    %v7145 = vpop.f32.mrf.mxu0
    %v7146 = vadd.f32 %v6845, %v7145
    %v7147 = vpop.f32.mrf.mxu0
    %v7148 = vadd.f32 %v6849, %v7147
    %7149 = vmatprep.mubr.bf16.mxu0 %v210
    %7150 = vmatmul.mubr.bf16.gmra.mxu0 %v209
    %v7151 = vpop.f32.mrf.mxu0
    %v7152 = vadd.f32 %v6845, %v7151
    %v7153 = vpop.f32.mrf.mxu0
    %v7154 = vadd.f32 %v6849, %v7153
    %v7155 = vpop.f32.mrf.mxu0
    %v7156 = vadd.f32 %v6845, %v7155
    %v7157 = vpop.f32.mrf.mxu0
    %v7158 = vadd.f32 %v6849, %v7157
    %7159 = vmatprep.mubr.bf16.mxu0 %v212
    %7160 = vmatmul.mubr.bf16.gmra.mxu0 %v211
    %v7161 = vpop.f32.mrf.mxu0
    %v7162 = vadd.f32 %v6845, %v7161
    %v7163 = vpop.f32.mrf.mxu0
    %v7164 = vadd.f32 %v6849, %v7163
    %v7165 = vpop.f32.mrf.mxu0
    %v7166 = vadd.f32 %v6845, %v7165
    %v7167 = vpop.f32.mrf.mxu0
    %v7168 = vadd.f32 %v6849, %v7167
    %7169 = vmatprep.mubr.bf16.mxu0 %v214
    %7170 = vmatmul.mubr.bf16.gmra.mxu0 %v213
    %v7171 = vpop.f32.mrf.mxu0
    %v7172 = vadd.f32 %v6845, %v7171
    %v7173 = vpop.f32.mrf.mxu0
    %v7174 = vadd.f32 %v6849, %v7173
    %v7175 = vpop.f32.mrf.mxu0
    %v7176 = vadd.f32 %v6845, %v7175
    %v7177 = vpop.f32.mrf.mxu0
    %v7178 = vadd.f32 %v6849, %v7177
    %7179 = vmatprep.mubr.bf16.mxu0 %v216
    %7180 = vmatmul.mubr.bf16.gmra.mxu0 %v215
    %v7181 = vpop.f32.mrf.mxu0
    %v7182 = vadd.f32 %v6845, %v7181
    %v7183 = vpop.f32.mrf.mxu0
    %v7184 = vadd.f32 %v6849, %v7183
    %v7185 = vpop.f32.mrf.mxu0
    %v7186 = vadd.f32 %v6845, %v7185
    %v7187 = vpop.f32.mrf.mxu0
    %v7188 = vadd.f32 %v6849, %v7187
    %7189 = vmatprep.mubr.bf16.mxu0 %v218
    %7190 = vmatmul.mubr.bf16.gmra.mxu0 %v217
    %v7191 = vpop.f32.mrf.mxu0
    %v7192 = vadd.f32 %v6845, %v7191
    %v7193 = vpop.f32.mrf.mxu0
    %v7194 = vadd.f32 %v6849, %v7193
    %v7195 = vpop.f32.mrf.mxu0
    %v7196 = vadd.f32 %v6845, %v7195
    %v7197 = vpop.f32.mrf.mxu0
    %v7198 = vadd.f32 %v6849, %v7197
    %7199 = vmatprep.mubr.bf16.mxu0 %v220
    %7200 = vmatmul.mubr.bf16.gmra.mxu0 %v219
    %v7201 = vpop.f32.mrf.mxu0
    %v7202 = vadd.f32 %v6845, %v7201
    %v7203 = vpop.f32.mrf.mxu0
    %v7204 = vadd.f32 %v6849, %v7203
    %v7205 = vpop.f32.mrf.mxu0
    %v7206 = vadd.f32 %v6845, %v7205
    %v7207 = vpop.f32.mrf.mxu0
    %v7208 = vadd.f32 %v6849, %v7207
    %7209 = vmatprep.mubr.bf16.mxu0 %v222
    %7210 = vmatmul.mubr.bf16.gmra.mxu0 %v221
    %v7211 = vpop.f32.mrf.mxu0
    %v7212 = vadd.f32 %v6845, %v7211
    %v7213 = vpop.f32.mrf.mxu0
    %v7214 = vadd.f32 %v6849, %v7213
    %v7215 = vpop.f32.mrf.mxu0
    %v7216 = vadd.f32 %v6845, %v7215
    %v7217 = vpop.f32.mrf.mxu0
    %v7218 = vadd.f32 %v6849, %v7217
    %7219 = vmatprep.mubr.bf16.mxu0 %v224
    %7220 = vmatmul.mubr.bf16.gmra.mxu0 %v223
    %v7221 = vpop.f32.mrf.mxu0
    %v7222 = vadd.f32 %v6845, %v7221
    %v7223 = vpop.f32.mrf.mxu0
    %v7224 = vadd.f32 %v6849, %v7223
    %v7225 = vpop.f32.mrf.mxu0
    %v7226 = vadd.f32 %v6845, %v7225
    %v7227 = vpop.f32.mrf.mxu0
    %v7228 = vadd.f32 %v6849, %v7227
    %7229 = vmatprep.mubr.bf16.mxu0 %v226
    %7230 = vmatmul.mubr.bf16.gmra.mxu0 %v225
    %v7231 = vpop.f32.mrf.mxu0
    %v7232 = vadd.f32 %v6845, %v7231
    %v7233 = vpop.f32.mrf.mxu0
    %v7234 = vadd.f32 %v6849, %v7233
    %v7235 = vpop.f32.mrf.mxu0
    %v7236 = vadd.f32 %v6845, %v7235
    %v7237 = vpop.f32.mrf.mxu0
    %v7238 = vadd.f32 %v6849, %v7237
    %7239 = vmatprep.mubr.bf16.mxu0 %v228
    %7240 = vmatmul.mubr.bf16.gmra.mxu0 %v227
    %v7241 = vpop.f32.mrf.mxu0
    %v7242 = vadd.f32 %v6845, %v7241
    %v7243 = vpop.f32.mrf.mxu0
    %v7244 = vadd.f32 %v6849, %v7243
    %v7245 = vpop.f32.mrf.mxu0
    %v7246 = vadd.f32 %v6845, %v7245
    %v7247 = vpop.f32.mrf.mxu0
    %v7248 = vadd.f32 %v6849, %v7247
    %7249 = vdwg.mxu0
    %7250 = vmatprep.subr.bf16.mxu0 %v6783
    %7251 = vmatpush1.bf16.msra.mxu0 %v6782
    %7252 = vmatprep.subr.bf16.mxu0 %v6777
    %7253 = vmatpush1.bf16.msra.mxu0 %v6776
    %7254 = vmatprep.subr.bf16.mxu0 %v6771
    %7255 = vmatpush1.bf16.msra.mxu0 %v6770
    %7256 = vmatprep.subr.bf16.mxu0 %v6765
    %7257 = vmatpush1.bf16.msra.mxu0 %v6764
    %7258 = vmatprep.subr.bf16.mxu0 %v6759
    %7259 = vmatpush1.bf16.msra.mxu0 %v6758
    %7260 = vmatprep.subr.bf16.mxu0 %v6753
    %7261 = vmatpush1.bf16.msra.mxu0 %v6752
    %7262 = vmatprep.subr.bf16.mxu0 %v6747
    %7263 = vmatpush1.bf16.msra.mxu0 %v6746
    %7264 = vmatprep.subr.bf16.mxu0 %v6741
    %7265 = vmatpush1.bf16.msra.mxu0 %v6740
    %7266 = vmatprep.subr.bf16.mxu0 %v6831
    %7267 = vmatpush2.bf16.msra.mxu0 %v6830
    %7268 = vmatprep.subr.bf16.mxu0 %v6825
    %7269 = vmatpush2.bf16.msra.mxu0 %v6824
    %7270 = vmatprep.subr.bf16.mxu0 %v6819
    %7271 = vmatpush2.bf16.msra.mxu0 %v6818
    %7272 = vmatprep.subr.bf16.mxu0 %v6813
    %7273 = vmatpush2.bf16.msra.mxu0 %v6812
    %7274 = vmatprep.subr.bf16.mxu0 %v6807
    %7275 = vmatpush2.bf16.msra.mxu0 %v6806
    %7276 = vmatprep.subr.bf16.mxu0 %v6801
    %7277 = vmatpush2.bf16.msra.mxu0 %v6800
    %7278 = vmatprep.subr.bf16.mxu0 %v6795
    %7279 = vmatpush2.bf16.msra.mxu0 %v6794
    %7280 = vmatprep.subr.bf16.mxu0 %v6789
    %7281 = vmatpush2.bf16.msra.mxu0 %v6788
    %7282 = vmatprep.mubr.bf16.mxu0 %v198
    %7283 = vmatmul.mubr.bf16.gmra.mxu0 %v197
    %v7284 = vpop.f32.mrf.mxu0
    %v7285 = vadd.f32 %v6853, %v7284
    %v7286 = vpop.f32.mrf.mxu0
    %v7287 = vadd.f32 %v6857, %v7286
    %v7288 = vpop.f32.mrf.mxu0
    %v7289 = vadd.f32 %v6853, %v7288
    %v7290 = vpop.f32.mrf.mxu0
    %v7291 = vadd.f32 %v6857, %v7290
    %7292 = vmatprep.mubr.bf16.mxu0 %v200
    %7293 = vmatmul.mubr.bf16.gmra.mxu0 %v199
    %v7294 = vpop.f32.mrf.mxu0
    %v7295 = vadd.f32 %v6853, %v7294
    %v7296 = vpop.f32.mrf.mxu0
    %v7297 = vadd.f32 %v6857, %v7296
    %v7298 = vpop.f32.mrf.mxu0
    %v7299 = vadd.f32 %v6853, %v7298
    %v7300 = vpop.f32.mrf.mxu0
    %v7301 = vadd.f32 %v6857, %v7300
    %7302 = vmatprep.mubr.bf16.mxu0 %v202
    %7303 = vmatmul.mubr.bf16.gmra.mxu0 %v201
    %v7304 = vpop.f32.mrf.mxu0
    %v7305 = vadd.f32 %v6853, %v7304
    %v7306 = vpop.f32.mrf.mxu0
    %v7307 = vadd.f32 %v6857, %v7306
    %v7308 = vpop.f32.mrf.mxu0
    %v7309 = vadd.f32 %v6853, %v7308
    %v7310 = vpop.f32.mrf.mxu0
    %v7311 = vadd.f32 %v6857, %v7310
    %7312 = vmatprep.mubr.bf16.mxu0 %v204
    %7313 = vmatmul.mubr.bf16.gmra.mxu0 %v203
    %v7314 = vpop.f32.mrf.mxu0
    %v7315 = vadd.f32 %v6853, %v7314
    %v7316 = vpop.f32.mrf.mxu0
    %v7317 = vadd.f32 %v6857, %v7316
    %v7318 = vpop.f32.mrf.mxu0
    %v7319 = vadd.f32 %v6853, %v7318
    %v7320 = vpop.f32.mrf.mxu0
    %v7321 = vadd.f32 %v6857, %v7320
    %7322 = vmatprep.mubr.bf16.mxu0 %v206
    %7323 = vmatmul.mubr.bf16.gmra.mxu0 %v205
    %v7324 = vpop.f32.mrf.mxu0
    %v7325 = vadd.f32 %v6853, %v7324
    %v7326 = vpop.f32.mrf.mxu0
    %v7327 = vadd.f32 %v6857, %v7326
    %v7328 = vpop.f32.mrf.mxu0
    %v7329 = vadd.f32 %v6853, %v7328
    %v7330 = vpop.f32.mrf.mxu0
    %v7331 = vadd.f32 %v6857, %v7330
    %7332 = vmatprep.mubr.bf16.mxu0 %v208
    %7333 = vmatmul.mubr.bf16.gmra.mxu0 %v207
    %v7334 = vpop.f32.mrf.mxu0
    %v7335 = vadd.f32 %v6853, %v7334
    %v7336 = vpop.f32.mrf.mxu0
    %v7337 = vadd.f32 %v6857, %v7336
    %v7338 = vpop.f32.mrf.mxu0
    %v7339 = vadd.f32 %v6853, %v7338
    %v7340 = vpop.f32.mrf.mxu0
    %v7341 = vadd.f32 %v6857, %v7340
    %7342 = vmatprep.mubr.bf16.mxu0 %v210
    %7343 = vmatmul.mubr.bf16.gmra.mxu0 %v209
    %v7344 = vpop.f32.mrf.mxu0
    %v7345 = vadd.f32 %v6853, %v7344
    %v7346 = vpop.f32.mrf.mxu0
    %v7347 = vadd.f32 %v6857, %v7346
    %v7348 = vpop.f32.mrf.mxu0
    %v7349 = vadd.f32 %v6853, %v7348
    %v7350 = vpop.f32.mrf.mxu0
    %v7351 = vadd.f32 %v6857, %v7350
    %7352 = vmatprep.mubr.bf16.mxu0 %v212
    %7353 = vmatmul.mubr.bf16.gmra.mxu0 %v211
    %v7354 = vpop.f32.mrf.mxu0
    %v7355 = vadd.f32 %v6853, %v7354
    %v7356 = vpop.f32.mrf.mxu0
    %v7357 = vadd.f32 %v6857, %v7356
    %v7358 = vpop.f32.mrf.mxu0
    %v7359 = vadd.f32 %v6853, %v7358
    %v7360 = vpop.f32.mrf.mxu0
    %v7361 = vadd.f32 %v6857, %v7360
    %7362 = vmatprep.mubr.bf16.mxu0 %v214
    %7363 = vmatmul.mubr.bf16.gmra.mxu0 %v213
    %v7364 = vpop.f32.mrf.mxu0
    %v7365 = vadd.f32 %v6853, %v7364
    %v7366 = vpop.f32.mrf.mxu0
    %v7367 = vadd.f32 %v6857, %v7366
    %v7368 = vpop.f32.mrf.mxu0
    %v7369 = vadd.f32 %v6853, %v7368
    %v7370 = vpop.f32.mrf.mxu0
    %v7371 = vadd.f32 %v6857, %v7370
    %7372 = vmatprep.mubr.bf16.mxu0 %v216
    %7373 = vmatmul.mubr.bf16.gmra.mxu0 %v215
    %v7374 = vpop.f32.mrf.mxu0
    %v7375 = vadd.f32 %v6853, %v7374
    %v7376 = vpop.f32.mrf.mxu0
    %v7377 = vadd.f32 %v6857, %v7376
    %v7378 = vpop.f32.mrf.mxu0
    %v7379 = vadd.f32 %v6853, %v7378
    %v7380 = vpop.f32.mrf.mxu0
    %v7381 = vadd.f32 %v6857, %v7380
    %7382 = vmatprep.mubr.bf16.mxu0 %v218
    %7383 = vmatmul.mubr.bf16.gmra.mxu0 %v217
    %v7384 = vpop.f32.mrf.mxu0
    %v7385 = vadd.f32 %v6853, %v7384
    %v7386 = vpop.f32.mrf.mxu0
    %v7387 = vadd.f32 %v6857, %v7386
    %v7388 = vpop.f32.mrf.mxu0
    %v7389 = vadd.f32 %v6853, %v7388
    %v7390 = vpop.f32.mrf.mxu0
    %v7391 = vadd.f32 %v6857, %v7390
    %7392 = vmatprep.mubr.bf16.mxu0 %v220
    %7393 = vmatmul.mubr.bf16.gmra.mxu0 %v219
    %v7394 = vpop.f32.mrf.mxu0
    %v7395 = vadd.f32 %v6853, %v7394
    %v7396 = vpop.f32.mrf.mxu0
    %v7397 = vadd.f32 %v6857, %v7396
    %v7398 = vpop.f32.mrf.mxu0
    %v7399 = vadd.f32 %v6853, %v7398
    %v7400 = vpop.f32.mrf.mxu0
    %v7401 = vadd.f32 %v6857, %v7400
    %7402 = vmatprep.mubr.bf16.mxu0 %v222
    %7403 = vmatmul.mubr.bf16.gmra.mxu0 %v221
    %v7404 = vpop.f32.mrf.mxu0
    %v7405 = vadd.f32 %v6853, %v7404
    %v7406 = vpop.f32.mrf.mxu0
    %v7407 = vadd.f32 %v6857, %v7406
    %v7408 = vpop.f32.mrf.mxu0
    %v7409 = vadd.f32 %v6853, %v7408
    %v7410 = vpop.f32.mrf.mxu0
    %v7411 = vadd.f32 %v6857, %v7410
    %7412 = vmatprep.mubr.bf16.mxu0 %v224
    %7413 = vmatmul.mubr.bf16.gmra.mxu0 %v223
    %v7414 = vpop.f32.mrf.mxu0
    %v7415 = vadd.f32 %v6853, %v7414
    %v7416 = vpop.f32.mrf.mxu0
    %v7417 = vadd.f32 %v6857, %v7416
    %v7418 = vpop.f32.mrf.mxu0
    %v7419 = vadd.f32 %v6853, %v7418
    %v7420 = vpop.f32.mrf.mxu0
    %v7421 = vadd.f32 %v6857, %v7420
    %7422 = vmatprep.mubr.bf16.mxu0 %v226
    %7423 = vmatmul.mubr.bf16.gmra.mxu0 %v225
    %v7424 = vpop.f32.mrf.mxu0
    %v7425 = vadd.f32 %v6853, %v7424
    %v7426 = vpop.f32.mrf.mxu0
    %v7427 = vadd.f32 %v6857, %v7426
    %v7428 = vpop.f32.mrf.mxu0
    %v7429 = vadd.f32 %v6853, %v7428
    %v7430 = vpop.f32.mrf.mxu0
    %v7431 = vadd.f32 %v6857, %v7430
    %7432 = vmatprep.mubr.bf16.mxu0 %v228
    %7433 = vmatmul.mubr.bf16.gmra.mxu0 %v227
    %v7434 = vpop.f32.mrf.mxu0
    %v7435 = vadd.f32 %v6853, %v7434
    %v7436 = vpop.f32.mrf.mxu0
    %v7437 = vadd.f32 %v6857, %v7436
    %v7438 = vpop.f32.mrf.mxu0
    %v7439 = vadd.f32 %v6853, %v7438
    %v7440 = vpop.f32.mrf.mxu0
    %v7441 = vadd.f32 %v6857, %v7440
    %7442 = vdwg.mxu0
    %v7443 = vmax.f32 %v6899, 0.0
    %v7444 = vmax.f32 %v6901, 0.0
    %v7445 = vmax.f32 %v7092, 0.0
    %v7446 = vmax.f32 %v7094, 0.0
    %v7447 = vmax.f32 %v7285, 0.0
    %v7448 = vmax.f32 %v7287, 0.0
    %v7449 = vmax.f32 %v6903, 0.0
    %v7450 = vmax.f32 %v6905, 0.0
    %v7451 = vmax.f32 %v7096, 0.0
    %v7452 = vmax.f32 %v7098, 0.0
    %v7453 = vmax.f32 %v7289, 0.0
    %v7454 = vmax.f32 %v7291, 0.0
    %v7455 = vmax.f32 %v6909, 0.0
    %v7456 = vmax.f32 %v6911, 0.0
    %v7457 = vmax.f32 %v7102, 0.0
    %v7458 = vmax.f32 %v7104, 0.0
    %v7459 = vmax.f32 %v7295, 0.0
    %v7460 = vmax.f32 %v7297, 0.0
    %v7461 = vmax.f32 %v6913, 0.0
    %v7462 = vmax.f32 %v6915, 0.0
    %v7463 = vmax.f32 %v7106, 0.0
    %v7464 = vmax.f32 %v7108, 0.0
    %v7465 = vmax.f32 %v7299, 0.0
    %v7466 = vmax.f32 %v7301, 0.0
    %v7467 = vmax.f32 %v6919, 0.0
    %v7468 = vmax.f32 %v6921, 0.0
    %v7469 = vmax.f32 %v7112, 0.0
    %v7470 = vmax.f32 %v7114, 0.0
    %v7471 = vmax.f32 %v7305, 0.0
    %v7472 = vmax.f32 %v7307, 0.0
    %v7473 = vmax.f32 %v6923, 0.0
    %v7474 = vmax.f32 %v6925, 0.0
    %v7475 = vmax.f32 %v7116, 0.0
    %v7476 = vmax.f32 %v7118, 0.0
    %v7477 = vmax.f32 %v7309, 0.0
    %v7478 = vmax.f32 %v7311, 0.0
    %v7479 = vmax.f32 %v6929, 0.0
    %v7480 = vmax.f32 %v6931, 0.0
    %v7481 = vmax.f32 %v7122, 0.0
    %v7482 = vmax.f32 %v7124, 0.0
    %v7483 = vmax.f32 %v7315, 0.0
    %v7484 = vmax.f32 %v7317, 0.0
    %v7485 = vmax.f32 %v6933, 0.0
    %v7486 = vmax.f32 %v6935, 0.0
    %v7487 = vmax.f32 %v7126, 0.0
    %v7488 = vmax.f32 %v7128, 0.0
    %v7489 = vmax.f32 %v7319, 0.0
    %v7490 = vmax.f32 %v7321, 0.0
    %v7491 = vmax.f32 %v6939, 0.0
    %v7492 = vmax.f32 %v6941, 0.0
    %v7493 = vmax.f32 %v7132, 0.0
    %v7494 = vmax.f32 %v7134, 0.0
    %v7495 = vmax.f32 %v7325, 0.0
    %v7496 = vmax.f32 %v7327, 0.0
    %v7497 = vmax.f32 %v6943, 0.0
    %v7498 = vmax.f32 %v6945, 0.0
    %v7499 = vmax.f32 %v7136, 0.0
    %v7500 = vmax.f32 %v7138, 0.0
    %v7501 = vmax.f32 %v7329, 0.0
    %v7502 = vmax.f32 %v7331, 0.0
    %v7503 = vmax.f32 %v6949, 0.0
    %v7504 = vmax.f32 %v6951, 0.0
    %v7505 = vmax.f32 %v7142, 0.0
    %v7506 = vmax.f32 %v7144, 0.0
    %v7507 = vmax.f32 %v7335, 0.0
    %v7508 = vmax.f32 %v7337, 0.0
    %v7509 = vmax.f32 %v6953, 0.0
    %v7510 = vmax.f32 %v6955, 0.0
    %v7511 = vmax.f32 %v7146, 0.0
    %v7512 = vmax.f32 %v7148, 0.0
    %v7513 = vmax.f32 %v7339, 0.0
    %v7514 = vmax.f32 %v7341, 0.0
    %v7515 = vmax.f32 %v6959, 0.0
    %v7516 = vmax.f32 %v6961, 0.0
    %v7517 = vmax.f32 %v7152, 0.0
    %v7518 = vmax.f32 %v7154, 0.0
    %v7519 = vmax.f32 %v7345, 0.0
    %v7520 = vmax.f32 %v7347, 0.0
    %v7521 = vmax.f32 %v6963, 0.0
    %v7522 = vmax.f32 %v6965, 0.0
    %v7523 = vmax.f32 %v7156, 0.0
    %v7524 = vmax.f32 %v7158, 0.0
    %v7525 = vmax.f32 %v7349, 0.0
    %v7526 = vmax.f32 %v7351, 0.0
    %v7527 = vmax.f32 %v6969, 0.0
    %v7528 = vmax.f32 %v6971, 0.0
    %v7529 = vmax.f32 %v7162, 0.0
    %v7530 = vmax.f32 %v7164, 0.0
    %v7531 = vmax.f32 %v7355, 0.0
    %v7532 = vmax.f32 %v7357, 0.0
    %v7533 = vmax.f32 %v6973, 0.0
    %v7534 = vmax.f32 %v6975, 0.0
    %v7535 = vmax.f32 %v7166, 0.0
    %v7536 = vmax.f32 %v7168, 0.0
    %v7537 = vmax.f32 %v7359, 0.0
    %v7538 = vmax.f32 %v7361, 0.0
    %v7539 = vmax.f32 %v6979, 0.0
    %v7540 = vmax.f32 %v6981, 0.0
    %v7541 = vmax.f32 %v7172, 0.0
    %v7542 = vmax.f32 %v7174, 0.0
    %v7543 = vmax.f32 %v7365, 0.0
    %v7544 = vmax.f32 %v7367, 0.0
    %v7545 = vmax.f32 %v6983, 0.0
    %v7546 = vmax.f32 %v6985, 0.0
    %v7547 = vmax.f32 %v7176, 0.0
    %v7548 = vmax.f32 %v7178, 0.0
    %v7549 = vmax.f32 %v7369, 0.0
    %v7550 = vmax.f32 %v7371, 0.0
    %v7551 = vmax.f32 %v6989, 0.0
    %v7552 = vmax.f32 %v6991, 0.0
    %v7553 = vmax.f32 %v7182, 0.0
    %v7554 = vmax.f32 %v7184, 0.0
    %v7555 = vmax.f32 %v7375, 0.0
    %v7556 = vmax.f32 %v7377, 0.0
    %v7557 = vmax.f32 %v6993, 0.0
    %v7558 = vmax.f32 %v6995, 0.0
    %v7559 = vmax.f32 %v7186, 0.0
    %v7560 = vmax.f32 %v7188, 0.0
    %v7561 = vmax.f32 %v7379, 0.0
    %v7562 = vmax.f32 %v7381, 0.0
    %v7563 = vmax.f32 %v6999, 0.0
    %v7564 = vmax.f32 %v7001, 0.0
    %v7565 = vmax.f32 %v7192, 0.0
    %v7566 = vmax.f32 %v7194, 0.0
    %v7567 = vmax.f32 %v7385, 0.0
    %v7568 = vmax.f32 %v7387, 0.0
    %v7569 = vmax.f32 %v7003, 0.0
    %v7570 = vmax.f32 %v7005, 0.0
    %v7571 = vmax.f32 %v7196, 0.0
    %v7572 = vmax.f32 %v7198, 0.0
    %v7573 = vmax.f32 %v7389, 0.0
    %v7574 = vmax.f32 %v7391, 0.0
    %v7575 = vmax.f32 %v7009, 0.0
    %v7576 = vmax.f32 %v7011, 0.0
    %v7577 = vmax.f32 %v7202, 0.0
    %v7578 = vmax.f32 %v7204, 0.0
    %v7579 = vmax.f32 %v7395, 0.0
    %v7580 = vmax.f32 %v7397, 0.0
    %v7581 = vmax.f32 %v7013, 0.0
    %v7582 = vmax.f32 %v7015, 0.0
    %v7583 = vmax.f32 %v7206, 0.0
    %v7584 = vmax.f32 %v7208, 0.0
    %v7585 = vmax.f32 %v7399, 0.0
    %v7586 = vmax.f32 %v7401, 0.0
    %v7587 = vmax.f32 %v7019, 0.0
    %v7588 = vmax.f32 %v7021, 0.0
    %v7589 = vmax.f32 %v7212, 0.0
    %v7590 = vmax.f32 %v7214, 0.0
    %v7591 = vmax.f32 %v7405, 0.0
    %v7592 = vmax.f32 %v7407, 0.0
    %v7593 = vmax.f32 %v7023, 0.0
    %v7594 = vmax.f32 %v7025, 0.0
    %v7595 = vmax.f32 %v7216, 0.0
    %v7596 = vmax.f32 %v7218, 0.0
    %v7597 = vmax.f32 %v7409, 0.0
    %v7598 = vmax.f32 %v7411, 0.0
    %v7599 = vmax.f32 %v7029, 0.0
    %v7600 = vmax.f32 %v7031, 0.0
    %v7601 = vmax.f32 %v7222, 0.0
    %v7602 = vmax.f32 %v7224, 0.0
    %v7603 = vmax.f32 %v7415, 0.0
    %v7604 = vmax.f32 %v7417, 0.0
    %v7605 = vmax.f32 %v7033, 0.0
    %v7606 = vmax.f32 %v7035, 0.0
    %v7607 = vmax.f32 %v7226, 0.0
    %v7608 = vmax.f32 %v7228, 0.0
    %v7609 = vmax.f32 %v7419, 0.0
    %v7610 = vmax.f32 %v7421, 0.0
    %v7611 = vmax.f32 %v7039, 0.0
    %v7612 = vmax.f32 %v7041, 0.0
    %v7613 = vmax.f32 %v7232, 0.0
    %v7614 = vmax.f32 %v7234, 0.0
    %v7615 = vmax.f32 %v7425, 0.0
    %v7616 = vmax.f32 %v7427, 0.0
    %v7617 = vmax.f32 %v7043, 0.0
    %v7618 = vmax.f32 %v7045, 0.0
    %v7619 = vmax.f32 %v7236, 0.0
    %v7620 = vmax.f32 %v7238, 0.0
    %v7621 = vmax.f32 %v7429, 0.0
    %v7622 = vmax.f32 %v7431, 0.0
    %v7623 = vmax.f32 %v7049, 0.0
    %v7624 = vmax.f32 %v7051, 0.0
    %v7625 = vmax.f32 %v7242, 0.0
    %v7626 = vmax.f32 %v7244, 0.0
    %v7627 = vmax.f32 %v7435, 0.0
    %v7628 = vmax.f32 %v7437, 0.0
    %v7629 = vmax.f32 %v7053, 0.0
    %v7630 = vmax.f32 %v7055, 0.0
    %v7631 = vmax.f32 %v7246, 0.0
    %v7632 = vmax.f32 %v7248, 0.0
    %v7633 = vmax.f32 %v7439, 0.0
    %v7634 = vmax.f32 %v7441, 0.0
    %v7635 = vpack.c.bf16 %v7449, %v7443
    %v7636 = vpack.c.bf16 %v7450, %v7444
    %v7637 = vpack.c.bf16 %v7451, %v7445
    %v7638 = vpack.c.bf16 %v7452, %v7446
    %v7639 = vpack.c.bf16 %v7453, %v7447
    %v7640 = vpack.c.bf16 %v7454, %v7448
    %v7641 = vpack.c.bf16 %v7461, %v7455
    %v7642 = vpack.c.bf16 %v7462, %v7456
    %v7643 = vpack.c.bf16 %v7463, %v7457
    %v7644 = vpack.c.bf16 %v7464, %v7458
    %v7645 = vpack.c.bf16 %v7465, %v7459
    %v7646 = vpack.c.bf16 %v7466, %v7460
    %v7647 = vpack.c.bf16 %v7473, %v7467
    %v7648 = vpack.c.bf16 %v7474, %v7468
    %v7649 = vpack.c.bf16 %v7475, %v7469
    %v7650 = vpack.c.bf16 %v7476, %v7470
    %v7651 = vpack.c.bf16 %v7477, %v7471
    %v7652 = vpack.c.bf16 %v7478, %v7472
    %v7653 = vpack.c.bf16 %v7485, %v7479
    %v7654 = vpack.c.bf16 %v7486, %v7480
    %v7655 = vpack.c.bf16 %v7487, %v7481
    %v7656 = vpack.c.bf16 %v7488, %v7482
    %v7657 = vpack.c.bf16 %v7489, %v7483
    %v7658 = vpack.c.bf16 %v7490, %v7484
    %v7659 = vpack.c.bf16 %v7497, %v7491
    %v7660 = vpack.c.bf16 %v7498, %v7492
    %v7661 = vpack.c.bf16 %v7499, %v7493
    %v7662 = vpack.c.bf16 %v7500, %v7494
    %v7663 = vpack.c.bf16 %v7501, %v7495
    %v7664 = vpack.c.bf16 %v7502, %v7496
    %v7665 = vpack.c.bf16 %v7509, %v7503
    %v7666 = vpack.c.bf16 %v7510, %v7504
    %v7667 = vpack.c.bf16 %v7511, %v7505
    %v7668 = vpack.c.bf16 %v7512, %v7506
    %v7669 = vpack.c.bf16 %v7513, %v7507
    %v7670 = vpack.c.bf16 %v7514, %v7508
    %v7671 = vpack.c.bf16 %v7521, %v7515
    %v7672 = vpack.c.bf16 %v7522, %v7516
    %v7673 = vpack.c.bf16 %v7523, %v7517
    %v7674 = vpack.c.bf16 %v7524, %v7518
    %v7675 = vpack.c.bf16 %v7525, %v7519
    %v7676 = vpack.c.bf16 %v7526, %v7520
    %v7677 = vpack.c.bf16 %v7533, %v7527
    %v7678 = vpack.c.bf16 %v7534, %v7528
    %v7679 = vpack.c.bf16 %v7535, %v7529
    %v7680 = vpack.c.bf16 %v7536, %v7530
    %v7681 = vpack.c.bf16 %v7537, %v7531
    %v7682 = vpack.c.bf16 %v7538, %v7532
    %v7683 = vpack.c.bf16 %v7545, %v7539
    %v7684 = vpack.c.bf16 %v7546, %v7540
    %v7685 = vpack.c.bf16 %v7547, %v7541
    %v7686 = vpack.c.bf16 %v7548, %v7542
    %v7687 = vpack.c.bf16 %v7549, %v7543
    %v7688 = vpack.c.bf16 %v7550, %v7544
    %v7689 = vpack.c.bf16 %v7557, %v7551
    %v7690 = vpack.c.bf16 %v7558, %v7552
    %v7691 = vpack.c.bf16 %v7559, %v7553
    %v7692 = vpack.c.bf16 %v7560, %v7554
    %v7693 = vpack.c.bf16 %v7561, %v7555
    %v7694 = vpack.c.bf16 %v7562, %v7556
    %v7695 = vpack.c.bf16 %v7569, %v7563
    %v7696 = vpack.c.bf16 %v7570, %v7564
    %v7697 = vpack.c.bf16 %v7571, %v7565
    %v7698 = vpack.c.bf16 %v7572, %v7566
    %v7699 = vpack.c.bf16 %v7573, %v7567
    %v7700 = vpack.c.bf16 %v7574, %v7568
    %v7701 = vpack.c.bf16 %v7581, %v7575
    %v7702 = vpack.c.bf16 %v7582, %v7576
    %v7703 = vpack.c.bf16 %v7583, %v7577
    %v7704 = vpack.c.bf16 %v7584, %v7578
    %v7705 = vpack.c.bf16 %v7585, %v7579
    %v7706 = vpack.c.bf16 %v7586, %v7580
    %v7707 = vpack.c.bf16 %v7593, %v7587
    %v7708 = vpack.c.bf16 %v7594, %v7588
    %v7709 = vpack.c.bf16 %v7595, %v7589
    %v7710 = vpack.c.bf16 %v7596, %v7590
    %v7711 = vpack.c.bf16 %v7597, %v7591
    %v7712 = vpack.c.bf16 %v7598, %v7592
    %v7713 = vpack.c.bf16 %v7605, %v7599
    %v7714 = vpack.c.bf16 %v7606, %v7600
    %v7715 = vpack.c.bf16 %v7607, %v7601
    %v7716 = vpack.c.bf16 %v7608, %v7602
    %v7717 = vpack.c.bf16 %v7609, %v7603
    %v7718 = vpack.c.bf16 %v7610, %v7604
    %v7719 = vpack.c.bf16 %v7617, %v7611
    %v7720 = vpack.c.bf16 %v7618, %v7612
    %v7721 = vpack.c.bf16 %v7619, %v7613
    %v7722 = vpack.c.bf16 %v7620, %v7614
    %v7723 = vpack.c.bf16 %v7621, %v7615
    %v7724 = vpack.c.bf16 %v7622, %v7616
    %v7725 = vpack.c.bf16 %v7629, %v7623
    %v7726 = vpack.c.bf16 %v7630, %v7624
    %v7727 = vpack.c.bf16 %v7631, %v7625
    %v7728 = vpack.c.bf16 %v7632, %v7626
    %v7729 = vpack.c.bf16 %v7633, %v7627
    %v7730 = vpack.c.bf16 %v7634, %v7628
    %v7731 = vld [vmem:[%s6] sm:$0xff]
    %v7732 = vld [vmem:[%s6 + $0x8] sm:$0xff]
    %v7733 = vld [vmem:[%s6 + $0x10] sm:$0xff]
    %v7734 = vld [vmem:[%s6 + $0x18] sm:$0xff]
    %v7735 = vld [vmem:[%s6 + $0x20] sm:$0xff]
    %v7736 = vld [vmem:[%s6 + $0x28] sm:$0xff]
    %v7737 = vld [vmem:[%s6 + $0x30] sm:$0xff]
    %v7738 = vld [vmem:[%s6 + $0x38] sm:$0xff]
    %v7739 = vld [vmem:[%s6 + $0x40] sm:$0xff]
    %v7740 = vld [vmem:[%s6 + $0x48] sm:$0xff]
    %v7741 = vld [vmem:[%s6 + $0x50] sm:$0xff]
    %v7742 = vld [vmem:[%s6 + $0x58] sm:$0xff]
    %v7743 = vld [vmem:[%s6 + $0x60] sm:$0xff]
    %v7744 = vld [vmem:[%s6 + $0x68] sm:$0xff]
    %v7745 = vld [vmem:[%s6 + $0x70] sm:$0xff]
    %v7746 = vld [vmem:[%s6 + $0x78] sm:$0xff]
    %v7747 = vld [vmem:[%s6 + $0x80] sm:$0xff]
    %v7748 = vld [vmem:[%s6 + $0x88] sm:$0xff]
    %v7749 = vld [vmem:[%s6 + $0x90] sm:$0xff]
    %v7750 = vld [vmem:[%s6 + $0x98] sm:$0xff]
    %v7751 = vld [vmem:[%s6 + $0xa0] sm:$0xff]
    %v7752 = vld [vmem:[%s6 + $0xa8] sm:$0xff]
    %v7753 = vld [vmem:[%s6 + $0xb0] sm:$0xff]
    %v7754 = vld [vmem:[%s6 + $0xb8] sm:$0xff]
    %v7755 = vld [vmem:[%s6 + $0xc0] sm:$0xff]
    %v7756 = vld [vmem:[%s6 + $0xc8] sm:$0xff]
    %v7757 = vld [vmem:[%s6 + $0xd0] sm:$0xff]
    %v7758 = vld [vmem:[%s6 + $0xd8] sm:$0xff]
    %v7759 = vld [vmem:[%s6 + $0xe0] sm:$0xff]
    %v7760 = vld [vmem:[%s6 + $0xe8] sm:$0xff]
    %v7761 = vld [vmem:[%s6 + $0xf0] sm:$0xff]
    %v7762 = vld [vmem:[%s6 + $0xf8] sm:$0xff]
    %v7763 = vld [vmem:[%s6 + $0x100] sm:$0xff]
    %v7764 = vld [vmem:[%s6 + $0x108] sm:$0xff]
    %v7765 = vld [vmem:[%s6 + $0x110] sm:$0xff]
    %v7766 = vld [vmem:[%s6 + $0x118] sm:$0xff]
    %v7767 = vld [vmem:[%s6 + $0x120] sm:$0xff]
    %v7768 = vld [vmem:[%s6 + $0x128] sm:$0xff]
    %v7769 = vld [vmem:[%s6 + $0x130] sm:$0xff]
    %v7770 = vld [vmem:[%s6 + $0x138] sm:$0xff]
    %v7771 = vld [vmem:[%s6 + $0x140] sm:$0xff]
    %v7772 = vld [vmem:[%s6 + $0x148] sm:$0xff]
    %v7773 = vld [vmem:[%s6 + $0x150] sm:$0xff]
    %v7774 = vld [vmem:[%s6 + $0x158] sm:$0xff]
    %v7775 = vld [vmem:[%s6 + $0x160] sm:$0xff]
    %v7776 = vld [vmem:[%s6 + $0x168] sm:$0xff]
    %v7777 = vld [vmem:[%s6 + $0x170] sm:$0xff]
    %v7778 = vld [vmem:[%s6 + $0x178] sm:$0xff]
    %v7779 = vld [vmem:[%s6 + $0x180] sm:$0xff]
    %v7780 = vld [vmem:[%s6 + $0x188] sm:$0xff]
    %v7781 = vld [vmem:[%s6 + $0x190] sm:$0xff]
    %v7782 = vld [vmem:[%s6 + $0x198] sm:$0xff]
    %v7783 = vld [vmem:[%s6 + $0x1a0] sm:$0xff]
    %v7784 = vld [vmem:[%s6 + $0x1a8] sm:$0xff]
    %v7785 = vld [vmem:[%s6 + $0x1b0] sm:$0xff]
    %v7786 = vld [vmem:[%s6 + $0x1b8] sm:$0xff]
    %v7787 = vld [vmem:[%s6 + $0x1c0] sm:$0xff]
    %v7788 = vld [vmem:[%s6 + $0x1c8] sm:$0xff]
    %v7789 = vld [vmem:[%s6 + $0x1d0] sm:$0xff]
    %v7790 = vld [vmem:[%s6 + $0x1d8] sm:$0xff]
    %v7791 = vld [vmem:[%s6 + $0x1e0] sm:$0xff]
    %v7792 = vld [vmem:[%s6 + $0x1e8] sm:$0xff]
    %v7793 = vld [vmem:[%s6 + $0x1f0] sm:$0xff]
    %v7794 = vld [vmem:[%s6 + $0x1f8] sm:$0xff]
    %v7795 = vld [vmem:[%s6 + $0x200] sm:$0xff]
    %v7796 = vld [vmem:[%s6 + $0x208] sm:$0xff]
    %v7797 = vld [vmem:[%s6 + $0x210] sm:$0xff]
    %v7798 = vld [vmem:[%s6 + $0x218] sm:$0xff]
    %v7799 = vld [vmem:[%s6 + $0x220] sm:$0xff]
    %v7800 = vld [vmem:[%s6 + $0x228] sm:$0xff]
    %v7801 = vld [vmem:[%s6 + $0x230] sm:$0xff]
    %v7802 = vld [vmem:[%s6 + $0x238] sm:$0xff]
    %v7803 = vld [vmem:[%s6 + $0x240] sm:$0xff]
    %v7804 = vld [vmem:[%s6 + $0x248] sm:$0xff]
    %v7805 = vld [vmem:[%s6 + $0x250] sm:$0xff]
    %v7806 = vld [vmem:[%s6 + $0x258] sm:$0xff]
    %v7807 = vld [vmem:[%s6 + $0x260] sm:$0xff]
    %v7808 = vld [vmem:[%s6 + $0x268] sm:$0xff]
    %v7809 = vld [vmem:[%s6 + $0x270] sm:$0xff]
    %v7810 = vld [vmem:[%s6 + $0x278] sm:$0xff]
    %v7811 = vld [vmem:[%s6 + $0x280] sm:$0xff]
    %v7812 = vld [vmem:[%s6 + $0x288] sm:$0xff]
    %v7813 = vld [vmem:[%s6 + $0x290] sm:$0xff]
    %v7814 = vld [vmem:[%s6 + $0x298] sm:$0xff]
    %v7815 = vld [vmem:[%s6 + $0x2a0] sm:$0xff]
    %v7816 = vld [vmem:[%s6 + $0x2a8] sm:$0xff]
    %v7817 = vld [vmem:[%s6 + $0x2b0] sm:$0xff]
    %v7818 = vld [vmem:[%s6 + $0x2b8] sm:$0xff]
    %v7819 = vld [vmem:[%s6 + $0x2c0] sm:$0xff]
    %v7820 = vld [vmem:[%s6 + $0x2c8] sm:$0xff]
    %v7821 = vld [vmem:[%s6 + $0x2d0] sm:$0xff]
    %v7822 = vld [vmem:[%s6 + $0x2d8] sm:$0xff]
    %v7823 = vld [vmem:[%s6 + $0x2e0] sm:$0xff]
    %v7824 = vld [vmem:[%s6 + $0x2e8] sm:$0xff]
    %v7825 = vld [vmem:[%s6 + $0x2f0] sm:$0xff]
    %v7826 = vld [vmem:[%s6 + $0x2f8] sm:$0xff]
    %v7923 = vunpack.c.l.b16 %v7731
    %v7924 = vunpack.c.h.b16 %v7731
    %v7925 = vunpack.c.l.b16 %v7732
    %v7926 = vunpack.c.h.b16 %v7732
    %v7927 = vunpack.c.l.b16 %v7733
    %v7928 = vunpack.c.h.b16 %v7733
    %v7929 = vunpack.c.l.b16 %v7734
    %v7930 = vunpack.c.h.b16 %v7734
    %v7931 = vunpack.c.l.b16 %v7735
    %v7932 = vunpack.c.h.b16 %v7735
    %v7933 = vunpack.c.l.b16 %v7736
    %v7934 = vunpack.c.h.b16 %v7736
    %v7935 = vunpack.c.l.b16 %v7737
    %v7936 = vunpack.c.h.b16 %v7737
    %v7937 = vunpack.c.l.b16 %v7738
    %v7938 = vunpack.c.h.b16 %v7738
    %v7939 = vunpack.c.l.b16 %v7739
    %v7940 = vunpack.c.h.b16 %v7739
    %v7941 = vunpack.c.l.b16 %v7740
    %v7942 = vunpack.c.h.b16 %v7740
    %v7943 = vunpack.c.l.b16 %v7741
    %v7944 = vunpack.c.h.b16 %v7741
    %v7945 = vunpack.c.l.b16 %v7742
    %v7946 = vunpack.c.h.b16 %v7742
    %v7947 = vunpack.c.l.b16 %v7743
    %v7948 = vunpack.c.h.b16 %v7743
    %v7949 = vunpack.c.l.b16 %v7744
    %v7950 = vunpack.c.h.b16 %v7744
    %v7951 = vunpack.c.l.b16 %v7745
    %v7952 = vunpack.c.h.b16 %v7745
    %v7953 = vunpack.c.l.b16 %v7746
    %v7954 = vunpack.c.h.b16 %v7746
    %v7955 = vunpack.c.l.b16 %v7747
    %v7956 = vunpack.c.h.b16 %v7747
    %v7957 = vunpack.c.l.b16 %v7748
    %v7958 = vunpack.c.h.b16 %v7748
    %v7959 = vunpack.c.l.b16 %v7749
    %v7960 = vunpack.c.h.b16 %v7749
    %v7961 = vunpack.c.l.b16 %v7750
    %v7962 = vunpack.c.h.b16 %v7750
    %v7963 = vunpack.c.l.b16 %v7751
    %v7964 = vunpack.c.h.b16 %v7751
    %v7965 = vunpack.c.l.b16 %v7752
    %v7966 = vunpack.c.h.b16 %v7752
    %v7967 = vunpack.c.l.b16 %v7753
    %v7968 = vunpack.c.h.b16 %v7753
    %v7969 = vunpack.c.l.b16 %v7754
    %v7970 = vunpack.c.h.b16 %v7754
    %v7971 = vunpack.c.l.b16 %v7755
    %v7972 = vunpack.c.h.b16 %v7755
    %v7973 = vunpack.c.l.b16 %v7756
    %v7974 = vunpack.c.h.b16 %v7756
    %v7975 = vunpack.c.l.b16 %v7757
    %v7976 = vunpack.c.h.b16 %v7757
    %v7977 = vunpack.c.l.b16 %v7758
    %v7978 = vunpack.c.h.b16 %v7758
    %v7979 = vunpack.c.l.b16 %v7759
    %v7980 = vunpack.c.h.b16 %v7759
    %v7981 = vunpack.c.l.b16 %v7760
    %v7982 = vunpack.c.h.b16 %v7760
    %v7983 = vunpack.c.l.b16 %v7761
    %v7984 = vunpack.c.h.b16 %v7761
    %v7985 = vunpack.c.l.b16 %v7762
    %v7986 = vunpack.c.h.b16 %v7762
    %v7987 = vunpack.c.l.b16 %v7763
    %v7988 = vunpack.c.h.b16 %v7763
    %v7989 = vunpack.c.l.b16 %v7764
    %v7990 = vunpack.c.h.b16 %v7764
    %v7991 = vunpack.c.l.b16 %v7765
    %v7992 = vunpack.c.h.b16 %v7765
    %v7993 = vunpack.c.l.b16 %v7766
    %v7994 = vunpack.c.h.b16 %v7766
    %v7995 = vunpack.c.l.b16 %v7767
    %v7996 = vunpack.c.h.b16 %v7767
    %v7997 = vunpack.c.l.b16 %v7768
    %v7998 = vunpack.c.h.b16 %v7768
    %v7999 = vunpack.c.l.b16 %v7769
    %v8000 = vunpack.c.h.b16 %v7769
    %v8001 = vunpack.c.l.b16 %v7770
    %v8002 = vunpack.c.h.b16 %v7770
    %v8003 = vunpack.c.l.b16 %v7771
    %v8004 = vunpack.c.h.b16 %v7771
    %v8005 = vunpack.c.l.b16 %v7772
    %v8006 = vunpack.c.h.b16 %v7772
    %v8007 = vunpack.c.l.b16 %v7773
    %v8008 = vunpack.c.h.b16 %v7773
    %v8009 = vunpack.c.l.b16 %v7774
    %v8010 = vunpack.c.h.b16 %v7774
    %v8011 = vunpack.c.l.b16 %v7775
    %v8012 = vunpack.c.h.b16 %v7775
    %v8013 = vunpack.c.l.b16 %v7776
    %v8014 = vunpack.c.h.b16 %v7776
    %v8015 = vunpack.c.l.b16 %v7777
    %v8016 = vunpack.c.h.b16 %v7777
    %v8017 = vunpack.c.l.b16 %v7778
    %v8018 = vunpack.c.h.b16 %v7778
    %v8019 = vunpack.c.l.b16 %v7779
    %v8020 = vunpack.c.h.b16 %v7779
    %v8021 = vunpack.c.l.b16 %v7780
    %v8022 = vunpack.c.h.b16 %v7780
    %v8023 = vunpack.c.l.b16 %v7781
    %v8024 = vunpack.c.h.b16 %v7781
    %v8025 = vunpack.c.l.b16 %v7782
    %v8026 = vunpack.c.h.b16 %v7782
    %v8027 = vunpack.c.l.b16 %v7783
    %v8028 = vunpack.c.h.b16 %v7783
    %v8029 = vunpack.c.l.b16 %v7784
    %v8030 = vunpack.c.h.b16 %v7784
    %v8031 = vunpack.c.l.b16 %v7785
    %v8032 = vunpack.c.h.b16 %v7785
    %v8033 = vunpack.c.l.b16 %v7786
    %v8034 = vunpack.c.h.b16 %v7786
    %v8035 = vunpack.c.l.b16 %v7787
    %v8036 = vunpack.c.h.b16 %v7787
    %v8037 = vunpack.c.l.b16 %v7788
    %v8038 = vunpack.c.h.b16 %v7788
    %v8039 = vunpack.c.l.b16 %v7789
    %v8040 = vunpack.c.h.b16 %v7789
    %v8041 = vunpack.c.l.b16 %v7790
    %v8042 = vunpack.c.h.b16 %v7790
    %v8043 = vunpack.c.l.b16 %v7791
    %v8044 = vunpack.c.h.b16 %v7791
    %v8045 = vunpack.c.l.b16 %v7792
    %v8046 = vunpack.c.h.b16 %v7792
    %v8047 = vunpack.c.l.b16 %v7793
    %v8048 = vunpack.c.h.b16 %v7793
    %v8049 = vunpack.c.l.b16 %v7794
    %v8050 = vunpack.c.h.b16 %v7794
    %v8051 = vunpack.c.l.b16 %v7795
    %v8052 = vunpack.c.h.b16 %v7795
    %v8053 = vunpack.c.l.b16 %v7796
    %v8054 = vunpack.c.h.b16 %v7796
    %v8055 = vunpack.c.l.b16 %v7797
    %v8056 = vunpack.c.h.b16 %v7797
    %v8057 = vunpack.c.l.b16 %v7798
    %v8058 = vunpack.c.h.b16 %v7798
    %v8059 = vunpack.c.l.b16 %v7799
    %v8060 = vunpack.c.h.b16 %v7799
    %v8061 = vunpack.c.l.b16 %v7800
    %v8062 = vunpack.c.h.b16 %v7800
    %v8063 = vunpack.c.l.b16 %v7801
    %v8064 = vunpack.c.h.b16 %v7801
    %v8065 = vunpack.c.l.b16 %v7802
    %v8066 = vunpack.c.h.b16 %v7802
    %v8067 = vunpack.c.l.b16 %v7803
    %v8068 = vunpack.c.h.b16 %v7803
    %v8069 = vunpack.c.l.b16 %v7804
    %v8070 = vunpack.c.h.b16 %v7804
    %v8071 = vunpack.c.l.b16 %v7805
    %v8072 = vunpack.c.h.b16 %v7805
    %v8073 = vunpack.c.l.b16 %v7806
    %v8074 = vunpack.c.h.b16 %v7806
    %v8075 = vunpack.c.l.b16 %v7807
    %v8076 = vunpack.c.h.b16 %v7807
    %v8077 = vunpack.c.l.b16 %v7808
    %v8078 = vunpack.c.h.b16 %v7808
    %v8079 = vunpack.c.l.b16 %v7809
    %v8080 = vunpack.c.h.b16 %v7809
    %v8081 = vunpack.c.l.b16 %v7810
    %v8082 = vunpack.c.h.b16 %v7810
    %v8083 = vunpack.c.l.b16 %v7811
    %v8084 = vunpack.c.h.b16 %v7811
    %v8085 = vunpack.c.l.b16 %v7812
    %v8086 = vunpack.c.h.b16 %v7812
    %v8087 = vunpack.c.l.b16 %v7813
    %v8088 = vunpack.c.h.b16 %v7813
    %v8089 = vunpack.c.l.b16 %v7814
    %v8090 = vunpack.c.h.b16 %v7814
    %v8091 = vunpack.c.l.b16 %v7815
    %v8092 = vunpack.c.h.b16 %v7815
    %v8093 = vunpack.c.l.b16 %v7816
    %v8094 = vunpack.c.h.b16 %v7816
    %v8095 = vunpack.c.l.b16 %v7817
    %v8096 = vunpack.c.h.b16 %v7817
    %v8097 = vunpack.c.l.b16 %v7818
    %v8098 = vunpack.c.h.b16 %v7818
    %v8099 = vunpack.c.l.b16 %v7819
    %v8100 = vunpack.c.h.b16 %v7819
    %v8101 = vunpack.c.l.b16 %v7820
    %v8102 = vunpack.c.h.b16 %v7820
    %v8103 = vunpack.c.l.b16 %v7821
    %v8104 = vunpack.c.h.b16 %v7821
    %v8105 = vunpack.c.l.b16 %v7822
    %v8106 = vunpack.c.h.b16 %v7822
    %v8107 = vunpack.c.l.b16 %v7823
    %v8108 = vunpack.c.h.b16 %v7823
    %v8109 = vunpack.c.l.b16 %v7824
    %v8110 = vunpack.c.h.b16 %v7824
    %v8111 = vunpack.c.l.b16 %v7825
    %v8112 = vunpack.c.h.b16 %v7825
    %v8113 = vunpack.c.l.b16 %v7826
    %v8114 = vunpack.c.h.b16 %v7826
    %v8115 = vpack.c.b16 %v7925, %v7923
    %v8116 = vpack.c.b16 %v7926, %v7924
    %v8117 = vpack.c.b16 %v7929, %v7927
    %v8118 = vpack.c.b16 %v7930, %v7928
    %v8119 = vpack.c.b16 %v7933, %v7931
    %v8120 = vpack.c.b16 %v7934, %v7932
    %v8121 = vpack.c.b16 %v7937, %v7935
    %v8122 = vpack.c.b16 %v7938, %v7936
    %v8123 = vpack.c.b16 %v7941, %v7939
    %v8124 = vpack.c.b16 %v7942, %v7940
    %v8125 = vpack.c.b16 %v7945, %v7943
    %v8126 = vpack.c.b16 %v7946, %v7944
    %v8127 = vpack.c.b16 %v7949, %v7947
    %v8128 = vpack.c.b16 %v7950, %v7948
    %v8129 = vpack.c.b16 %v7953, %v7951
    %v8130 = vpack.c.b16 %v7954, %v7952
    %v8131 = vpack.c.b16 %v7957, %v7955
    %v8132 = vpack.c.b16 %v7958, %v7956
    %v8133 = vpack.c.b16 %v7961, %v7959
    %v8134 = vpack.c.b16 %v7962, %v7960
    %v8135 = vpack.c.b16 %v7965, %v7963
    %v8136 = vpack.c.b16 %v7966, %v7964
    %v8137 = vpack.c.b16 %v7969, %v7967
    %v8138 = vpack.c.b16 %v7970, %v7968
    %v8139 = vpack.c.b16 %v7973, %v7971
    %v8140 = vpack.c.b16 %v7974, %v7972
    %v8141 = vpack.c.b16 %v7977, %v7975
    %v8142 = vpack.c.b16 %v7978, %v7976
    %v8143 = vpack.c.b16 %v7981, %v7979
    %v8144 = vpack.c.b16 %v7982, %v7980
    %v8145 = vpack.c.b16 %v7985, %v7983
    %v8146 = vpack.c.b16 %v7986, %v7984
    %v8147 = vpack.c.b16 %v7989, %v7987
    %v8148 = vpack.c.b16 %v7990, %v7988
    %v8149 = vpack.c.b16 %v7993, %v7991
    %v8150 = vpack.c.b16 %v7994, %v7992
    %v8151 = vpack.c.b16 %v7997, %v7995
    %v8152 = vpack.c.b16 %v7998, %v7996
    %v8153 = vpack.c.b16 %v8001, %v7999
    %v8154 = vpack.c.b16 %v8002, %v8000
    %v8155 = vpack.c.b16 %v8005, %v8003
    %v8156 = vpack.c.b16 %v8006, %v8004
    %v8157 = vpack.c.b16 %v8009, %v8007
    %v8158 = vpack.c.b16 %v8010, %v8008
    %v8159 = vpack.c.b16 %v8013, %v8011
    %v8160 = vpack.c.b16 %v8014, %v8012
    %v8161 = vpack.c.b16 %v8017, %v8015
    %v8162 = vpack.c.b16 %v8018, %v8016
    %v8163 = vpack.c.b16 %v8021, %v8019
    %v8164 = vpack.c.b16 %v8022, %v8020
    %v8165 = vpack.c.b16 %v8025, %v8023
    %v8166 = vpack.c.b16 %v8026, %v8024
    %v8167 = vpack.c.b16 %v8029, %v8027
    %v8168 = vpack.c.b16 %v8030, %v8028
    %v8169 = vpack.c.b16 %v8033, %v8031
    %v8170 = vpack.c.b16 %v8034, %v8032
    %v8171 = vpack.c.b16 %v8037, %v8035
    %v8172 = vpack.c.b16 %v8038, %v8036
    %v8173 = vpack.c.b16 %v8041, %v8039
    %v8174 = vpack.c.b16 %v8042, %v8040
    %v8175 = vpack.c.b16 %v8045, %v8043
    %v8176 = vpack.c.b16 %v8046, %v8044
    %v8177 = vpack.c.b16 %v8049, %v8047
    %v8178 = vpack.c.b16 %v8050, %v8048
    %v8179 = vpack.c.b16 %v8053, %v8051
    %v8180 = vpack.c.b16 %v8054, %v8052
    %v8181 = vpack.c.b16 %v8057, %v8055
    %v8182 = vpack.c.b16 %v8058, %v8056
    %v8183 = vpack.c.b16 %v8061, %v8059
    %v8184 = vpack.c.b16 %v8062, %v8060
    %v8185 = vpack.c.b16 %v8065, %v8063
    %v8186 = vpack.c.b16 %v8066, %v8064
    %v8187 = vpack.c.b16 %v8069, %v8067
    %v8188 = vpack.c.b16 %v8070, %v8068
    %v8189 = vpack.c.b16 %v8073, %v8071
    %v8190 = vpack.c.b16 %v8074, %v8072
    %v8191 = vpack.c.b16 %v8077, %v8075
    %v8192 = vpack.c.b16 %v8078, %v8076
    %v8193 = vpack.c.b16 %v8081, %v8079
    %v8194 = vpack.c.b16 %v8082, %v8080
    %v8195 = vpack.c.b16 %v8085, %v8083
    %v8196 = vpack.c.b16 %v8086, %v8084
    %v8197 = vpack.c.b16 %v8089, %v8087
    %v8198 = vpack.c.b16 %v8090, %v8088
    %v8199 = vpack.c.b16 %v8093, %v8091
    %v8200 = vpack.c.b16 %v8094, %v8092
    %v8201 = vpack.c.b16 %v8097, %v8095
    %v8202 = vpack.c.b16 %v8098, %v8096
    %v8203 = vpack.c.b16 %v8101, %v8099
    %v8204 = vpack.c.b16 %v8102, %v8100
    %v8205 = vpack.c.b16 %v8105, %v8103
    %v8206 = vpack.c.b16 %v8106, %v8104
    %v8207 = vpack.c.b16 %v8109, %v8107
    %v8208 = vpack.c.b16 %v8110, %v8108
    %v8209 = vpack.c.b16 %v8113, %v8111
    %v8210 = vpack.c.b16 %v8114, %v8112
    %8307 = vmatprep.subr.bf16.mxu0 %v8130
    %8308 = vmatpush1.bf16.msra.mxu0 %v8129
    %8309 = vmatprep.subr.bf16.mxu0 %v8128
    %8310 = vmatpush1.bf16.msra.mxu0 %v8127
    %8311 = vmatprep.subr.bf16.mxu0 %v8126
    %8312 = vmatpush1.bf16.msra.mxu0 %v8125
    %8313 = vmatprep.subr.bf16.mxu0 %v8124
    %8314 = vmatpush1.bf16.msra.mxu0 %v8123
    %8315 = vmatprep.subr.bf16.mxu0 %v8122
    %8316 = vmatpush1.bf16.msra.mxu0 %v8121
    %8317 = vmatprep.subr.bf16.mxu0 %v8120
    %8318 = vmatpush1.bf16.msra.mxu0 %v8119
    %8319 = vmatprep.subr.bf16.mxu0 %v8118
    %8320 = vmatpush1.bf16.msra.mxu0 %v8117
    %8321 = vmatprep.subr.bf16.mxu0 %v8116
    %8322 = vmatpush1.bf16.msra.mxu0 %v8115
    %8323 = vmatprep.subr.bf16.mxu0 %v8146
    %8324 = vmatpush2.bf16.msra.mxu0 %v8145
    %8325 = vmatprep.subr.bf16.mxu0 %v8144
    %8326 = vmatpush2.bf16.msra.mxu0 %v8143
    %8327 = vmatprep.subr.bf16.mxu0 %v8142
    %8328 = vmatpush2.bf16.msra.mxu0 %v8141
    %8329 = vmatprep.subr.bf16.mxu0 %v8140
    %8330 = vmatpush2.bf16.msra.mxu0 %v8139
    %8331 = vmatprep.subr.bf16.mxu0 %v8138
    %8332 = vmatpush2.bf16.msra.mxu0 %v8137
    %8333 = vmatprep.subr.bf16.mxu0 %v8136
    %8334 = vmatpush2.bf16.msra.mxu0 %v8135
    %8335 = vmatprep.subr.bf16.mxu0 %v8134
    %8336 = vmatpush2.bf16.msra.mxu0 %v8133
    %8337 = vmatprep.subr.bf16.mxu0 %v8132
    %8338 = vmatpush2.bf16.msra.mxu0 %v8131
    %8339 = vmatprep.mubr.bf16.mxu0 %v7636
    %8340 = vmatmul.mubr.bf16.gmra.mxu0 %v7635
    %v8341 = vpop.f32.mrf.mxu0
    %v8342 = vadd.f32 0.0, %v8341
    %v8343 = vpop.f32.mrf.mxu0
    %v8344 = vadd.f32 0.0, %v8343
    %v8345 = vpop.f32.mrf.mxu0
    %v8346 = vadd.f32 0.0, %v8345
    %v8347 = vpop.f32.mrf.mxu0
    %v8348 = vadd.f32 0.0, %v8347
    %8349 = vmatprep.mubr.bf16.mxu0 %v7642
    %8350 = vmatmul.mubr.bf16.gmra.mxu0 %v7641
    %v8351 = vpop.f32.mrf.mxu0
    %v8352 = vadd.f32 0.0, %v8351
    %v8353 = vpop.f32.mrf.mxu0
    %v8354 = vadd.f32 0.0, %v8353
    %v8355 = vpop.f32.mrf.mxu0
    %v8356 = vadd.f32 0.0, %v8355
    %v8357 = vpop.f32.mrf.mxu0
    %v8358 = vadd.f32 0.0, %v8357
    %8359 = vmatprep.mubr.bf16.mxu0 %v7648
    %8360 = vmatmul.mubr.bf16.gmra.mxu0 %v7647
    %v8361 = vpop.f32.mrf.mxu0
    %v8362 = vadd.f32 0.0, %v8361
    %v8363 = vpop.f32.mrf.mxu0
    %v8364 = vadd.f32 0.0, %v8363
    %v8365 = vpop.f32.mrf.mxu0
    %v8366 = vadd.f32 0.0, %v8365
    %v8367 = vpop.f32.mrf.mxu0
    %v8368 = vadd.f32 0.0, %v8367
    %8369 = vmatprep.mubr.bf16.mxu0 %v7654
    %8370 = vmatmul.mubr.bf16.gmra.mxu0 %v7653
    %v8371 = vpop.f32.mrf.mxu0
    %v8372 = vadd.f32 0.0, %v8371
    %v8373 = vpop.f32.mrf.mxu0
    %v8374 = vadd.f32 0.0, %v8373
    %v8375 = vpop.f32.mrf.mxu0
    %v8376 = vadd.f32 0.0, %v8375
    %v8377 = vpop.f32.mrf.mxu0
    %v8378 = vadd.f32 0.0, %v8377
    %8379 = vmatprep.mubr.bf16.mxu0 %v7660
    %8380 = vmatmul.mubr.bf16.gmra.mxu0 %v7659
    %v8381 = vpop.f32.mrf.mxu0
    %v8382 = vadd.f32 0.0, %v8381
    %v8383 = vpop.f32.mrf.mxu0
    %v8384 = vadd.f32 0.0, %v8383
    %v8385 = vpop.f32.mrf.mxu0
    %v8386 = vadd.f32 0.0, %v8385
    %v8387 = vpop.f32.mrf.mxu0
    %v8388 = vadd.f32 0.0, %v8387
    %8389 = vmatprep.mubr.bf16.mxu0 %v7666
    %8390 = vmatmul.mubr.bf16.gmra.mxu0 %v7665
    %v8391 = vpop.f32.mrf.mxu0
    %v8392 = vadd.f32 0.0, %v8391
    %v8393 = vpop.f32.mrf.mxu0
    %v8394 = vadd.f32 0.0, %v8393
    %v8395 = vpop.f32.mrf.mxu0
    %v8396 = vadd.f32 0.0, %v8395
    %v8397 = vpop.f32.mrf.mxu0
    %v8398 = vadd.f32 0.0, %v8397
    %8399 = vmatprep.mubr.bf16.mxu0 %v7672
    %8400 = vmatmul.mubr.bf16.gmra.mxu0 %v7671
    %v8401 = vpop.f32.mrf.mxu0
    %v8402 = vadd.f32 0.0, %v8401
    %v8403 = vpop.f32.mrf.mxu0
    %v8404 = vadd.f32 0.0, %v8403
    %v8405 = vpop.f32.mrf.mxu0
    %v8406 = vadd.f32 0.0, %v8405
    %v8407 = vpop.f32.mrf.mxu0
    %v8408 = vadd.f32 0.0, %v8407
    %8409 = vmatprep.mubr.bf16.mxu0 %v7678
    %8410 = vmatmul.mubr.bf16.gmra.mxu0 %v7677
    %v8411 = vpop.f32.mrf.mxu0
    %v8412 = vadd.f32 0.0, %v8411
    %v8413 = vpop.f32.mrf.mxu0
    %v8414 = vadd.f32 0.0, %v8413
    %v8415 = vpop.f32.mrf.mxu0
    %v8416 = vadd.f32 0.0, %v8415
    %v8417 = vpop.f32.mrf.mxu0
    %v8418 = vadd.f32 0.0, %v8417
    %8419 = vmatprep.mubr.bf16.mxu0 %v7684
    %8420 = vmatmul.mubr.bf16.gmra.mxu0 %v7683
    %v8421 = vpop.f32.mrf.mxu0
    %v8422 = vadd.f32 0.0, %v8421
    %v8423 = vpop.f32.mrf.mxu0
    %v8424 = vadd.f32 0.0, %v8423
    %v8425 = vpop.f32.mrf.mxu0
    %v8426 = vadd.f32 0.0, %v8425
    %v8427 = vpop.f32.mrf.mxu0
    %v8428 = vadd.f32 0.0, %v8427
    %8429 = vmatprep.mubr.bf16.mxu0 %v7690
    %8430 = vmatmul.mubr.bf16.gmra.mxu0 %v7689
    %v8431 = vpop.f32.mrf.mxu0
    %v8432 = vadd.f32 0.0, %v8431
    %v8433 = vpop.f32.mrf.mxu0
    %v8434 = vadd.f32 0.0, %v8433
    %v8435 = vpop.f32.mrf.mxu0
    %v8436 = vadd.f32 0.0, %v8435
    %v8437 = vpop.f32.mrf.mxu0
    %v8438 = vadd.f32 0.0, %v8437
    %8439 = vmatprep.mubr.bf16.mxu0 %v7696
    %8440 = vmatmul.mubr.bf16.gmra.mxu0 %v7695
    %v8441 = vpop.f32.mrf.mxu0
    %v8442 = vadd.f32 0.0, %v8441
    %v8443 = vpop.f32.mrf.mxu0
    %v8444 = vadd.f32 0.0, %v8443
    %v8445 = vpop.f32.mrf.mxu0
    %v8446 = vadd.f32 0.0, %v8445
    %v8447 = vpop.f32.mrf.mxu0
    %v8448 = vadd.f32 0.0, %v8447
    %8449 = vmatprep.mubr.bf16.mxu0 %v7702
    %8450 = vmatmul.mubr.bf16.gmra.mxu0 %v7701
    %v8451 = vpop.f32.mrf.mxu0
    %v8452 = vadd.f32 0.0, %v8451
    %v8453 = vpop.f32.mrf.mxu0
    %v8454 = vadd.f32 0.0, %v8453
    %v8455 = vpop.f32.mrf.mxu0
    %v8456 = vadd.f32 0.0, %v8455
    %v8457 = vpop.f32.mrf.mxu0
    %v8458 = vadd.f32 0.0, %v8457
    %8459 = vmatprep.mubr.bf16.mxu0 %v7708
    %8460 = vmatmul.mubr.bf16.gmra.mxu0 %v7707
    %v8461 = vpop.f32.mrf.mxu0
    %v8462 = vadd.f32 0.0, %v8461
    %v8463 = vpop.f32.mrf.mxu0
    %v8464 = vadd.f32 0.0, %v8463
    %v8465 = vpop.f32.mrf.mxu0
    %v8466 = vadd.f32 0.0, %v8465
    %v8467 = vpop.f32.mrf.mxu0
    %v8468 = vadd.f32 0.0, %v8467
    %8469 = vmatprep.mubr.bf16.mxu0 %v7714
    %8470 = vmatmul.mubr.bf16.gmra.mxu0 %v7713
    %v8471 = vpop.f32.mrf.mxu0
    %v8472 = vadd.f32 0.0, %v8471
    %v8473 = vpop.f32.mrf.mxu0
    %v8474 = vadd.f32 0.0, %v8473
    %v8475 = vpop.f32.mrf.mxu0
    %v8476 = vadd.f32 0.0, %v8475
    %v8477 = vpop.f32.mrf.mxu0
    %v8478 = vadd.f32 0.0, %v8477
    %8479 = vmatprep.mubr.bf16.mxu0 %v7720
    %8480 = vmatmul.mubr.bf16.gmra.mxu0 %v7719
    %v8481 = vpop.f32.mrf.mxu0
    %v8482 = vadd.f32 0.0, %v8481
    %v8483 = vpop.f32.mrf.mxu0
    %v8484 = vadd.f32 0.0, %v8483
    %v8485 = vpop.f32.mrf.mxu0
    %v8486 = vadd.f32 0.0, %v8485
    %v8487 = vpop.f32.mrf.mxu0
    %v8488 = vadd.f32 0.0, %v8487
    %8489 = vmatprep.mubr.bf16.mxu0 %v7726
    %8490 = vmatmul.mubr.bf16.gmra.mxu0 %v7725
    %v8491 = vpop.f32.mrf.mxu0
    %v8492 = vadd.f32 0.0, %v8491
    %v8493 = vpop.f32.mrf.mxu0
    %v8494 = vadd.f32 0.0, %v8493
    %v8495 = vpop.f32.mrf.mxu0
    %v8496 = vadd.f32 0.0, %v8495
    %v8497 = vpop.f32.mrf.mxu0
    %v8498 = vadd.f32 0.0, %v8497
    %8499 = vdwg.mxu0
    %8500 = vmatprep.subr.bf16.mxu0 %v8162
    %8501 = vmatpush1.bf16.msra.mxu0 %v8161
    %8502 = vmatprep.subr.bf16.mxu0 %v8160
    %8503 = vmatpush1.bf16.msra.mxu0 %v8159
    %8504 = vmatprep.subr.bf16.mxu0 %v8158
    %8505 = vmatpush1.bf16.msra.mxu0 %v8157
    %8506 = vmatprep.subr.bf16.mxu0 %v8156
    %8507 = vmatpush1.bf16.msra.mxu0 %v8155
    %8508 = vmatprep.subr.bf16.mxu0 %v8154
    %8509 = vmatpush1.bf16.msra.mxu0 %v8153
    %8510 = vmatprep.subr.bf16.mxu0 %v8152
    %8511 = vmatpush1.bf16.msra.mxu0 %v8151
    %8512 = vmatprep.subr.bf16.mxu0 %v8150
    %8513 = vmatpush1.bf16.msra.mxu0 %v8149
    %8514 = vmatprep.subr.bf16.mxu0 %v8148
    %8515 = vmatpush1.bf16.msra.mxu0 %v8147
    %8516 = vmatprep.subr.bf16.mxu0 %v8178
    %8517 = vmatpush2.bf16.msra.mxu0 %v8177
    %8518 = vmatprep.subr.bf16.mxu0 %v8176
    %8519 = vmatpush2.bf16.msra.mxu0 %v8175
    %8520 = vmatprep.subr.bf16.mxu0 %v8174
    %8521 = vmatpush2.bf16.msra.mxu0 %v8173
    %8522 = vmatprep.subr.bf16.mxu0 %v8172
    %8523 = vmatpush2.bf16.msra.mxu0 %v8171
    %8524 = vmatprep.subr.bf16.mxu0 %v8170
    %8525 = vmatpush2.bf16.msra.mxu0 %v8169
    %8526 = vmatprep.subr.bf16.mxu0 %v8168
    %8527 = vmatpush2.bf16.msra.mxu0 %v8167
    %8528 = vmatprep.subr.bf16.mxu0 %v8166
    %8529 = vmatpush2.bf16.msra.mxu0 %v8165
    %8530 = vmatprep.subr.bf16.mxu0 %v8164
    %8531 = vmatpush2.bf16.msra.mxu0 %v8163
    %8532 = vmatprep.mubr.bf16.mxu0 %v7638
    %8533 = vmatmul.mubr.bf16.gmra.mxu0 %v7637
    %v8534 = vpop.f32.mrf.mxu0
    %v8535 = vadd.f32 %v8342, %v8534
    %v8536 = vpop.f32.mrf.mxu0
    %v8537 = vadd.f32 %v8344, %v8536
    %v8538 = vpop.f32.mrf.mxu0
    %v8539 = vadd.f32 %v8346, %v8538
    %v8540 = vpop.f32.mrf.mxu0
    %v8541 = vadd.f32 %v8348, %v8540
    %8542 = vmatprep.mubr.bf16.mxu0 %v7644
    %8543 = vmatmul.mubr.bf16.gmra.mxu0 %v7643
    %v8544 = vpop.f32.mrf.mxu0
    %v8545 = vadd.f32 %v8352, %v8544
    %v8546 = vpop.f32.mrf.mxu0
    %v8547 = vadd.f32 %v8354, %v8546
    %v8548 = vpop.f32.mrf.mxu0
    %v8549 = vadd.f32 %v8356, %v8548
    %v8550 = vpop.f32.mrf.mxu0
    %v8551 = vadd.f32 %v8358, %v8550
    %8552 = vmatprep.mubr.bf16.mxu0 %v7650
    %8553 = vmatmul.mubr.bf16.gmra.mxu0 %v7649
    %v8554 = vpop.f32.mrf.mxu0
    %v8555 = vadd.f32 %v8362, %v8554
    %v8556 = vpop.f32.mrf.mxu0
    %v8557 = vadd.f32 %v8364, %v8556
    %v8558 = vpop.f32.mrf.mxu0
    %v8559 = vadd.f32 %v8366, %v8558
    %v8560 = vpop.f32.mrf.mxu0
    %v8561 = vadd.f32 %v8368, %v8560
    %8562 = vmatprep.mubr.bf16.mxu0 %v7656
    %8563 = vmatmul.mubr.bf16.gmra.mxu0 %v7655
    %v8564 = vpop.f32.mrf.mxu0
    %v8565 = vadd.f32 %v8372, %v8564
    %v8566 = vpop.f32.mrf.mxu0
    %v8567 = vadd.f32 %v8374, %v8566
    %v8568 = vpop.f32.mrf.mxu0
    %v8569 = vadd.f32 %v8376, %v8568
    %v8570 = vpop.f32.mrf.mxu0
    %v8571 = vadd.f32 %v8378, %v8570
    %8572 = vmatprep.mubr.bf16.mxu0 %v7662
    %8573 = vmatmul.mubr.bf16.gmra.mxu0 %v7661
    %v8574 = vpop.f32.mrf.mxu0
    %v8575 = vadd.f32 %v8382, %v8574
    %v8576 = vpop.f32.mrf.mxu0
    %v8577 = vadd.f32 %v8384, %v8576
    %v8578 = vpop.f32.mrf.mxu0
    %v8579 = vadd.f32 %v8386, %v8578
    %v8580 = vpop.f32.mrf.mxu0
    %v8581 = vadd.f32 %v8388, %v8580
    %8582 = vmatprep.mubr.bf16.mxu0 %v7668
    %8583 = vmatmul.mubr.bf16.gmra.mxu0 %v7667
    %v8584 = vpop.f32.mrf.mxu0
    %v8585 = vadd.f32 %v8392, %v8584
    %v8586 = vpop.f32.mrf.mxu0
    %v8587 = vadd.f32 %v8394, %v8586
    %v8588 = vpop.f32.mrf.mxu0
    %v8589 = vadd.f32 %v8396, %v8588
    %v8590 = vpop.f32.mrf.mxu0
    %v8591 = vadd.f32 %v8398, %v8590
    %8592 = vmatprep.mubr.bf16.mxu0 %v7674
    %8593 = vmatmul.mubr.bf16.gmra.mxu0 %v7673
    %v8594 = vpop.f32.mrf.mxu0
    %v8595 = vadd.f32 %v8402, %v8594
    %v8596 = vpop.f32.mrf.mxu0
    %v8597 = vadd.f32 %v8404, %v8596
    %v8598 = vpop.f32.mrf.mxu0
    %v8599 = vadd.f32 %v8406, %v8598
    %v8600 = vpop.f32.mrf.mxu0
    %v8601 = vadd.f32 %v8408, %v8600
    %8602 = vmatprep.mubr.bf16.mxu0 %v7680
    %8603 = vmatmul.mubr.bf16.gmra.mxu0 %v7679
    %v8604 = vpop.f32.mrf.mxu0
    %v8605 = vadd.f32 %v8412, %v8604
    %v8606 = vpop.f32.mrf.mxu0
    %v8607 = vadd.f32 %v8414, %v8606
    %v8608 = vpop.f32.mrf.mxu0
    %v8609 = vadd.f32 %v8416, %v8608
    %v8610 = vpop.f32.mrf.mxu0
    %v8611 = vadd.f32 %v8418, %v8610
    %8612 = vmatprep.mubr.bf16.mxu0 %v7686
    %8613 = vmatmul.mubr.bf16.gmra.mxu0 %v7685
    %v8614 = vpop.f32.mrf.mxu0
    %v8615 = vadd.f32 %v8422, %v8614
    %v8616 = vpop.f32.mrf.mxu0
    %v8617 = vadd.f32 %v8424, %v8616
    %v8618 = vpop.f32.mrf.mxu0
    %v8619 = vadd.f32 %v8426, %v8618
    %v8620 = vpop.f32.mrf.mxu0
    %v8621 = vadd.f32 %v8428, %v8620
    %8622 = vmatprep.mubr.bf16.mxu0 %v7692
    %8623 = vmatmul.mubr.bf16.gmra.mxu0 %v7691
    %v8624 = vpop.f32.mrf.mxu0
    %v8625 = vadd.f32 %v8432, %v8624
    %v8626 = vpop.f32.mrf.mxu0
    %v8627 = vadd.f32 %v8434, %v8626
    %v8628 = vpop.f32.mrf.mxu0
    %v8629 = vadd.f32 %v8436, %v8628
    %v8630 = vpop.f32.mrf.mxu0
    %v8631 = vadd.f32 %v8438, %v8630
    %8632 = vmatprep.mubr.bf16.mxu0 %v7698
    %8633 = vmatmul.mubr.bf16.gmra.mxu0 %v7697
    %v8634 = vpop.f32.mrf.mxu0
    %v8635 = vadd.f32 %v8442, %v8634
    %v8636 = vpop.f32.mrf.mxu0
    %v8637 = vadd.f32 %v8444, %v8636
    %v8638 = vpop.f32.mrf.mxu0
    %v8639 = vadd.f32 %v8446, %v8638
    %v8640 = vpop.f32.mrf.mxu0
    %v8641 = vadd.f32 %v8448, %v8640
    %8642 = vmatprep.mubr.bf16.mxu0 %v7704
    %8643 = vmatmul.mubr.bf16.gmra.mxu0 %v7703
    %v8644 = vpop.f32.mrf.mxu0
    %v8645 = vadd.f32 %v8452, %v8644
    %v8646 = vpop.f32.mrf.mxu0
    %v8647 = vadd.f32 %v8454, %v8646
    %v8648 = vpop.f32.mrf.mxu0
    %v8649 = vadd.f32 %v8456, %v8648
    %v8650 = vpop.f32.mrf.mxu0
    %v8651 = vadd.f32 %v8458, %v8650
    %8652 = vmatprep.mubr.bf16.mxu0 %v7710
    %8653 = vmatmul.mubr.bf16.gmra.mxu0 %v7709
    %v8654 = vpop.f32.mrf.mxu0
    %v8655 = vadd.f32 %v8462, %v8654
    %v8656 = vpop.f32.mrf.mxu0
    %v8657 = vadd.f32 %v8464, %v8656
    %v8658 = vpop.f32.mrf.mxu0
    %v8659 = vadd.f32 %v8466, %v8658
    %v8660 = vpop.f32.mrf.mxu0
    %v8661 = vadd.f32 %v8468, %v8660
    %8662 = vmatprep.mubr.bf16.mxu0 %v7716
    %8663 = vmatmul.mubr.bf16.gmra.mxu0 %v7715
    %v8664 = vpop.f32.mrf.mxu0
    %v8665 = vadd.f32 %v8472, %v8664
    %v8666 = vpop.f32.mrf.mxu0
    %v8667 = vadd.f32 %v8474, %v8666
    %v8668 = vpop.f32.mrf.mxu0
    %v8669 = vadd.f32 %v8476, %v8668
    %v8670 = vpop.f32.mrf.mxu0
    %v8671 = vadd.f32 %v8478, %v8670
    %8672 = vmatprep.mubr.bf16.mxu0 %v7722
    %8673 = vmatmul.mubr.bf16.gmra.mxu0 %v7721
    %v8674 = vpop.f32.mrf.mxu0
    %v8675 = vadd.f32 %v8482, %v8674
    %v8676 = vpop.f32.mrf.mxu0
    %v8677 = vadd.f32 %v8484, %v8676
    %v8678 = vpop.f32.mrf.mxu0
    %v8679 = vadd.f32 %v8486, %v8678
    %v8680 = vpop.f32.mrf.mxu0
    %v8681 = vadd.f32 %v8488, %v8680
    %8682 = vmatprep.mubr.bf16.mxu0 %v7728
    %8683 = vmatmul.mubr.bf16.gmra.mxu0 %v7727
    %v8684 = vpop.f32.mrf.mxu0
    %v8685 = vadd.f32 %v8492, %v8684
    %v8686 = vpop.f32.mrf.mxu0
    %v8687 = vadd.f32 %v8494, %v8686
    %v8688 = vpop.f32.mrf.mxu0
    %v8689 = vadd.f32 %v8496, %v8688
    %v8690 = vpop.f32.mrf.mxu0
    %v8691 = vadd.f32 %v8498, %v8690
    %8692 = vdwg.mxu0
    %8693 = vmatprep.subr.bf16.mxu0 %v8194
    %8694 = vmatpush1.bf16.msra.mxu0 %v8193
    %8695 = vmatprep.subr.bf16.mxu0 %v8192
    %8696 = vmatpush1.bf16.msra.mxu0 %v8191
    %8697 = vmatprep.subr.bf16.mxu0 %v8190
    %8698 = vmatpush1.bf16.msra.mxu0 %v8189
    %8699 = vmatprep.subr.bf16.mxu0 %v8188
    %8700 = vmatpush1.bf16.msra.mxu0 %v8187
    %8701 = vmatprep.subr.bf16.mxu0 %v8186
    %8702 = vmatpush1.bf16.msra.mxu0 %v8185
    %8703 = vmatprep.subr.bf16.mxu0 %v8184
    %8704 = vmatpush1.bf16.msra.mxu0 %v8183
    %8705 = vmatprep.subr.bf16.mxu0 %v8182
    %8706 = vmatpush1.bf16.msra.mxu0 %v8181
    %8707 = vmatprep.subr.bf16.mxu0 %v8180
    %8708 = vmatpush1.bf16.msra.mxu0 %v8179
    %8709 = vmatprep.subr.bf16.mxu0 %v8210
    %8710 = vmatpush2.bf16.msra.mxu0 %v8209
    %8711 = vmatprep.subr.bf16.mxu0 %v8208
    %8712 = vmatpush2.bf16.msra.mxu0 %v8207
    %8713 = vmatprep.subr.bf16.mxu0 %v8206
    %8714 = vmatpush2.bf16.msra.mxu0 %v8205
    %8715 = vmatprep.subr.bf16.mxu0 %v8204
    %8716 = vmatpush2.bf16.msra.mxu0 %v8203
    %8717 = vmatprep.subr.bf16.mxu0 %v8202
    %8718 = vmatpush2.bf16.msra.mxu0 %v8201
    %8719 = vmatprep.subr.bf16.mxu0 %v8200
    %8720 = vmatpush2.bf16.msra.mxu0 %v8199
    %8721 = vmatprep.subr.bf16.mxu0 %v8198
    %8722 = vmatpush2.bf16.msra.mxu0 %v8197
    %8723 = vmatprep.subr.bf16.mxu0 %v8196
    %8724 = vmatpush2.bf16.msra.mxu0 %v8195
    %8725 = vmatprep.mubr.bf16.mxu0 %v7640
    %8726 = vmatmul.mubr.bf16.gmra.mxu0 %v7639
    %v8727 = vpop.f32.mrf.mxu0
    %v8728 = vadd.f32 %v8535, %v8727
    %v8729 = vpop.f32.mrf.mxu0
    %v8730 = vadd.f32 %v8537, %v8729
    %v8731 = vpop.f32.mrf.mxu0
    %v8732 = vadd.f32 %v8539, %v8731
    %v8733 = vpop.f32.mrf.mxu0
    %v8734 = vadd.f32 %v8541, %v8733
    %8735 = vmatprep.mubr.bf16.mxu0 %v7646
    %8736 = vmatmul.mubr.bf16.gmra.mxu0 %v7645
    %v8737 = vpop.f32.mrf.mxu0
    %v8738 = vadd.f32 %v8545, %v8737
    %v8739 = vpop.f32.mrf.mxu0
    %v8740 = vadd.f32 %v8547, %v8739
    %v8741 = vpop.f32.mrf.mxu0
    %v8742 = vadd.f32 %v8549, %v8741
    %v8743 = vpop.f32.mrf.mxu0
    %v8744 = vadd.f32 %v8551, %v8743
    %8745 = vmatprep.mubr.bf16.mxu0 %v7652
    %8746 = vmatmul.mubr.bf16.gmra.mxu0 %v7651
    %v8747 = vpop.f32.mrf.mxu0
    %v8748 = vadd.f32 %v8555, %v8747
    %v8749 = vpop.f32.mrf.mxu0
    %v8750 = vadd.f32 %v8557, %v8749
    %v8751 = vpop.f32.mrf.mxu0
    %v8752 = vadd.f32 %v8559, %v8751
    %v8753 = vpop.f32.mrf.mxu0
    %v8754 = vadd.f32 %v8561, %v8753
    %8755 = vmatprep.mubr.bf16.mxu0 %v7658
    %8756 = vmatmul.mubr.bf16.gmra.mxu0 %v7657
    %v8757 = vpop.f32.mrf.mxu0
    %v8758 = vadd.f32 %v8565, %v8757
    %v8759 = vpop.f32.mrf.mxu0
    %v8760 = vadd.f32 %v8567, %v8759
    %v8761 = vpop.f32.mrf.mxu0
    %v8762 = vadd.f32 %v8569, %v8761
    %v8763 = vpop.f32.mrf.mxu0
    %v8764 = vadd.f32 %v8571, %v8763
    %8765 = vmatprep.mubr.bf16.mxu0 %v7664
    %8766 = vmatmul.mubr.bf16.gmra.mxu0 %v7663
    %v8767 = vpop.f32.mrf.mxu0
    %v8768 = vadd.f32 %v8575, %v8767
    %v8769 = vpop.f32.mrf.mxu0
    %v8770 = vadd.f32 %v8577, %v8769
    %v8771 = vpop.f32.mrf.mxu0
    %v8772 = vadd.f32 %v8579, %v8771
    %v8773 = vpop.f32.mrf.mxu0
    %v8774 = vadd.f32 %v8581, %v8773
    %8775 = vmatprep.mubr.bf16.mxu0 %v7670
    %8776 = vmatmul.mubr.bf16.gmra.mxu0 %v7669
    %v8777 = vpop.f32.mrf.mxu0
    %v8778 = vadd.f32 %v8585, %v8777
    %v8779 = vpop.f32.mrf.mxu0
    %v8780 = vadd.f32 %v8587, %v8779
    %v8781 = vpop.f32.mrf.mxu0
    %v8782 = vadd.f32 %v8589, %v8781
    %v8783 = vpop.f32.mrf.mxu0
    %v8784 = vadd.f32 %v8591, %v8783
    %8785 = vmatprep.mubr.bf16.mxu0 %v7676
    %8786 = vmatmul.mubr.bf16.gmra.mxu0 %v7675
    %v8787 = vpop.f32.mrf.mxu0
    %v8788 = vadd.f32 %v8595, %v8787
    %v8789 = vpop.f32.mrf.mxu0
    %v8790 = vadd.f32 %v8597, %v8789
    %v8791 = vpop.f32.mrf.mxu0
    %v8792 = vadd.f32 %v8599, %v8791
    %v8793 = vpop.f32.mrf.mxu0
    %v8794 = vadd.f32 %v8601, %v8793
    %8795 = vmatprep.mubr.bf16.mxu0 %v7682
    %8796 = vmatmul.mubr.bf16.gmra.mxu0 %v7681
    %v8797 = vpop.f32.mrf.mxu0
    %v8798 = vadd.f32 %v8605, %v8797
    %v8799 = vpop.f32.mrf.mxu0
    %v8800 = vadd.f32 %v8607, %v8799
    %v8801 = vpop.f32.mrf.mxu0
    %v8802 = vadd.f32 %v8609, %v8801
    %v8803 = vpop.f32.mrf.mxu0
    %v8804 = vadd.f32 %v8611, %v8803
    %8805 = vmatprep.mubr.bf16.mxu0 %v7688
    %8806 = vmatmul.mubr.bf16.gmra.mxu0 %v7687
    %v8807 = vpop.f32.mrf.mxu0
    %v8808 = vadd.f32 %v8615, %v8807
    %v8809 = vpop.f32.mrf.mxu0
    %v8810 = vadd.f32 %v8617, %v8809
    %v8811 = vpop.f32.mrf.mxu0
    %v8812 = vadd.f32 %v8619, %v8811
    %v8813 = vpop.f32.mrf.mxu0
    %v8814 = vadd.f32 %v8621, %v8813
    %8815 = vmatprep.mubr.bf16.mxu0 %v7694
    %8816 = vmatmul.mubr.bf16.gmra.mxu0 %v7693
    %v8817 = vpop.f32.mrf.mxu0
    %v8818 = vadd.f32 %v8625, %v8817
    %v8819 = vpop.f32.mrf.mxu0
    %v8820 = vadd.f32 %v8627, %v8819
    %v8821 = vpop.f32.mrf.mxu0
    %v8822 = vadd.f32 %v8629, %v8821
    %v8823 = vpop.f32.mrf.mxu0
    %v8824 = vadd.f32 %v8631, %v8823
    %8825 = vmatprep.mubr.bf16.mxu0 %v7700
    %8826 = vmatmul.mubr.bf16.gmra.mxu0 %v7699
    %v8827 = vpop.f32.mrf.mxu0
    %v8828 = vadd.f32 %v8635, %v8827
    %v8829 = vpop.f32.mrf.mxu0
    %v8830 = vadd.f32 %v8637, %v8829
    %v8831 = vpop.f32.mrf.mxu0
    %v8832 = vadd.f32 %v8639, %v8831
    %v8833 = vpop.f32.mrf.mxu0
    %v8834 = vadd.f32 %v8641, %v8833
    %8835 = vmatprep.mubr.bf16.mxu0 %v7706
    %8836 = vmatmul.mubr.bf16.gmra.mxu0 %v7705
    %v8837 = vpop.f32.mrf.mxu0
    %v8838 = vadd.f32 %v8645, %v8837
    %v8839 = vpop.f32.mrf.mxu0
    %v8840 = vadd.f32 %v8647, %v8839
    %v8841 = vpop.f32.mrf.mxu0
    %v8842 = vadd.f32 %v8649, %v8841
    %v8843 = vpop.f32.mrf.mxu0
    %v8844 = vadd.f32 %v8651, %v8843
    %8845 = vmatprep.mubr.bf16.mxu0 %v7712
    %8846 = vmatmul.mubr.bf16.gmra.mxu0 %v7711
    %v8847 = vpop.f32.mrf.mxu0
    %v8848 = vadd.f32 %v8655, %v8847
    %v8849 = vpop.f32.mrf.mxu0
    %v8850 = vadd.f32 %v8657, %v8849
    %v8851 = vpop.f32.mrf.mxu0
    %v8852 = vadd.f32 %v8659, %v8851
    %v8853 = vpop.f32.mrf.mxu0
    %v8854 = vadd.f32 %v8661, %v8853
    %8855 = vmatprep.mubr.bf16.mxu0 %v7718
    %8856 = vmatmul.mubr.bf16.gmra.mxu0 %v7717
    %v8857 = vpop.f32.mrf.mxu0
    %v8858 = vadd.f32 %v8665, %v8857
    %v8859 = vpop.f32.mrf.mxu0
    %v8860 = vadd.f32 %v8667, %v8859
    %v8861 = vpop.f32.mrf.mxu0
    %v8862 = vadd.f32 %v8669, %v8861
    %v8863 = vpop.f32.mrf.mxu0
    %v8864 = vadd.f32 %v8671, %v8863
    %8865 = vmatprep.mubr.bf16.mxu0 %v7724
    %8866 = vmatmul.mubr.bf16.gmra.mxu0 %v7723
    %v8867 = vpop.f32.mrf.mxu0
    %v8868 = vadd.f32 %v8675, %v8867
    %v8869 = vpop.f32.mrf.mxu0
    %v8870 = vadd.f32 %v8677, %v8869
    %v8871 = vpop.f32.mrf.mxu0
    %v8872 = vadd.f32 %v8679, %v8871
    %v8873 = vpop.f32.mrf.mxu0
    %v8874 = vadd.f32 %v8681, %v8873
    %8875 = vmatprep.mubr.bf16.mxu0 %v7730
    %8876 = vmatmul.mubr.bf16.gmra.mxu0 %v7729
    %v8877 = vpop.f32.mrf.mxu0
    %v8878 = vadd.f32 %v8685, %v8877
    %v8879 = vpop.f32.mrf.mxu0
    %v8880 = vadd.f32 %v8687, %v8879
    %v8881 = vpop.f32.mrf.mxu0
    %v8882 = vadd.f32 %v8689, %v8881
    %v8883 = vpop.f32.mrf.mxu0
    %v8884 = vadd.f32 %v8691, %v8883
    %8885 = vdwg.mxu0
    %v8886 = vpack.c.bf16 %v8732, %v8728
    %v8887 = vpack.c.bf16 %v8734, %v8730
    %v8888 = vpack.c.bf16 %v8742, %v8738
    %v8889 = vpack.c.bf16 %v8744, %v8740
    %v8890 = vpack.c.bf16 %v8752, %v8748
    %v8891 = vpack.c.bf16 %v8754, %v8750
    %v8892 = vpack.c.bf16 %v8762, %v8758
    %v8893 = vpack.c.bf16 %v8764, %v8760
    %v8894 = vpack.c.bf16 %v8772, %v8768
    %v8895 = vpack.c.bf16 %v8774, %v8770
    %v8896 = vpack.c.bf16 %v8782, %v8778
    %v8897 = vpack.c.bf16 %v8784, %v8780
    %v8898 = vpack.c.bf16 %v8792, %v8788
    %v8899 = vpack.c.bf16 %v8794, %v8790
    %v8900 = vpack.c.bf16 %v8802, %v8798
    %v8901 = vpack.c.bf16 %v8804, %v8800
    %v8902 = vpack.c.bf16 %v8812, %v8808
    %v8903 = vpack.c.bf16 %v8814, %v8810
    %v8904 = vpack.c.bf16 %v8822, %v8818
    %v8905 = vpack.c.bf16 %v8824, %v8820
    %v8906 = vpack.c.bf16 %v8832, %v8828
    %v8907 = vpack.c.bf16 %v8834, %v8830
    %v8908 = vpack.c.bf16 %v8842, %v8838
    %v8909 = vpack.c.bf16 %v8844, %v8840
    %v8910 = vpack.c.bf16 %v8852, %v8848
    %v8911 = vpack.c.bf16 %v8854, %v8850
    %v8912 = vpack.c.bf16 %v8862, %v8858
    %v8913 = vpack.c.bf16 %v8864, %v8860
    %v8914 = vpack.c.bf16 %v8872, %v8868
    %v8915 = vpack.c.bf16 %v8874, %v8870
    %v8916 = vpack.c.bf16 %v8882, %v8878
    %v8917 = vpack.c.bf16 %v8884, %v8880
    %v8918 = vld [vmem:[%s7] sm:$0x3]
    %v8920 = vlaneseq
    %v8921 = vshrl.u32 %v8920, 7
    %v8922 = vsub.s32 0, %v8921
    %v8923 = vrot.slane %v8918, %v8922
    %v8924 = vlaneseq
    %v8925 = vshrl.u32 %v8924, 7
    %v8926 = vsub.s32 1, %v8925
    %v8927 = vrot.slane %v8918, %v8926
    %8930 = vmatprep.subr.bf16.mxu0 %v8901
    %8931 = vmatpush1.bf16.msra.mxu0 %v8900
    %8932 = vmatprep.subr.bf16.mxu0 %v8899
    %8933 = vmatpush1.bf16.msra.mxu0 %v8898
    %8934 = vmatprep.subr.bf16.mxu0 %v8897
    %8935 = vmatpush1.bf16.msra.mxu0 %v8896
    %8936 = vmatprep.subr.bf16.mxu0 %v8895
    %8937 = vmatpush1.bf16.msra.mxu0 %v8894
    %8938 = vmatprep.subr.bf16.mxu0 %v8893
    %8939 = vmatpush1.bf16.msra.mxu0 %v8892
    %8940 = vmatprep.subr.bf16.mxu0 %v8891
    %8941 = vmatpush1.bf16.msra.mxu0 %v8890
    %8942 = vmatprep.subr.bf16.mxu0 %v8889
    %8943 = vmatpush1.bf16.msra.mxu0 %v8888
    %8944 = vmatprep.subr.bf16.mxu0 %v8887
    %8945 = vmatpush1.bf16.msra.mxu0 %v8886
    %8946 = vmatprep.subr.bf16.mxu0 %v8917
    %8947 = vmatpush2.bf16.msra.mxu0 %v8916
    %8948 = vmatprep.subr.bf16.mxu0 %v8915
    %8949 = vmatpush2.bf16.msra.mxu0 %v8914
    %8950 = vmatprep.subr.bf16.mxu0 %v8913
    %8951 = vmatpush2.bf16.msra.mxu0 %v8912
    %8952 = vmatprep.subr.bf16.mxu0 %v8911
    %8953 = vmatpush2.bf16.msra.mxu0 %v8910
    %8954 = vmatprep.subr.bf16.mxu0 %v8909
    %8955 = vmatpush2.bf16.msra.mxu0 %v8908
    %8956 = vmatprep.subr.bf16.mxu0 %v8907
    %8957 = vmatpush2.bf16.msra.mxu0 %v8906
    %8958 = vmatprep.subr.bf16.mxu0 %v8905
    %8959 = vmatpush2.bf16.msra.mxu0 %v8904
    %8960 = vmatprep.subr.bf16.mxu0 %v8903
    %8961 = vmatpush2.bf16.msra.mxu0 %v8902
    %8962 = vmatprep.mubr.bf16.mxu0 %v198
    %8963 = vmatmul.mubr.bf16.gmra.mxu0 %v197
    %v8964 = vpop.f32.mrf.mxu0
    %v8965 = vadd.f32 %v8923, %v8964
    %v8966 = vpop.f32.mrf.mxu0
    %v8967 = vadd.f32 %v8927, %v8966
    %v8968 = vpop.f32.mrf.mxu0
    %v8969 = vadd.f32 %v8923, %v8968
    %v8970 = vpop.f32.mrf.mxu0
    %v8971 = vadd.f32 %v8927, %v8970
    %8972 = vmatprep.mubr.bf16.mxu0 %v200
    %8973 = vmatmul.mubr.bf16.gmra.mxu0 %v199
    %v8974 = vpop.f32.mrf.mxu0
    %v8975 = vadd.f32 %v8923, %v8974
    %v8976 = vpop.f32.mrf.mxu0
    %v8977 = vadd.f32 %v8927, %v8976
    %v8978 = vpop.f32.mrf.mxu0
    %v8979 = vadd.f32 %v8923, %v8978
    %v8980 = vpop.f32.mrf.mxu0
    %v8981 = vadd.f32 %v8927, %v8980
    %8982 = vmatprep.mubr.bf16.mxu0 %v202
    %8983 = vmatmul.mubr.bf16.gmra.mxu0 %v201
    %v8984 = vpop.f32.mrf.mxu0
    %v8985 = vadd.f32 %v8923, %v8984
    %v8986 = vpop.f32.mrf.mxu0
    %v8987 = vadd.f32 %v8927, %v8986
    %v8988 = vpop.f32.mrf.mxu0
    %v8989 = vadd.f32 %v8923, %v8988
    %v8990 = vpop.f32.mrf.mxu0
    %v8991 = vadd.f32 %v8927, %v8990
    %8992 = vmatprep.mubr.bf16.mxu0 %v204
    %8993 = vmatmul.mubr.bf16.gmra.mxu0 %v203
    %v8994 = vpop.f32.mrf.mxu0
    %v8995 = vadd.f32 %v8923, %v8994
    %v8996 = vpop.f32.mrf.mxu0
    %v8997 = vadd.f32 %v8927, %v8996
    %v8998 = vpop.f32.mrf.mxu0
    %v8999 = vadd.f32 %v8923, %v8998
    %v9000 = vpop.f32.mrf.mxu0
    %v9001 = vadd.f32 %v8927, %v9000
    %9002 = vmatprep.mubr.bf16.mxu0 %v206
    %9003 = vmatmul.mubr.bf16.gmra.mxu0 %v205
    %v9004 = vpop.f32.mrf.mxu0
    %v9005 = vadd.f32 %v8923, %v9004
    %v9006 = vpop.f32.mrf.mxu0
    %v9007 = vadd.f32 %v8927, %v9006
    %v9008 = vpop.f32.mrf.mxu0
    %v9009 = vadd.f32 %v8923, %v9008
    %v9010 = vpop.f32.mrf.mxu0
    %v9011 = vadd.f32 %v8927, %v9010
    %9012 = vmatprep.mubr.bf16.mxu0 %v208
    %9013 = vmatmul.mubr.bf16.gmra.mxu0 %v207
    %v9014 = vpop.f32.mrf.mxu0
    %v9015 = vadd.f32 %v8923, %v9014
    %v9016 = vpop.f32.mrf.mxu0
    %v9017 = vadd.f32 %v8927, %v9016
    %v9018 = vpop.f32.mrf.mxu0
    %v9019 = vadd.f32 %v8923, %v9018
    %v9020 = vpop.f32.mrf.mxu0
    %v9021 = vadd.f32 %v8927, %v9020
    %9022 = vmatprep.mubr.bf16.mxu0 %v210
    %9023 = vmatmul.mubr.bf16.gmra.mxu0 %v209
    %v9024 = vpop.f32.mrf.mxu0
    %v9025 = vadd.f32 %v8923, %v9024
    %v9026 = vpop.f32.mrf.mxu0
    %v9027 = vadd.f32 %v8927, %v9026
    %v9028 = vpop.f32.mrf.mxu0
    %v9029 = vadd.f32 %v8923, %v9028
    %v9030 = vpop.f32.mrf.mxu0
    %v9031 = vadd.f32 %v8927, %v9030
    %9032 = vmatprep.mubr.bf16.mxu0 %v212
    %9033 = vmatmul.mubr.bf16.gmra.mxu0 %v211
    %v9034 = vpop.f32.mrf.mxu0
    %v9035 = vadd.f32 %v8923, %v9034
    %v9036 = vpop.f32.mrf.mxu0
    %v9037 = vadd.f32 %v8927, %v9036
    %v9038 = vpop.f32.mrf.mxu0
    %v9039 = vadd.f32 %v8923, %v9038
    %v9040 = vpop.f32.mrf.mxu0
    %v9041 = vadd.f32 %v8927, %v9040
    %9042 = vmatprep.mubr.bf16.mxu0 %v214
    %9043 = vmatmul.mubr.bf16.gmra.mxu0 %v213
    %v9044 = vpop.f32.mrf.mxu0
    %v9045 = vadd.f32 %v8923, %v9044
    %v9046 = vpop.f32.mrf.mxu0
    %v9047 = vadd.f32 %v8927, %v9046
    %v9048 = vpop.f32.mrf.mxu0
    %v9049 = vadd.f32 %v8923, %v9048
    %v9050 = vpop.f32.mrf.mxu0
    %v9051 = vadd.f32 %v8927, %v9050
    %9052 = vmatprep.mubr.bf16.mxu0 %v216
    %9053 = vmatmul.mubr.bf16.gmra.mxu0 %v215
    %v9054 = vpop.f32.mrf.mxu0
    %v9055 = vadd.f32 %v8923, %v9054
    %v9056 = vpop.f32.mrf.mxu0
    %v9057 = vadd.f32 %v8927, %v9056
    %v9058 = vpop.f32.mrf.mxu0
    %v9059 = vadd.f32 %v8923, %v9058
    %v9060 = vpop.f32.mrf.mxu0
    %v9061 = vadd.f32 %v8927, %v9060
    %9062 = vmatprep.mubr.bf16.mxu0 %v218
    %9063 = vmatmul.mubr.bf16.gmra.mxu0 %v217
    %v9064 = vpop.f32.mrf.mxu0
    %v9065 = vadd.f32 %v8923, %v9064
    %v9066 = vpop.f32.mrf.mxu0
    %v9067 = vadd.f32 %v8927, %v9066
    %v9068 = vpop.f32.mrf.mxu0
    %v9069 = vadd.f32 %v8923, %v9068
    %v9070 = vpop.f32.mrf.mxu0
    %v9071 = vadd.f32 %v8927, %v9070
    %9072 = vmatprep.mubr.bf16.mxu0 %v220
    %9073 = vmatmul.mubr.bf16.gmra.mxu0 %v219
    %v9074 = vpop.f32.mrf.mxu0
    %v9075 = vadd.f32 %v8923, %v9074
    %v9076 = vpop.f32.mrf.mxu0
    %v9077 = vadd.f32 %v8927, %v9076
    %v9078 = vpop.f32.mrf.mxu0
    %v9079 = vadd.f32 %v8923, %v9078
    %v9080 = vpop.f32.mrf.mxu0
    %v9081 = vadd.f32 %v8927, %v9080
    %9082 = vmatprep.mubr.bf16.mxu0 %v222
    %9083 = vmatmul.mubr.bf16.gmra.mxu0 %v221
    %v9084 = vpop.f32.mrf.mxu0
    %v9085 = vadd.f32 %v8923, %v9084
    %v9086 = vpop.f32.mrf.mxu0
    %v9087 = vadd.f32 %v8927, %v9086
    %v9088 = vpop.f32.mrf.mxu0
    %v9089 = vadd.f32 %v8923, %v9088
    %v9090 = vpop.f32.mrf.mxu0
    %v9091 = vadd.f32 %v8927, %v9090
    %9092 = vmatprep.mubr.bf16.mxu0 %v224
    %9093 = vmatmul.mubr.bf16.gmra.mxu0 %v223
    %v9094 = vpop.f32.mrf.mxu0
    %v9095 = vadd.f32 %v8923, %v9094
    %v9096 = vpop.f32.mrf.mxu0
    %v9097 = vadd.f32 %v8927, %v9096
    %v9098 = vpop.f32.mrf.mxu0
    %v9099 = vadd.f32 %v8923, %v9098
    %v9100 = vpop.f32.mrf.mxu0
    %v9101 = vadd.f32 %v8927, %v9100
    %9102 = vmatprep.mubr.bf16.mxu0 %v226
    %9103 = vmatmul.mubr.bf16.gmra.mxu0 %v225
    %v9104 = vpop.f32.mrf.mxu0
    %v9105 = vadd.f32 %v8923, %v9104
    %v9106 = vpop.f32.mrf.mxu0
    %v9107 = vadd.f32 %v8927, %v9106
    %v9108 = vpop.f32.mrf.mxu0
    %v9109 = vadd.f32 %v8923, %v9108
    %v9110 = vpop.f32.mrf.mxu0
    %v9111 = vadd.f32 %v8927, %v9110
    %9112 = vmatprep.mubr.bf16.mxu0 %v228
    %9113 = vmatmul.mubr.bf16.gmra.mxu0 %v227
    %v9114 = vpop.f32.mrf.mxu0
    %v9115 = vadd.f32 %v8923, %v9114
    %v9116 = vpop.f32.mrf.mxu0
    %v9117 = vadd.f32 %v8927, %v9116
    %v9118 = vpop.f32.mrf.mxu0
    %v9119 = vadd.f32 %v8923, %v9118
    %v9120 = vpop.f32.mrf.mxu0
    %v9121 = vadd.f32 %v8927, %v9120
    %9122 = vdwg.mxu0
    %v9123 = vmax.f32 %v8965, 0.0
    %v9124 = vmax.f32 %v8967, 0.0
    %v9125 = vmax.f32 %v8969, 0.0
    %v9126 = vmax.f32 %v8971, 0.0
    %v9127 = vmax.f32 %v8975, 0.0
    %v9128 = vmax.f32 %v8977, 0.0
    %v9129 = vmax.f32 %v8979, 0.0
    %v9130 = vmax.f32 %v8981, 0.0
    %v9131 = vmax.f32 %v8985, 0.0
    %v9132 = vmax.f32 %v8987, 0.0
    %v9133 = vmax.f32 %v8989, 0.0
    %v9134 = vmax.f32 %v8991, 0.0
    %v9135 = vmax.f32 %v8995, 0.0
    %v9136 = vmax.f32 %v8997, 0.0
    %v9137 = vmax.f32 %v8999, 0.0
    %v9138 = vmax.f32 %v9001, 0.0
    %v9139 = vmax.f32 %v9005, 0.0
    %v9140 = vmax.f32 %v9007, 0.0
    %v9141 = vmax.f32 %v9009, 0.0
    %v9142 = vmax.f32 %v9011, 0.0
    %v9143 = vmax.f32 %v9015, 0.0
    %v9144 = vmax.f32 %v9017, 0.0
    %v9145 = vmax.f32 %v9019, 0.0
    %v9146 = vmax.f32 %v9021, 0.0
    %v9147 = vmax.f32 %v9025, 0.0
    %v9148 = vmax.f32 %v9027, 0.0
    %v9149 = vmax.f32 %v9029, 0.0
    %v9150 = vmax.f32 %v9031, 0.0
    %v9151 = vmax.f32 %v9035, 0.0
    %v9152 = vmax.f32 %v9037, 0.0
    %v9153 = vmax.f32 %v9039, 0.0
    %v9154 = vmax.f32 %v9041, 0.0
    %v9155 = vmax.f32 %v9045, 0.0
    %v9156 = vmax.f32 %v9047, 0.0
    %v9157 = vmax.f32 %v9049, 0.0
    %v9158 = vmax.f32 %v9051, 0.0
    %v9159 = vmax.f32 %v9055, 0.0
    %v9160 = vmax.f32 %v9057, 0.0
    %v9161 = vmax.f32 %v9059, 0.0
    %v9162 = vmax.f32 %v9061, 0.0
    %v9163 = vmax.f32 %v9065, 0.0
    %v9164 = vmax.f32 %v9067, 0.0
    %v9165 = vmax.f32 %v9069, 0.0
    %v9166 = vmax.f32 %v9071, 0.0
    %v9167 = vmax.f32 %v9075, 0.0
    %v9168 = vmax.f32 %v9077, 0.0
    %v9169 = vmax.f32 %v9079, 0.0
    %v9170 = vmax.f32 %v9081, 0.0
    %v9171 = vmax.f32 %v9085, 0.0
    %v9172 = vmax.f32 %v9087, 0.0
    %v9173 = vmax.f32 %v9089, 0.0
    %v9174 = vmax.f32 %v9091, 0.0
    %v9175 = vmax.f32 %v9095, 0.0
    %v9176 = vmax.f32 %v9097, 0.0
    %v9177 = vmax.f32 %v9099, 0.0
    %v9178 = vmax.f32 %v9101, 0.0
    %v9179 = vmax.f32 %v9105, 0.0
    %v9180 = vmax.f32 %v9107, 0.0
    %v9181 = vmax.f32 %v9109, 0.0
    %v9182 = vmax.f32 %v9111, 0.0
    %v9183 = vmax.f32 %v9115, 0.0
    %v9184 = vmax.f32 %v9117, 0.0
    %v9185 = vmax.f32 %v9119, 0.0
    %v9186 = vmax.f32 %v9121, 0.0
    %v9187 = vlaneseq
    %v9188 = vshrl.u32 %v9187, 7
    %v9189 = vadd.s32 %v9188, 8
    %v9190 = vadd.s32 %v9188, 16
    %v9191 = vadd.s32 %v9188, 24
    %v9192 = vadd.s32 %v9188, 32
    %v9193 = vadd.s32 %v9188, 40
    %v9194 = vadd.s32 %v9188, 48
    %v9195 = vadd.s32 %v9188, 56
    %v9196 = vadd.s32 %v9188, 64
    %v9197 = vadd.s32 %v9188, 72
    %v9198 = vadd.s32 %v9188, 80
    %v9199 = vadd.s32 %v9188, 88
    %v9200 = vadd.s32 %v9188, 96
    %v9201 = vadd.s32 %v9188, 104
    %v9202 = vadd.s32 %v9188, 112
    %v9203 = vadd.s32 %v9188, 120
    %v9204 = vadd.s32 %v9188, 128
    %v9205 = vadd.s32 %v9188, 136
    %v9206 = vadd.s32 %v9188, 144
    %v9207 = vadd.s32 %v9188, 152
    %v9208 = vadd.s32 %v9188, 160
    %v9209 = vadd.s32 %v9188, 168
    %v9210 = vadd.s32 %v9188, 176
    %v9211 = vadd.s32 %v9188, 184
    %v9212 = vadd.s32 %v9188, 192
    %v9213 = vadd.s32 %v9188, 200
    %v9214 = vadd.s32 %v9188, 208
    %v9215 = vadd.s32 %v9188, 216
    %v9216 = vadd.s32 %v9188, 224
    %v9217 = vadd.s32 %v9188, 232
    %v9218 = vadd.s32 %v9188, 240
    %v9219 = vadd.s32 %v9188, 248
    %vm9220 = vcmp.lt.s32.totalorder %v9188, 32
    %vm9221 = vcmp.lt.s32.totalorder %v9189, 32
    %vm9222 = vcmp.lt.s32.totalorder %v9190, 32
    %vm9223 = vcmp.lt.s32.totalorder %v9191, 32
    %vm9224 = vcmp.lt.s32.totalorder %v9192, 32
    %vm9225 = vcmp.lt.s32.totalorder %v9193, 32
    %vm9226 = vcmp.lt.s32.totalorder %v9194, 32
    %vm9227 = vcmp.lt.s32.totalorder %v9195, 32
    %vm9228 = vcmp.lt.s32.totalorder %v9196, 32
    %vm9229 = vcmp.lt.s32.totalorder %v9197, 32
    %vm9230 = vcmp.lt.s32.totalorder %v9198, 32
    %vm9231 = vcmp.lt.s32.totalorder %v9199, 32
    %vm9232 = vcmp.lt.s32.totalorder %v9200, 32
    %vm9233 = vcmp.lt.s32.totalorder %v9201, 32
    %vm9234 = vcmp.lt.s32.totalorder %v9202, 32
    %vm9235 = vcmp.lt.s32.totalorder %v9203, 32
    %vm9236 = vcmp.lt.s32.totalorder %v9204, 32
    %vm9237 = vcmp.lt.s32.totalorder %v9205, 32
    %vm9238 = vcmp.lt.s32.totalorder %v9206, 32
    %vm9239 = vcmp.lt.s32.totalorder %v9207, 32
    %vm9240 = vcmp.lt.s32.totalorder %v9208, 32
    %vm9241 = vcmp.lt.s32.totalorder %v9209, 32
    %vm9242 = vcmp.lt.s32.totalorder %v9210, 32
    %vm9243 = vcmp.lt.s32.totalorder %v9211, 32
    %vm9244 = vcmp.lt.s32.totalorder %v9212, 32
    %vm9245 = vcmp.lt.s32.totalorder %v9213, 32
    %vm9246 = vcmp.lt.s32.totalorder %v9214, 32
    %vm9247 = vcmp.lt.s32.totalorder %v9215, 32
    %vm9248 = vcmp.lt.s32.totalorder %v9216, 32
    %vm9249 = vcmp.lt.s32.totalorder %v9217, 32
    %vm9250 = vcmp.lt.s32.totalorder %v9218, 32
    %vm9251 = vcmp.lt.s32.totalorder %v9219, 32
    %v9252 = vsel %vm9220, 1, 0
    %v9253 = vsel %vm9221, 1, 0
    %v9254 = vsel %vm9222, 1, 0
    %v9255 = vsel %vm9223, 1, 0
    %v9256 = vsel %vm9224, 1, 0
    %v9257 = vsel %vm9225, 1, 0
    %v9258 = vsel %vm9226, 1, 0
    %v9259 = vsel %vm9227, 1, 0
    %v9260 = vsel %vm9228, 1, 0
    %v9261 = vsel %vm9229, 1, 0
    %v9262 = vsel %vm9230, 1, 0
    %v9263 = vsel %vm9231, 1, 0
    %v9264 = vsel %vm9232, 1, 0
    %v9265 = vsel %vm9233, 1, 0
    %v9266 = vsel %vm9234, 1, 0
    %v9267 = vsel %vm9235, 1, 0
    %v9268 = vsel %vm9236, 1, 0
    %v9269 = vsel %vm9237, 1, 0
    %v9270 = vsel %vm9238, 1, 0
    %v9271 = vsel %vm9239, 1, 0
    %v9272 = vsel %vm9240, 1, 0
    %v9273 = vsel %vm9241, 1, 0
    %v9274 = vsel %vm9242, 1, 0
    %v9275 = vsel %vm9243, 1, 0
    %v9276 = vsel %vm9244, 1, 0
    %v9277 = vsel %vm9245, 1, 0
    %v9278 = vsel %vm9246, 1, 0
    %v9279 = vsel %vm9247, 1, 0
    %v9280 = vsel %vm9248, 1, 0
    %v9281 = vsel %vm9249, 1, 0
    %v9282 = vsel %vm9250, 1, 0
    %v9283 = vsel %vm9251, 1, 0
    %vm9284 = vcmp.eq.s32.totalorder %v9252, 1
    %vm9285 = vcmp.eq.s32.totalorder %v9253, 1
    %vm9286 = vcmp.eq.s32.totalorder %v9254, 1
    %vm9287 = vcmp.eq.s32.totalorder %v9255, 1
    %vm9288 = vcmp.eq.s32.totalorder %v9256, 1
    %vm9289 = vcmp.eq.s32.totalorder %v9257, 1
    %vm9290 = vcmp.eq.s32.totalorder %v9258, 1
    %vm9291 = vcmp.eq.s32.totalorder %v9259, 1
    %vm9292 = vcmp.eq.s32.totalorder %v9260, 1
    %vm9293 = vcmp.eq.s32.totalorder %v9261, 1
    %vm9294 = vcmp.eq.s32.totalorder %v9262, 1
    %vm9295 = vcmp.eq.s32.totalorder %v9263, 1
    %vm9296 = vcmp.eq.s32.totalorder %v9264, 1
    %vm9297 = vcmp.eq.s32.totalorder %v9265, 1
    %vm9298 = vcmp.eq.s32.totalorder %v9266, 1
    %vm9299 = vcmp.eq.s32.totalorder %v9267, 1
    %vm9300 = vcmp.eq.s32.totalorder %v9268, 1
    %vm9301 = vcmp.eq.s32.totalorder %v9269, 1
    %vm9302 = vcmp.eq.s32.totalorder %v9270, 1
    %vm9303 = vcmp.eq.s32.totalorder %v9271, 1
    %vm9304 = vcmp.eq.s32.totalorder %v9272, 1
    %vm9305 = vcmp.eq.s32.totalorder %v9273, 1
    %vm9306 = vcmp.eq.s32.totalorder %v9274, 1
    %vm9307 = vcmp.eq.s32.totalorder %v9275, 1
    %vm9308 = vcmp.eq.s32.totalorder %v9276, 1
    %vm9309 = vcmp.eq.s32.totalorder %v9277, 1
    %vm9310 = vcmp.eq.s32.totalorder %v9278, 1
    %vm9311 = vcmp.eq.s32.totalorder %v9279, 1
    %vm9312 = vcmp.eq.s32.totalorder %v9280, 1
    %vm9313 = vcmp.eq.s32.totalorder %v9281, 1
    %vm9314 = vcmp.eq.s32.totalorder %v9282, 1
    %vm9315 = vcmp.eq.s32.totalorder %v9283, 1
    %v9316 = vsel %vm9284, %v9123, 0.0
    %v9317 = vsel %vm9284, %v9124, 0.0
    %v9318 = vsel %vm9285, %v9125, 0.0
    %v9319 = vsel %vm9285, %v9126, 0.0
    %v9320 = vsel %vm9286, %v9127, 0.0
    %v9321 = vsel %vm9286, %v9128, 0.0
    %v9322 = vsel %vm9287, %v9129, 0.0
    %v9323 = vsel %vm9287, %v9130, 0.0
    %v9324 = vsel %vm9288, %v9131, 0.0
    %v9325 = vsel %vm9288, %v9132, 0.0
    %v9326 = vsel %vm9289, %v9133, 0.0
    %v9327 = vsel %vm9289, %v9134, 0.0
    %v9328 = vsel %vm9290, %v9135, 0.0
    %v9329 = vsel %vm9290, %v9136, 0.0
    %v9330 = vsel %vm9291, %v9137, 0.0
    %v9331 = vsel %vm9291, %v9138, 0.0
    %v9332 = vsel %vm9292, %v9139, 0.0
    %v9333 = vsel %vm9292, %v9140, 0.0
    %v9334 = vsel %vm9293, %v9141, 0.0
    %v9335 = vsel %vm9293, %v9142, 0.0
    %v9336 = vsel %vm9294, %v9143, 0.0
    %v9337 = vsel %vm9294, %v9144, 0.0
    %v9338 = vsel %vm9295, %v9145, 0.0
    %v9339 = vsel %vm9295, %v9146, 0.0
    %v9340 = vsel %vm9296, %v9147, 0.0
    %v9341 = vsel %vm9296, %v9148, 0.0
    %v9342 = vsel %vm9297, %v9149, 0.0
    %v9343 = vsel %vm9297, %v9150, 0.0
    %v9344 = vsel %vm9298, %v9151, 0.0
    %v9345 = vsel %vm9298, %v9152, 0.0
    %v9346 = vsel %vm9299, %v9153, 0.0
    %v9347 = vsel %vm9299, %v9154, 0.0
    %v9348 = vsel %vm9300, %v9155, 0.0
    %v9349 = vsel %vm9300, %v9156, 0.0
    %v9350 = vsel %vm9301, %v9157, 0.0
    %v9351 = vsel %vm9301, %v9158, 0.0
    %v9352 = vsel %vm9302, %v9159, 0.0
    %v9353 = vsel %vm9302, %v9160, 0.0
    %v9354 = vsel %vm9303, %v9161, 0.0
    %v9355 = vsel %vm9303, %v9162, 0.0
    %v9356 = vsel %vm9304, %v9163, 0.0
    %v9357 = vsel %vm9304, %v9164, 0.0
    %v9358 = vsel %vm9305, %v9165, 0.0
    %v9359 = vsel %vm9305, %v9166, 0.0
    %v9360 = vsel %vm9306, %v9167, 0.0
    %v9361 = vsel %vm9306, %v9168, 0.0
    %v9362 = vsel %vm9307, %v9169, 0.0
    %v9363 = vsel %vm9307, %v9170, 0.0
    %v9364 = vsel %vm9308, %v9171, 0.0
    %v9365 = vsel %vm9308, %v9172, 0.0
    %v9366 = vsel %vm9309, %v9173, 0.0
    %v9367 = vsel %vm9309, %v9174, 0.0
    %v9368 = vsel %vm9310, %v9175, 0.0
    %v9369 = vsel %vm9310, %v9176, 0.0
    %v9370 = vsel %vm9311, %v9177, 0.0
    %v9371 = vsel %vm9311, %v9178, 0.0
    %v9372 = vsel %vm9312, %v9179, 0.0
    %v9373 = vsel %vm9312, %v9180, 0.0
    %v9374 = vsel %vm9313, %v9181, 0.0
    %v9375 = vsel %vm9313, %v9182, 0.0
    %v9376 = vsel %vm9314, %v9183, 0.0
    %v9377 = vsel %vm9314, %v9184, 0.0
    %v9378 = vsel %vm9315, %v9185, 0.0
    %v9379 = vsel %vm9315, %v9186, 0.0
    %v9380 = vadd.f32 %v9316, %v9318
    %v9381 = vadd.f32 %v9380, %v9320
    %v9382 = vadd.f32 %v9381, %v9322
    %v9383 = vadd.f32 %v9382, %v9324
    %v9384 = vadd.f32 %v9383, %v9326
    %v9385 = vadd.f32 %v9384, %v9328
    %v9386 = vadd.f32 %v9385, %v9330
    %v9387 = vadd.f32 %v9386, %v9332
    %v9388 = vadd.f32 %v9387, %v9334
    %v9389 = vadd.f32 %v9388, %v9336
    %v9390 = vadd.f32 %v9389, %v9338
    %v9391 = vadd.f32 %v9390, %v9340
    %v9392 = vadd.f32 %v9391, %v9342
    %v9393 = vadd.f32 %v9392, %v9344
    %v9394 = vadd.f32 %v9393, %v9346
    %v9395 = vadd.f32 %v9394, %v9348
    %v9396 = vadd.f32 %v9395, %v9350
    %v9397 = vadd.f32 %v9396, %v9352
    %v9398 = vadd.f32 %v9397, %v9354
    %v9399 = vadd.f32 %v9398, %v9356
    %v9400 = vadd.f32 %v9399, %v9358
    %v9401 = vadd.f32 %v9400, %v9360
    %v9402 = vadd.f32 %v9401, %v9362
    %v9403 = vadd.f32 %v9402, %v9364
    %v9404 = vadd.f32 %v9403, %v9366
    %v9405 = vadd.f32 %v9404, %v9368
    %v9406 = vadd.f32 %v9405, %v9370
    %v9407 = vadd.f32 %v9406, %v9372
    %v9408 = vadd.f32 %v9407, %v9374
    %v9409 = vadd.f32 %v9408, %v9376
    %v9410 = vadd.f32 %v9409, %v9378
    %v9411 = vrot.slane %v9410, 4
    %v9412 = vadd.f32 %v9410, %v9411
    %v9413 = vrot.slane %v9412, 2
    %v9414 = vadd.f32 %v9412, %v9413
    %v9415 = vrot.slane %v9414, 1
    %v9416 = vadd.f32 %v9414, %v9415
    %v9417 = vadd.f32 %v9317, %v9319
    %v9418 = vadd.f32 %v9417, %v9321
    %v9419 = vadd.f32 %v9418, %v9323
    %v9420 = vadd.f32 %v9419, %v9325
    %v9421 = vadd.f32 %v9420, %v9327
    %v9422 = vadd.f32 %v9421, %v9329
    %v9423 = vadd.f32 %v9422, %v9331
    %v9424 = vadd.f32 %v9423, %v9333
    %v9425 = vadd.f32 %v9424, %v9335
    %v9426 = vadd.f32 %v9425, %v9337
    %v9427 = vadd.f32 %v9426, %v9339
    %v9428 = vadd.f32 %v9427, %v9341
    %v9429 = vadd.f32 %v9428, %v9343
    %v9430 = vadd.f32 %v9429, %v9345
    %v9431 = vadd.f32 %v9430, %v9347
    %v9432 = vadd.f32 %v9431, %v9349
    %v9433 = vadd.f32 %v9432, %v9351
    %v9434 = vadd.f32 %v9433, %v9353
    %v9435 = vadd.f32 %v9434, %v9355
    %v9436 = vadd.f32 %v9435, %v9357
    %v9437 = vadd.f32 %v9436, %v9359
    %v9438 = vadd.f32 %v9437, %v9361
    %v9439 = vadd.f32 %v9438, %v9363
    %v9440 = vadd.f32 %v9439, %v9365
    %v9441 = vadd.f32 %v9440, %v9367
    %v9442 = vadd.f32 %v9441, %v9369
    %v9443 = vadd.f32 %v9442, %v9371
    %v9444 = vadd.f32 %v9443, %v9373
    %v9445 = vadd.f32 %v9444, %v9375
    %v9446 = vadd.f32 %v9445, %v9377
    %v9447 = vadd.f32 %v9446, %v9379
    %v9448 = vrot.slane %v9447, 4
    %v9449 = vadd.f32 %v9447, %v9448
    %v9450 = vrot.slane %v9449, 2
    %v9451 = vadd.f32 %v9449, %v9450
    %v9452 = vrot.slane %v9451, 1
    %v9453 = vadd.f32 %v9451, %v9452
    %v9454 = vmul.f32 %v9416, 0.03125
    %v9455 = vmul.f32 %v9453, 0.03125
    %v9456 = vld [vmem:[%s8] sm:$0xff]
    %v9457 = vld [vmem:[%s8 + $0x8] sm:$0xff]
    %v9458 = vld [vmem:[%s8 + $0x10] sm:$0xff]
    %v9459 = vld [vmem:[%s8 + $0x18] sm:$0xff]
    %v9460 = vld [vmem:[%s8 + $0x20] sm:$0xff]
    %v9461 = vld [vmem:[%s8 + $0x28] sm:$0xff]
    %v9462 = vld [vmem:[%s8 + $0x30] sm:$0xff]
    %v9463 = vld [vmem:[%s8 + $0x38] sm:$0xff]
    %v9464 = vld [vmem:[%s8 + $0x40] sm:$0xff]
    %v9465 = vld [vmem:[%s8 + $0x48] sm:$0xff]
    %v9466 = vld [vmem:[%s8 + $0x50] sm:$0xff]
    %v9467 = vld [vmem:[%s8 + $0x58] sm:$0xff]
    %v9468 = vld [vmem:[%s8 + $0x60] sm:$0xff]
    %v9469 = vld [vmem:[%s8 + $0x68] sm:$0xff]
    %v9470 = vld [vmem:[%s8 + $0x70] sm:$0xff]
    %v9471 = vld [vmem:[%s8 + $0x78] sm:$0xff]
    %v9472 = vld [vmem:[%s8 + $0x80] sm:$0xff]
    %v9473 = vld [vmem:[%s8 + $0x88] sm:$0xff]
    %v9474 = vld [vmem:[%s8 + $0x90] sm:$0xff]
    %v9475 = vld [vmem:[%s8 + $0x98] sm:$0xff]
    %v9476 = vld [vmem:[%s8 + $0xa0] sm:$0xff]
    %v9477 = vld [vmem:[%s8 + $0xa8] sm:$0xff]
    %v9478 = vld [vmem:[%s8 + $0xb0] sm:$0xff]
    %v9479 = vld [vmem:[%s8 + $0xb8] sm:$0xff]
    %v9480 = vld [vmem:[%s8 + $0xc0] sm:$0xff]
    %v9481 = vld [vmem:[%s8 + $0xc8] sm:$0xff]
    %v9482 = vld [vmem:[%s8 + $0xd0] sm:$0xff]
    %v9483 = vld [vmem:[%s8 + $0xd8] sm:$0xff]
    %v9484 = vld [vmem:[%s8 + $0xe0] sm:$0xff]
    %v9485 = vld [vmem:[%s8 + $0xe8] sm:$0xff]
    %v9486 = vld [vmem:[%s8 + $0xf0] sm:$0xff]
    %v9487 = vld [vmem:[%s8 + $0xf8] sm:$0xff]
    %v9488 = vld [vmem:[%s9] sm:$0x1]
    %9489 = vmatprep.subr.mxu0 0.0
    %9490 = vmatpush1.msra.mxu0 %v9471
    %9491 = vmatprep.subr.mxu0 0.0
    %9492 = vmatpush1.msra.mxu0 %v9470
    %9493 = vmatprep.subr.mxu0 0.0
    %9494 = vmatpush1.msra.mxu0 %v9469
    %9495 = vmatprep.subr.mxu0 0.0
    %9496 = vmatpush1.msra.mxu0 %v9468
    %9497 = vmatprep.subr.mxu0 0.0
    %9498 = vmatpush1.msra.mxu0 %v9467
    %9499 = vmatprep.subr.mxu0 0.0
    %9500 = vmatpush1.msra.mxu0 %v9466
    %9501 = vmatprep.subr.mxu0 0.0
    %9502 = vmatpush1.msra.mxu0 %v9465
    %9503 = vmatprep.subr.mxu0 0.0
    %9504 = vmatpush1.msra.mxu0 %v9464
    %9505 = vmatprep.subr.mxu0 0.0
    %9506 = vmatpush1.msra.mxu0 %v9463
    %9507 = vmatprep.subr.mxu0 0.0
    %9508 = vmatpush1.msra.mxu0 %v9462
    %9509 = vmatprep.subr.mxu0 0.0
    %9510 = vmatpush1.msra.mxu0 %v9461
    %9511 = vmatprep.subr.mxu0 0.0
    %9512 = vmatpush1.msra.mxu0 %v9460
    %9513 = vmatprep.subr.mxu0 0.0
    %9514 = vmatpush1.msra.mxu0 %v9459
    %9515 = vmatprep.subr.mxu0 0.0
    %9516 = vmatpush1.msra.mxu0 %v9458
    %9517 = vmatprep.subr.mxu0 0.0
    %9518 = vmatpush1.msra.mxu0 %v9457
    %9519 = vmatprep.subr.mxu0 0.0
    %9520 = vmatpush1.msra.mxu0 %v9456
    %9521 = vmatprep.subr.mxu0 0.0
    %9522 = vmatpush2.msra.mxu0 %v9487
    %9523 = vmatprep.subr.mxu0 0.0
    %9524 = vmatpush2.msra.mxu0 %v9486
    %9525 = vmatprep.subr.mxu0 0.0
    %9526 = vmatpush2.msra.mxu0 %v9485
    %9527 = vmatprep.subr.mxu0 0.0
    %9528 = vmatpush2.msra.mxu0 %v9484
    %9529 = vmatprep.subr.mxu0 0.0
    %9530 = vmatpush2.msra.mxu0 %v9483
    %9531 = vmatprep.subr.mxu0 0.0
    %9532 = vmatpush2.msra.mxu0 %v9482
    %9533 = vmatprep.subr.mxu0 0.0
    %9534 = vmatpush2.msra.mxu0 %v9481
    %9535 = vmatprep.subr.mxu0 0.0
    %9536 = vmatpush2.msra.mxu0 %v9480
    %9537 = vmatprep.subr.mxu0 0.0
    %9538 = vmatpush2.msra.mxu0 %v9479
    %9539 = vmatprep.subr.mxu0 0.0
    %9540 = vmatpush2.msra.mxu0 %v9478
    %9541 = vmatprep.subr.mxu0 0.0
    %9542 = vmatpush2.msra.mxu0 %v9477
    %9543 = vmatprep.subr.mxu0 0.0
    %9544 = vmatpush2.msra.mxu0 %v9476
    %9545 = vmatprep.subr.mxu0 0.0
    %9546 = vmatpush2.msra.mxu0 %v9475
    %9547 = vmatprep.subr.mxu0 0.0
    %9548 = vmatpush2.msra.mxu0 %v9474
    %9549 = vmatprep.subr.mxu0 0.0
    %9550 = vmatpush2.msra.mxu0 %v9473
    %9551 = vmatprep.subr.mxu0 0.0
    %9552 = vmatpush2.msra.mxu0 %v9472
    %9553 = vmatprep.mubr.f32.mxu0 %v9455
    %9554 = vmatmul.mubr.f32.gmra.mxu0 %v9454
    %v9555 = vpop.f32.mrf.mxu0
    %v9556 = vadd.f32 %v9488, %v9555
    %v9557 = vpop.f32.mrf.mxu0
    %9558 = vdwg.mxu0
    %9559 = vst [vmem:[#allocation2] sm:$0x1] %v9556
    // Predicated region
    $region42: #{simple_gcn_forward.1} parent=1 // pred_check
      _
    $region43: #{simple_gcn_forward.1} parent=1 // pred_check_branch
      %9561 = sbr.rel (0) target = $region45
    $region44: #{simple_gcn_forward.1} parent=1 // pred_region
      %s9563 = ssub.s32 16, 16
      %9564 = vsyncadd [#allocation3], %s9563
      %s9566 = sshll.u32 [#allocation2], 4
      %s9567 = int_to_ptr.vmem [resolvable:$true] %s9566
      %9569 = dma.vmem_to_hbm [thread:$0]  %s9567, 16, %s10, [#allocation3]
    $region45: #{simple_gcn_forward.1} parent=1 // pred_fallthru
      _
    // Predicated region
    $region46: #{simple_gcn_forward.1} parent=1 // pred_check
      _
    $region47: #{simple_gcn_forward.1} parent=1 // pred_check_branch
      %9571 = sbr.rel (0) target = $region49
    $region48: #{simple_gcn_forward.1} parent=1 // pred_region
      %9572 = dma.done [#allocation3], 16
    $region49: #{simple_gcn_forward.1} parent=1 // pred_fallthru
      _
    %9573 = vsyncpa [#allocation3], 1

</llo_original>
